<compile_context>
chip_gen: v7x
topology: tpu7x:2x2x1
jax: 0.10.0
libtpu: 0.0.40
codegen_flags: <defaults>
</compile_context>

<pallas_src>
import functools
import math

import jax
import jax.numpy as jnp
from jax.experimental import pallas as pl
from jax.experimental.pallas import tpu as pltpu


IN_DIM = 11          # 4 (ringmapped angles) + 7 (latent sample)
HIDDEN = 400
OUT_DIM = 3
OUT_PAD = 128        # lane-dense padded output width
TM_MAX = 1024        # batch-tile cap (VMEM-safe on v7x's 64 MiB per TC)
MIN_TILES = 2        # >=2 grid steps so v7x's two TensorCores both get work


# ----------------------------------------------------------------------------
# Device-generation helpers
# ----------------------------------------------------------------------------
def _device_kind():
    try:
        return jax.devices()[0].device_kind.lower()
    except Exception:
        return ""


def _act_dtype():
    """bf16 inter-layer activations on v6e/v7x (native bf16 VPU); f32 otherwise."""
    kind = _device_kind()
    if any(tag in kind for tag in ("v6", "v7", "6e", "7x")):
        return jnp.bfloat16
    return jnp.float32


# ----------------------------------------------------------------------------
# Pallas kernel: y [TM, 11] -> 7-layer Linear+ReLU stack -> 4x nested exp
#                -> out [TM, 128] (only first 3 lanes meaningful)
# ----------------------------------------------------------------------------
def _nps_mlp_kernel(y_ref,
                    w1, b1, w2, b2, w3, b3, w4, b4, w5, b5, w6, b6, w7, b7,
                    o_ref, *, act_dtype):
    # Layer 1 in f32: K=11 so MXU cost is negligible and the input (angles +
    # latent sample) is not quantized to bf16.
    h = jnp.dot(y_ref[...], w1[...], preferred_element_type=jnp.float32)
    h = jnp.maximum(h + b1[...], 0.0).astype(act_dtype)           # (TM, 400)

    def dense_relu(h_in, w_ref, b_ref):
        # bf16 x bf16 on the MXU, f32 accumulation; bias add + ReLU in the
        # activation dtype (bf16 on v6e/v7x, f32 on v5e).
        acc = jnp.dot(h_in.astype(jnp.bfloat16), w_ref[...],
                      preferred_element_type=jnp.float32)
        acc = acc.astype(act_dtype) + b_ref[...]
        return jnp.maximum(acc, 0.0)

    h = dense_relu(h, w2, b2)        # (TM, 400)
    h = dense_relu(h, w3, b3)
    h = dense_relu(h, w4, b4)
    h = dense_relu(h, w5, b5)
    h = dense_relu(h, w6, b6)

    # Final layer + postprocess in f32 for output accuracy.
    acc = jnp.dot(h.astype(jnp.bfloat16), w7[...],
                  preferred_element_type=jnp.float32)              # (TM, 128)
    y_hat = jnp.maximum(acc + b7[...], 0.0)                        # padded lanes == 0

    # postprocess: mat = y_hat * 0.15; 4x (exp(mat) - 1)   (f32, EUP)
    mat = y_hat * 0.15
    for _ in range(4):
        mat = jnp.exp(mat) - 1.0     # padded lanes stay exactly 0
    o_ref[...] = mat


def _make_mlp_call(n_pad, tm, flat_params, act_dtype):
    grid = (n_pad // tm,)

    in_specs = [pl.BlockSpec((tm, IN_DIM), lambda i: (i, 0))]
    for p in flat_params:
        # full-array, grid-invariant blocks for every weight / bias
        in_specs.append(pl.BlockSpec(p.shape, lambda i: (0, 0)))

    out_specs = pl.BlockSpec((tm, OUT_PAD), lambda i: (i, 0))

    flops = 2 * n_pad * (IN_DIM * HIDDEN + 5 * HIDDEN * HIDDEN + HIDDEN * OUT_PAD)
    transcendentals = 4 * n_pad * OUT_PAD
    weight_bytes = sum(int(p.size) * p.dtype.itemsize for p in flat_params)
    bytes_accessed = n_pad * (IN_DIM + OUT_PAD) * 4 + weight_bytes

    return pl.pallas_call(
        functools.partial(_nps_mlp_kernel, act_dtype=act_dtype),
        out_shape=jax.ShapeDtypeStruct((n_pad, OUT_PAD), jnp.float32),
        grid_spec=pltpu.PrefetchScalarGridSpec(
            num_scalar_prefetch=0,
            grid=grid,
            in_specs=in_specs,
            out_specs=out_specs,
        ),
        compiler_params=pltpu.CompilerParams(
            dimension_semantics=("parallel",),
            vmem_limit_bytes=48 << 20,
        ),
        cost_estimate=pl.CostEstimate(
            flops=flops,
            transcendentals=transcendentals,
            bytes_accessed=bytes_accessed,
        ),
    )


# ----------------------------------------------------------------------------
# Parameter init & one-time packing (OUTSIDE the per-call jitted path)
# ----------------------------------------------------------------------------
def init_params(key):
    """Deterministic init mimicking nn.Linear default (U[-1/sqrt(fan_in), ...])."""
    dims = [(IN_DIM, HIDDEN)] + [(HIDDEN, HIDDEN)] * 5 + [(HIDDEN, OUT_DIM)]
    params = []
    for (fan_in, fan_out) in dims:
        key, kw, kb = jax.random.split(key, 3)
        bound = 1.0 / math.sqrt(fan_in)
        w = jax.random.uniform(kw, (fan_in, fan_out), jnp.float32, -bound, bound)
        b = jax.random.uniform(kb, (1, fan_out), jnp.float32, -bound, bound)
        params.append((w, b))
    return params


def pack_params(params, act_dtype=None):
    """One-time packing: layer-1 in f32, hidden weights bf16 (+act-dtype biases),
    last layer zero-padded to 128 output lanes (bf16 weight / f32 bias)."""
    if act_dtype is None:
        act_dtype = _act_dtype()
    flat = []
    n_layers = len(params)
    for li, (w, b) in enumerate(params):
        b = b.reshape(1, -1)
        if li == 0:
            flat += [w.astype(jnp.float32), b.astype(jnp.float32)]
        elif li == n_layers - 1:
            w = jnp.pad(w, ((0, 0), (0, OUT_PAD - w.shape[1])))
            b = jnp.pad(b, ((0, 0), (0, OUT_PAD - b.shape[1])))
            flat += [w.astype(jnp.bfloat16), b.astype(jnp.float32)]
        else:
            flat += [w.astype(jnp.bfloat16), b.astype(act_dtype)]
    return tuple(jax.device_put(x) for x in flat)


# ----------------------------------------------------------------------------
# Plain-JAX glue (matches PyTorch semantics exactly)
# ----------------------------------------------------------------------------
def _preprocess(phi_d, theta_h, theta_d):
    phi_d = phi_d / jnp.pi
    theta_h = theta_h / (jnp.pi / 2.0)
    theta_d = theta_d / (jnp.pi / 2.0)
    x_grid = jnp.stack([phi_d, theta_h, theta_d], axis=-1)       # (N, 3)
    # ringmap
    x_add = x_grid[:, 0:1] * 2.0 * jnp.pi
    sin_col = jnp.sin(x_add) * 0.5 + 0.5                         # overwrites col 0
    cos_col = jnp.cos(x_add) * 0.5 + 0.5
    return jnp.concatenate([cos_col, sin_col, x_grid[:, 1:]], axis=-1)  # (N, 4)


def _sampling(z_mean, z_log_var, epsilon):
    # reparameterization trick; epsilon ~ N(0, 1), shape (N, 7)
    # TODO(synk): epsilon is generated outside the kernel (stand-in for torch.randn)
    return z_mean + jnp.exp(z_log_var / 2.0) * epsilon


def _round_up(x, m):
    return ((x + m - 1) // m) * m


def _pick_tiles(n):
    """Even tile count (>=2, for v7x megacore), tm <= 1024, balanced so batch
    padding stays under one 8-row sublane group per tile."""
    if n <= 8:
        return 1, 8
    n_tiles = max(MIN_TILES, 2 * pl.cdiv(n, 2 * TM_MAX))
    tm = _round_up(pl.cdiv(n, n_tiles), 8)
    return n_tiles, tm


@functools.partial(jax.jit, static_argnames=("act_dtype",))
def nps_decoder_forward(flat_params, z_mean, z_log_var, phi_d, theta_h, theta_d,
                        epsilon, act_dtype=jnp.float32):
    x = _preprocess(phi_d, theta_h, theta_d)                     # (N, 4)
    z_sample = _sampling(z_mean, z_log_var, epsilon)             # (N, 7)
    y = jnp.concatenate([x, z_sample], axis=-1).astype(jnp.float32)  # (N, 11)

    n = y.shape[0]
    n_tiles, tm = _pick_tiles(n)
    n_pad = n_tiles * tm
    if n_pad != n:
        y = jnp.pad(y, ((0, n_pad - n), (0, 0)))

    call = _make_mlp_call(n_pad, tm, flat_params, act_dtype)
    out = call(y, *flat_params)                                  # (n_pad, 128)
    return out[:n, :OUT_DIM]                                     # (N, 3)


# ----------------------------------------------------------------------------
# Pure-JAX f32 reference (for a quick sanity check)
# ----------------------------------------------------------------------------
def _reference(params, z_mean, z_log_var, phi_d, theta_h, theta_d, epsilon):
    x = _preprocess(phi_d, theta_h, theta_d)
    z_sample = _sampling(z_mean, z_log_var, epsilon)
    h = jnp.concatenate([x, z_sample], axis=-1)
    for (w, b) in params:
        h = jnp.maximum(h @ w + b, 0.0)
    mat = h * 0.15
    for _ in range(4):
        mat = jnp.exp(mat) - 1.0
    return mat


if __name__ == "__main__":
    key = jax.random.PRNGKey(0)
    k_params, k_zm, k_zv, k_phi, k_th, k_td, k_eps = jax.random.split(key, 7)

    N = 200  # batch of (phi_d, theta_h, theta_d) samples (exercises 2-tile grid + pad)
    params = init_params(k_params)

    act_dtype = _act_dtype()
    flat_params = pack_params(params, act_dtype)   # one-time packing, outside jit

    z_mean = jax.random.normal(k_zm, (N, 7), jnp.float32)
    z_log_var = jax.random.normal(k_zv, (N, 7), jnp.float32) * 0.1
    phi_d = jax.random.uniform(k_phi, (N,), jnp.float32, 0.0, math.pi)
    theta_h = jax.random.uniform(k_th, (N,), jnp.float32, 0.0, math.pi / 2)
    theta_d = jax.random.uniform(k_td, (N,), jnp.float32, 0.0, math.pi / 2)
    epsilon = jax.random.normal(k_eps, (N, 7), jnp.float32)

    out = nps_decoder_forward(flat_params, z_mean, z_log_var, phi_d, theta_h,
                              theta_d, epsilon, act_dtype=act_dtype)
    out = jax.block_until_ready(out)

    ref = _reference(params, z_mean, z_log_var, phi_d, theta_h, theta_d, epsilon)
    assert out.shape == (N, OUT_DIM), out.shape
    assert bool(jnp.all(jnp.isfinite(out))), "non-finite output"
    # bf16 matmuls / activations with f32 accumulation: compare against the
    # f32 reference with a tolerance matching bf16 precision.
    assert jnp.allclose(out, ref, atol=2e-2, rtol=5e-2), (
        "mismatch vs reference: max abs diff = "
        f"{float(jnp.max(jnp.abs(out - ref)))}")

    print("KERNEL_OK")
</pallas_src>

<mosaic_0001>
module attributes {stable_mosaic.version = 11 : i64} {
  func.func @_nps_mlp_kernel(%arg0: i32, %arg1: memref<104x11xf32, #tpu.memory_space<vmem>>, %arg2: memref<11x400xf32, #tpu.memory_space<vmem>>, %arg3: memref<1x400xf32, #tpu.memory_space<vmem>>, %arg4: memref<400x400xbf16, #tpu.memory_space<vmem>>, %arg5: memref<1x400xf32, #tpu.memory_space<vmem>>, %arg6: memref<400x400xbf16, #tpu.memory_space<vmem>>, %arg7: memref<1x400xf32, #tpu.memory_space<vmem>>, %arg8: memref<400x400xbf16, #tpu.memory_space<vmem>>, %arg9: memref<1x400xf32, #tpu.memory_space<vmem>>, %arg10: memref<400x400xbf16, #tpu.memory_space<vmem>>, %arg11: memref<1x400xf32, #tpu.memory_space<vmem>>, %arg12: memref<400x400xbf16, #tpu.memory_space<vmem>>, %arg13: memref<1x400xf32, #tpu.memory_space<vmem>>, %arg14: memref<400x128xbf16, #tpu.memory_space<vmem>>, %arg15: memref<1x128xf32, #tpu.memory_space<vmem>>, %arg16: memref<104x128xf32, #tpu.memory_space<vmem>>) attributes {dimension_semantics = [#tpu.dimension_semantics<parallel>], iteration_bounds = array<i64: 2>, scalar_prefetch = 0 : i64, scratch_operands = 0 : i64, tpu.core_type = #tpu.core_type<tc>, window_params = [{transform_indices = @transform_0, window_bounds = array<i64: 104, 11>}, {pipeline_mode = #tpu.pipeline_mode<synchronous>, transform_indices = @transform_1, window_bounds = array<i64: 11, 400>}, {pipeline_mode = #tpu.pipeline_mode<synchronous>, transform_indices = @transform_2, window_bounds = array<i64: 1, 400>}, {pipeline_mode = #tpu.pipeline_mode<synchronous>, transform_indices = @transform_3, window_bounds = array<i64: 400, 400>}, {pipeline_mode = #tpu.pipeline_mode<synchronous>, transform_indices = @transform_4, window_bounds = array<i64: 1, 400>}, {pipeline_mode = #tpu.pipeline_mode<synchronous>, transform_indices = @transform_5, window_bounds = array<i64: 400, 400>}, {pipeline_mode = #tpu.pipeline_mode<synchronous>, transform_indices = @transform_6, window_bounds = array<i64: 1, 400>}, {pipeline_mode = #tpu.pipeline_mode<synchronous>, transform_indices = @transform_7, window_bounds = array<i64: 400, 400>}, {pipeline_mode = #tpu.pipeline_mode<synchronous>, transform_indices = @transform_8, window_bounds = array<i64: 1, 400>}, {pipeline_mode = #tpu.pipeline_mode<synchronous>, transform_indices = @transform_9, window_bounds = array<i64: 400, 400>}, {pipeline_mode = #tpu.pipeline_mode<synchronous>, transform_indices = @transform_10, window_bounds = array<i64: 1, 400>}, {pipeline_mode = #tpu.pipeline_mode<synchronous>, transform_indices = @transform_11, window_bounds = array<i64: 400, 400>}, {pipeline_mode = #tpu.pipeline_mode<synchronous>, transform_indices = @transform_12, window_bounds = array<i64: 1, 400>}, {pipeline_mode = #tpu.pipeline_mode<synchronous>, transform_indices = @transform_13, window_bounds = array<i64: 400, 128>}, {pipeline_mode = #tpu.pipeline_mode<synchronous>, transform_indices = @transform_14, window_bounds = array<i64: 1, 128>}, {transform_indices = @transform_15, window_bounds = array<i64: 104, 128>}]} {
    %c0 = arith.constant 0 : index
    %c0_0 = arith.constant 0 : index
    %0 = vector.load %arg1[%c0, %c0_0] : memref<104x11xf32, #tpu.memory_space<vmem>>, vector<104x11xf32>
    %c0_1 = arith.constant 0 : index
    %c0_2 = arith.constant 0 : index
    %1 = vector.load %arg2[%c0_1, %c0_2] : memref<11x400xf32, #tpu.memory_space<vmem>>, vector<11x400xf32>
    %cst = arith.constant dense<0.000000e+00> : vector<104x400xf32>
    %2 = tpu.matmul %0, %1, %cst {dimension_numbers = #tpu.dot_dimension_numbers<[1], [0], [0], [1], [0, 0, 1, 1], [], []>} : vector<104x11xf32>, vector<11x400xf32>, vector<104x400xf32> -> vector<104x400xf32>
    %c0_3 = arith.constant 0 : index
    %c0_4 = arith.constant 0 : index
    %3 = vector.load %arg3[%c0_3, %c0_4] : memref<1x400xf32, #tpu.memory_space<vmem>>, vector<1x400xf32>
    %4 = vector.broadcast %3 : vector<1x400xf32> to vector<104x400xf32>
    %5 = arith.addf %2, %4 : vector<104x400xf32>
    %cst_5 = arith.constant 0.000000e+00 : f32
    %6 = vector.broadcast %cst_5 : f32 to vector<104x400xf32>
    %7 = arith.maximumf %5, %6 : vector<104x400xf32>
    %8 = arith.truncf %7 : vector<104x400xf32> to vector<104x400xbf16>
    %c0_6 = arith.constant 0 : index
    %c0_7 = arith.constant 0 : index
    %9 = vector.load %arg4[%c0_6, %c0_7] : memref<400x400xbf16, #tpu.memory_space<vmem>>, vector<400x400xbf16>
    %cst_8 = arith.constant dense<0.000000e+00> : vector<104x400xf32>
    %10 = tpu.matmul %8, %9, %cst_8 {dimension_numbers = #tpu.dot_dimension_numbers<[1], [0], [0], [1], [0, 0, 1, 1], [], []>} : vector<104x400xbf16>, vector<400x400xbf16>, vector<104x400xf32> -> vector<104x400xf32>
    %c0_9 = arith.constant 0 : index
    %c0_10 = arith.constant 0 : index
    %11 = vector.load %arg5[%c0_9, %c0_10] : memref<1x400xf32, #tpu.memory_space<vmem>>, vector<1x400xf32>
    %12 = vector.broadcast %11 : vector<1x400xf32> to vector<104x400xf32>
    %13 = arith.addf %10, %12 : vector<104x400xf32>
    %cst_11 = arith.constant 0.000000e+00 : f32
    %14 = vector.broadcast %cst_11 : f32 to vector<104x400xf32>
    %15 = arith.maximumf %13, %14 : vector<104x400xf32>
    %16 = arith.truncf %15 : vector<104x400xf32> to vector<104x400xbf16>
    %c0_12 = arith.constant 0 : index
    %c0_13 = arith.constant 0 : index
    %17 = vector.load %arg6[%c0_12, %c0_13] : memref<400x400xbf16, #tpu.memory_space<vmem>>, vector<400x400xbf16>
    %cst_14 = arith.constant dense<0.000000e+00> : vector<104x400xf32>
    %18 = tpu.matmul %16, %17, %cst_14 {dimension_numbers = #tpu.dot_dimension_numbers<[1], [0], [0], [1], [0, 0, 1, 1], [], []>} : vector<104x400xbf16>, vector<400x400xbf16>, vector<104x400xf32> -> vector<104x400xf32>
    %c0_15 = arith.constant 0 : index
    %c0_16 = arith.constant 0 : index
    %19 = vector.load %arg7[%c0_15, %c0_16] : memref<1x400xf32, #tpu.memory_space<vmem>>, vector<1x400xf32>
    %20 = vector.broadcast %19 : vector<1x400xf32> to vector<104x400xf32>
    %21 = arith.addf %18, %20 : vector<104x400xf32>
    %cst_17 = arith.constant 0.000000e+00 : f32
    %22 = vector.broadcast %cst_17 : f32 to vector<104x400xf32>
    %23 = arith.maximumf %21, %22 : vector<104x400xf32>
    %24 = arith.truncf %23 : vector<104x400xf32> to vector<104x400xbf16>
    %c0_18 = arith.constant 0 : index
    %c0_19 = arith.constant 0 : index
    %25 = vector.load %arg8[%c0_18, %c0_19] : memref<400x400xbf16, #tpu.memory_space<vmem>>, vector<400x400xbf16>
    %cst_20 = arith.constant dense<0.000000e+00> : vector<104x400xf32>
    %26 = tpu.matmul %24, %25, %cst_20 {dimension_numbers = #tpu.dot_dimension_numbers<[1], [0], [0], [1], [0, 0, 1, 1], [], []>} : vector<104x400xbf16>, vector<400x400xbf16>, vector<104x400xf32> -> vector<104x400xf32>
    %c0_21 = arith.constant 0 : index
    %c0_22 = arith.constant 0 : index
    %27 = vector.load %arg9[%c0_21, %c0_22] : memref<1x400xf32, #tpu.memory_space<vmem>>, vector<1x400xf32>
    %28 = vector.broadcast %27 : vector<1x400xf32> to vector<104x400xf32>
    %29 = arith.addf %26, %28 : vector<104x400xf32>
    %cst_23 = arith.constant 0.000000e+00 : f32
    %30 = vector.broadcast %cst_23 : f32 to vector<104x400xf32>
    %31 = arith.maximumf %29, %30 : vector<104x400xf32>
    %32 = arith.truncf %31 : vector<104x400xf32> to vector<104x400xbf16>
    %c0_24 = arith.constant 0 : index
    %c0_25 = arith.constant 0 : index
    %33 = vector.load %arg10[%c0_24, %c0_25] : memref<400x400xbf16, #tpu.memory_space<vmem>>, vector<400x400xbf16>
    %cst_26 = arith.constant dense<0.000000e+00> : vector<104x400xf32>
    %34 = tpu.matmul %32, %33, %cst_26 {dimension_numbers = #tpu.dot_dimension_numbers<[1], [0], [0], [1], [0, 0, 1, 1], [], []>} : vector<104x400xbf16>, vector<400x400xbf16>, vector<104x400xf32> -> vector<104x400xf32>
    %c0_27 = arith.constant 0 : index
    %c0_28 = arith.constant 0 : index
    %35 = vector.load %arg11[%c0_27, %c0_28] : memref<1x400xf32, #tpu.memory_space<vmem>>, vector<1x400xf32>
    %36 = vector.broadcast %35 : vector<1x400xf32> to vector<104x400xf32>
    %37 = arith.addf %34, %36 : vector<104x400xf32>
    %cst_29 = arith.constant 0.000000e+00 : f32
    %38 = vector.broadcast %cst_29 : f32 to vector<104x400xf32>
    %39 = arith.maximumf %37, %38 : vector<104x400xf32>
    %40 = arith.truncf %39 : vector<104x400xf32> to vector<104x400xbf16>
    %c0_30 = arith.constant 0 : index
    %c0_31 = arith.constant 0 : index
    %41 = vector.load %arg12[%c0_30, %c0_31] : memref<400x400xbf16, #tpu.memory_space<vmem>>, vector<400x400xbf16>
    %cst_32 = arith.constant dense<0.000000e+00> : vector<104x400xf32>
    %42 = tpu.matmul %40, %41, %cst_32 {dimension_numbers = #tpu.dot_dimension_numbers<[1], [0], [0], [1], [0, 0, 1, 1], [], []>} : vector<104x400xbf16>, vector<400x400xbf16>, vector<104x400xf32> -> vector<104x400xf32>
    %c0_33 = arith.constant 0 : index
    %c0_34 = arith.constant 0 : index
    %43 = vector.load %arg13[%c0_33, %c0_34] : memref<1x400xf32, #tpu.memory_space<vmem>>, vector<1x400xf32>
    %44 = vector.broadcast %43 : vector<1x400xf32> to vector<104x400xf32>
    %45 = arith.addf %42, %44 : vector<104x400xf32>
    %cst_35 = arith.constant 0.000000e+00 : f32
    %46 = vector.broadcast %cst_35 : f32 to vector<104x400xf32>
    %47 = arith.maximumf %45, %46 : vector<104x400xf32>
    %48 = arith.truncf %47 : vector<104x400xf32> to vector<104x400xbf16>
    %c0_36 = arith.constant 0 : index
    %c0_37 = arith.constant 0 : index
    %49 = vector.load %arg14[%c0_36, %c0_37] : memref<400x128xbf16, #tpu.memory_space<vmem>>, vector<400x128xbf16>
    %cst_38 = arith.constant dense<0.000000e+00> : vector<104x128xf32>
    %50 = tpu.matmul %48, %49, %cst_38 {dimension_numbers = #tpu.dot_dimension_numbers<[1], [0], [0], [1], [0, 0, 1, 1], [], []>} : vector<104x400xbf16>, vector<400x128xbf16>, vector<104x128xf32> -> vector<104x128xf32>
    %c0_39 = arith.constant 0 : index
    %c0_40 = arith.constant 0 : index
    %51 = vector.load %arg15[%c0_39, %c0_40] : memref<1x128xf32, #tpu.memory_space<vmem>>, vector<1x128xf32>
    %52 = vector.broadcast %51 : vector<1x128xf32> to vector<104x128xf32>
    %53 = arith.addf %50, %52 : vector<104x128xf32>
    %cst_41 = arith.constant 0.000000e+00 : f32
    %54 = vector.broadcast %cst_41 : f32 to vector<104x128xf32>
    %55 = arith.maximumf %53, %54 : vector<104x128xf32>
    %cst_42 = arith.constant 1.500000e-01 : f32
    %56 = vector.broadcast %cst_42 : f32 to vector<104x128xf32>
    %57 = arith.mulf %55, %56 : vector<104x128xf32>
    %58 = math.exp %57 : vector<104x128xf32>
    %cst_43 = arith.constant 1.000000e+00 : f32
    %59 = vector.broadcast %cst_43 : f32 to vector<104x128xf32>
    %60 = arith.subf %58, %59 : vector<104x128xf32>
    %61 = math.exp %60 : vector<104x128xf32>
    %cst_44 = arith.constant 1.000000e+00 : f32
    %62 = vector.broadcast %cst_44 : f32 to vector<104x128xf32>
    %63 = arith.subf %61, %62 : vector<104x128xf32>
    %64 = math.exp %63 : vector<104x128xf32>
    %cst_45 = arith.constant 1.000000e+00 : f32
    %65 = vector.broadcast %cst_45 : f32 to vector<104x128xf32>
    %66 = arith.subf %64, %65 : vector<104x128xf32>
    %67 = math.exp %66 : vector<104x128xf32>
    %cst_46 = arith.constant 1.000000e+00 : f32
    %68 = vector.broadcast %cst_46 : f32 to vector<104x128xf32>
    %69 = arith.subf %67, %68 : vector<104x128xf32>
    %c0_47 = arith.constant 0 : index
    %c0_48 = arith.constant 0 : index
    %70 = vector.load %arg16[%c0_47, %c0_48] : memref<104x128xf32, #tpu.memory_space<vmem>>, vector<104x128xf32>
    tpu.vector_store %arg16[%c0_47, %c0_48], %69 {strides = array<i32>} : memref<104x128xf32, #tpu.memory_space<vmem>>, vector<104x128xf32>,
    return
  }
  func.func @transform_0(%arg0: i32) -> (i32, i32) {
    %c0_i32 = arith.constant 0 : i32
    %c0_i32_0 = arith.constant 0 : i32
    return %arg0, %c0_i32 : i32, i32
  }
  func.func @transform_1(%arg0: i32) -> (i32, i32) {
    %c0_i32 = arith.constant 0 : i32
    %c0_i32_0 = arith.constant 0 : i32
    %c0_i32_1 = arith.constant 0 : i32
    return %c0_i32, %c0_i32_0 : i32, i32
  }
  func.func @transform_2(%arg0: i32) -> (i32, i32) {
    %c0_i32 = arith.constant 0 : i32
    %c0_i32_0 = arith.constant 0 : i32
    %c0_i32_1 = arith.constant 0 : i32
    return %c0_i32, %c0_i32_0 : i32, i32
  }
  func.func @transform_3(%arg0: i32) -> (i32, i32) {
    %c0_i32 = arith.constant 0 : i32
    %c0_i32_0 = arith.constant 0 : i32
    %c0_i32_1 = arith.constant 0 : i32
    return %c0_i32, %c0_i32_0 : i32, i32
  }
  func.func @transform_4(%arg0: i32) -> (i32, i32) {
    %c0_i32 = arith.constant 0 : i32
    %c0_i32_0 = arith.constant 0 : i32
    %c0_i32_1 = arith.constant 0 : i32
    return %c0_i32, %c0_i32_0 : i32, i32
  }
  func.func @transform_5(%arg0: i32) -> (i32, i32) {
    %c0_i32 = arith.constant 0 : i32
    %c0_i32_0 = arith.constant 0 : i32
    %c0_i32_1 = arith.constant 0 : i32
    return %c0_i32, %c0_i32_0 : i32, i32
  }
  func.func @transform_6(%arg0: i32) -> (i32, i32) {
    %c0_i32 = arith.constant 0 : i32
    %c0_i32_0 = arith.constant 0 : i32
    %c0_i32_1 = arith.constant 0 : i32
    return %c0_i32, %c0_i32_0 : i32, i32
  }
  func.func @transform_7(%arg0: i32) -> (i32, i32) {
    %c0_i32 = arith.constant 0 : i32
    %c0_i32_0 = arith.constant 0 : i32
    %c0_i32_1 = arith.constant 0 : i32
    return %c0_i32, %c0_i32_0 : i32, i32
  }
  func.func @transform_8(%arg0: i32) -> (i32, i32) {
    %c0_i32 = arith.constant 0 : i32
    %c0_i32_0 = arith.constant 0 : i32
    %c0_i32_1 = arith.constant 0 : i32
    return %c0_i32, %c0_i32_0 : i32, i32
  }
  func.func @transform_9(%arg0: i32) -> (i32, i32) {
    %c0_i32 = arith.constant 0 : i32
    %c0_i32_0 = arith.constant 0 : i32
    %c0_i32_1 = arith.constant 0 : i32
    return %c0_i32, %c0_i32_0 : i32, i32
  }
  func.func @transform_10(%arg0: i32) -> (i32, i32) {
    %c0_i32 = arith.constant 0 : i32
    %c0_i32_0 = arith.constant 0 : i32
    %c0_i32_1 = arith.constant 0 : i32
    return %c0_i32, %c0_i32_0 : i32, i32
  }
  func.func @transform_11(%arg0: i32) -> (i32, i32) {
    %c0_i32 = arith.constant 0 : i32
    %c0_i32_0 = arith.constant 0 : i32
    %c0_i32_1 = arith.constant 0 : i32
    return %c0_i32, %c0_i32_0 : i32, i32
  }
  func.func @transform_12(%arg0: i32) -> (i32, i32) {
    %c0_i32 = arith.constant 0 : i32
    %c0_i32_0 = arith.constant 0 : i32
    %c0_i32_1 = arith.constant 0 : i32
    return %c0_i32, %c0_i32_0 : i32, i32
  }
  func.func @transform_13(%arg0: i32) -> (i32, i32) {
    %c0_i32 = arith.constant 0 : i32
    %c0_i32_0 = arith.constant 0 : i32
    %c0_i32_1 = arith.constant 0 : i32
    return %c0_i32, %c0_i32_0 : i32, i32
  }
  func.func @transform_14(%arg0: i32) -> (i32, i32) {
    %c0_i32 = arith.constant 0 : i32
    %c0_i32_0 = arith.constant 0 : i32
    %c0_i32_1 = arith.constant 0 : i32
    return %c0_i32, %c0_i32_0 : i32, i32
  }
  func.func @transform_15(%arg0: i32) -> (i32, i32) {
    %c0_i32 = arith.constant 0 : i32
    %c0_i32_0 = arith.constant 0 : i32
    return %arg0, %c0_i32 : i32, i32
  }
}

</mosaic_0001>

<llo_original>
// kernel: nps_decoder_forward.1
$region0: #{nps_decoder_forward.1}
  #allocation0 [shape = 'u32[]', space=smem, size = 0x4, offset = 0x4, fixed_abs, tag = 'smem constant byte address 0x4 - core index']
  #allocation1 [shape = 'u32[144,128]{1,0:T(1,128)}', space=vmem, size = 0x12000, scoped, tag = 'internal scratch']
  %s0 = inlined_call_operand.vmem [shape: f32[208,11], index: 0, kind: input, shape index: {}]
  %s1 = inlined_call_operand.hbm [shape: f32[11,400], index: 1, kind: input, shape index: {}]
  %s2 = inlined_call_operand.hbm [shape: f32[1,400], index: 2, kind: input, shape index: {}]
  %s3 = inlined_call_operand.vmem [shape: bf16[400,400], index: 3, kind: input, shape index: {}]
  %s4 = inlined_call_operand.hbm [shape: f32[1,400], index: 4, kind: input, shape index: {}]
  %s5 = inlined_call_operand.hbm [shape: bf16[400,400], index: 5, kind: input, shape index: {}]
  %s6 = inlined_call_operand.hbm [shape: f32[1,400], index: 6, kind: input, shape index: {}]
  %s7 = inlined_call_operand.hbm [shape: bf16[400,400], index: 7, kind: input, shape index: {}]
  %s8 = inlined_call_operand.hbm [shape: f32[1,400], index: 8, kind: input, shape index: {}]
  %s9 = inlined_call_operand.hbm [shape: bf16[400,400], index: 9, kind: input, shape index: {}]
  %s10 = inlined_call_operand.hbm [shape: f32[1,400], index: 10, kind: input, shape index: {}]
  %s11 = inlined_call_operand.hbm [shape: bf16[400,400], index: 11, kind: input, shape index: {}]
  %s12 = inlined_call_operand.hbm [shape: f32[1,400], index: 12, kind: input, shape index: {}]
  %s13 = inlined_call_operand.hbm [shape: bf16[400,128], index: 13, kind: input, shape index: {}]
  %s14 = inlined_call_operand.hbm [shape: f32[1,128], index: 14, kind: input, shape index: {}]
  %s15 = inlined_call_operand.vmem [shape: f32[208,128], index: 15, kind: output, shape index: {}]
  %s16 = sld [smem:[#allocation0]]
  $region145: #{nps_decoder_forward.1} parent=0
    _
  %s18 = ssub.s32 1, %s16
  %s19 = scalar_select 0, %s18, %s16
  $region1: #{nps_decoder_forward.1} parent=0
    #allocation2 [shape = 'u8[32768]{0}', space=vmem, size = 0x8000, scoped, tag = 'input window, operand 1, single buffered']
    #allocation3 [shape = 's32[2]{0}', space=sflag, size = 0x8, scoped, tag = 'scoped memory for nps_decoder_forward.1']
    #allocation4 [shape = 'u8[2048]{0}', space=vmem, size = 0x800, scoped, tag = 'input window, operand 2, single buffered']
    #allocation5 [shape = 's32[1]{0}', space=sflag, size = 0x4, scoped, tag = 'scoped memory for nps_decoder_forward.1']
    #allocation6 [shape = 'u8[2048]{0}', space=vmem, size = 0x800, scoped, tag = 'input window, operand 4, single buffered']
    #allocation7 [shape = 'u8[409600]{0}', space=vmem, size = 0x64000, scoped, tag = 'input window, operand 5, single buffered']
    #allocation8 [shape = 's32[1]{0}', space=sflag, size = 0x4, scoped, tag = 'scoped memory for nps_decoder_forward.1']
    #allocation9 [shape = 'u8[2048]{0}', space=vmem, size = 0x800, scoped, tag = 'input window, operand 6, single buffered']
    #allocation10 [shape = 'u8[409600]{0}', space=vmem, size = 0x64000, scoped, tag = 'input window, operand 7, single buffered']
    #allocation11 [shape = 's32[1]{0}', space=sflag, size = 0x4, scoped, tag = 'scoped memory for nps_decoder_forward.1']
    #allocation12 [shape = 'u8[2048]{0}', space=vmem, size = 0x800, scoped, tag = 'input window, operand 8, single buffered']
    #allocation13 [shape = 'u8[409600]{0}', space=vmem, size = 0x64000, scoped, tag = 'input window, operand 9, single buffered']
    #allocation14 [shape = 's32[1]{0}', space=sflag, size = 0x4, scoped, tag = 'scoped memory for nps_decoder_forward.1']
    #allocation15 [shape = 'u8[2048]{0}', space=vmem, size = 0x800, scoped, tag = 'input window, operand 10, single buffered']
    #allocation16 [shape = 'u8[409600]{0}', space=vmem, size = 0x64000, scoped, tag = 'input window, operand 11, single buffered']
    #allocation17 [shape = 's32[1]{0}', space=sflag, size = 0x4, scoped, tag = 'scoped memory for nps_decoder_forward.1']
    #allocation18 [shape = 'u8[2048]{0}', space=vmem, size = 0x800, scoped, tag = 'input window, operand 12, single buffered']
    #allocation19 [shape = 'u8[102400]{0}', space=vmem, size = 0x19000, scoped, tag = 'input window, operand 13, single buffered']
    #allocation20 [shape = 's32[1]{0}', space=sflag, size = 0x4, scoped, tag = 'scoped memory for nps_decoder_forward.1']
    #allocation21 [shape = 'u8[512]{0}', space=vmem, size = 0x400, scoped, tag = 'input window, operand 14, single buffered']
    %20 = vsyncpa [#allocation3], 0
    %21 = vsyncpa [#allocation5], 0
    %22 = vsyncpa [#allocation8], 0
    %23 = vsyncpa [#allocation11], 0
    %24 = vsyncpa [#allocation14], 0
    %25 = vsyncpa [#allocation17], 0
    %26 = vsyncpa [#allocation20], 0
    loop: start=0, step=1, limit=4
    $region2: #{nps_decoder_forward.1} parent=1 // loop_pre_header
      _
    $region3: #{nps_decoder_forward.1} parent=1 // loop_header
      %s28 = sphi 0, %s32
      %p29 = scmp.ge.s32.totalorder %s28, 4
      %s38 = sphi 0, %s40
      %s41 = sphi 0, %s38
      %s42 = sphi 0, %s41
      %s58 = sphi 0, %s42
      %s62 = sphi 0, %s62
      %s64 = sphi 0, %s62
      %s65 = sphi 0, %s64
      %s79 = sphi 0, %s65
      %s83 = sphi 0, %s83
      %s85 = sphi 0, %s83
      %s86 = sphi 0, %s85
      %s100 = sphi 0, %s86
      %s104 = sphi 0, %s104
      %s106 = sphi 0, %s104
      %s107 = sphi 0, %s106
      %s121 = sphi 0, %s107
      %s125 = sphi 0, %s125
      %s127 = sphi 0, %s125
      %s128 = sphi 0, %s127
      %s142 = sphi 0, %s128
      %s146 = sphi 0, %s146
      %s148 = sphi 0, %s146
      %s149 = sphi 0, %s148
      %s163 = sphi 0, %s149
      %s167 = sphi 0, %s167
      %s169 = sphi 0, %s167
      %s170 = sphi 0, %s169
      %s184 = sphi 0, %s170
      %s188 = sphi 0, %s188
      %s190 = sphi 0, %s188
      %s191 = sphi 0, %s190
      %s205 = sphi 0, %s191
      %s209 = sphi 0, %s209
      %s211 = sphi 0, %s209
      %s212 = sphi 0, %s211
      %s226 = sphi 0, %s212
      %s230 = sphi 0, %s230
      %s232 = sphi 0, %s230
      %s233 = sphi 0, %s232
      %s247 = sphi 0, %s233
      %s251 = sphi 0, %s251
      %s253 = sphi 0, %s251
      %s254 = sphi 0, %s253
      %s268 = sphi 0, %s254
      %s272 = sphi 0, %s272
      %s274 = sphi 0, %s272
      %s275 = sphi 0, %s274
      %s289 = sphi 0, %s275
      %s293 = sphi 0, %s293
      %s295 = sphi 0, %s293
      %s296 = sphi 0, %s295
      %s310 = sphi 0, %s296
      %s314 = sphi 0, %s314
      %s316 = sphi 0, %s314
      %s317 = sphi 0, %s316
      %s331 = sphi 0, %s317
      %s335 = sphi 0, %s335
      %s337 = sphi 0, %s335
      %s338 = sphi 0, %s337
      %s352 = sphi 0, %s338
      %s358 = sphi 0, %s360
      %s361 = sphi 0, %s358
      %s362 = sphi 0, %s361
      %s378 = sphi 0, %s362
    $region4: #{nps_decoder_forward.1} parent=1 // loop_header_branch
      %31 = sbr.rel (%p29) target = $region8
    $region5: #{nps_decoder_forward.1} parent=1 // loop_body
      %s33 = ssub.s32 %s28, 1
      %s34 = ssub.s32 %s28, 2
      %s35 = sadd.s32 %s28, 1
      %s36 = ssub.s32 %s28, %s35
      %p37 = scmp.eq.s32.totalorder %s36, 0
      %s39 = sadd.s32 %s38, 1
      %s40 = scalar_select %p37, %s38, %s39
      %p43 = pneg %p37
      %p44 = scmp.eq.s32.totalorder %s28, 1
      %p45 = por %p43, %p44
      %p46 = scmp.ne.s32.totalorder %s38, %s41
      %p47 = scmp.eq.s32.totalorder %s28, 0
      %p48 = por %p46, %p47
      %p49 = scmp.ne.s32.totalorder %s38, %s41
      %p50 = scmp.eq.s32.totalorder %s33, 1
      %p51 = por %p49, %p50
      %p52 = scmp.ne.s32.totalorder %s41, %s42
      %p53 = scmp.eq.s32.totalorder %s33, 0
      %p54 = por %p52, %p53
      %p55 = scmp.ne.s32.totalorder %s41, %s42
      %p56 = scmp.eq.s32.totalorder %s34, 1
      %p57 = por %p55, %p56
      %p59 = scmp.ne.s32.totalorder %s42, %s58
      %p60 = scmp.eq.s32.totalorder %s34, 0
      %p61 = por %p59, %p60
      %s63 = sadd.s32 %s62, 1
      %p66 = scmp.eq.s32.totalorder %s28, 1
      %p67 = scmp.ne.s32.totalorder %s62, %s64
      %p68 = scmp.eq.s32.totalorder %s28, 0
      %p69 = por %p67, %p68
      %p70 = scmp.ne.s32.totalorder %s62, %s64
      %p71 = scmp.eq.s32.totalorder %s33, 1
      %p72 = por %p70, %p71
      %p73 = scmp.ne.s32.totalorder %s64, %s65
      %p74 = scmp.eq.s32.totalorder %s33, 0
      %p75 = por %p73, %p74
      %p76 = scmp.ne.s32.totalorder %s64, %s65
      %p77 = scmp.eq.s32.totalorder %s34, 1
      %p78 = por %p76, %p77
      %p80 = scmp.ne.s32.totalorder %s65, %s79
      %p81 = scmp.eq.s32.totalorder %s34, 0
      %p82 = por %p80, %p81
      %s84 = sadd.s32 %s83, 1
      %p87 = scmp.eq.s32.totalorder %s28, 1
      %p88 = scmp.ne.s32.totalorder %s83, %s85
      %p89 = scmp.eq.s32.totalorder %s28, 0
      %p90 = por %p88, %p89
      %p91 = scmp.ne.s32.totalorder %s83, %s85
      %p92 = scmp.eq.s32.totalorder %s33, 1
      %p93 = por %p91, %p92
      %p94 = scmp.ne.s32.totalorder %s85, %s86
      %p95 = scmp.eq.s32.totalorder %s33, 0
      %p96 = por %p94, %p95
      %p97 = scmp.ne.s32.totalorder %s85, %s86
      %p98 = scmp.eq.s32.totalorder %s34, 1
      %p99 = por %p97, %p98
      %p101 = scmp.ne.s32.totalorder %s86, %s100
      %p102 = scmp.eq.s32.totalorder %s34, 0
      %p103 = por %p101, %p102
      %s105 = sadd.s32 %s104, 1
      %p108 = scmp.eq.s32.totalorder %s28, 1
      %p109 = scmp.ne.s32.totalorder %s104, %s106
      %p110 = scmp.eq.s32.totalorder %s28, 0
      %p111 = por %p109, %p110
      %p112 = scmp.ne.s32.totalorder %s104, %s106
      %p113 = scmp.eq.s32.totalorder %s33, 1
      %p114 = por %p112, %p113
      %p115 = scmp.ne.s32.totalorder %s106, %s107
      %p116 = scmp.eq.s32.totalorder %s33, 0
      %p117 = por %p115, %p116
      %p118 = scmp.ne.s32.totalorder %s106, %s107
      %p119 = scmp.eq.s32.totalorder %s34, 1
      %p120 = por %p118, %p119
      %p122 = scmp.ne.s32.totalorder %s107, %s121
      %p123 = scmp.eq.s32.totalorder %s34, 0
      %p124 = por %p122, %p123
      %s126 = sadd.s32 %s125, 1
      %p129 = scmp.eq.s32.totalorder %s28, 1
      %p130 = scmp.ne.s32.totalorder %s125, %s127
      %p131 = scmp.eq.s32.totalorder %s28, 0
      %p132 = por %p130, %p131
      %p133 = scmp.ne.s32.totalorder %s125, %s127
      %p134 = scmp.eq.s32.totalorder %s33, 1
      %p135 = por %p133, %p134
      %p136 = scmp.ne.s32.totalorder %s127, %s128
      %p137 = scmp.eq.s32.totalorder %s33, 0
      %p138 = por %p136, %p137
      %p139 = scmp.ne.s32.totalorder %s127, %s128
      %p140 = scmp.eq.s32.totalorder %s34, 1
      %p141 = por %p139, %p140
      %p143 = scmp.ne.s32.totalorder %s128, %s142
      %p144 = scmp.eq.s32.totalorder %s34, 0
      %p145 = por %p143, %p144
      %s147 = sadd.s32 %s146, 1
      %p150 = scmp.eq.s32.totalorder %s28, 1
      %p151 = scmp.ne.s32.totalorder %s146, %s148
      %p152 = scmp.eq.s32.totalorder %s28, 0
      %p153 = por %p151, %p152
      %p154 = scmp.ne.s32.totalorder %s146, %s148
      %p155 = scmp.eq.s32.totalorder %s33, 1
      %p156 = por %p154, %p155
      %p157 = scmp.ne.s32.totalorder %s148, %s149
      %p158 = scmp.eq.s32.totalorder %s33, 0
      %p159 = por %p157, %p158
      %p160 = scmp.ne.s32.totalorder %s148, %s149
      %p161 = scmp.eq.s32.totalorder %s34, 1
      %p162 = por %p160, %p161
      %p164 = scmp.ne.s32.totalorder %s149, %s163
      %p165 = scmp.eq.s32.totalorder %s34, 0
      %p166 = por %p164, %p165
      %s168 = sadd.s32 %s167, 1
      %p171 = scmp.eq.s32.totalorder %s28, 1
      %p172 = scmp.ne.s32.totalorder %s167, %s169
      %p173 = scmp.eq.s32.totalorder %s28, 0
      %p174 = por %p172, %p173
      %p175 = scmp.ne.s32.totalorder %s167, %s169
      %p176 = scmp.eq.s32.totalorder %s33, 1
      %p177 = por %p175, %p176
      %p178 = scmp.ne.s32.totalorder %s169, %s170
      %p179 = scmp.eq.s32.totalorder %s33, 0
      %p180 = por %p178, %p179
      %p181 = scmp.ne.s32.totalorder %s169, %s170
      %p182 = scmp.eq.s32.totalorder %s34, 1
      %p183 = por %p181, %p182
      %p185 = scmp.ne.s32.totalorder %s170, %s184
      %p186 = scmp.eq.s32.totalorder %s34, 0
      %p187 = por %p185, %p186
      %s189 = sadd.s32 %s188, 1
      %p192 = scmp.eq.s32.totalorder %s28, 1
      %p193 = scmp.ne.s32.totalorder %s188, %s190
      %p194 = scmp.eq.s32.totalorder %s28, 0
      %p195 = por %p193, %p194
      %p196 = scmp.ne.s32.totalorder %s188, %s190
      %p197 = scmp.eq.s32.totalorder %s33, 1
      %p198 = por %p196, %p197
      %p199 = scmp.ne.s32.totalorder %s190, %s191
      %p200 = scmp.eq.s32.totalorder %s33, 0
      %p201 = por %p199, %p200
      %p202 = scmp.ne.s32.totalorder %s190, %s191
      %p203 = scmp.eq.s32.totalorder %s34, 1
      %p204 = por %p202, %p203
      %p206 = scmp.ne.s32.totalorder %s191, %s205
      %p207 = scmp.eq.s32.totalorder %s34, 0
      %p208 = por %p206, %p207
      %s210 = sadd.s32 %s209, 1
      %p213 = scmp.eq.s32.totalorder %s28, 1
      %p214 = scmp.ne.s32.totalorder %s209, %s211
      %p215 = scmp.eq.s32.totalorder %s28, 0
      %p216 = por %p214, %p215
      %p217 = scmp.ne.s32.totalorder %s209, %s211
      %p218 = scmp.eq.s32.totalorder %s33, 1
      %p219 = por %p217, %p218
      %p220 = scmp.ne.s32.totalorder %s211, %s212
      %p221 = scmp.eq.s32.totalorder %s33, 0
      %p222 = por %p220, %p221
      %p223 = scmp.ne.s32.totalorder %s211, %s212
      %p224 = scmp.eq.s32.totalorder %s34, 1
      %p225 = por %p223, %p224
      %p227 = scmp.ne.s32.totalorder %s212, %s226
      %p228 = scmp.eq.s32.totalorder %s34, 0
      %p229 = por %p227, %p228
      %s231 = sadd.s32 %s230, 1
      %p234 = scmp.eq.s32.totalorder %s28, 1
      %p235 = scmp.ne.s32.totalorder %s230, %s232
      %p236 = scmp.eq.s32.totalorder %s28, 0
      %p237 = por %p235, %p236
      %p238 = scmp.ne.s32.totalorder %s230, %s232
      %p239 = scmp.eq.s32.totalorder %s33, 1
      %p240 = por %p238, %p239
      %p241 = scmp.ne.s32.totalorder %s232, %s233
      %p242 = scmp.eq.s32.totalorder %s33, 0
      %p243 = por %p241, %p242
      %p244 = scmp.ne.s32.totalorder %s232, %s233
      %p245 = scmp.eq.s32.totalorder %s34, 1
      %p246 = por %p244, %p245
      %p248 = scmp.ne.s32.totalorder %s233, %s247
      %p249 = scmp.eq.s32.totalorder %s34, 0
      %p250 = por %p248, %p249
      %s252 = sadd.s32 %s251, 1
      %p255 = scmp.eq.s32.totalorder %s28, 1
      %p256 = scmp.ne.s32.totalorder %s251, %s253
      %p257 = scmp.eq.s32.totalorder %s28, 0
      %p258 = por %p256, %p257
      %p259 = scmp.ne.s32.totalorder %s251, %s253
      %p260 = scmp.eq.s32.totalorder %s33, 1
      %p261 = por %p259, %p260
      %p262 = scmp.ne.s32.totalorder %s253, %s254
      %p263 = scmp.eq.s32.totalorder %s33, 0
      %p264 = por %p262, %p263
      %p265 = scmp.ne.s32.totalorder %s253, %s254
      %p266 = scmp.eq.s32.totalorder %s34, 1
      %p267 = por %p265, %p266
      %p269 = scmp.ne.s32.totalorder %s254, %s268
      %p270 = scmp.eq.s32.totalorder %s34, 0
      %p271 = por %p269, %p270
      %s273 = sadd.s32 %s272, 1
      %p276 = scmp.eq.s32.totalorder %s28, 1
      %p277 = scmp.ne.s32.totalorder %s272, %s274
      %p278 = scmp.eq.s32.totalorder %s28, 0
      %p279 = por %p277, %p278
      %p280 = scmp.ne.s32.totalorder %s272, %s274
      %p281 = scmp.eq.s32.totalorder %s33, 1
      %p282 = por %p280, %p281
      %p283 = scmp.ne.s32.totalorder %s274, %s275
      %p284 = scmp.eq.s32.totalorder %s33, 0
      %p285 = por %p283, %p284
      %p286 = scmp.ne.s32.totalorder %s274, %s275
      %p287 = scmp.eq.s32.totalorder %s34, 1
      %p288 = por %p286, %p287
      %p290 = scmp.ne.s32.totalorder %s275, %s289
      %p291 = scmp.eq.s32.totalorder %s34, 0
      %p292 = por %p290, %p291
      %s294 = sadd.s32 %s293, 1
      %p297 = scmp.eq.s32.totalorder %s28, 1
      %p298 = scmp.ne.s32.totalorder %s293, %s295
      %p299 = scmp.eq.s32.totalorder %s28, 0
      %p300 = por %p298, %p299
      %p301 = scmp.ne.s32.totalorder %s293, %s295
      %p302 = scmp.eq.s32.totalorder %s33, 1
      %p303 = por %p301, %p302
      %p304 = scmp.ne.s32.totalorder %s295, %s296
      %p305 = scmp.eq.s32.totalorder %s33, 0
      %p306 = por %p304, %p305
      %p307 = scmp.ne.s32.totalorder %s295, %s296
      %p308 = scmp.eq.s32.totalorder %s34, 1
      %p309 = por %p307, %p308
      %p311 = scmp.ne.s32.totalorder %s296, %s310
      %p312 = scmp.eq.s32.totalorder %s34, 0
      %p313 = por %p311, %p312
      %s315 = sadd.s32 %s314, 1
      %p318 = scmp.eq.s32.totalorder %s28, 1
      %p319 = scmp.ne.s32.totalorder %s314, %s316
      %p320 = scmp.eq.s32.totalorder %s28, 0
      %p321 = por %p319, %p320
      %p322 = scmp.ne.s32.totalorder %s314, %s316
      %p323 = scmp.eq.s32.totalorder %s33, 1
      %p324 = por %p322, %p323
      %p325 = scmp.ne.s32.totalorder %s316, %s317
      %p326 = scmp.eq.s32.totalorder %s33, 0
      %p327 = por %p325, %p326
      %p328 = scmp.ne.s32.totalorder %s316, %s317
      %p329 = scmp.eq.s32.totalorder %s34, 1
      %p330 = por %p328, %p329
      %p332 = scmp.ne.s32.totalorder %s317, %s331
      %p333 = scmp.eq.s32.totalorder %s34, 0
      %p334 = por %p332, %p333
      %s336 = sadd.s32 %s335, 1
      %p339 = scmp.eq.s32.totalorder %s28, 1
      %p340 = scmp.ne.s32.totalorder %s335, %s337
      %p341 = scmp.eq.s32.totalorder %s28, 0
      %p342 = por %p340, %p341
      %p343 = scmp.ne.s32.totalorder %s335, %s337
      %p344 = scmp.eq.s32.totalorder %s33, 1
      %p345 = por %p343, %p344
      %p346 = scmp.ne.s32.totalorder %s337, %s338
      %p347 = scmp.eq.s32.totalorder %s33, 0
      %p348 = por %p346, %p347
      %p349 = scmp.ne.s32.totalorder %s337, %s338
      %p350 = scmp.eq.s32.totalorder %s34, 1
      %p351 = por %p349, %p350
      %p353 = scmp.ne.s32.totalorder %s338, %s352
      %p354 = scmp.eq.s32.totalorder %s34, 0
      %p355 = por %p353, %p354
      %s356 = ssub.s32 %s28, %s35
      %p357 = scmp.eq.s32.totalorder %s356, 0
      %s359 = sadd.s32 %s358, 1
      %s360 = scalar_select %p357, %s358, %s359
      %p363 = pneg %p357
      %p364 = scmp.eq.s32.totalorder %s28, 1
      %p365 = por %p363, %p364
      %p366 = scmp.ne.s32.totalorder %s358, %s361
      %p367 = scmp.eq.s32.totalorder %s28, 0
      %p368 = por %p366, %p367
      %p369 = scmp.ne.s32.totalorder %s358, %s361
      %p370 = scmp.eq.s32.totalorder %s33, 1
      %p371 = por %p369, %p370
      %p372 = scmp.ne.s32.totalorder %s361, %s362
      %p373 = scmp.eq.s32.totalorder %s33, 0
      %p374 = por %p372, %p373
      %p375 = scmp.ne.s32.totalorder %s361, %s362
      %p376 = scmp.eq.s32.totalorder %s34, 1
      %p377 = por %p375, %p376
      %p379 = scmp.ne.s32.totalorder %s362, %s378
      %p380 = scmp.eq.s32.totalorder %s34, 0
      %p381 = por %p379, %p380
      %p382 = scmp.le.s32.totalorder 1, %s28
      %p383 = scmp.lt.s32.totalorder %s28, 3
      %p384 = pnand %p382, %p383
      %p385 = pneg %p384
      // Predicated region
      $region9: #{nps_decoder_forward.1} parent=5 // pred_check
        _
      $region10: #{nps_decoder_forward.1} parent=5 // pred_check_branch
        %387 = sbr.rel (%p384) target = $region12
      $region11: #{nps_decoder_forward.1} parent=5 // pred_region
        %s388 = ssub.s32 %s28, 1
        // Predicated region
        $region13: #{nps_decoder_forward.1} parent=11 // pred_check
          %p389 = pneg %p75
        $region14: #{nps_decoder_forward.1} parent=11 // pred_check_branch
          %391 = sbr.rel (%p389) target = $region16
        $region15: #{nps_decoder_forward.1} parent=11 // pred_region
          %s393 = ssub.s32 1024, 1024
          %394 = vsyncadd [#allocation3], %s393
          %s395 = sshll.u32 [#allocation2], 4
          %s396 = int_to_ptr.vmem [resolvable:$true] %s395
          %401 = dma.hbm_to_vmem [thread:$0]  %s1, 1024, %s396, [#allocation3], 512, 512, 32
        $region16: #{nps_decoder_forward.1} parent=11 // pred_fallthru
          _
        // Predicated region
        $region17: #{nps_decoder_forward.1} parent=11 // pred_check
          %p402 = pneg %p96
        $region18: #{nps_decoder_forward.1} parent=11 // pred_check_branch
          %404 = sbr.rel (%p402) target = $region20
        $region19: #{nps_decoder_forward.1} parent=11 // pred_region
          %s406 = ssub.s32 64, 64
          %407 = vsyncadd [#allocation5], %s406
          %s409 = sshll.u32 [#allocation4], 4
          %s410 = int_to_ptr.vmem [resolvable:$true] %s409
          %412 = dma.hbm_to_vmem [thread:$0]  %s2, 64, %s410, [#allocation5]
        $region20: #{nps_decoder_forward.1} parent=11 // pred_fallthru
          _
        // Predicated region
        $region21: #{nps_decoder_forward.1} parent=11 // pred_check
          %p413 = pneg %p117
        $region22: #{nps_decoder_forward.1} parent=11 // pred_check_branch
          %415 = sbr.rel (%p413) target = $region24
        $region23: #{nps_decoder_forward.1} parent=11 // pred_region
          _
        $region24: #{nps_decoder_forward.1} parent=11 // pred_fallthru
          _
        // Predicated region
        $region25: #{nps_decoder_forward.1} parent=11 // pred_check
          %p416 = pneg %p138
        $region26: #{nps_decoder_forward.1} parent=11 // pred_check_branch
          %418 = sbr.rel (%p416) target = $region28
        $region27: #{nps_decoder_forward.1} parent=11 // pred_region
          %s420 = ssub.s32 64, 64
          %421 = vsyncadd [#allocation5], %s420
          %s423 = sshll.u32 [#allocation6], 4
          %s424 = int_to_ptr.vmem [resolvable:$true] %s423
          %426 = dma.hbm_to_vmem [thread:$0]  %s4, 64, %s424, [#allocation5]
        $region28: #{nps_decoder_forward.1} parent=11 // pred_fallthru
          _
        // Predicated region
        $region29: #{nps_decoder_forward.1} parent=11 // pred_check
          %p427 = pneg %p159
        $region30: #{nps_decoder_forward.1} parent=11 // pred_check_branch
          %429 = sbr.rel (%p427) target = $region32
        $region31: #{nps_decoder_forward.1} parent=11 // pred_region
          %s431 = ssub.s32 12800, 12800
          %432 = vsyncadd [#allocation8], %s431
          %s433 = sshll.u32 [#allocation7], 4
          %s434 = int_to_ptr.vmem [resolvable:$true] %s433
          %439 = dma.hbm_to_vmem [thread:$0]  %s5, 12800, %s434, [#allocation8], 256, 256, 16
        $region32: #{nps_decoder_forward.1} parent=11 // pred_fallthru
          _
        // Predicated region
        $region33: #{nps_decoder_forward.1} parent=11 // pred_check
          %p440 = pneg %p180
        $region34: #{nps_decoder_forward.1} parent=11 // pred_check_branch
          %442 = sbr.rel (%p440) target = $region36
        $region35: #{nps_decoder_forward.1} parent=11 // pred_region
          %s444 = ssub.s32 64, 64
          %445 = vsyncadd [#allocation8], %s444
          %s447 = sshll.u32 [#allocation9], 4
          %s448 = int_to_ptr.vmem [resolvable:$true] %s447
          %450 = dma.hbm_to_vmem [thread:$0]  %s6, 64, %s448, [#allocation8]
        $region36: #{nps_decoder_forward.1} parent=11 // pred_fallthru
          _
        // Predicated region
        $region37: #{nps_decoder_forward.1} parent=11 // pred_check
          %p451 = pneg %p201
        $region38: #{nps_decoder_forward.1} parent=11 // pred_check_branch
          %453 = sbr.rel (%p451) target = $region40
        $region39: #{nps_decoder_forward.1} parent=11 // pred_region
          %s455 = ssub.s32 12800, 12800
          %456 = vsyncadd [#allocation11], %s455
          %s457 = sshll.u32 [#allocation10], 4
          %s458 = int_to_ptr.vmem [resolvable:$true] %s457
          %463 = dma.hbm_to_vmem [thread:$0]  %s7, 12800, %s458, [#allocation11], 256, 256, 16
        $region40: #{nps_decoder_forward.1} parent=11 // pred_fallthru
          _
        // Predicated region
        $region41: #{nps_decoder_forward.1} parent=11 // pred_check
          %p464 = pneg %p222
        $region42: #{nps_decoder_forward.1} parent=11 // pred_check_branch
          %466 = sbr.rel (%p464) target = $region44
        $region43: #{nps_decoder_forward.1} parent=11 // pred_region
          %s468 = ssub.s32 64, 64
          %469 = vsyncadd [#allocation11], %s468
          %s471 = sshll.u32 [#allocation12], 4
          %s472 = int_to_ptr.vmem [resolvable:$true] %s471
          %474 = dma.hbm_to_vmem [thread:$0]  %s8, 64, %s472, [#allocation11]
        $region44: #{nps_decoder_forward.1} parent=11 // pred_fallthru
          _
        // Predicated region
        $region45: #{nps_decoder_forward.1} parent=11 // pred_check
          %p475 = pneg %p243
        $region46: #{nps_decoder_forward.1} parent=11 // pred_check_branch
          %477 = sbr.rel (%p475) target = $region48
        $region47: #{nps_decoder_forward.1} parent=11 // pred_region
          %s479 = ssub.s32 12800, 12800
          %480 = vsyncadd [#allocation14], %s479
          %s481 = sshll.u32 [#allocation13], 4
          %s482 = int_to_ptr.vmem [resolvable:$true] %s481
          %487 = dma.hbm_to_vmem [thread:$0]  %s9, 12800, %s482, [#allocation14], 256, 256, 16
        $region48: #{nps_decoder_forward.1} parent=11 // pred_fallthru
          _
        // Predicated region
        $region49: #{nps_decoder_forward.1} parent=11 // pred_check
          %p488 = pneg %p264
        $region50: #{nps_decoder_forward.1} parent=11 // pred_check_branch
          %490 = sbr.rel (%p488) target = $region52
        $region51: #{nps_decoder_forward.1} parent=11 // pred_region
          %s492 = ssub.s32 64, 64
          %493 = vsyncadd [#allocation14], %s492
          %s495 = sshll.u32 [#allocation15], 4
          %s496 = int_to_ptr.vmem [resolvable:$true] %s495
          %498 = dma.hbm_to_vmem [thread:$0]  %s10, 64, %s496, [#allocation14]
        $region52: #{nps_decoder_forward.1} parent=11 // pred_fallthru
          _
        // Predicated region
        $region53: #{nps_decoder_forward.1} parent=11 // pred_check
          %p499 = pneg %p285
        $region54: #{nps_decoder_forward.1} parent=11 // pred_check_branch
          %501 = sbr.rel (%p499) target = $region56
        $region55: #{nps_decoder_forward.1} parent=11 // pred_region
          %s503 = ssub.s32 12800, 12800
          %504 = vsyncadd [#allocation17], %s503
          %s505 = sshll.u32 [#allocation16], 4
          %s506 = int_to_ptr.vmem [resolvable:$true] %s505
          %511 = dma.hbm_to_vmem [thread:$0]  %s11, 12800, %s506, [#allocation17], 256, 256, 16
        $region56: #{nps_decoder_forward.1} parent=11 // pred_fallthru
          _
        // Predicated region
        $region57: #{nps_decoder_forward.1} parent=11 // pred_check
          %p512 = pneg %p306
        $region58: #{nps_decoder_forward.1} parent=11 // pred_check_branch
          %514 = sbr.rel (%p512) target = $region60
        $region59: #{nps_decoder_forward.1} parent=11 // pred_region
          %s516 = ssub.s32 64, 64
          %517 = vsyncadd [#allocation17], %s516
          %s519 = sshll.u32 [#allocation18], 4
          %s520 = int_to_ptr.vmem [resolvable:$true] %s519
          %522 = dma.hbm_to_vmem [thread:$0]  %s12, 64, %s520, [#allocation17]
        $region60: #{nps_decoder_forward.1} parent=11 // pred_fallthru
          _
        // Predicated region
        $region61: #{nps_decoder_forward.1} parent=11 // pred_check
          %p523 = pneg %p327
        $region62: #{nps_decoder_forward.1} parent=11 // pred_check_branch
          %525 = sbr.rel (%p523) target = $region64
        $region63: #{nps_decoder_forward.1} parent=11 // pred_region
          %s527 = ssub.s32 3200, 3200
          %528 = vsyncadd [#allocation20], %s527
          %s529 = sshll.u32 [#allocation19], 4
          %s530 = int_to_ptr.vmem [resolvable:$true] %s529
          %535 = dma.hbm_to_vmem [thread:$0]  %s13, 3200, %s530, [#allocation20], 64, 64, 4
        $region64: #{nps_decoder_forward.1} parent=11 // pred_fallthru
          _
        // Predicated region
        $region65: #{nps_decoder_forward.1} parent=11 // pred_check
          %p536 = pneg %p348
        $region66: #{nps_decoder_forward.1} parent=11 // pred_check_branch
          %538 = sbr.rel (%p536) target = $region68
        $region67: #{nps_decoder_forward.1} parent=11 // pred_region
          %s540 = ssub.s32 16, 16
          %541 = vsyncadd [#allocation20], %s540
          %s543 = sshll.u32 [#allocation21], 4
          %s544 = int_to_ptr.vmem [resolvable:$true] %s543
          %546 = dma.hbm_to_vmem [thread:$0]  %s14, 16, %s544, [#allocation20]
        $region68: #{nps_decoder_forward.1} parent=11 // pred_fallthru
          _
      $region12: #{nps_decoder_forward.1} parent=5 // pred_fallthru
        _
      %p547 = scmp.lt.s32.totalorder %s28, 2
      // Predicated region
      $region69: #{nps_decoder_forward.1} parent=5 // pred_check
        %p548 = pneg %p547
      $region70: #{nps_decoder_forward.1} parent=5 // pred_check_branch
        %550 = sbr.rel (%p548) target = $region72
      $region71: #{nps_decoder_forward.1} parent=5 // pred_region
        // Predicated region
        $region73: #{nps_decoder_forward.1} parent=71 // pred_check
          %p551 = pneg %p48
        $region74: #{nps_decoder_forward.1} parent=71 // pred_check_branch
          %553 = sbr.rel (%p551) target = $region76
        $region75: #{nps_decoder_forward.1} parent=71 // pred_region
          %s554 = smul.u32 13, %s28
          %p555 = scmp.lt.s32.totalorder %s554, 25
          %s556 = scalar_select %p555, %s554, 25
          %s557 = smul.addr %s556, 8
          %s558 = scalar_lea.vmem %s0, %s557
          %s559 = smul.u32 13, %s28
        $region76: #{nps_decoder_forward.1} parent=71 // pred_fallthru
          _
      $region72: #{nps_decoder_forward.1} parent=5 // pred_fallthru
        _
      %p560 = scmp.le.s32.totalorder 1, %s28
      %p561 = scmp.lt.s32.totalorder %s28, 3
      %p562 = pnand %p560, %p561
      %p563 = pneg %p562
      // Predicated region
      $region77: #{nps_decoder_forward.1} parent=5 // pred_check
        _
      $region78: #{nps_decoder_forward.1} parent=5 // pred_check_branch
        %565 = sbr.rel (%p562) target = $region80
      $region79: #{nps_decoder_forward.1} parent=5 // pred_region
        %s566 = ssub.s32 %s28, 1
        // Predicated region
        $region81: #{nps_decoder_forward.1} parent=79 // pred_check
          %p567 = pneg %p75
        $region82: #{nps_decoder_forward.1} parent=79 // pred_check_branch
          %569 = sbr.rel (%p567) target = $region84
        $region83: #{nps_decoder_forward.1} parent=79 // pred_region
          %570 = dma.done [#allocation3], 1024
        $region84: #{nps_decoder_forward.1} parent=79 // pred_fallthru
          _
        // Predicated region
        $region85: #{nps_decoder_forward.1} parent=79 // pred_check
          %p571 = pneg %p96
        $region86: #{nps_decoder_forward.1} parent=79 // pred_check_branch
          %573 = sbr.rel (%p571) target = $region88
        $region87: #{nps_decoder_forward.1} parent=79 // pred_region
          %574 = dma.done [#allocation5], 64
        $region88: #{nps_decoder_forward.1} parent=79 // pred_fallthru
          _
        // Predicated region
        $region89: #{nps_decoder_forward.1} parent=79 // pred_check
          %p575 = pneg %p138
        $region90: #{nps_decoder_forward.1} parent=79 // pred_check_branch
          %577 = sbr.rel (%p575) target = $region92
        $region91: #{nps_decoder_forward.1} parent=79 // pred_region
          %578 = dma.done [#allocation5], 64
        $region92: #{nps_decoder_forward.1} parent=79 // pred_fallthru
          _
        // Predicated region
        $region93: #{nps_decoder_forward.1} parent=79 // pred_check
          %p579 = pneg %p159
        $region94: #{nps_decoder_forward.1} parent=79 // pred_check_branch
          %581 = sbr.rel (%p579) target = $region96
        $region95: #{nps_decoder_forward.1} parent=79 // pred_region
          %582 = dma.done [#allocation8], 12800
        $region96: #{nps_decoder_forward.1} parent=79 // pred_fallthru
          _
        // Predicated region
        $region97: #{nps_decoder_forward.1} parent=79 // pred_check
          %p583 = pneg %p180
        $region98: #{nps_decoder_forward.1} parent=79 // pred_check_branch
          %585 = sbr.rel (%p583) target = $region100
        $region99: #{nps_decoder_forward.1} parent=79 // pred_region
          %586 = dma.done [#allocation8], 64
        $region100: #{nps_decoder_forward.1} parent=79 // pred_fallthru
          _
        // Predicated region
        $region101: #{nps_decoder_forward.1} parent=79 // pred_check
          %p587 = pneg %p201
        $region102: #{nps_decoder_forward.1} parent=79 // pred_check_branch
          %589 = sbr.rel (%p587) target = $region104
        $region103: #{nps_decoder_forward.1} parent=79 // pred_region
          %590 = dma.done [#allocation11], 12800
        $region104: #{nps_decoder_forward.1} parent=79 // pred_fallthru
          _
        // Predicated region
        $region105: #{nps_decoder_forward.1} parent=79 // pred_check
          %p591 = pneg %p222
        $region106: #{nps_decoder_forward.1} parent=79 // pred_check_branch
          %593 = sbr.rel (%p591) target = $region108
        $region107: #{nps_decoder_forward.1} parent=79 // pred_region
          %594 = dma.done [#allocation11], 64
        $region108: #{nps_decoder_forward.1} parent=79 // pred_fallthru
          _
        // Predicated region
        $region109: #{nps_decoder_forward.1} parent=79 // pred_check
          %p595 = pneg %p243
        $region110: #{nps_decoder_forward.1} parent=79 // pred_check_branch
          %597 = sbr.rel (%p595) target = $region112
        $region111: #{nps_decoder_forward.1} parent=79 // pred_region
          %598 = dma.done [#allocation14], 12800
        $region112: #{nps_decoder_forward.1} parent=79 // pred_fallthru
          _
        // Predicated region
        $region113: #{nps_decoder_forward.1} parent=79 // pred_check
          %p599 = pneg %p264
        $region114: #{nps_decoder_forward.1} parent=79 // pred_check_branch
          %601 = sbr.rel (%p599) target = $region116
        $region115: #{nps_decoder_forward.1} parent=79 // pred_region
          %602 = dma.done [#allocation14], 64
        $region116: #{nps_decoder_forward.1} parent=79 // pred_fallthru
          _
        // Predicated region
        $region117: #{nps_decoder_forward.1} parent=79 // pred_check
          %p603 = pneg %p285
        $region118: #{nps_decoder_forward.1} parent=79 // pred_check_branch
          %605 = sbr.rel (%p603) target = $region120
        $region119: #{nps_decoder_forward.1} parent=79 // pred_region
          %606 = dma.done [#allocation17], 12800
        $region120: #{nps_decoder_forward.1} parent=79 // pred_fallthru
          _
        // Predicated region
        $region121: #{nps_decoder_forward.1} parent=79 // pred_check
          %p607 = pneg %p306
        $region122: #{nps_decoder_forward.1} parent=79 // pred_check_branch
          %609 = sbr.rel (%p607) target = $region124
        $region123: #{nps_decoder_forward.1} parent=79 // pred_region
          %610 = dma.done [#allocation17], 64
        $region124: #{nps_decoder_forward.1} parent=79 // pred_fallthru
          _
        // Predicated region
        $region125: #{nps_decoder_forward.1} parent=79 // pred_check
          %p611 = pneg %p327
        $region126: #{nps_decoder_forward.1} parent=79 // pred_check_branch
          %613 = sbr.rel (%p611) target = $region128
        $region127: #{nps_decoder_forward.1} parent=79 // pred_region
          %614 = dma.done [#allocation20], 3200
        $region128: #{nps_decoder_forward.1} parent=79 // pred_fallthru
          _
        // Predicated region
        $region129: #{nps_decoder_forward.1} parent=79 // pred_check
          %p615 = pneg %p348
        $region130: #{nps_decoder_forward.1} parent=79 // pred_check_branch
          %617 = sbr.rel (%p615) target = $region132
        $region131: #{nps_decoder_forward.1} parent=79 // pred_region
          %618 = dma.done [#allocation20], 16
        $region132: #{nps_decoder_forward.1} parent=79 // pred_fallthru
          _
        %s619 = smul.u32 13, %s33
        %p620 = scmp.lt.s32.totalorder %s619, 25
        %s621 = scalar_select %p620, %s619, 25
        %s622 = smul.addr %s621, 8
        %s623 = scalar_lea.vmem %s0, %s622
        %p624 = pneg %p54
        %p625 = pneg %p51
        %p626 = pneg %p75
        %p627 = pneg %p72
        %p628 = pneg %p96
        %p629 = pneg %p93
        %p630 = pneg %p117
        %p631 = pneg %p114
        %p632 = pneg %p138
        %p633 = pneg %p135
        %p634 = pneg %p159
        %p635 = pneg %p156
        %p636 = pneg %p180
        %p637 = pneg %p177
        %p638 = pneg %p201
        %p639 = pneg %p198
        %p640 = pneg %p222
        %p641 = pneg %p219
        %p642 = pneg %p243
        %p643 = pneg %p240
        %p644 = pneg %p264
        %p645 = pneg %p261
        %p646 = pneg %p285
        %p647 = pneg %p282
        %p648 = pneg %p306
        %p649 = pneg %p303
        %p650 = pneg %p327
        %p651 = pneg %p324
        %p652 = pneg %p348
        %p653 = pneg %p345
        %p654 = pneg %p374
        %p655 = pneg %p371
        %s656 = smul.u32 13, %s33
        %p657 = scmp.lt.s32.totalorder %s656, 25
        %s658 = scalar_select %p657, %s656, 25
        %s659 = smul.addr %s658, 8
        %s660 = scalar_lea.vmem %s15, %s659
        %s661 = smul.u32 13, %s33
        %p662 = scmp.lt.s32.totalorder %s661, 25
        %s663 = scalar_select %p662, %s661, 25
        %s664 = smul.addr %s663, 8
        %s665 = scalar_lea.vmem %s0, %s664
        %s666 = smul.u32 13, %s33
        %s667 = smul.u32 13, %s33
        %p668 = scmp.lt.s32.totalorder %s667, 25
        %s669 = scalar_select %p668, %s667, 25
        %s670 = smul.addr %s669, 8
        %s671 = scalar_lea.vmem %s15, %s670
        %s672 = smul.u32 13, %s33
        %v674 = vld [vmem:[%s665] sm:$0xff]
        %v675 = vld [vmem:[%s665 + $0x8] sm:$0xff]
        %v676 = vld [vmem:[%s665 + $0x10] sm:$0xff]
        %v677 = vld [vmem:[%s665 + $0x18] sm:$0xff]
        %v678 = vld [vmem:[%s665 + $0x20] sm:$0xff]
        %v679 = vld [vmem:[%s665 + $0x28] sm:$0xff]
        %v680 = vld [vmem:[%s665 + $0x30] sm:$0xff]
        %v681 = vld [vmem:[%s665 + $0x38] sm:$0xff]
        %v682 = vld [vmem:[%s665 + $0x40] sm:$0xff]
        %v683 = vld [vmem:[%s665 + $0x48] sm:$0xff]
        %v684 = vld [vmem:[%s665 + $0x50] sm:$0xff]
        %v685 = vld [vmem:[%s665 + $0x58] sm:$0xff]
        %v686 = vld [vmem:[%s665 + $0x60] sm:$0xff]
        %v687 = vld [vmem:[#allocation2] sm:$0xff]
        %v688 = vld [vmem:[#allocation2 + $0x8] sm:$0xff]
        %v689 = vld [vmem:[#allocation2 + $0x10] sm:$0xff]
        %v690 = vld [vmem:[#allocation2 + $0x18] sm:$0xff]
        %v691 = vld [vmem:[#allocation2 + $0x20] sm:$0x7]
        %v692 = vld [vmem:[#allocation2 + $0x28] sm:$0x7]
        %v693 = vld [vmem:[#allocation2 + $0x30] sm:$0x7]
        %v694 = vld [vmem:[#allocation2 + $0x38] sm:$0x7]
        %v695 = vld [vmem:[#allocation4] sm:$0xf]
        %v697 = vlaneseq
        %v698 = vshrl.u32 %v697, 7
        %v699 = vsub.s32 0, %v698
        %v700 = vrot.slane %v695, %v699
        %v701 = vlaneseq
        %v702 = vshrl.u32 %v701, 7
        %v703 = vsub.s32 1, %v702
        %v704 = vrot.slane %v695, %v703
        %v705 = vlaneseq
        %v706 = vshrl.u32 %v705, 7
        %v707 = vsub.s32 2, %v706
        %v708 = vrot.slane %v695, %v707
        %v709 = vlaneseq
        %v710 = vshrl.u32 %v709, 7
        %v711 = vsub.s32 3, %v710
        %v712 = vrot.slane %v695, %v711
        %vm717 = vcmask 89088
        %v719 = vsel %vm717, %v674, 0
        %v722 = vsel %vm717, %v675, 0
        %v725 = vsel %vm717, %v676, 0
        %v728 = vsel %vm717, %v677, 0
        %v731 = vsel %vm717, %v678, 0
        %v734 = vsel %vm717, %v679, 0
        %v737 = vsel %vm717, %v680, 0
        %v740 = vsel %vm717, %v681, 0
        %v743 = vsel %vm717, %v682, 0
        %v746 = vsel %vm717, %v683, 0
        %v749 = vsel %vm717, %v684, 0
        %v752 = vsel %vm717, %v685, 0
        %v755 = vsel %vm717, %v686, 0
        %vm757 = vcmask 1042432
        %v759 = vsel %vm757, %v691, 0
        %v762 = vsel %vm757, %v692, 0
        %v765 = vsel %vm757, %v693, 0
        %v768 = vsel %vm757, %v694, 0
        %770 = vmatprep.subr.mxu0 %v688
        %771 = vmatpush1.msra.mxu0 %v687
        %772 = vmatprep.subr.mxu0 %v762
        %773 = vmatpush1.msra.mxu0 %v759
        %774 = vmatprep.subr.mxu0 0.0
        %775 = vmatpush1.msra.mxu0 0.0
        %776 = vmatprep.subr.mxu0 0.0
        %777 = vmatpush1.msra.mxu0 0.0
        %778 = vmatprep.subr.mxu0 0.0
        %779 = vmatpush1.msra.mxu0 0.0
        %780 = vmatprep.subr.mxu0 0.0
        %781 = vmatpush1.msra.mxu0 0.0
        %782 = vmatprep.subr.mxu0 0.0
        %783 = vmatpush1.msra.mxu0 0.0
        %784 = vmatprep.subr.mxu0 0.0
        %785 = vmatpush1.msra.mxu0 0.0
        %786 = vmatprep.subr.mxu0 0.0
        %787 = vmatpush1.msra.mxu0 0.0
        %788 = vmatprep.subr.mxu0 0.0
        %789 = vmatpush1.msra.mxu0 0.0
        %790 = vmatprep.subr.mxu0 0.0
        %791 = vmatpush1.msra.mxu0 0.0
        %792 = vmatprep.subr.mxu0 0.0
        %793 = vmatpush1.msra.mxu0 0.0
        %794 = vmatprep.subr.mxu0 0.0
        %795 = vmatpush1.msra.mxu0 0.0
        %796 = vmatprep.subr.mxu0 0.0
        %797 = vmatpush1.msra.mxu0 0.0
        %798 = vmatprep.subr.mxu0 0.0
        %799 = vmatpush1.msra.mxu0 0.0
        %800 = vmatprep.subr.mxu0 0.0
        %801 = vmatpush1.msra.mxu0 0.0
        %802 = vmatprep.subr.mxu0 0.0
        %803 = vmatpush1.msra.mxu0 0.0
        %804 = vmatprep.subr.mxu0 0.0
        %805 = vmatpush1.msra.mxu0 0.0
        %806 = vmatprep.subr.mxu0 0.0
        %807 = vmatpush1.msra.mxu0 0.0
        %808 = vmatprep.subr.mxu0 0.0
        %809 = vmatpush1.msra.mxu0 0.0
        %810 = vmatprep.subr.mxu0 0.0
        %811 = vmatpush1.msra.mxu0 0.0
        %812 = vmatprep.subr.mxu0 0.0
        %813 = vmatpush1.msra.mxu0 0.0
        %814 = vmatprep.subr.mxu0 0.0
        %815 = vmatpush1.msra.mxu0 0.0
        %816 = vmatprep.subr.mxu0 0.0
        %817 = vmatpush1.msra.mxu0 0.0
        %818 = vmatprep.subr.mxu0 0.0
        %819 = vmatpush1.msra.mxu0 0.0
        %820 = vmatprep.subr.mxu0 0.0
        %821 = vmatpush1.msra.mxu0 0.0
        %822 = vmatprep.subr.mxu0 0.0
        %823 = vmatpush1.msra.mxu0 0.0
        %824 = vmatprep.subr.mxu0 0.0
        %825 = vmatpush1.msra.mxu0 0.0
        %826 = vmatprep.subr.mxu0 0.0
        %827 = vmatpush1.msra.mxu0 0.0
        %828 = vmatprep.subr.mxu0 0.0
        %829 = vmatpush1.msra.mxu0 0.0
        %830 = vmatprep.subr.mxu0 0.0
        %831 = vmatpush1.msra.mxu0 0.0
        %832 = vmatprep.subr.mxu0 0.0
        %833 = vmatpush1.msra.mxu0 0.0
        %834 = vmatprep.mubr.f32.mxu0 0.0
        %835 = vmatmul.mubr.f32.gmra.mrb[0].mxu0 %v719
        %v836 = vpop.f32.mrb[0].mxu0
        %v837 = vadd.f32 %v700, %v836
        %v838 = vpop.f32.mrb[0].mxu0
        %v839 = vadd.f32 %v704, %v838
        %840 = vmatprep.mubr.f32.mxu0 0.0
        %841 = vmatmul.mubr.f32.gmra.mrb[0].mxu0 %v722
        %v842 = vpop.f32.mrb[0].mxu0
        %v843 = vadd.f32 %v700, %v842
        %v844 = vpop.f32.mrb[0].mxu0
        %v845 = vadd.f32 %v704, %v844
        %846 = vmatprep.mubr.f32.mxu0 0.0
        %847 = vmatmul.mubr.f32.gmra.mrb[0].mxu0 %v725
        %v848 = vpop.f32.mrb[0].mxu0
        %v849 = vadd.f32 %v700, %v848
        %v850 = vpop.f32.mrb[0].mxu0
        %v851 = vadd.f32 %v704, %v850
        %852 = vmatprep.mubr.f32.mxu0 0.0
        %853 = vmatmul.mubr.f32.gmra.mrb[0].mxu0 %v728
        %v854 = vpop.f32.mrb[0].mxu0
        %v855 = vadd.f32 %v700, %v854
        %v856 = vpop.f32.mrb[0].mxu0
        %v857 = vadd.f32 %v704, %v856
        %858 = vmatprep.mubr.f32.mxu0 0.0
        %859 = vmatmul.mubr.f32.gmra.mrb[0].mxu0 %v731
        %v860 = vpop.f32.mrb[0].mxu0
        %v861 = vadd.f32 %v700, %v860
        %v862 = vpop.f32.mrb[0].mxu0
        %v863 = vadd.f32 %v704, %v862
        %864 = vmatprep.mubr.f32.mxu0 0.0
        %865 = vmatmul.mubr.f32.gmra.mrb[0].mxu0 %v734
        %v866 = vpop.f32.mrb[0].mxu0
        %v867 = vadd.f32 %v700, %v866
        %v868 = vpop.f32.mrb[0].mxu0
        %v869 = vadd.f32 %v704, %v868
        %870 = vmatprep.mubr.f32.mxu0 0.0
        %871 = vmatmul.mubr.f32.gmra.mrb[0].mxu0 %v737
        %v872 = vpop.f32.mrb[0].mxu0
        %v873 = vadd.f32 %v700, %v872
        %v874 = vpop.f32.mrb[0].mxu0
        %v875 = vadd.f32 %v704, %v874
        %876 = vmatprep.mubr.f32.mxu0 0.0
        %877 = vmatmul.mubr.f32.gmra.mrb[0].mxu0 %v740
        %v878 = vpop.f32.mrb[0].mxu0
        %v879 = vadd.f32 %v700, %v878
        %v880 = vpop.f32.mrb[0].mxu0
        %v881 = vadd.f32 %v704, %v880
        %882 = vmatprep.mubr.f32.mxu0 0.0
        %883 = vmatmul.mubr.f32.gmra.mrb[0].mxu0 %v743
        %v884 = vpop.f32.mrb[0].mxu0
        %v885 = vadd.f32 %v700, %v884
        %v886 = vpop.f32.mrb[0].mxu0
        %v887 = vadd.f32 %v704, %v886
        %888 = vmatprep.mubr.f32.mxu0 0.0
        %889 = vmatmul.mubr.f32.gmra.mrb[0].mxu0 %v746
        %v890 = vpop.f32.mrb[0].mxu0
        %v891 = vadd.f32 %v700, %v890
        %v892 = vpop.f32.mrb[0].mxu0
        %v893 = vadd.f32 %v704, %v892
        %894 = vmatprep.mubr.f32.mxu0 0.0
        %895 = vmatmul.mubr.f32.gmra.mrb[0].mxu0 %v749
        %v896 = vpop.f32.mrb[0].mxu0
        %v897 = vadd.f32 %v700, %v896
        %v898 = vpop.f32.mrb[0].mxu0
        %v899 = vadd.f32 %v704, %v898
        %900 = vmatprep.mubr.f32.mxu0 0.0
        %901 = vmatmul.mubr.f32.gmra.mrb[0].mxu0 %v752
        %v902 = vpop.f32.mrb[0].mxu0
        %v903 = vadd.f32 %v700, %v902
        %v904 = vpop.f32.mrb[0].mxu0
        %v905 = vadd.f32 %v704, %v904
        %906 = vmatprep.mubr.f32.mxu0 0.0
        %907 = vmatmul.mubr.f32.gmra.mrb[0].mxu0 %v755
        %v908 = vpop.f32.mrb[0].mxu0
        %v909 = vadd.f32 %v700, %v908
        %v910 = vpop.f32.mrb[0].mxu0
        %v911 = vadd.f32 %v704, %v910
        %912 = vdwg.mxu0
        %913 = vmatprep.subr.mxu0 %v690
        %914 = vmatpush1.msra.mxu0 %v689
        %915 = vmatprep.subr.mxu0 %v768
        %916 = vmatpush1.msra.mxu0 %v765
        %917 = vmatprep.subr.mxu0 0.0
        %918 = vmatpush1.msra.mxu0 0.0
        %919 = vmatprep.subr.mxu0 0.0
        %920 = vmatpush1.msra.mxu0 0.0
        %921 = vmatprep.subr.mxu0 0.0
        %922 = vmatpush1.msra.mxu0 0.0
        %923 = vmatprep.subr.mxu0 0.0
        %924 = vmatpush1.msra.mxu0 0.0
        %925 = vmatprep.subr.mxu0 0.0
        %926 = vmatpush1.msra.mxu0 0.0
        %927 = vmatprep.subr.mxu0 0.0
        %928 = vmatpush1.msra.mxu0 0.0
        %929 = vmatprep.subr.mxu0 0.0
        %930 = vmatpush1.msra.mxu0 0.0
        %931 = vmatprep.subr.mxu0 0.0
        %932 = vmatpush1.msra.mxu0 0.0
        %933 = vmatprep.subr.mxu0 0.0
        %934 = vmatpush1.msra.mxu0 0.0
        %935 = vmatprep.subr.mxu0 0.0
        %936 = vmatpush1.msra.mxu0 0.0
        %937 = vmatprep.subr.mxu0 0.0
        %938 = vmatpush1.msra.mxu0 0.0
        %939 = vmatprep.subr.mxu0 0.0
        %940 = vmatpush1.msra.mxu0 0.0
        %941 = vmatprep.subr.mxu0 0.0
        %942 = vmatpush1.msra.mxu0 0.0
        %943 = vmatprep.subr.mxu0 0.0
        %944 = vmatpush1.msra.mxu0 0.0
        %945 = vmatprep.subr.mxu0 0.0
        %946 = vmatpush1.msra.mxu0 0.0
        %947 = vmatprep.subr.mxu0 0.0
        %948 = vmatpush1.msra.mxu0 0.0
        %949 = vmatprep.subr.mxu0 0.0
        %950 = vmatpush1.msra.mxu0 0.0
        %951 = vmatprep.subr.mxu0 0.0
        %952 = vmatpush1.msra.mxu0 0.0
        %953 = vmatprep.subr.mxu0 0.0
        %954 = vmatpush1.msra.mxu0 0.0
        %955 = vmatprep.subr.mxu0 0.0
        %956 = vmatpush1.msra.mxu0 0.0
        %957 = vmatprep.subr.mxu0 0.0
        %958 = vmatpush1.msra.mxu0 0.0
        %959 = vmatprep.subr.mxu0 0.0
        %960 = vmatpush1.msra.mxu0 0.0
        %961 = vmatprep.subr.mxu0 0.0
        %962 = vmatpush1.msra.mxu0 0.0
        %963 = vmatprep.subr.mxu0 0.0
        %964 = vmatpush1.msra.mxu0 0.0
        %965 = vmatprep.subr.mxu0 0.0
        %966 = vmatpush1.msra.mxu0 0.0
        %967 = vmatprep.subr.mxu0 0.0
        %968 = vmatpush1.msra.mxu0 0.0
        %969 = vmatprep.subr.mxu0 0.0
        %970 = vmatpush1.msra.mxu0 0.0
        %971 = vmatprep.subr.mxu0 0.0
        %972 = vmatpush1.msra.mxu0 0.0
        %973 = vmatprep.subr.mxu0 0.0
        %974 = vmatpush1.msra.mxu0 0.0
        %975 = vmatprep.subr.mxu0 0.0
        %976 = vmatpush1.msra.mxu0 0.0
        %977 = vmatprep.mubr.f32.mxu0 0.0
        %978 = vmatmul.mubr.f32.gmra.mrb[0].mxu0 %v719
        %v979 = vpop.f32.mrb[0].mxu0
        %v980 = vadd.f32 %v708, %v979
        %v981 = vpop.f32.mrb[0].mxu0
        %v982 = vadd.f32 %v712, %v981
        %983 = vmatprep.mubr.f32.mxu0 0.0
        %984 = vmatmul.mubr.f32.gmra.mrb[0].mxu0 %v722
        %v985 = vpop.f32.mrb[0].mxu0
        %v986 = vadd.f32 %v708, %v985
        %v987 = vpop.f32.mrb[0].mxu0
        %v988 = vadd.f32 %v712, %v987
        %989 = vmatprep.mubr.f32.mxu0 0.0
        %990 = vmatmul.mubr.f32.gmra.mrb[0].mxu0 %v725
        %v991 = vpop.f32.mrb[0].mxu0
        %v992 = vadd.f32 %v708, %v991
        %v993 = vpop.f32.mrb[0].mxu0
        %v994 = vadd.f32 %v712, %v993
        %995 = vmatprep.mubr.f32.mxu0 0.0
        %996 = vmatmul.mubr.f32.gmra.mrb[0].mxu0 %v728
        %v997 = vpop.f32.mrb[0].mxu0
        %v998 = vadd.f32 %v708, %v997
        %v999 = vpop.f32.mrb[0].mxu0
        %v1000 = vadd.f32 %v712, %v999
        %1001 = vmatprep.mubr.f32.mxu0 0.0
        %1002 = vmatmul.mubr.f32.gmra.mrb[0].mxu0 %v731
        %v1003 = vpop.f32.mrb[0].mxu0
        %v1004 = vadd.f32 %v708, %v1003
        %v1005 = vpop.f32.mrb[0].mxu0
        %v1006 = vadd.f32 %v712, %v1005
        %1007 = vmatprep.mubr.f32.mxu0 0.0
        %1008 = vmatmul.mubr.f32.gmra.mrb[0].mxu0 %v734
        %v1009 = vpop.f32.mrb[0].mxu0
        %v1010 = vadd.f32 %v708, %v1009
        %v1011 = vpop.f32.mrb[0].mxu0
        %v1012 = vadd.f32 %v712, %v1011
        %1013 = vmatprep.mubr.f32.mxu0 0.0
        %1014 = vmatmul.mubr.f32.gmra.mrb[0].mxu0 %v737
        %v1015 = vpop.f32.mrb[0].mxu0
        %v1016 = vadd.f32 %v708, %v1015
        %v1017 = vpop.f32.mrb[0].mxu0
        %v1018 = vadd.f32 %v712, %v1017
        %1019 = vmatprep.mubr.f32.mxu0 0.0
        %1020 = vmatmul.mubr.f32.gmra.mrb[0].mxu0 %v740
        %v1021 = vpop.f32.mrb[0].mxu0
        %v1022 = vadd.f32 %v708, %v1021
        %v1023 = vpop.f32.mrb[0].mxu0
        %v1024 = vadd.f32 %v712, %v1023
        %1025 = vmatprep.mubr.f32.mxu0 0.0
        %1026 = vmatmul.mubr.f32.gmra.mrb[0].mxu0 %v743
        %v1027 = vpop.f32.mrb[0].mxu0
        %v1028 = vadd.f32 %v708, %v1027
        %v1029 = vpop.f32.mrb[0].mxu0
        %v1030 = vadd.f32 %v712, %v1029
        %1031 = vmatprep.mubr.f32.mxu0 0.0
        %1032 = vmatmul.mubr.f32.gmra.mrb[0].mxu0 %v746
        %v1033 = vpop.f32.mrb[0].mxu0
        %v1034 = vadd.f32 %v708, %v1033
        %v1035 = vpop.f32.mrb[0].mxu0
        %v1036 = vadd.f32 %v712, %v1035
        %1037 = vmatprep.mubr.f32.mxu0 0.0
        %1038 = vmatmul.mubr.f32.gmra.mrb[0].mxu0 %v749
        %v1039 = vpop.f32.mrb[0].mxu0
        %v1040 = vadd.f32 %v708, %v1039
        %v1041 = vpop.f32.mrb[0].mxu0
        %v1042 = vadd.f32 %v712, %v1041
        %1043 = vmatprep.mubr.f32.mxu0 0.0
        %1044 = vmatmul.mubr.f32.gmra.mrb[0].mxu0 %v752
        %v1045 = vpop.f32.mrb[0].mxu0
        %v1046 = vadd.f32 %v708, %v1045
        %v1047 = vpop.f32.mrb[0].mxu0
        %v1048 = vadd.f32 %v712, %v1047
        %1049 = vmatprep.mubr.f32.mxu0 0.0
        %1050 = vmatmul.mubr.f32.gmra.mrb[0].mxu0 %v755
        %v1051 = vpop.f32.mrb[0].mxu0
        %v1052 = vadd.f32 %v708, %v1051
        %v1053 = vpop.f32.mrb[0].mxu0
        %v1054 = vadd.f32 %v712, %v1053
        %1055 = vdwg.mxu0
        %v1056 = vmax.f32 %v837, 0.0
        %v1057 = vmax.f32 %v839, 0.0
        %v1058 = vmax.f32 %v980, 0.0
        %v1059 = vmax.f32 %v982, 0.0
        %v1060 = vmax.f32 %v843, 0.0
        %v1061 = vmax.f32 %v845, 0.0
        %v1062 = vmax.f32 %v986, 0.0
        %v1063 = vmax.f32 %v988, 0.0
        %v1064 = vmax.f32 %v849, 0.0
        %v1065 = vmax.f32 %v851, 0.0
        %v1066 = vmax.f32 %v992, 0.0
        %v1067 = vmax.f32 %v994, 0.0
        %v1068 = vmax.f32 %v855, 0.0
        %v1069 = vmax.f32 %v857, 0.0
        %v1070 = vmax.f32 %v998, 0.0
        %v1071 = vmax.f32 %v1000, 0.0
        %v1072 = vmax.f32 %v861, 0.0
        %v1073 = vmax.f32 %v863, 0.0
        %v1074 = vmax.f32 %v1004, 0.0
        %v1075 = vmax.f32 %v1006, 0.0
        %v1076 = vmax.f32 %v867, 0.0
        %v1077 = vmax.f32 %v869, 0.0
        %v1078 = vmax.f32 %v1010, 0.0
        %v1079 = vmax.f32 %v1012, 0.0
        %v1080 = vmax.f32 %v873, 0.0
        %v1081 = vmax.f32 %v875, 0.0
        %v1082 = vmax.f32 %v1016, 0.0
        %v1083 = vmax.f32 %v1018, 0.0
        %v1084 = vmax.f32 %v879, 0.0
        %v1085 = vmax.f32 %v881, 0.0
        %v1086 = vmax.f32 %v1022, 0.0
        %v1087 = vmax.f32 %v1024, 0.0
        %v1088 = vmax.f32 %v885, 0.0
        %v1089 = vmax.f32 %v887, 0.0
        %v1090 = vmax.f32 %v1028, 0.0
        %v1091 = vmax.f32 %v1030, 0.0
        %v1092 = vmax.f32 %v891, 0.0
        %v1093 = vmax.f32 %v893, 0.0
        %v1094 = vmax.f32 %v1034, 0.0
        %v1095 = vmax.f32 %v1036, 0.0
        %v1096 = vmax.f32 %v897, 0.0
        %v1097 = vmax.f32 %v899, 0.0
        %v1098 = vmax.f32 %v1040, 0.0
        %v1099 = vmax.f32 %v1042, 0.0
        %v1100 = vmax.f32 %v903, 0.0
        %v1101 = vmax.f32 %v905, 0.0
        %v1102 = vmax.f32 %v1046, 0.0
        %v1103 = vmax.f32 %v1048, 0.0
        %v1104 = vmax.f32 %v909, 0.0
        %v1105 = vmax.f32 %v911, 0.0
        %v1106 = vmax.f32 %v1052, 0.0
        %v1107 = vmax.f32 %v1054, 0.0
        %v1108 = vpack.c.bf16 %v1060, %v1056
        %v1109 = vpack.c.bf16 %v1061, %v1057
        %v1110 = vpack.c.bf16 %v1062, %v1058
        %v1111 = vpack.c.bf16 %v1063, %v1059
        %v1112 = vpack.c.bf16 %v1068, %v1064
        %v1113 = vpack.c.bf16 %v1069, %v1065
        %v1114 = vpack.c.bf16 %v1070, %v1066
        %v1115 = vpack.c.bf16 %v1071, %v1067
        %v1116 = vpack.c.bf16 %v1076, %v1072
        %v1117 = vpack.c.bf16 %v1077, %v1073
        %v1118 = vpack.c.bf16 %v1078, %v1074
        %v1119 = vpack.c.bf16 %v1079, %v1075
        %v1120 = vpack.c.bf16 %v1084, %v1080
        %v1121 = vpack.c.bf16 %v1085, %v1081
        %v1122 = vpack.c.bf16 %v1086, %v1082
        %v1123 = vpack.c.bf16 %v1087, %v1083
        %v1124 = vpack.c.bf16 %v1092, %v1088
        %v1125 = vpack.c.bf16 %v1093, %v1089
        %v1126 = vpack.c.bf16 %v1094, %v1090
        %v1127 = vpack.c.bf16 %v1095, %v1091
        %v1128 = vpack.c.bf16 %v1100, %v1096
        %v1129 = vpack.c.bf16 %v1101, %v1097
        %v1130 = vpack.c.bf16 %v1102, %v1098
        %v1131 = vpack.c.bf16 %v1103, %v1099
        %v1132 = vpack.c.bf16 %v1104, %v1104
        %v1133 = vpack.c.bf16 %v1105, %v1105
        %v1134 = vpack.c.bf16 %v1106, %v1106
        %v1135 = vpack.c.bf16 %v1107, %v1107
        %v1136 = vld [vmem:[%s3] sm:$0xff]
        %v1137 = vld [vmem:[%s3 + $0x8] sm:$0xff]
        %v1138 = vld [vmem:[%s3 + $0x10] sm:$0xff]
        %v1139 = vld [vmem:[%s3 + $0x18] sm:$0xff]
        %v1140 = vld [vmem:[%s3 + $0x20] sm:$0xff]
        %v1141 = vld [vmem:[%s3 + $0x28] sm:$0xff]
        %v1142 = vld [vmem:[%s3 + $0x30] sm:$0xff]
        %v1143 = vld [vmem:[%s3 + $0x38] sm:$0xff]
        %v1144 = vld [vmem:[%s3 + $0x40] sm:$0xff]
        %v1145 = vld [vmem:[%s3 + $0x48] sm:$0xff]
        %v1146 = vld [vmem:[%s3 + $0x50] sm:$0xff]
        %v1147 = vld [vmem:[%s3 + $0x58] sm:$0xff]
        %v1148 = vld [vmem:[%s3 + $0x60] sm:$0xff]
        %v1149 = vld [vmem:[%s3 + $0x68] sm:$0xff]
        %v1150 = vld [vmem:[%s3 + $0x70] sm:$0xff]
        %v1151 = vld [vmem:[%s3 + $0x78] sm:$0xff]
        %v1152 = vld [vmem:[%s3 + $0x80] sm:$0xff]
        %v1153 = vld [vmem:[%s3 + $0x88] sm:$0xff]
        %v1154 = vld [vmem:[%s3 + $0x90] sm:$0xff]
        %v1155 = vld [vmem:[%s3 + $0x98] sm:$0xff]
        %v1156 = vld [vmem:[%s3 + $0xa0] sm:$0xff]
        %v1157 = vld [vmem:[%s3 + $0xa8] sm:$0xff]
        %v1158 = vld [vmem:[%s3 + $0xb0] sm:$0xff]
        %v1159 = vld [vmem:[%s3 + $0xb8] sm:$0xff]
        %v1160 = vld [vmem:[%s3 + $0xc0] sm:$0xff]
        %v1161 = vld [vmem:[%s3 + $0xc8] sm:$0xff]
        %v1162 = vld [vmem:[%s3 + $0xd0] sm:$0xff]
        %v1163 = vld [vmem:[%s3 + $0xd8] sm:$0xff]
        %v1164 = vld [vmem:[%s3 + $0xe0] sm:$0xff]
        %v1165 = vld [vmem:[%s3 + $0xe8] sm:$0xff]
        %v1166 = vld [vmem:[%s3 + $0xf0] sm:$0xff]
        %v1167 = vld [vmem:[%s3 + $0xf8] sm:$0xff]
        %v1168 = vld [vmem:[%s3 + $0x100] sm:$0xff]
        %v1169 = vld [vmem:[%s3 + $0x108] sm:$0xff]
        %v1170 = vld [vmem:[%s3 + $0x110] sm:$0xff]
        %v1171 = vld [vmem:[%s3 + $0x118] sm:$0xff]
        %v1172 = vld [vmem:[%s3 + $0x120] sm:$0xff]
        %v1173 = vld [vmem:[%s3 + $0x128] sm:$0xff]
        %v1174 = vld [vmem:[%s3 + $0x130] sm:$0xff]
        %v1175 = vld [vmem:[%s3 + $0x138] sm:$0xff]
        %v1176 = vld [vmem:[%s3 + $0x140] sm:$0xff]
        %v1177 = vld [vmem:[%s3 + $0x148] sm:$0xff]
        %v1178 = vld [vmem:[%s3 + $0x150] sm:$0xff]
        %v1179 = vld [vmem:[%s3 + $0x158] sm:$0xff]
        %v1180 = vld [vmem:[%s3 + $0x160] sm:$0xff]
        %v1181 = vld [vmem:[%s3 + $0x168] sm:$0xff]
        %v1182 = vld [vmem:[%s3 + $0x170] sm:$0xff]
        %v1183 = vld [vmem:[%s3 + $0x178] sm:$0xff]
        %v1184 = vld [vmem:[%s3 + $0x180] sm:$0xff]
        %v1185 = vld [vmem:[%s3 + $0x188] sm:$0xff]
        %v1186 = vld [vmem:[%s3 + $0x190] sm:$0xff]
        %v1187 = vld [vmem:[%s3 + $0x198] sm:$0xff]
        %v1188 = vld [vmem:[%s3 + $0x1a0] sm:$0xff]
        %v1189 = vld [vmem:[%s3 + $0x1a8] sm:$0xff]
        %v1190 = vld [vmem:[%s3 + $0x1b0] sm:$0xff]
        %v1191 = vld [vmem:[%s3 + $0x1b8] sm:$0xff]
        %v1192 = vld [vmem:[%s3 + $0x1c0] sm:$0xff]
        %v1193 = vld [vmem:[%s3 + $0x1c8] sm:$0xff]
        %v1194 = vld [vmem:[%s3 + $0x1d0] sm:$0xff]
        %v1195 = vld [vmem:[%s3 + $0x1d8] sm:$0xff]
        %v1196 = vld [vmem:[%s3 + $0x1e0] sm:$0xff]
        %v1197 = vld [vmem:[%s3 + $0x1e8] sm:$0xff]
        %v1198 = vld [vmem:[%s3 + $0x1f0] sm:$0xff]
        %v1199 = vld [vmem:[%s3 + $0x1f8] sm:$0xff]
        %v1200 = vld [vmem:[%s3 + $0x200] sm:$0xff]
        %v1201 = vld [vmem:[%s3 + $0x208] sm:$0xff]
        %v1202 = vld [vmem:[%s3 + $0x210] sm:$0xff]
        %v1203 = vld [vmem:[%s3 + $0x218] sm:$0xff]
        %v1204 = vld [vmem:[%s3 + $0x220] sm:$0xff]
        %v1205 = vld [vmem:[%s3 + $0x228] sm:$0xff]
        %v1206 = vld [vmem:[%s3 + $0x230] sm:$0xff]
        %v1207 = vld [vmem:[%s3 + $0x238] sm:$0xff]
        %v1208 = vld [vmem:[%s3 + $0x240] sm:$0xff]
        %v1209 = vld [vmem:[%s3 + $0x248] sm:$0xff]
        %v1210 = vld [vmem:[%s3 + $0x250] sm:$0xff]
        %v1211 = vld [vmem:[%s3 + $0x258] sm:$0xff]
        %v1212 = vld [vmem:[%s3 + $0x260] sm:$0xff]
        %v1213 = vld [vmem:[%s3 + $0x268] sm:$0xff]
        %v1214 = vld [vmem:[%s3 + $0x270] sm:$0xff]
        %v1215 = vld [vmem:[%s3 + $0x278] sm:$0xff]
        %v1216 = vld [vmem:[%s3 + $0x280] sm:$0xff]
        %v1217 = vld [vmem:[%s3 + $0x288] sm:$0xff]
        %v1218 = vld [vmem:[%s3 + $0x290] sm:$0xff]
        %v1219 = vld [vmem:[%s3 + $0x298] sm:$0xff]
        %v1220 = vld [vmem:[%s3 + $0x2a0] sm:$0xff]
        %v1221 = vld [vmem:[%s3 + $0x2a8] sm:$0xff]
        %v1222 = vld [vmem:[%s3 + $0x2b0] sm:$0xff]
        %v1223 = vld [vmem:[%s3 + $0x2b8] sm:$0xff]
        %v1224 = vld [vmem:[%s3 + $0x2c0] sm:$0xff]
        %v1225 = vld [vmem:[%s3 + $0x2c8] sm:$0xff]
        %v1226 = vld [vmem:[%s3 + $0x2d0] sm:$0xff]
        %v1227 = vld [vmem:[%s3 + $0x2d8] sm:$0xff]
        %v1228 = vld [vmem:[%s3 + $0x2e0] sm:$0xff]
        %v1229 = vld [vmem:[%s3 + $0x2e8] sm:$0xff]
        %v1230 = vld [vmem:[%s3 + $0x2f0] sm:$0xff]
        %v1231 = vld [vmem:[%s3 + $0x2f8] sm:$0xff]
        %v1232 = vld [vmem:[%s3 + $0x300] sm:$0xff]
        %v1233 = vld [vmem:[%s3 + $0x308] sm:$0xff]
        %v1234 = vld [vmem:[%s3 + $0x310] sm:$0xff]
        %v1235 = vld [vmem:[%s3 + $0x318] sm:$0xff]
        %v1236 = vld [vmem:[#allocation6] sm:$0xf]
        %v1238 = vlaneseq
        %v1239 = vshrl.u32 %v1238, 7
        %v1240 = vsub.s32 0, %v1239
        %v1241 = vrot.slane %v1236, %v1240
        %v1242 = vlaneseq
        %v1243 = vshrl.u32 %v1242, 7
        %v1244 = vsub.s32 1, %v1243
        %v1245 = vrot.slane %v1236, %v1244
        %v1246 = vlaneseq
        %v1247 = vshrl.u32 %v1246, 7
        %v1248 = vsub.s32 2, %v1247
        %v1249 = vrot.slane %v1236, %v1248
        %v1250 = vlaneseq
        %v1251 = vshrl.u32 %v1250, 7
        %v1252 = vsub.s32 3, %v1251
        %v1253 = vrot.slane %v1236, %v1252
        %v1358 = vunpack.c.l.b16 %v1136
        %v1359 = vunpack.c.h.b16 %v1136
        %v1360 = vunpack.c.l.b16 %v1137
        %v1361 = vunpack.c.h.b16 %v1137
        %v1362 = vunpack.c.l.b16 %v1138
        %v1363 = vunpack.c.h.b16 %v1138
        %v1364 = vunpack.c.l.b16 %v1139
        %v1365 = vunpack.c.h.b16 %v1139
        %v1366 = vunpack.c.l.b16 %v1140
        %v1367 = vunpack.c.h.b16 %v1140
        %v1368 = vunpack.c.l.b16 %v1141
        %v1369 = vunpack.c.h.b16 %v1141
        %v1370 = vunpack.c.l.b16 %v1142
        %v1371 = vunpack.c.h.b16 %v1142
        %v1372 = vunpack.c.l.b16 %v1143
        %v1373 = vunpack.c.h.b16 %v1143
        %v1374 = vunpack.c.l.b16 %v1144
        %v1375 = vunpack.c.h.b16 %v1144
        %v1376 = vunpack.c.l.b16 %v1145
        %v1377 = vunpack.c.h.b16 %v1145
        %v1378 = vunpack.c.l.b16 %v1146
        %v1379 = vunpack.c.h.b16 %v1146
        %v1380 = vunpack.c.l.b16 %v1147
        %v1381 = vunpack.c.h.b16 %v1147
        %v1382 = vunpack.c.l.b16 %v1148
        %v1383 = vunpack.c.h.b16 %v1148
        %v1384 = vunpack.c.l.b16 %v1149
        %v1385 = vunpack.c.h.b16 %v1149
        %v1386 = vunpack.c.l.b16 %v1150
        %v1387 = vunpack.c.h.b16 %v1150
        %v1388 = vunpack.c.l.b16 %v1151
        %v1389 = vunpack.c.h.b16 %v1151
        %v1390 = vunpack.c.l.b16 %v1152
        %v1391 = vunpack.c.h.b16 %v1152
        %v1392 = vunpack.c.l.b16 %v1153
        %v1393 = vunpack.c.h.b16 %v1153
        %v1394 = vunpack.c.l.b16 %v1154
        %v1395 = vunpack.c.h.b16 %v1154
        %v1396 = vunpack.c.l.b16 %v1155
        %v1397 = vunpack.c.h.b16 %v1155
        %v1398 = vunpack.c.l.b16 %v1156
        %v1399 = vunpack.c.h.b16 %v1156
        %v1400 = vunpack.c.l.b16 %v1157
        %v1401 = vunpack.c.h.b16 %v1157
        %v1402 = vunpack.c.l.b16 %v1158
        %v1403 = vunpack.c.h.b16 %v1158
        %v1404 = vunpack.c.l.b16 %v1159
        %v1405 = vunpack.c.h.b16 %v1159
        %v1406 = vunpack.c.l.b16 %v1160
        %v1407 = vunpack.c.h.b16 %v1160
        %v1408 = vunpack.c.l.b16 %v1161
        %v1409 = vunpack.c.h.b16 %v1161
        %v1410 = vunpack.c.l.b16 %v1162
        %v1411 = vunpack.c.h.b16 %v1162
        %v1412 = vunpack.c.l.b16 %v1163
        %v1413 = vunpack.c.h.b16 %v1163
        %v1414 = vunpack.c.l.b16 %v1164
        %v1415 = vunpack.c.h.b16 %v1164
        %v1416 = vunpack.c.l.b16 %v1165
        %v1417 = vunpack.c.h.b16 %v1165
        %v1418 = vunpack.c.l.b16 %v1166
        %v1419 = vunpack.c.h.b16 %v1166
        %v1420 = vunpack.c.l.b16 %v1167
        %v1421 = vunpack.c.h.b16 %v1167
        %v1422 = vunpack.c.l.b16 %v1168
        %v1423 = vunpack.c.h.b16 %v1168
        %v1424 = vunpack.c.l.b16 %v1169
        %v1425 = vunpack.c.h.b16 %v1169
        %v1426 = vunpack.c.l.b16 %v1170
        %v1427 = vunpack.c.h.b16 %v1170
        %v1428 = vunpack.c.l.b16 %v1171
        %v1429 = vunpack.c.h.b16 %v1171
        %v1430 = vunpack.c.l.b16 %v1172
        %v1431 = vunpack.c.h.b16 %v1172
        %v1432 = vunpack.c.l.b16 %v1173
        %v1433 = vunpack.c.h.b16 %v1173
        %v1434 = vunpack.c.l.b16 %v1174
        %v1435 = vunpack.c.h.b16 %v1174
        %v1436 = vunpack.c.l.b16 %v1175
        %v1437 = vunpack.c.h.b16 %v1175
        %v1438 = vunpack.c.l.b16 %v1176
        %v1439 = vunpack.c.h.b16 %v1176
        %v1440 = vunpack.c.l.b16 %v1177
        %v1441 = vunpack.c.h.b16 %v1177
        %v1442 = vunpack.c.l.b16 %v1178
        %v1443 = vunpack.c.h.b16 %v1178
        %v1444 = vunpack.c.l.b16 %v1179
        %v1445 = vunpack.c.h.b16 %v1179
        %v1446 = vunpack.c.l.b16 %v1180
        %v1447 = vunpack.c.h.b16 %v1180
        %v1448 = vunpack.c.l.b16 %v1181
        %v1449 = vunpack.c.h.b16 %v1181
        %v1450 = vunpack.c.l.b16 %v1182
        %v1451 = vunpack.c.h.b16 %v1182
        %v1452 = vunpack.c.l.b16 %v1183
        %v1453 = vunpack.c.h.b16 %v1183
        %v1454 = vunpack.c.l.b16 %v1184
        %v1455 = vunpack.c.h.b16 %v1184
        %v1456 = vunpack.c.l.b16 %v1185
        %v1457 = vunpack.c.h.b16 %v1185
        %v1458 = vunpack.c.l.b16 %v1186
        %v1459 = vunpack.c.h.b16 %v1186
        %v1460 = vunpack.c.l.b16 %v1187
        %v1461 = vunpack.c.h.b16 %v1187
        %v1462 = vunpack.c.l.b16 %v1188
        %v1463 = vunpack.c.h.b16 %v1188
        %v1464 = vunpack.c.l.b16 %v1189
        %v1465 = vunpack.c.h.b16 %v1189
        %v1466 = vunpack.c.l.b16 %v1190
        %v1467 = vunpack.c.h.b16 %v1190
        %v1468 = vunpack.c.l.b16 %v1191
        %v1469 = vunpack.c.h.b16 %v1191
        %v1470 = vunpack.c.l.b16 %v1192
        %v1471 = vunpack.c.h.b16 %v1192
        %v1472 = vunpack.c.l.b16 %v1193
        %v1473 = vunpack.c.h.b16 %v1193
        %v1474 = vunpack.c.l.b16 %v1194
        %v1475 = vunpack.c.h.b16 %v1194
        %v1476 = vunpack.c.l.b16 %v1195
        %v1477 = vunpack.c.h.b16 %v1195
        %v1478 = vunpack.c.l.b16 %v1196
        %v1479 = vunpack.c.h.b16 %v1196
        %v1480 = vunpack.c.l.b16 %v1197
        %v1481 = vunpack.c.h.b16 %v1197
        %v1482 = vunpack.c.l.b16 %v1198
        %v1483 = vunpack.c.h.b16 %v1198
        %v1484 = vunpack.c.l.b16 %v1199
        %v1485 = vunpack.c.h.b16 %v1199
        %v1486 = vunpack.c.l.b16 %v1200
        %v1487 = vunpack.c.h.b16 %v1200
        %v1488 = vunpack.c.l.b16 %v1201
        %v1489 = vunpack.c.h.b16 %v1201
        %v1490 = vunpack.c.l.b16 %v1202
        %v1491 = vunpack.c.h.b16 %v1202
        %v1492 = vunpack.c.l.b16 %v1203
        %v1493 = vunpack.c.h.b16 %v1203
        %v1494 = vunpack.c.l.b16 %v1204
        %v1495 = vunpack.c.h.b16 %v1204
        %v1496 = vunpack.c.l.b16 %v1205
        %v1497 = vunpack.c.h.b16 %v1205
        %v1498 = vunpack.c.l.b16 %v1206
        %v1499 = vunpack.c.h.b16 %v1206
        %v1500 = vunpack.c.l.b16 %v1207
        %v1501 = vunpack.c.h.b16 %v1207
        %v1502 = vunpack.c.l.b16 %v1208
        %v1503 = vunpack.c.h.b16 %v1208
        %v1504 = vunpack.c.l.b16 %v1209
        %v1505 = vunpack.c.h.b16 %v1209
        %v1506 = vunpack.c.l.b16 %v1210
        %v1507 = vunpack.c.h.b16 %v1210
        %v1508 = vunpack.c.l.b16 %v1211
        %v1509 = vunpack.c.h.b16 %v1211
        %v1510 = vunpack.c.l.b16 %v1212
        %v1511 = vunpack.c.h.b16 %v1212
        %v1512 = vunpack.c.l.b16 %v1213
        %v1513 = vunpack.c.h.b16 %v1213
        %v1514 = vunpack.c.l.b16 %v1214
        %v1515 = vunpack.c.h.b16 %v1214
        %v1516 = vunpack.c.l.b16 %v1215
        %v1517 = vunpack.c.h.b16 %v1215
        %v1518 = vunpack.c.l.b16 %v1216
        %v1519 = vunpack.c.h.b16 %v1216
        %v1520 = vunpack.c.l.b16 %v1217
        %v1521 = vunpack.c.h.b16 %v1217
        %v1522 = vunpack.c.l.b16 %v1218
        %v1523 = vunpack.c.h.b16 %v1218
        %v1524 = vunpack.c.l.b16 %v1219
        %v1525 = vunpack.c.h.b16 %v1219
        %v1526 = vunpack.c.l.b16 %v1220
        %v1527 = vunpack.c.h.b16 %v1220
        %v1528 = vunpack.c.l.b16 %v1221
        %v1529 = vunpack.c.h.b16 %v1221
        %v1530 = vunpack.c.l.b16 %v1222
        %v1531 = vunpack.c.h.b16 %v1222
        %v1532 = vunpack.c.l.b16 %v1223
        %v1533 = vunpack.c.h.b16 %v1223
        %v1534 = vunpack.c.l.b16 %v1224
        %v1535 = vunpack.c.h.b16 %v1224
        %v1536 = vunpack.c.l.b16 %v1225
        %v1537 = vunpack.c.h.b16 %v1225
        %v1538 = vunpack.c.l.b16 %v1226
        %v1539 = vunpack.c.h.b16 %v1226
        %v1540 = vunpack.c.l.b16 %v1227
        %v1541 = vunpack.c.h.b16 %v1227
        %v1542 = vunpack.c.l.b16 %v1228
        %v1543 = vunpack.c.h.b16 %v1228
        %v1544 = vunpack.c.l.b16 %v1229
        %v1545 = vunpack.c.h.b16 %v1229
        %v1546 = vunpack.c.l.b16 %v1230
        %v1547 = vunpack.c.h.b16 %v1230
        %v1548 = vunpack.c.l.b16 %v1231
        %v1549 = vunpack.c.h.b16 %v1231
        %v1550 = vunpack.c.l.b16 %v1232
        %v1551 = vunpack.c.h.b16 %v1232
        %v1552 = vunpack.c.l.b16 %v1233
        %v1553 = vunpack.c.h.b16 %v1233
        %v1554 = vunpack.c.l.b16 %v1234
        %v1555 = vunpack.c.h.b16 %v1234
        %v1556 = vunpack.c.l.b16 %v1235
        %v1557 = vunpack.c.h.b16 %v1235
        %v1558 = vpack.c.b16 %v1362, %v1358
        %v1559 = vpack.c.b16 %v1363, %v1359
        %v1560 = vpack.c.b16 %v1364, %v1360
        %v1561 = vpack.c.b16 %v1365, %v1361
        %v1562 = vpack.c.b16 %v1370, %v1366
        %v1563 = vpack.c.b16 %v1371, %v1367
        %v1564 = vpack.c.b16 %v1372, %v1368
        %v1565 = vpack.c.b16 %v1373, %v1369
        %v1566 = vpack.c.b16 %v1378, %v1374
        %v1567 = vpack.c.b16 %v1379, %v1375
        %v1568 = vpack.c.b16 %v1380, %v1376
        %v1569 = vpack.c.b16 %v1381, %v1377
        %v1570 = vpack.c.b16 %v1386, %v1382
        %v1571 = vpack.c.b16 %v1387, %v1383
        %v1572 = vpack.c.b16 %v1388, %v1384
        %v1573 = vpack.c.b16 %v1389, %v1385
        %v1574 = vpack.c.b16 %v1394, %v1390
        %v1575 = vpack.c.b16 %v1395, %v1391
        %v1576 = vpack.c.b16 %v1396, %v1392
        %v1577 = vpack.c.b16 %v1397, %v1393
        %v1578 = vpack.c.b16 %v1402, %v1398
        %v1579 = vpack.c.b16 %v1403, %v1399
        %v1580 = vpack.c.b16 %v1404, %v1400
        %v1581 = vpack.c.b16 %v1405, %v1401
        %v1582 = vpack.c.b16 %v1410, %v1406
        %v1583 = vpack.c.b16 %v1411, %v1407
        %v1584 = vpack.c.b16 %v1412, %v1408
        %v1585 = vpack.c.b16 %v1413, %v1409
        %v1586 = vpack.c.b16 %v1418, %v1414
        %v1587 = vpack.c.b16 %v1419, %v1415
        %v1588 = vpack.c.b16 %v1420, %v1416
        %v1589 = vpack.c.b16 %v1421, %v1417
        %v1590 = vpack.c.b16 %v1426, %v1422
        %v1591 = vpack.c.b16 %v1427, %v1423
        %v1592 = vpack.c.b16 %v1428, %v1424
        %v1593 = vpack.c.b16 %v1429, %v1425
        %v1594 = vpack.c.b16 %v1434, %v1430
        %v1595 = vpack.c.b16 %v1435, %v1431
        %v1596 = vpack.c.b16 %v1436, %v1432
        %v1597 = vpack.c.b16 %v1437, %v1433
        %v1598 = vpack.c.b16 %v1442, %v1438
        %v1599 = vpack.c.b16 %v1443, %v1439
        %v1600 = vpack.c.b16 %v1444, %v1440
        %v1601 = vpack.c.b16 %v1445, %v1441
        %v1602 = vpack.c.b16 %v1450, %v1446
        %v1603 = vpack.c.b16 %v1451, %v1447
        %v1604 = vpack.c.b16 %v1452, %v1448
        %v1605 = vpack.c.b16 %v1453, %v1449
        %v1606 = vpack.c.b16 %v1458, %v1454
        %v1607 = vpack.c.b16 %v1459, %v1455
        %v1608 = vpack.c.b16 %v1460, %v1456
        %v1609 = vpack.c.b16 %v1461, %v1457
        %v1610 = vpack.c.b16 %v1466, %v1462
        %v1611 = vpack.c.b16 %v1467, %v1463
        %v1612 = vpack.c.b16 %v1468, %v1464
        %v1613 = vpack.c.b16 %v1469, %v1465
        %v1614 = vpack.c.b16 %v1474, %v1470
        %v1615 = vpack.c.b16 %v1475, %v1471
        %v1616 = vpack.c.b16 %v1476, %v1472
        %v1617 = vpack.c.b16 %v1477, %v1473
        %v1618 = vpack.c.b16 %v1482, %v1478
        %v1619 = vpack.c.b16 %v1483, %v1479
        %v1620 = vpack.c.b16 %v1484, %v1480
        %v1621 = vpack.c.b16 %v1485, %v1481
        %v1622 = vpack.c.b16 %v1490, %v1486
        %v1623 = vpack.c.b16 %v1491, %v1487
        %v1624 = vpack.c.b16 %v1492, %v1488
        %v1625 = vpack.c.b16 %v1493, %v1489
        %v1626 = vpack.c.b16 %v1498, %v1494
        %v1627 = vpack.c.b16 %v1499, %v1495
        %v1628 = vpack.c.b16 %v1500, %v1496
        %v1629 = vpack.c.b16 %v1501, %v1497
        %v1630 = vpack.c.b16 %v1506, %v1502
        %v1631 = vpack.c.b16 %v1507, %v1503
        %v1632 = vpack.c.b16 %v1508, %v1504
        %v1633 = vpack.c.b16 %v1509, %v1505
        %v1634 = vpack.c.b16 %v1514, %v1510
        %v1635 = vpack.c.b16 %v1515, %v1511
        %v1636 = vpack.c.b16 %v1516, %v1512
        %v1637 = vpack.c.b16 %v1517, %v1513
        %v1638 = vpack.c.b16 %v1522, %v1518
        %v1639 = vpack.c.b16 %v1523, %v1519
        %v1640 = vpack.c.b16 %v1524, %v1520
        %v1641 = vpack.c.b16 %v1525, %v1521
        %v1642 = vpack.c.b16 %v1530, %v1526
        %v1643 = vpack.c.b16 %v1531, %v1527
        %v1644 = vpack.c.b16 %v1532, %v1528
        %v1645 = vpack.c.b16 %v1533, %v1529
        %v1646 = vpack.c.b16 %v1538, %v1534
        %v1647 = vpack.c.b16 %v1539, %v1535
        %v1648 = vpack.c.b16 %v1540, %v1536
        %v1649 = vpack.c.b16 %v1541, %v1537
        %v1650 = vpack.c.b16 %v1546, %v1542
        %v1651 = vpack.c.b16 %v1547, %v1543
        %v1652 = vpack.c.b16 %v1548, %v1544
        %v1653 = vpack.c.b16 %v1549, %v1545
        %v1654 = vpack.c.b16 %v1554, %v1550
        %v1655 = vpack.c.b16 %v1555, %v1551
        %v1656 = vpack.c.b16 %v1556, %v1552
        %v1657 = vpack.c.b16 %v1557, %v1553
        %vm1758 = vcmask 130048
        %v1760 = vsel %vm1758, %v1111, 0
        %v1763 = vsel %vm1758, %v1115, 0
        %v1766 = vsel %vm1758, %v1119, 0
        %v1769 = vsel %vm1758, %v1123, 0
        %v1772 = vsel %vm1758, %v1127, 0
        %v1775 = vsel %vm1758, %v1131, 0
        %v1778 = vsel %vm1758, %v1135, 0
        %1780 = vmatprep.subr.bf16.mxu0 %v1559
        %1781 = vmatpush1.bf16.msra.mxu0 %v1558
        %1782 = vmatprep.subr.bf16.mxu0 %v1563
        %1783 = vmatpush1.bf16.msra.mxu0 %v1562
        %1784 = vmatprep.subr.bf16.mxu0 %v1567
        %1785 = vmatpush1.bf16.msra.mxu0 %v1566
        %1786 = vmatprep.subr.bf16.mxu0 %v1571
        %1787 = vmatpush1.bf16.msra.mxu0 %v1570
        %1788 = vmatprep.subr.bf16.mxu0 %v1575
        %1789 = vmatpush1.bf16.msra.mxu0 %v1574
        %1790 = vmatprep.subr.bf16.mxu0 %v1579
        %1791 = vmatpush1.bf16.msra.mxu0 %v1578
        %1792 = vmatprep.subr.bf16.mxu0 %v1583
        %1793 = vmatpush1.bf16.msra.mxu0 %v1582
        %1794 = vmatprep.subr.bf16.mxu0 %v1587
        %1795 = vmatpush1.bf16.msra.mxu0 %v1586
        %1796 = vmatprep.subr.bf16.mxu0 %v1591
        %1797 = vmatpush1.bf16.msra.mxu0 %v1590
        %1798 = vmatprep.subr.bf16.mxu0 %v1595
        %1799 = vmatpush1.bf16.msra.mxu0 %v1594
        %1800 = vmatprep.subr.bf16.mxu0 %v1599
        %1801 = vmatpush1.bf16.msra.mxu0 %v1598
        %1802 = vmatprep.subr.bf16.mxu0 %v1603
        %1803 = vmatpush1.bf16.msra.mxu0 %v1602
        %1804 = vmatprep.subr.bf16.mxu0 %v1607
        %1805 = vmatpush1.bf16.msra.mxu0 %v1606
        %1806 = vmatprep.subr.bf16.mxu0 %v1611
        %1807 = vmatpush1.bf16.msra.mxu0 %v1610
        %1808 = vmatprep.subr.bf16.mxu0 %v1615
        %1809 = vmatpush1.bf16.msra.mxu0 %v1614
        %1810 = vmatprep.subr.bf16.mxu0 %v1619
        %1811 = vmatpush1.bf16.msra.mxu0 %v1618
        %1812 = vmatprep.mubr.bf16.mxu0 %v1109
        %1813 = vmatmul.mubr.bf16.gmra.mrb[0].mxu0 %v1108
        %v1814 = vpop.f32.mrb[0].mxu0
        %v1815 = vadd.f32 %v1241, %v1814
        %v1816 = vpop.f32.mrb[0].mxu0
        %v1817 = vadd.f32 %v1245, %v1816
        %v1818 = vpop.f32.mrb[0].mxu0
        %v1819 = vadd.f32 %v1241, %v1818
        %v1820 = vpop.f32.mrb[0].mxu0
        %v1821 = vadd.f32 %v1245, %v1820
        %1822 = vmatprep.mubr.bf16.mxu0 %v1113
        %1823 = vmatmul.mubr.bf16.gmra.mrb[0].mxu0 %v1112
        %v1824 = vpop.f32.mrb[0].mxu0
        %v1825 = vadd.f32 %v1241, %v1824
        %v1826 = vpop.f32.mrb[0].mxu0
        %v1827 = vadd.f32 %v1245, %v1826
        %v1828 = vpop.f32.mrb[0].mxu0
        %v1829 = vadd.f32 %v1241, %v1828
        %v1830 = vpop.f32.mrb[0].mxu0
        %v1831 = vadd.f32 %v1245, %v1830
        %1832 = vmatprep.mubr.bf16.mxu0 %v1117
        %1833 = vmatmul.mubr.bf16.gmra.mrb[0].mxu0 %v1116
        %v1834 = vpop.f32.mrb[0].mxu0
        %v1835 = vadd.f32 %v1241, %v1834
        %v1836 = vpop.f32.mrb[0].mxu0
        %v1837 = vadd.f32 %v1245, %v1836
        %v1838 = vpop.f32.mrb[0].mxu0
        %v1839 = vadd.f32 %v1241, %v1838
        %v1840 = vpop.f32.mrb[0].mxu0
        %v1841 = vadd.f32 %v1245, %v1840
        %1842 = vmatprep.mubr.bf16.mxu0 %v1121
        %1843 = vmatmul.mubr.bf16.gmra.mrb[0].mxu0 %v1120
        %v1844 = vpop.f32.mrb[0].mxu0
        %v1845 = vadd.f32 %v1241, %v1844
        %v1846 = vpop.f32.mrb[0].mxu0
        %v1847 = vadd.f32 %v1245, %v1846
        %v1848 = vpop.f32.mrb[0].mxu0
        %v1849 = vadd.f32 %v1241, %v1848
        %v1850 = vpop.f32.mrb[0].mxu0
        %v1851 = vadd.f32 %v1245, %v1850
        %1852 = vmatprep.mubr.bf16.mxu0 %v1125
        %1853 = vmatmul.mubr.bf16.gmra.mrb[0].mxu0 %v1124
        %v1854 = vpop.f32.mrb[0].mxu0
        %v1855 = vadd.f32 %v1241, %v1854
        %v1856 = vpop.f32.mrb[0].mxu0
        %v1857 = vadd.f32 %v1245, %v1856
        %v1858 = vpop.f32.mrb[0].mxu0
        %v1859 = vadd.f32 %v1241, %v1858
        %v1860 = vpop.f32.mrb[0].mxu0
        %v1861 = vadd.f32 %v1245, %v1860
        %1862 = vmatprep.mubr.bf16.mxu0 %v1129
        %1863 = vmatmul.mubr.bf16.gmra.mrb[0].mxu0 %v1128
        %v1864 = vpop.f32.mrb[0].mxu0
        %v1865 = vadd.f32 %v1241, %v1864
        %v1866 = vpop.f32.mrb[0].mxu0
        %v1867 = vadd.f32 %v1245, %v1866
        %v1868 = vpop.f32.mrb[0].mxu0
        %v1869 = vadd.f32 %v1241, %v1868
        %v1870 = vpop.f32.mrb[0].mxu0
        %v1871 = vadd.f32 %v1245, %v1870
        %1872 = vmatprep.mubr.bf16.mxu0 %v1133
        %1873 = vmatmul.mubr.bf16.gmra.mrb[0].mxu0 %v1132
        %v1874 = vpop.f32.mrb[0].mxu0
        %v1875 = vadd.f32 %v1241, %v1874
        %v1876 = vpop.f32.mrb[0].mxu0
        %v1877 = vadd.f32 %v1245, %v1876
        %v1878 = vpop.f32.mrb[0].mxu0
        %v1879 = vpop.f32.mrb[0].mxu0
        %1880 = vdwg.mxu0
        %1881 = vmatprep.subr.bf16.mxu0 %v1623
        %1882 = vmatpush1.bf16.msra.mxu0 %v1622
        %1883 = vmatprep.subr.bf16.mxu0 %v1627
        %1884 = vmatpush1.bf16.msra.mxu0 %v1626
        %1885 = vmatprep.subr.bf16.mxu0 %v1631
        %1886 = vmatpush1.bf16.msra.mxu0 %v1630
        %1887 = vmatprep.subr.bf16.mxu0 %v1635
        %1888 = vmatpush1.bf16.msra.mxu0 %v1634
        %1889 = vmatprep.subr.bf16.mxu0 %v1639
        %1890 = vmatpush1.bf16.msra.mxu0 %v1638
        %1891 = vmatprep.subr.bf16.mxu0 %v1643
        %1892 = vmatpush1.bf16.msra.mxu0 %v1642
        %1893 = vmatprep.subr.bf16.mxu0 %v1647
        %1894 = vmatpush1.bf16.msra.mxu0 %v1646
        %1895 = vmatprep.subr.bf16.mxu0 %v1651
        %1896 = vmatpush1.bf16.msra.mxu0 %v1650
        %1897 = vmatprep.subr.bf16.mxu0 %v1655
        %1898 = vmatpush1.bf16.msra.mxu0 %v1654
        %1899 = vmatprep.subr.bf16.mxu0 0
        %1900 = vmatpush1.bf16.msra.mxu0 0
        %1901 = vmatprep.subr.bf16.mxu0 0
        %1902 = vmatpush1.bf16.msra.mxu0 0
        %1903 = vmatprep.subr.bf16.mxu0 0
        %1904 = vmatpush1.bf16.msra.mxu0 0
        %1905 = vmatprep.subr.bf16.mxu0 0
        %1906 = vmatpush1.bf16.msra.mxu0 0
        %1907 = vmatprep.subr.bf16.mxu0 0
        %1908 = vmatpush1.bf16.msra.mxu0 0
        %1909 = vmatprep.subr.bf16.mxu0 0
        %1910 = vmatpush1.bf16.msra.mxu0 0
        %1911 = vmatprep.subr.bf16.mxu0 0
        %1912 = vmatpush1.bf16.msra.mxu0 0
        %1913 = vmatprep.mubr.bf16.mxu0 %v1760
        %1914 = vmatmul.mubr.bf16.gmra.mrb[0].mxu0 %v1110
        %v1915 = vpop.f32.mrb[0].mxu0
        %v1916 = vadd.f32 %v1815, %v1915
        %v1917 = vpop.f32.mrb[0].mxu0
        %v1918 = vadd.f32 %v1817, %v1917
        %v1919 = vpop.f32.mrb[0].mxu0
        %v1920 = vadd.f32 %v1819, %v1919
        %v1921 = vpop.f32.mrb[0].mxu0
        %v1922 = vadd.f32 %v1821, %v1921
        %1923 = vmatprep.mubr.bf16.mxu0 %v1763
        %1924 = vmatmul.mubr.bf16.gmra.mrb[0].mxu0 %v1114
        %v1925 = vpop.f32.mrb[0].mxu0
        %v1926 = vadd.f32 %v1825, %v1925
        %v1927 = vpop.f32.mrb[0].mxu0
        %v1928 = vadd.f32 %v1827, %v1927
        %v1929 = vpop.f32.mrb[0].mxu0
        %v1930 = vadd.f32 %v1829, %v1929
        %v1931 = vpop.f32.mrb[0].mxu0
        %v1932 = vadd.f32 %v1831, %v1931
        %1933 = vmatprep.mubr.bf16.mxu0 %v1766
        %1934 = vmatmul.mubr.bf16.gmra.mrb[0].mxu0 %v1118
        %v1935 = vpop.f32.mrb[0].mxu0
        %v1936 = vadd.f32 %v1835, %v1935
        %v1937 = vpop.f32.mrb[0].mxu0
        %v1938 = vadd.f32 %v1837, %v1937
        %v1939 = vpop.f32.mrb[0].mxu0
        %v1940 = vadd.f32 %v1839, %v1939
        %v1941 = vpop.f32.mrb[0].mxu0
        %v1942 = vadd.f32 %v1841, %v1941
        %1943 = vmatprep.mubr.bf16.mxu0 %v1769
        %1944 = vmatmul.mubr.bf16.gmra.mrb[0].mxu0 %v1122
        %v1945 = vpop.f32.mrb[0].mxu0
        %v1946 = vadd.f32 %v1845, %v1945
        %v1947 = vpop.f32.mrb[0].mxu0
        %v1948 = vadd.f32 %v1847, %v1947
        %v1949 = vpop.f32.mrb[0].mxu0
        %v1950 = vadd.f32 %v1849, %v1949
        %v1951 = vpop.f32.mrb[0].mxu0
        %v1952 = vadd.f32 %v1851, %v1951
        %1953 = vmatprep.mubr.bf16.mxu0 %v1772
        %1954 = vmatmul.mubr.bf16.gmra.mrb[0].mxu0 %v1126
        %v1955 = vpop.f32.mrb[0].mxu0
        %v1956 = vadd.f32 %v1855, %v1955
        %v1957 = vpop.f32.mrb[0].mxu0
        %v1958 = vadd.f32 %v1857, %v1957
        %v1959 = vpop.f32.mrb[0].mxu0
        %v1960 = vadd.f32 %v1859, %v1959
        %v1961 = vpop.f32.mrb[0].mxu0
        %v1962 = vadd.f32 %v1861, %v1961
        %1963 = vmatprep.mubr.bf16.mxu0 %v1775
        %1964 = vmatmul.mubr.bf16.gmra.mrb[0].mxu0 %v1130
        %v1965 = vpop.f32.mrb[0].mxu0
        %v1966 = vadd.f32 %v1865, %v1965
        %v1967 = vpop.f32.mrb[0].mxu0
        %v1968 = vadd.f32 %v1867, %v1967
        %v1969 = vpop.f32.mrb[0].mxu0
        %v1970 = vadd.f32 %v1869, %v1969
        %v1971 = vpop.f32.mrb[0].mxu0
        %v1972 = vadd.f32 %v1871, %v1971
        %1973 = vmatprep.mubr.bf16.mxu0 %v1778
        %1974 = vmatmul.mubr.bf16.gmra.mrb[0].mxu0 %v1134
        %v1975 = vpop.f32.mrb[0].mxu0
        %v1976 = vadd.f32 %v1875, %v1975
        %v1977 = vpop.f32.mrb[0].mxu0
        %v1978 = vadd.f32 %v1877, %v1977
        %v1979 = vpop.f32.mrb[0].mxu0
        %v1980 = vpop.f32.mrb[0].mxu0
        %1981 = vdwg.mxu0
        %1982 = vmatprep.subr.bf16.mxu0 %v1561
        %1983 = vmatpush1.bf16.msra.mxu0 %v1560
        %1984 = vmatprep.subr.bf16.mxu0 %v1565
        %1985 = vmatpush1.bf16.msra.mxu0 %v1564
        %1986 = vmatprep.subr.bf16.mxu0 %v1569
        %1987 = vmatpush1.bf16.msra.mxu0 %v1568
        %1988 = vmatprep.subr.bf16.mxu0 %v1573
        %1989 = vmatpush1.bf16.msra.mxu0 %v1572
        %1990 = vmatprep.subr.bf16.mxu0 %v1577
        %1991 = vmatpush1.bf16.msra.mxu0 %v1576
        %1992 = vmatprep.subr.bf16.mxu0 %v1581
        %1993 = vmatpush1.bf16.msra.mxu0 %v1580
        %1994 = vmatprep.subr.bf16.mxu0 %v1585
        %1995 = vmatpush1.bf16.msra.mxu0 %v1584
        %1996 = vmatprep.subr.bf16.mxu0 %v1589
        %1997 = vmatpush1.bf16.msra.mxu0 %v1588
        %1998 = vmatprep.subr.bf16.mxu0 %v1593
        %1999 = vmatpush1.bf16.msra.mxu0 %v1592
        %2000 = vmatprep.subr.bf16.mxu0 %v1597
        %2001 = vmatpush1.bf16.msra.mxu0 %v1596
        %2002 = vmatprep.subr.bf16.mxu0 %v1601
        %2003 = vmatpush1.bf16.msra.mxu0 %v1600
        %2004 = vmatprep.subr.bf16.mxu0 %v1605
        %2005 = vmatpush1.bf16.msra.mxu0 %v1604
        %2006 = vmatprep.subr.bf16.mxu0 %v1609
        %2007 = vmatpush1.bf16.msra.mxu0 %v1608
        %2008 = vmatprep.subr.bf16.mxu0 %v1613
        %2009 = vmatpush1.bf16.msra.mxu0 %v1612
        %2010 = vmatprep.subr.bf16.mxu0 %v1617
        %2011 = vmatpush1.bf16.msra.mxu0 %v1616
        %2012 = vmatprep.subr.bf16.mxu0 %v1621
        %2013 = vmatpush1.bf16.msra.mxu0 %v1620
        %2014 = vmatprep.mubr.bf16.mxu0 %v1109
        %2015 = vmatmul.mubr.bf16.gmra.mrb[0].mxu0 %v1108
        %v2016 = vpop.f32.mrb[0].mxu0
        %v2017 = vadd.f32 %v1249, %v2016
        %v2018 = vpop.f32.mrb[0].mxu0
        %v2019 = vadd.f32 %v1253, %v2018
        %v2020 = vpop.f32.mrb[0].mxu0
        %v2021 = vadd.f32 %v1249, %v2020
        %v2022 = vpop.f32.mrb[0].mxu0
        %v2023 = vadd.f32 %v1253, %v2022
        %2024 = vmatprep.mubr.bf16.mxu0 %v1113
        %2025 = vmatmul.mubr.bf16.gmra.mrb[0].mxu0 %v1112
        %v2026 = vpop.f32.mrb[0].mxu0
        %v2027 = vadd.f32 %v1249, %v2026
        %v2028 = vpop.f32.mrb[0].mxu0
        %v2029 = vadd.f32 %v1253, %v2028
        %v2030 = vpop.f32.mrb[0].mxu0
        %v2031 = vadd.f32 %v1249, %v2030
        %v2032 = vpop.f32.mrb[0].mxu0
        %v2033 = vadd.f32 %v1253, %v2032
        %2034 = vmatprep.mubr.bf16.mxu0 %v1117
        %2035 = vmatmul.mubr.bf16.gmra.mrb[0].mxu0 %v1116
        %v2036 = vpop.f32.mrb[0].mxu0
        %v2037 = vadd.f32 %v1249, %v2036
        %v2038 = vpop.f32.mrb[0].mxu0
        %v2039 = vadd.f32 %v1253, %v2038
        %v2040 = vpop.f32.mrb[0].mxu0
        %v2041 = vadd.f32 %v1249, %v2040
        %v2042 = vpop.f32.mrb[0].mxu0
        %v2043 = vadd.f32 %v1253, %v2042
        %2044 = vmatprep.mubr.bf16.mxu0 %v1121
        %2045 = vmatmul.mubr.bf16.gmra.mrb[0].mxu0 %v1120
        %v2046 = vpop.f32.mrb[0].mxu0
        %v2047 = vadd.f32 %v1249, %v2046
        %v2048 = vpop.f32.mrb[0].mxu0
        %v2049 = vadd.f32 %v1253, %v2048
        %v2050 = vpop.f32.mrb[0].mxu0
        %v2051 = vadd.f32 %v1249, %v2050
        %v2052 = vpop.f32.mrb[0].mxu0
        %v2053 = vadd.f32 %v1253, %v2052
        %2054 = vmatprep.mubr.bf16.mxu0 %v1125
        %2055 = vmatmul.mubr.bf16.gmra.mrb[0].mxu0 %v1124
        %v2056 = vpop.f32.mrb[0].mxu0
        %v2057 = vadd.f32 %v1249, %v2056
        %v2058 = vpop.f32.mrb[0].mxu0
        %v2059 = vadd.f32 %v1253, %v2058
        %v2060 = vpop.f32.mrb[0].mxu0
        %v2061 = vadd.f32 %v1249, %v2060
        %v2062 = vpop.f32.mrb[0].mxu0
        %v2063 = vadd.f32 %v1253, %v2062
        %2064 = vmatprep.mubr.bf16.mxu0 %v1129
        %2065 = vmatmul.mubr.bf16.gmra.mrb[0].mxu0 %v1128
        %v2066 = vpop.f32.mrb[0].mxu0
        %v2067 = vadd.f32 %v1249, %v2066
        %v2068 = vpop.f32.mrb[0].mxu0
        %v2069 = vadd.f32 %v1253, %v2068
        %v2070 = vpop.f32.mrb[0].mxu0
        %v2071 = vadd.f32 %v1249, %v2070
        %v2072 = vpop.f32.mrb[0].mxu0
        %v2073 = vadd.f32 %v1253, %v2072
        %2074 = vmatprep.mubr.bf16.mxu0 %v1133
        %2075 = vmatmul.mubr.bf16.gmra.mrb[0].mxu0 %v1132
        %v2076 = vpop.f32.mrb[0].mxu0
        %v2077 = vadd.f32 %v1249, %v2076
        %v2078 = vpop.f32.mrb[0].mxu0
        %v2079 = vadd.f32 %v1253, %v2078
        %v2080 = vpop.f32.mrb[0].mxu0
        %v2081 = vpop.f32.mrb[0].mxu0
        %2082 = vdwg.mxu0
        %2083 = vmatprep.subr.bf16.mxu0 %v1625
        %2084 = vmatpush1.bf16.msra.mxu0 %v1624
        %2085 = vmatprep.subr.bf16.mxu0 %v1629
        %2086 = vmatpush1.bf16.msra.mxu0 %v1628
        %2087 = vmatprep.subr.bf16.mxu0 %v1633
        %2088 = vmatpush1.bf16.msra.mxu0 %v1632
        %2089 = vmatprep.subr.bf16.mxu0 %v1637
        %2090 = vmatpush1.bf16.msra.mxu0 %v1636
        %2091 = vmatprep.subr.bf16.mxu0 %v1641
        %2092 = vmatpush1.bf16.msra.mxu0 %v1640
        %2093 = vmatprep.subr.bf16.mxu0 %v1645
        %2094 = vmatpush1.bf16.msra.mxu0 %v1644
        %2095 = vmatprep.subr.bf16.mxu0 %v1649
        %2096 = vmatpush1.bf16.msra.mxu0 %v1648
        %2097 = vmatprep.subr.bf16.mxu0 %v1653
        %2098 = vmatpush1.bf16.msra.mxu0 %v1652
        %2099 = vmatprep.subr.bf16.mxu0 %v1657
        %2100 = vmatpush1.bf16.msra.mxu0 %v1656
        %2101 = vmatprep.subr.bf16.mxu0 0
        %2102 = vmatpush1.bf16.msra.mxu0 0
        %2103 = vmatprep.subr.bf16.mxu0 0
        %2104 = vmatpush1.bf16.msra.mxu0 0
        %2105 = vmatprep.subr.bf16.mxu0 0
        %2106 = vmatpush1.bf16.msra.mxu0 0
        %2107 = vmatprep.subr.bf16.mxu0 0
        %2108 = vmatpush1.bf16.msra.mxu0 0
        %2109 = vmatprep.subr.bf16.mxu0 0
        %2110 = vmatpush1.bf16.msra.mxu0 0
        %2111 = vmatprep.subr.bf16.mxu0 0
        %2112 = vmatpush1.bf16.msra.mxu0 0
        %2113 = vmatprep.subr.bf16.mxu0 0
        %2114 = vmatpush1.bf16.msra.mxu0 0
        %2115 = vmatprep.mubr.bf16.mxu0 %v1760
        %2116 = vmatmul.mubr.bf16.gmra.mrb[0].mxu0 %v1110
        %v2117 = vpop.f32.mrb[0].mxu0
        %v2118 = vadd.f32 %v2017, %v2117
        %v2119 = vpop.f32.mrb[0].mxu0
        %v2120 = vadd.f32 %v2019, %v2119
        %v2121 = vpop.f32.mrb[0].mxu0
        %v2122 = vadd.f32 %v2021, %v2121
        %v2123 = vpop.f32.mrb[0].mxu0
        %v2124 = vadd.f32 %v2023, %v2123
        %2125 = vmatprep.mubr.bf16.mxu0 %v1763
        %2126 = vmatmul.mubr.bf16.gmra.mrb[0].mxu0 %v1114
        %v2127 = vpop.f32.mrb[0].mxu0
        %v2128 = vadd.f32 %v2027, %v2127
        %v2129 = vpop.f32.mrb[0].mxu0
        %v2130 = vadd.f32 %v2029, %v2129
        %v2131 = vpop.f32.mrb[0].mxu0
        %v2132 = vadd.f32 %v2031, %v2131
        %v2133 = vpop.f32.mrb[0].mxu0
        %v2134 = vadd.f32 %v2033, %v2133
        %2135 = vmatprep.mubr.bf16.mxu0 %v1766
        %2136 = vmatmul.mubr.bf16.gmra.mrb[0].mxu0 %v1118
        %v2137 = vpop.f32.mrb[0].mxu0
        %v2138 = vadd.f32 %v2037, %v2137
        %v2139 = vpop.f32.mrb[0].mxu0
        %v2140 = vadd.f32 %v2039, %v2139
        %v2141 = vpop.f32.mrb[0].mxu0
        %v2142 = vadd.f32 %v2041, %v2141
        %v2143 = vpop.f32.mrb[0].mxu0
        %v2144 = vadd.f32 %v2043, %v2143
        %2145 = vmatprep.mubr.bf16.mxu0 %v1769
        %2146 = vmatmul.mubr.bf16.gmra.mrb[0].mxu0 %v1122
        %v2147 = vpop.f32.mrb[0].mxu0
        %v2148 = vadd.f32 %v2047, %v2147
        %v2149 = vpop.f32.mrb[0].mxu0
        %v2150 = vadd.f32 %v2049, %v2149
        %v2151 = vpop.f32.mrb[0].mxu0
        %v2152 = vadd.f32 %v2051, %v2151
        %v2153 = vpop.f32.mrb[0].mxu0
        %v2154 = vadd.f32 %v2053, %v2153
        %2155 = vmatprep.mubr.bf16.mxu0 %v1772
        %2156 = vmatmul.mubr.bf16.gmra.mrb[0].mxu0 %v1126
        %v2157 = vpop.f32.mrb[0].mxu0
        %v2158 = vadd.f32 %v2057, %v2157
        %v2159 = vpop.f32.mrb[0].mxu0
        %v2160 = vadd.f32 %v2059, %v2159
        %v2161 = vpop.f32.mrb[0].mxu0
        %v2162 = vadd.f32 %v2061, %v2161
        %v2163 = vpop.f32.mrb[0].mxu0
        %v2164 = vadd.f32 %v2063, %v2163
        %2165 = vmatprep.mubr.bf16.mxu0 %v1775
        %2166 = vmatmul.mubr.bf16.gmra.mrb[0].mxu0 %v1130
        %v2167 = vpop.f32.mrb[0].mxu0
        %v2168 = vadd.f32 %v2067, %v2167
        %v2169 = vpop.f32.mrb[0].mxu0
        %v2170 = vadd.f32 %v2069, %v2169
        %v2171 = vpop.f32.mrb[0].mxu0
        %v2172 = vadd.f32 %v2071, %v2171
        %v2173 = vpop.f32.mrb[0].mxu0
        %v2174 = vadd.f32 %v2073, %v2173
        %2175 = vmatprep.mubr.bf16.mxu0 %v1778
        %2176 = vmatmul.mubr.bf16.gmra.mrb[0].mxu0 %v1134
        %v2177 = vpop.f32.mrb[0].mxu0
        %v2178 = vadd.f32 %v2077, %v2177
        %v2179 = vpop.f32.mrb[0].mxu0
        %v2180 = vadd.f32 %v2079, %v2179
        %v2181 = vpop.f32.mrb[0].mxu0
        %v2182 = vpop.f32.mrb[0].mxu0
        %2183 = vdwg.mxu0
        %v2184 = vmax.f32 %v1916, 0.0
        %v2185 = vmax.f32 %v1918, 0.0
        %v2186 = vmax.f32 %v2118, 0.0
        %v2187 = vmax.f32 %v2120, 0.0
        %v2188 = vmax.f32 %v1920, 0.0
        %v2189 = vmax.f32 %v1922, 0.0
        %v2190 = vmax.f32 %v2122, 0.0
        %v2191 = vmax.f32 %v2124, 0.0
        %v2192 = vmax.f32 %v1926, 0.0
        %v2193 = vmax.f32 %v1928, 0.0
        %v2194 = vmax.f32 %v2128, 0.0
        %v2195 = vmax.f32 %v2130, 0.0
        %v2196 = vmax.f32 %v1930, 0.0
        %v2197 = vmax.f32 %v1932, 0.0
        %v2198 = vmax.f32 %v2132, 0.0
        %v2199 = vmax.f32 %v2134, 0.0
        %v2200 = vmax.f32 %v1936, 0.0
        %v2201 = vmax.f32 %v1938, 0.0
        %v2202 = vmax.f32 %v2138, 0.0
        %v2203 = vmax.f32 %v2140, 0.0
        %v2204 = vmax.f32 %v1940, 0.0
        %v2205 = vmax.f32 %v1942, 0.0
        %v2206 = vmax.f32 %v2142, 0.0
        %v2207 = vmax.f32 %v2144, 0.0
        %v2208 = vmax.f32 %v1946, 0.0
        %v2209 = vmax.f32 %v1948, 0.0
        %v2210 = vmax.f32 %v2148, 0.0
        %v2211 = vmax.f32 %v2150, 0.0
        %v2212 = vmax.f32 %v1950, 0.0
        %v2213 = vmax.f32 %v1952, 0.0
        %v2214 = vmax.f32 %v2152, 0.0
        %v2215 = vmax.f32 %v2154, 0.0
        %v2216 = vmax.f32 %v1956, 0.0
        %v2217 = vmax.f32 %v1958, 0.0
        %v2218 = vmax.f32 %v2158, 0.0
        %v2219 = vmax.f32 %v2160, 0.0
        %v2220 = vmax.f32 %v1960, 0.0
        %v2221 = vmax.f32 %v1962, 0.0
        %v2222 = vmax.f32 %v2162, 0.0
        %v2223 = vmax.f32 %v2164, 0.0
        %v2224 = vmax.f32 %v1966, 0.0
        %v2225 = vmax.f32 %v1968, 0.0
        %v2226 = vmax.f32 %v2168, 0.0
        %v2227 = vmax.f32 %v2170, 0.0
        %v2228 = vmax.f32 %v1970, 0.0
        %v2229 = vmax.f32 %v1972, 0.0
        %v2230 = vmax.f32 %v2172, 0.0
        %v2231 = vmax.f32 %v2174, 0.0
        %v2232 = vmax.f32 %v1976, 0.0
        %v2233 = vmax.f32 %v1978, 0.0
        %v2234 = vmax.f32 %v2178, 0.0
        %v2235 = vmax.f32 %v2180, 0.0
        %v2236 = vpack.c.bf16 %v2188, %v2184
        %v2237 = vpack.c.bf16 %v2189, %v2185
        %v2238 = vpack.c.bf16 %v2190, %v2186
        %v2239 = vpack.c.bf16 %v2191, %v2187
        %v2240 = vpack.c.bf16 %v2196, %v2192
        %v2241 = vpack.c.bf16 %v2197, %v2193
        %v2242 = vpack.c.bf16 %v2198, %v2194
        %v2243 = vpack.c.bf16 %v2199, %v2195
        %v2244 = vpack.c.bf16 %v2204, %v2200
        %v2245 = vpack.c.bf16 %v2205, %v2201
        %v2246 = vpack.c.bf16 %v2206, %v2202
        %v2247 = vpack.c.bf16 %v2207, %v2203
        %v2248 = vpack.c.bf16 %v2212, %v2208
        %v2249 = vpack.c.bf16 %v2213, %v2209
        %v2250 = vpack.c.bf16 %v2214, %v2210
        %v2251 = vpack.c.bf16 %v2215, %v2211
        %v2252 = vpack.c.bf16 %v2220, %v2216
        %v2253 = vpack.c.bf16 %v2221, %v2217
        %v2254 = vpack.c.bf16 %v2222, %v2218
        %v2255 = vpack.c.bf16 %v2223, %v2219
        %v2256 = vpack.c.bf16 %v2228, %v2224
        %v2257 = vpack.c.bf16 %v2229, %v2225
        %v2258 = vpack.c.bf16 %v2230, %v2226
        %v2259 = vpack.c.bf16 %v2231, %v2227
        %v2260 = vpack.c.bf16 %v2232, %v2232
        %v2261 = vpack.c.bf16 %v2233, %v2233
        %v2262 = vpack.c.bf16 %v2234, %v2234
        %v2263 = vpack.c.bf16 %v2235, %v2235
        %v2264 = vld [vmem:[#allocation7] sm:$0xff]
        %v2265 = vld [vmem:[#allocation7 + $0x8] sm:$0xff]
        %v2266 = vld [vmem:[#allocation7 + $0x10] sm:$0xff]
        %v2267 = vld [vmem:[#allocation7 + $0x18] sm:$0xff]
        %v2268 = vld [vmem:[#allocation7 + $0x20] sm:$0xff]
        %v2269 = vld [vmem:[#allocation7 + $0x28] sm:$0xff]
        %v2270 = vld [vmem:[#allocation7 + $0x30] sm:$0xff]
        %v2271 = vld [vmem:[#allocation7 + $0x38] sm:$0xff]
        %v2272 = vld [vmem:[#allocation7 + $0x40] sm:$0xff]
        %v2273 = vld [vmem:[#allocation7 + $0x48] sm:$0xff]
        %v2274 = vld [vmem:[#allocation7 + $0x50] sm:$0xff]
        %v2275 = vld [vmem:[#allocation7 + $0x58] sm:$0xff]
        %v2276 = vld [vmem:[#allocation7 + $0x60] sm:$0xff]
        %v2277 = vld [vmem:[#allocation7 + $0x68] sm:$0xff]
        %v2278 = vld [vmem:[#allocation7 + $0x70] sm:$0xff]
        %v2279 = vld [vmem:[#allocation7 + $0x78] sm:$0xff]
        %v2280 = vld [vmem:[#allocation7 + $0x80] sm:$0xff]
        %v2281 = vld [vmem:[#allocation7 + $0x88] sm:$0xff]
        %v2282 = vld [vmem:[#allocation7 + $0x90] sm:$0xff]
        %v2283 = vld [vmem:[#allocation7 + $0x98] sm:$0xff]
        %v2284 = vld [vmem:[#allocation7 + $0xa0] sm:$0xff]
        %v2285 = vld [vmem:[#allocation7 + $0xa8] sm:$0xff]
        %v2286 = vld [vmem:[#allocation7 + $0xb0] sm:$0xff]
        %v2287 = vld [vmem:[#allocation7 + $0xb8] sm:$0xff]
        %v2288 = vld [vmem:[#allocation7 + $0xc0] sm:$0xff]
        %v2289 = vld [vmem:[#allocation7 + $0xc8] sm:$0xff]
        %v2290 = vld [vmem:[#allocation7 + $0xd0] sm:$0xff]
        %v2291 = vld [vmem:[#allocation7 + $0xd8] sm:$0xff]
        %v2292 = vld [vmem:[#allocation7 + $0xe0] sm:$0xff]
        %v2293 = vld [vmem:[#allocation7 + $0xe8] sm:$0xff]
        %v2294 = vld [vmem:[#allocation7 + $0xf0] sm:$0xff]
        %v2295 = vld [vmem:[#allocation7 + $0xf8] sm:$0xff]
        %v2296 = vld [vmem:[#allocation7 + $0x100] sm:$0xff]
        %v2297 = vld [vmem:[#allocation7 + $0x108] sm:$0xff]
        %v2298 = vld [vmem:[#allocation7 + $0x110] sm:$0xff]
        %v2299 = vld [vmem:[#allocation7 + $0x118] sm:$0xff]
        %v2300 = vld [vmem:[#allocation7 + $0x120] sm:$0xff]
        %v2301 = vld [vmem:[#allocation7 + $0x128] sm:$0xff]
        %v2302 = vld [vmem:[#allocation7 + $0x130] sm:$0xff]
        %v2303 = vld [vmem:[#allocation7 + $0x138] sm:$0xff]
        %v2304 = vld [vmem:[#allocation7 + $0x140] sm:$0xff]
        %v2305 = vld [vmem:[#allocation7 + $0x148] sm:$0xff]
        %v2306 = vld [vmem:[#allocation7 + $0x150] sm:$0xff]
        %v2307 = vld [vmem:[#allocation7 + $0x158] sm:$0xff]
        %v2308 = vld [vmem:[#allocation7 + $0x160] sm:$0xff]
        %v2309 = vld [vmem:[#allocation7 + $0x168] sm:$0xff]
        %v2310 = vld [vmem:[#allocation7 + $0x170] sm:$0xff]
        %v2311 = vld [vmem:[#allocation7 + $0x178] sm:$0xff]
        %v2312 = vld [vmem:[#allocation7 + $0x180] sm:$0xff]
        %v2313 = vld [vmem:[#allocation7 + $0x188] sm:$0xff]
        %v2314 = vld [vmem:[#allocation7 + $0x190] sm:$0xff]
        %v2315 = vld [vmem:[#allocation7 + $0x198] sm:$0xff]
        %v2316 = vld [vmem:[#allocation7 + $0x1a0] sm:$0xff]
        %v2317 = vld [vmem:[#allocation7 + $0x1a8] sm:$0xff]
        %v2318 = vld [vmem:[#allocation7 + $0x1b0] sm:$0xff]
        %v2319 = vld [vmem:[#allocation7 + $0x1b8] sm:$0xff]
        %v2320 = vld [vmem:[#allocation7 + $0x1c0] sm:$0xff]
        %v2321 = vld [vmem:[#allocation7 + $0x1c8] sm:$0xff]
        %v2322 = vld [vmem:[#allocation7 + $0x1d0] sm:$0xff]
        %v2323 = vld [vmem:[#allocation7 + $0x1d8] sm:$0xff]
        %v2324 = vld [vmem:[#allocation7 + $0x1e0] sm:$0xff]
        %v2325 = vld [vmem:[#allocation7 + $0x1e8] sm:$0xff]
        %v2326 = vld [vmem:[#allocation7 + $0x1f0] sm:$0xff]
        %v2327 = vld [vmem:[#allocation7 + $0x1f8] sm:$0xff]
        %v2328 = vld [vmem:[#allocation7 + $0x200] sm:$0xff]
        %v2329 = vld [vmem:[#allocation7 + $0x208] sm:$0xff]
        %v2330 = vld [vmem:[#allocation7 + $0x210] sm:$0xff]
        %v2331 = vld [vmem:[#allocation7 + $0x218] sm:$0xff]
        %v2332 = vld [vmem:[#allocation7 + $0x220] sm:$0xff]
        %v2333 = vld [vmem:[#allocation7 + $0x228] sm:$0xff]
        %v2334 = vld [vmem:[#allocation7 + $0x230] sm:$0xff]
        %v2335 = vld [vmem:[#allocation7 + $0x238] sm:$0xff]
        %v2336 = vld [vmem:[#allocation7 + $0x240] sm:$0xff]
        %v2337 = vld [vmem:[#allocation7 + $0x248] sm:$0xff]
        %v2338 = vld [vmem:[#allocation7 + $0x250] sm:$0xff]
        %v2339 = vld [vmem:[#allocation7 + $0x258] sm:$0xff]
        %v2340 = vld [vmem:[#allocation7 + $0x260] sm:$0xff]
        %v2341 = vld [vmem:[#allocation7 + $0x268] sm:$0xff]
        %v2342 = vld [vmem:[#allocation7 + $0x270] sm:$0xff]
        %v2343 = vld [vmem:[#allocation7 + $0x278] sm:$0xff]
        %v2344 = vld [vmem:[#allocation7 + $0x280] sm:$0xff]
        %v2345 = vld [vmem:[#allocation7 + $0x288] sm:$0xff]
        %v2346 = vld [vmem:[#allocation7 + $0x290] sm:$0xff]
        %v2347 = vld [vmem:[#allocation7 + $0x298] sm:$0xff]
        %v2348 = vld [vmem:[#allocation7 + $0x2a0] sm:$0xff]
        %v2349 = vld [vmem:[#allocation7 + $0x2a8] sm:$0xff]
        %v2350 = vld [vmem:[#allocation7 + $0x2b0] sm:$0xff]
        %v2351 = vld [vmem:[#allocation7 + $0x2b8] sm:$0xff]
        %v2352 = vld [vmem:[#allocation7 + $0x2c0] sm:$0xff]
        %v2353 = vld [vmem:[#allocation7 + $0x2c8] sm:$0xff]
        %v2354 = vld [vmem:[#allocation7 + $0x2d0] sm:$0xff]
        %v2355 = vld [vmem:[#allocation7 + $0x2d8] sm:$0xff]
        %v2356 = vld [vmem:[#allocation7 + $0x2e0] sm:$0xff]
        %v2357 = vld [vmem:[#allocation7 + $0x2e8] sm:$0xff]
        %v2358 = vld [vmem:[#allocation7 + $0x2f0] sm:$0xff]
        %v2359 = vld [vmem:[#allocation7 + $0x2f8] sm:$0xff]
        %v2360 = vld [vmem:[#allocation7 + $0x300] sm:$0xff]
        %v2361 = vld [vmem:[#allocation7 + $0x308] sm:$0xff]
        %v2362 = vld [vmem:[#allocation7 + $0x310] sm:$0xff]
        %v2363 = vld [vmem:[#allocation7 + $0x318] sm:$0xff]
        %v2364 = vld [vmem:[#allocation9] sm:$0xf]
        %v2366 = vlaneseq
        %v2367 = vshrl.u32 %v2366, 7
        %v2368 = vsub.s32 0, %v2367
        %v2369 = vrot.slane %v2364, %v2368
        %v2370 = vlaneseq
        %v2371 = vshrl.u32 %v2370, 7
        %v2372 = vsub.s32 1, %v2371
        %v2373 = vrot.slane %v2364, %v2372
        %v2374 = vlaneseq
        %v2375 = vshrl.u32 %v2374, 7
        %v2376 = vsub.s32 2, %v2375
        %v2377 = vrot.slane %v2364, %v2376
        %v2378 = vlaneseq
        %v2379 = vshrl.u32 %v2378, 7
        %v2380 = vsub.s32 3, %v2379
        %v2381 = vrot.slane %v2364, %v2380
        %v2486 = vunpack.c.l.b16 %v2264
        %v2487 = vunpack.c.h.b16 %v2264
        %v2488 = vunpack.c.l.b16 %v2265
        %v2489 = vunpack.c.h.b16 %v2265
        %v2490 = vunpack.c.l.b16 %v2266
        %v2491 = vunpack.c.h.b16 %v2266
        %v2492 = vunpack.c.l.b16 %v2267
        %v2493 = vunpack.c.h.b16 %v2267
        %v2494 = vunpack.c.l.b16 %v2268
        %v2495 = vunpack.c.h.b16 %v2268
        %v2496 = vunpack.c.l.b16 %v2269
        %v2497 = vunpack.c.h.b16 %v2269
        %v2498 = vunpack.c.l.b16 %v2270
        %v2499 = vunpack.c.h.b16 %v2270
        %v2500 = vunpack.c.l.b16 %v2271
        %v2501 = vunpack.c.h.b16 %v2271
        %v2502 = vunpack.c.l.b16 %v2272
        %v2503 = vunpack.c.h.b16 %v2272
        %v2504 = vunpack.c.l.b16 %v2273
        %v2505 = vunpack.c.h.b16 %v2273
        %v2506 = vunpack.c.l.b16 %v2274
        %v2507 = vunpack.c.h.b16 %v2274
        %v2508 = vunpack.c.l.b16 %v2275
        %v2509 = vunpack.c.h.b16 %v2275
        %v2510 = vunpack.c.l.b16 %v2276
        %v2511 = vunpack.c.h.b16 %v2276
        %v2512 = vunpack.c.l.b16 %v2277
        %v2513 = vunpack.c.h.b16 %v2277
        %v2514 = vunpack.c.l.b16 %v2278
        %v2515 = vunpack.c.h.b16 %v2278
        %v2516 = vunpack.c.l.b16 %v2279
        %v2517 = vunpack.c.h.b16 %v2279
        %v2518 = vunpack.c.l.b16 %v2280
        %v2519 = vunpack.c.h.b16 %v2280
        %v2520 = vunpack.c.l.b16 %v2281
        %v2521 = vunpack.c.h.b16 %v2281
        %v2522 = vunpack.c.l.b16 %v2282
        %v2523 = vunpack.c.h.b16 %v2282
        %v2524 = vunpack.c.l.b16 %v2283
        %v2525 = vunpack.c.h.b16 %v2283
        %v2526 = vunpack.c.l.b16 %v2284
        %v2527 = vunpack.c.h.b16 %v2284
        %v2528 = vunpack.c.l.b16 %v2285
        %v2529 = vunpack.c.h.b16 %v2285
        %v2530 = vunpack.c.l.b16 %v2286
        %v2531 = vunpack.c.h.b16 %v2286
        %v2532 = vunpack.c.l.b16 %v2287
        %v2533 = vunpack.c.h.b16 %v2287
        %v2534 = vunpack.c.l.b16 %v2288
        %v2535 = vunpack.c.h.b16 %v2288
        %v2536 = vunpack.c.l.b16 %v2289
        %v2537 = vunpack.c.h.b16 %v2289
        %v2538 = vunpack.c.l.b16 %v2290
        %v2539 = vunpack.c.h.b16 %v2290
        %v2540 = vunpack.c.l.b16 %v2291
        %v2541 = vunpack.c.h.b16 %v2291
        %v2542 = vunpack.c.l.b16 %v2292
        %v2543 = vunpack.c.h.b16 %v2292
        %v2544 = vunpack.c.l.b16 %v2293
        %v2545 = vunpack.c.h.b16 %v2293
        %v2546 = vunpack.c.l.b16 %v2294
        %v2547 = vunpack.c.h.b16 %v2294
        %v2548 = vunpack.c.l.b16 %v2295
        %v2549 = vunpack.c.h.b16 %v2295
        %v2550 = vunpack.c.l.b16 %v2296
        %v2551 = vunpack.c.h.b16 %v2296
        %v2552 = vunpack.c.l.b16 %v2297
        %v2553 = vunpack.c.h.b16 %v2297
        %v2554 = vunpack.c.l.b16 %v2298
        %v2555 = vunpack.c.h.b16 %v2298
        %v2556 = vunpack.c.l.b16 %v2299
        %v2557 = vunpack.c.h.b16 %v2299
        %v2558 = vunpack.c.l.b16 %v2300
        %v2559 = vunpack.c.h.b16 %v2300
        %v2560 = vunpack.c.l.b16 %v2301
        %v2561 = vunpack.c.h.b16 %v2301
        %v2562 = vunpack.c.l.b16 %v2302
        %v2563 = vunpack.c.h.b16 %v2302
        %v2564 = vunpack.c.l.b16 %v2303
        %v2565 = vunpack.c.h.b16 %v2303
        %v2566 = vunpack.c.l.b16 %v2304
        %v2567 = vunpack.c.h.b16 %v2304
        %v2568 = vunpack.c.l.b16 %v2305
        %v2569 = vunpack.c.h.b16 %v2305
        %v2570 = vunpack.c.l.b16 %v2306
        %v2571 = vunpack.c.h.b16 %v2306
        %v2572 = vunpack.c.l.b16 %v2307
        %v2573 = vunpack.c.h.b16 %v2307
        %v2574 = vunpack.c.l.b16 %v2308
        %v2575 = vunpack.c.h.b16 %v2308
        %v2576 = vunpack.c.l.b16 %v2309
        %v2577 = vunpack.c.h.b16 %v2309
        %v2578 = vunpack.c.l.b16 %v2310
        %v2579 = vunpack.c.h.b16 %v2310
        %v2580 = vunpack.c.l.b16 %v2311
        %v2581 = vunpack.c.h.b16 %v2311
        %v2582 = vunpack.c.l.b16 %v2312
        %v2583 = vunpack.c.h.b16 %v2312
        %v2584 = vunpack.c.l.b16 %v2313
        %v2585 = vunpack.c.h.b16 %v2313
        %v2586 = vunpack.c.l.b16 %v2314
        %v2587 = vunpack.c.h.b16 %v2314
        %v2588 = vunpack.c.l.b16 %v2315
        %v2589 = vunpack.c.h.b16 %v2315
        %v2590 = vunpack.c.l.b16 %v2316
        %v2591 = vunpack.c.h.b16 %v2316
        %v2592 = vunpack.c.l.b16 %v2317
        %v2593 = vunpack.c.h.b16 %v2317
        %v2594 = vunpack.c.l.b16 %v2318
        %v2595 = vunpack.c.h.b16 %v2318
        %v2596 = vunpack.c.l.b16 %v2319
        %v2597 = vunpack.c.h.b16 %v2319
        %v2598 = vunpack.c.l.b16 %v2320
        %v2599 = vunpack.c.h.b16 %v2320
        %v2600 = vunpack.c.l.b16 %v2321
        %v2601 = vunpack.c.h.b16 %v2321
        %v2602 = vunpack.c.l.b16 %v2322
        %v2603 = vunpack.c.h.b16 %v2322
        %v2604 = vunpack.c.l.b16 %v2323
        %v2605 = vunpack.c.h.b16 %v2323
        %v2606 = vunpack.c.l.b16 %v2324
        %v2607 = vunpack.c.h.b16 %v2324
        %v2608 = vunpack.c.l.b16 %v2325
        %v2609 = vunpack.c.h.b16 %v2325
        %v2610 = vunpack.c.l.b16 %v2326
        %v2611 = vunpack.c.h.b16 %v2326
        %v2612 = vunpack.c.l.b16 %v2327
        %v2613 = vunpack.c.h.b16 %v2327
        %v2614 = vunpack.c.l.b16 %v2328
        %v2615 = vunpack.c.h.b16 %v2328
        %v2616 = vunpack.c.l.b16 %v2329
        %v2617 = vunpack.c.h.b16 %v2329
        %v2618 = vunpack.c.l.b16 %v2330
        %v2619 = vunpack.c.h.b16 %v2330
        %v2620 = vunpack.c.l.b16 %v2331
        %v2621 = vunpack.c.h.b16 %v2331
        %v2622 = vunpack.c.l.b16 %v2332
        %v2623 = vunpack.c.h.b16 %v2332
        %v2624 = vunpack.c.l.b16 %v2333
        %v2625 = vunpack.c.h.b16 %v2333
        %v2626 = vunpack.c.l.b16 %v2334
        %v2627 = vunpack.c.h.b16 %v2334
        %v2628 = vunpack.c.l.b16 %v2335
        %v2629 = vunpack.c.h.b16 %v2335
        %v2630 = vunpack.c.l.b16 %v2336
        %v2631 = vunpack.c.h.b16 %v2336
        %v2632 = vunpack.c.l.b16 %v2337
        %v2633 = vunpack.c.h.b16 %v2337
        %v2634 = vunpack.c.l.b16 %v2338
        %v2635 = vunpack.c.h.b16 %v2338
        %v2636 = vunpack.c.l.b16 %v2339
        %v2637 = vunpack.c.h.b16 %v2339
        %v2638 = vunpack.c.l.b16 %v2340
        %v2639 = vunpack.c.h.b16 %v2340
        %v2640 = vunpack.c.l.b16 %v2341
        %v2641 = vunpack.c.h.b16 %v2341
        %v2642 = vunpack.c.l.b16 %v2342
        %v2643 = vunpack.c.h.b16 %v2342
        %v2644 = vunpack.c.l.b16 %v2343
        %v2645 = vunpack.c.h.b16 %v2343
        %v2646 = vunpack.c.l.b16 %v2344
        %v2647 = vunpack.c.h.b16 %v2344
        %v2648 = vunpack.c.l.b16 %v2345
        %v2649 = vunpack.c.h.b16 %v2345
        %v2650 = vunpack.c.l.b16 %v2346
        %v2651 = vunpack.c.h.b16 %v2346
        %v2652 = vunpack.c.l.b16 %v2347
        %v2653 = vunpack.c.h.b16 %v2347
        %v2654 = vunpack.c.l.b16 %v2348
        %v2655 = vunpack.c.h.b16 %v2348
        %v2656 = vunpack.c.l.b16 %v2349
        %v2657 = vunpack.c.h.b16 %v2349
        %v2658 = vunpack.c.l.b16 %v2350
        %v2659 = vunpack.c.h.b16 %v2350
        %v2660 = vunpack.c.l.b16 %v2351
        %v2661 = vunpack.c.h.b16 %v2351
        %v2662 = vunpack.c.l.b16 %v2352
        %v2663 = vunpack.c.h.b16 %v2352
        %v2664 = vunpack.c.l.b16 %v2353
        %v2665 = vunpack.c.h.b16 %v2353
        %v2666 = vunpack.c.l.b16 %v2354
        %v2667 = vunpack.c.h.b16 %v2354
        %v2668 = vunpack.c.l.b16 %v2355
        %v2669 = vunpack.c.h.b16 %v2355
        %v2670 = vunpack.c.l.b16 %v2356
        %v2671 = vunpack.c.h.b16 %v2356
        %v2672 = vunpack.c.l.b16 %v2357
        %v2673 = vunpack.c.h.b16 %v2357
        %v2674 = vunpack.c.l.b16 %v2358
        %v2675 = vunpack.c.h.b16 %v2358
        %v2676 = vunpack.c.l.b16 %v2359
        %v2677 = vunpack.c.h.b16 %v2359
        %v2678 = vunpack.c.l.b16 %v2360
        %v2679 = vunpack.c.h.b16 %v2360
        %v2680 = vunpack.c.l.b16 %v2361
        %v2681 = vunpack.c.h.b16 %v2361
        %v2682 = vunpack.c.l.b16 %v2362
        %v2683 = vunpack.c.h.b16 %v2362
        %v2684 = vunpack.c.l.b16 %v2363
        %v2685 = vunpack.c.h.b16 %v2363
        %v2686 = vpack.c.b16 %v2490, %v2486
        %v2687 = vpack.c.b16 %v2491, %v2487
        %v2688 = vpack.c.b16 %v2492, %v2488
        %v2689 = vpack.c.b16 %v2493, %v2489
        %v2690 = vpack.c.b16 %v2498, %v2494
        %v2691 = vpack.c.b16 %v2499, %v2495
        %v2692 = vpack.c.b16 %v2500, %v2496
        %v2693 = vpack.c.b16 %v2501, %v2497
        %v2694 = vpack.c.b16 %v2506, %v2502
        %v2695 = vpack.c.b16 %v2507, %v2503
        %v2696 = vpack.c.b16 %v2508, %v2504
        %v2697 = vpack.c.b16 %v2509, %v2505
        %v2698 = vpack.c.b16 %v2514, %v2510
        %v2699 = vpack.c.b16 %v2515, %v2511
        %v2700 = vpack.c.b16 %v2516, %v2512
        %v2701 = vpack.c.b16 %v2517, %v2513
        %v2702 = vpack.c.b16 %v2522, %v2518
        %v2703 = vpack.c.b16 %v2523, %v2519
        %v2704 = vpack.c.b16 %v2524, %v2520
        %v2705 = vpack.c.b16 %v2525, %v2521
        %v2706 = vpack.c.b16 %v2530, %v2526
        %v2707 = vpack.c.b16 %v2531, %v2527
        %v2708 = vpack.c.b16 %v2532, %v2528
        %v2709 = vpack.c.b16 %v2533, %v2529
        %v2710 = vpack.c.b16 %v2538, %v2534
        %v2711 = vpack.c.b16 %v2539, %v2535
        %v2712 = vpack.c.b16 %v2540, %v2536
        %v2713 = vpack.c.b16 %v2541, %v2537
        %v2714 = vpack.c.b16 %v2546, %v2542
        %v2715 = vpack.c.b16 %v2547, %v2543
        %v2716 = vpack.c.b16 %v2548, %v2544
        %v2717 = vpack.c.b16 %v2549, %v2545
        %v2718 = vpack.c.b16 %v2554, %v2550
        %v2719 = vpack.c.b16 %v2555, %v2551
        %v2720 = vpack.c.b16 %v2556, %v2552
        %v2721 = vpack.c.b16 %v2557, %v2553
        %v2722 = vpack.c.b16 %v2562, %v2558
        %v2723 = vpack.c.b16 %v2563, %v2559
        %v2724 = vpack.c.b16 %v2564, %v2560
        %v2725 = vpack.c.b16 %v2565, %v2561
        %v2726 = vpack.c.b16 %v2570, %v2566
        %v2727 = vpack.c.b16 %v2571, %v2567
        %v2728 = vpack.c.b16 %v2572, %v2568
        %v2729 = vpack.c.b16 %v2573, %v2569
        %v2730 = vpack.c.b16 %v2578, %v2574
        %v2731 = vpack.c.b16 %v2579, %v2575
        %v2732 = vpack.c.b16 %v2580, %v2576
        %v2733 = vpack.c.b16 %v2581, %v2577
        %v2734 = vpack.c.b16 %v2586, %v2582
        %v2735 = vpack.c.b16 %v2587, %v2583
        %v2736 = vpack.c.b16 %v2588, %v2584
        %v2737 = vpack.c.b16 %v2589, %v2585
        %v2738 = vpack.c.b16 %v2594, %v2590
        %v2739 = vpack.c.b16 %v2595, %v2591
        %v2740 = vpack.c.b16 %v2596, %v2592
        %v2741 = vpack.c.b16 %v2597, %v2593
        %v2742 = vpack.c.b16 %v2602, %v2598
        %v2743 = vpack.c.b16 %v2603, %v2599
        %v2744 = vpack.c.b16 %v2604, %v2600
        %v2745 = vpack.c.b16 %v2605, %v2601
        %v2746 = vpack.c.b16 %v2610, %v2606
        %v2747 = vpack.c.b16 %v2611, %v2607
        %v2748 = vpack.c.b16 %v2612, %v2608
        %v2749 = vpack.c.b16 %v2613, %v2609
        %v2750 = vpack.c.b16 %v2618, %v2614
        %v2751 = vpack.c.b16 %v2619, %v2615
        %v2752 = vpack.c.b16 %v2620, %v2616
        %v2753 = vpack.c.b16 %v2621, %v2617
        %v2754 = vpack.c.b16 %v2626, %v2622
        %v2755 = vpack.c.b16 %v2627, %v2623
        %v2756 = vpack.c.b16 %v2628, %v2624
        %v2757 = vpack.c.b16 %v2629, %v2625
        %v2758 = vpack.c.b16 %v2634, %v2630
        %v2759 = vpack.c.b16 %v2635, %v2631
        %v2760 = vpack.c.b16 %v2636, %v2632
        %v2761 = vpack.c.b16 %v2637, %v2633
        %v2762 = vpack.c.b16 %v2642, %v2638
        %v2763 = vpack.c.b16 %v2643, %v2639
        %v2764 = vpack.c.b16 %v2644, %v2640
        %v2765 = vpack.c.b16 %v2645, %v2641
        %v2766 = vpack.c.b16 %v2650, %v2646
        %v2767 = vpack.c.b16 %v2651, %v2647
        %v2768 = vpack.c.b16 %v2652, %v2648
        %v2769 = vpack.c.b16 %v2653, %v2649
        %v2770 = vpack.c.b16 %v2658, %v2654
        %v2771 = vpack.c.b16 %v2659, %v2655
        %v2772 = vpack.c.b16 %v2660, %v2656
        %v2773 = vpack.c.b16 %v2661, %v2657
        %v2774 = vpack.c.b16 %v2666, %v2662
        %v2775 = vpack.c.b16 %v2667, %v2663
        %v2776 = vpack.c.b16 %v2668, %v2664
        %v2777 = vpack.c.b16 %v2669, %v2665
        %v2778 = vpack.c.b16 %v2674, %v2670
        %v2779 = vpack.c.b16 %v2675, %v2671
        %v2780 = vpack.c.b16 %v2676, %v2672
        %v2781 = vpack.c.b16 %v2677, %v2673
        %v2782 = vpack.c.b16 %v2682, %v2678
        %v2783 = vpack.c.b16 %v2683, %v2679
        %v2784 = vpack.c.b16 %v2684, %v2680
        %v2785 = vpack.c.b16 %v2685, %v2681
        %v2887 = vsel %vm1758, %v2239, 0
        %v2890 = vsel %vm1758, %v2243, 0
        %v2893 = vsel %vm1758, %v2247, 0
        %v2896 = vsel %vm1758, %v2251, 0
        %v2899 = vsel %vm1758, %v2255, 0
        %v2902 = vsel %vm1758, %v2259, 0
        %v2905 = vsel %vm1758, %v2263, 0
        %2907 = vmatprep.subr.bf16.mxu0 %v2687
        %2908 = vmatpush1.bf16.msra.mxu0 %v2686
        %2909 = vmatprep.subr.bf16.mxu0 %v2691
        %2910 = vmatpush1.bf16.msra.mxu0 %v2690
        %2911 = vmatprep.subr.bf16.mxu0 %v2695
        %2912 = vmatpush1.bf16.msra.mxu0 %v2694
        %2913 = vmatprep.subr.bf16.mxu0 %v2699
        %2914 = vmatpush1.bf16.msra.mxu0 %v2698
        %2915 = vmatprep.subr.bf16.mxu0 %v2703
        %2916 = vmatpush1.bf16.msra.mxu0 %v2702
        %2917 = vmatprep.subr.bf16.mxu0 %v2707
        %2918 = vmatpush1.bf16.msra.mxu0 %v2706
        %2919 = vmatprep.subr.bf16.mxu0 %v2711
        %2920 = vmatpush1.bf16.msra.mxu0 %v2710
        %2921 = vmatprep.subr.bf16.mxu0 %v2715
        %2922 = vmatpush1.bf16.msra.mxu0 %v2714
        %2923 = vmatprep.subr.bf16.mxu0 %v2719
        %2924 = vmatpush1.bf16.msra.mxu0 %v2718
        %2925 = vmatprep.subr.bf16.mxu0 %v2723
        %2926 = vmatpush1.bf16.msra.mxu0 %v2722
        %2927 = vmatprep.subr.bf16.mxu0 %v2727
        %2928 = vmatpush1.bf16.msra.mxu0 %v2726
        %2929 = vmatprep.subr.bf16.mxu0 %v2731
        %2930 = vmatpush1.bf16.msra.mxu0 %v2730
        %2931 = vmatprep.subr.bf16.mxu0 %v2735
        %2932 = vmatpush1.bf16.msra.mxu0 %v2734
        %2933 = vmatprep.subr.bf16.mxu0 %v2739
        %2934 = vmatpush1.bf16.msra.mxu0 %v2738
        %2935 = vmatprep.subr.bf16.mxu0 %v2743
        %2936 = vmatpush1.bf16.msra.mxu0 %v2742
        %2937 = vmatprep.subr.bf16.mxu0 %v2747
        %2938 = vmatpush1.bf16.msra.mxu0 %v2746
        %2939 = vmatprep.mubr.bf16.mxu0 %v2237
        %2940 = vmatmul.mubr.bf16.gmra.mrb[0].mxu0 %v2236
        %v2941 = vpop.f32.mrb[0].mxu0
        %v2942 = vadd.f32 %v2369, %v2941
        %v2943 = vpop.f32.mrb[0].mxu0
        %v2944 = vadd.f32 %v2373, %v2943
        %v2945 = vpop.f32.mrb[0].mxu0
        %v2946 = vadd.f32 %v2369, %v2945
        %v2947 = vpop.f32.mrb[0].mxu0
        %v2948 = vadd.f32 %v2373, %v2947
        %2949 = vmatprep.mubr.bf16.mxu0 %v2241
        %2950 = vmatmul.mubr.bf16.gmra.mrb[0].mxu0 %v2240
        %v2951 = vpop.f32.mrb[0].mxu0
        %v2952 = vadd.f32 %v2369, %v2951
        %v2953 = vpop.f32.mrb[0].mxu0
        %v2954 = vadd.f32 %v2373, %v2953
        %v2955 = vpop.f32.mrb[0].mxu0
        %v2956 = vadd.f32 %v2369, %v2955
        %v2957 = vpop.f32.mrb[0].mxu0
        %v2958 = vadd.f32 %v2373, %v2957
        %2959 = vmatprep.mubr.bf16.mxu0 %v2245
        %2960 = vmatmul.mubr.bf16.gmra.mrb[0].mxu0 %v2244
        %v2961 = vpop.f32.mrb[0].mxu0
        %v2962 = vadd.f32 %v2369, %v2961
        %v2963 = vpop.f32.mrb[0].mxu0
        %v2964 = vadd.f32 %v2373, %v2963
        %v2965 = vpop.f32.mrb[0].mxu0
        %v2966 = vadd.f32 %v2369, %v2965
        %v2967 = vpop.f32.mrb[0].mxu0
        %v2968 = vadd.f32 %v2373, %v2967
        %2969 = vmatprep.mubr.bf16.mxu0 %v2249
        %2970 = vmatmul.mubr.bf16.gmra.mrb[0].mxu0 %v2248
        %v2971 = vpop.f32.mrb[0].mxu0
        %v2972 = vadd.f32 %v2369, %v2971
        %v2973 = vpop.f32.mrb[0].mxu0
        %v2974 = vadd.f32 %v2373, %v2973
        %v2975 = vpop.f32.mrb[0].mxu0
        %v2976 = vadd.f32 %v2369, %v2975
        %v2977 = vpop.f32.mrb[0].mxu0
        %v2978 = vadd.f32 %v2373, %v2977
        %2979 = vmatprep.mubr.bf16.mxu0 %v2253
        %2980 = vmatmul.mubr.bf16.gmra.mrb[0].mxu0 %v2252
        %v2981 = vpop.f32.mrb[0].mxu0
        %v2982 = vadd.f32 %v2369, %v2981
        %v2983 = vpop.f32.mrb[0].mxu0
        %v2984 = vadd.f32 %v2373, %v2983
        %v2985 = vpop.f32.mrb[0].mxu0
        %v2986 = vadd.f32 %v2369, %v2985
        %v2987 = vpop.f32.mrb[0].mxu0
        %v2988 = vadd.f32 %v2373, %v2987
        %2989 = vmatprep.mubr.bf16.mxu0 %v2257
        %2990 = vmatmul.mubr.bf16.gmra.mrb[0].mxu0 %v2256
        %v2991 = vpop.f32.mrb[0].mxu0
        %v2992 = vadd.f32 %v2369, %v2991
        %v2993 = vpop.f32.mrb[0].mxu0
        %v2994 = vadd.f32 %v2373, %v2993
        %v2995 = vpop.f32.mrb[0].mxu0
        %v2996 = vadd.f32 %v2369, %v2995
        %v2997 = vpop.f32.mrb[0].mxu0
        %v2998 = vadd.f32 %v2373, %v2997
        %2999 = vmatprep.mubr.bf16.mxu0 %v2261
        %3000 = vmatmul.mubr.bf16.gmra.mrb[0].mxu0 %v2260
        %v3001 = vpop.f32.mrb[0].mxu0
        %v3002 = vadd.f32 %v2369, %v3001
        %v3003 = vpop.f32.mrb[0].mxu0
        %v3004 = vadd.f32 %v2373, %v3003
        %v3005 = vpop.f32.mrb[0].mxu0
        %v3006 = vpop.f32.mrb[0].mxu0
        %3007 = vdwg.mxu0
        %3008 = vmatprep.subr.bf16.mxu0 %v2751
        %3009 = vmatpush1.bf16.msra.mxu0 %v2750
        %3010 = vmatprep.subr.bf16.mxu0 %v2755
        %3011 = vmatpush1.bf16.msra.mxu0 %v2754
        %3012 = vmatprep.subr.bf16.mxu0 %v2759
        %3013 = vmatpush1.bf16.msra.mxu0 %v2758
        %3014 = vmatprep.subr.bf16.mxu0 %v2763
        %3015 = vmatpush1.bf16.msra.mxu0 %v2762
        %3016 = vmatprep.subr.bf16.mxu0 %v2767
        %3017 = vmatpush1.bf16.msra.mxu0 %v2766
        %3018 = vmatprep.subr.bf16.mxu0 %v2771
        %3019 = vmatpush1.bf16.msra.mxu0 %v2770
        %3020 = vmatprep.subr.bf16.mxu0 %v2775
        %3021 = vmatpush1.bf16.msra.mxu0 %v2774
        %3022 = vmatprep.subr.bf16.mxu0 %v2779
        %3023 = vmatpush1.bf16.msra.mxu0 %v2778
        %3024 = vmatprep.subr.bf16.mxu0 %v2783
        %3025 = vmatpush1.bf16.msra.mxu0 %v2782
        %3026 = vmatprep.subr.bf16.mxu0 0
        %3027 = vmatpush1.bf16.msra.mxu0 0
        %3028 = vmatprep.subr.bf16.mxu0 0
        %3029 = vmatpush1.bf16.msra.mxu0 0
        %3030 = vmatprep.subr.bf16.mxu0 0
        %3031 = vmatpush1.bf16.msra.mxu0 0
        %3032 = vmatprep.subr.bf16.mxu0 0
        %3033 = vmatpush1.bf16.msra.mxu0 0
        %3034 = vmatprep.subr.bf16.mxu0 0
        %3035 = vmatpush1.bf16.msra.mxu0 0
        %3036 = vmatprep.subr.bf16.mxu0 0
        %3037 = vmatpush1.bf16.msra.mxu0 0
        %3038 = vmatprep.subr.bf16.mxu0 0
        %3039 = vmatpush1.bf16.msra.mxu0 0
        %3040 = vmatprep.mubr.bf16.mxu0 %v2887
        %3041 = vmatmul.mubr.bf16.gmra.mrb[0].mxu0 %v2238
        %v3042 = vpop.f32.mrb[0].mxu0
        %v3043 = vadd.f32 %v2942, %v3042
        %v3044 = vpop.f32.mrb[0].mxu0
        %v3045 = vadd.f32 %v2944, %v3044
        %v3046 = vpop.f32.mrb[0].mxu0
        %v3047 = vadd.f32 %v2946, %v3046
        %v3048 = vpop.f32.mrb[0].mxu0
        %v3049 = vadd.f32 %v2948, %v3048
        %3050 = vmatprep.mubr.bf16.mxu0 %v2890
        %3051 = vmatmul.mubr.bf16.gmra.mrb[0].mxu0 %v2242
        %v3052 = vpop.f32.mrb[0].mxu0
        %v3053 = vadd.f32 %v2952, %v3052
        %v3054 = vpop.f32.mrb[0].mxu0
        %v3055 = vadd.f32 %v2954, %v3054
        %v3056 = vpop.f32.mrb[0].mxu0
        %v3057 = vadd.f32 %v2956, %v3056
        %v3058 = vpop.f32.mrb[0].mxu0
        %v3059 = vadd.f32 %v2958, %v3058
        %3060 = vmatprep.mubr.bf16.mxu0 %v2893
        %3061 = vmatmul.mubr.bf16.gmra.mrb[0].mxu0 %v2246
        %v3062 = vpop.f32.mrb[0].mxu0
        %v3063 = vadd.f32 %v2962, %v3062
        %v3064 = vpop.f32.mrb[0].mxu0
        %v3065 = vadd.f32 %v2964, %v3064
        %v3066 = vpop.f32.mrb[0].mxu0
        %v3067 = vadd.f32 %v2966, %v3066
        %v3068 = vpop.f32.mrb[0].mxu0
        %v3069 = vadd.f32 %v2968, %v3068
        %3070 = vmatprep.mubr.bf16.mxu0 %v2896
        %3071 = vmatmul.mubr.bf16.gmra.mrb[0].mxu0 %v2250
        %v3072 = vpop.f32.mrb[0].mxu0
        %v3073 = vadd.f32 %v2972, %v3072
        %v3074 = vpop.f32.mrb[0].mxu0
        %v3075 = vadd.f32 %v2974, %v3074
        %v3076 = vpop.f32.mrb[0].mxu0
        %v3077 = vadd.f32 %v2976, %v3076
        %v3078 = vpop.f32.mrb[0].mxu0
        %v3079 = vadd.f32 %v2978, %v3078
        %3080 = vmatprep.mubr.bf16.mxu0 %v2899
        %3081 = vmatmul.mubr.bf16.gmra.mrb[0].mxu0 %v2254
        %v3082 = vpop.f32.mrb[0].mxu0
        %v3083 = vadd.f32 %v2982, %v3082
        %v3084 = vpop.f32.mrb[0].mxu0
        %v3085 = vadd.f32 %v2984, %v3084
        %v3086 = vpop.f32.mrb[0].mxu0
        %v3087 = vadd.f32 %v2986, %v3086
        %v3088 = vpop.f32.mrb[0].mxu0
        %v3089 = vadd.f32 %v2988, %v3088
        %3090 = vmatprep.mubr.bf16.mxu0 %v2902
        %3091 = vmatmul.mubr.bf16.gmra.mrb[0].mxu0 %v2258
        %v3092 = vpop.f32.mrb[0].mxu0
        %v3093 = vadd.f32 %v2992, %v3092
        %v3094 = vpop.f32.mrb[0].mxu0
        %v3095 = vadd.f32 %v2994, %v3094
        %v3096 = vpop.f32.mrb[0].mxu0
        %v3097 = vadd.f32 %v2996, %v3096
        %v3098 = vpop.f32.mrb[0].mxu0
        %v3099 = vadd.f32 %v2998, %v3098
        %3100 = vmatprep.mubr.bf16.mxu0 %v2905
        %3101 = vmatmul.mubr.bf16.gmra.mrb[0].mxu0 %v2262
        %v3102 = vpop.f32.mrb[0].mxu0
        %v3103 = vadd.f32 %v3002, %v3102
        %v3104 = vpop.f32.mrb[0].mxu0
        %v3105 = vadd.f32 %v3004, %v3104
        %v3106 = vpop.f32.mrb[0].mxu0
        %v3107 = vpop.f32.mrb[0].mxu0
        %3108 = vdwg.mxu0
        %3109 = vmatprep.subr.bf16.mxu0 %v2689
        %3110 = vmatpush1.bf16.msra.mxu0 %v2688
        %3111 = vmatprep.subr.bf16.mxu0 %v2693
        %3112 = vmatpush1.bf16.msra.mxu0 %v2692
        %3113 = vmatprep.subr.bf16.mxu0 %v2697
        %3114 = vmatpush1.bf16.msra.mxu0 %v2696
        %3115 = vmatprep.subr.bf16.mxu0 %v2701
        %3116 = vmatpush1.bf16.msra.mxu0 %v2700
        %3117 = vmatprep.subr.bf16.mxu0 %v2705
        %3118 = vmatpush1.bf16.msra.mxu0 %v2704
        %3119 = vmatprep.subr.bf16.mxu0 %v2709
        %3120 = vmatpush1.bf16.msra.mxu0 %v2708
        %3121 = vmatprep.subr.bf16.mxu0 %v2713
        %3122 = vmatpush1.bf16.msra.mxu0 %v2712
        %3123 = vmatprep.subr.bf16.mxu0 %v2717
        %3124 = vmatpush1.bf16.msra.mxu0 %v2716
        %3125 = vmatprep.subr.bf16.mxu0 %v2721
        %3126 = vmatpush1.bf16.msra.mxu0 %v2720
        %3127 = vmatprep.subr.bf16.mxu0 %v2725
        %3128 = vmatpush1.bf16.msra.mxu0 %v2724
        %3129 = vmatprep.subr.bf16.mxu0 %v2729
        %3130 = vmatpush1.bf16.msra.mxu0 %v2728
        %3131 = vmatprep.subr.bf16.mxu0 %v2733
        %3132 = vmatpush1.bf16.msra.mxu0 %v2732
        %3133 = vmatprep.subr.bf16.mxu0 %v2737
        %3134 = vmatpush1.bf16.msra.mxu0 %v2736
        %3135 = vmatprep.subr.bf16.mxu0 %v2741
        %3136 = vmatpush1.bf16.msra.mxu0 %v2740
        %3137 = vmatprep.subr.bf16.mxu0 %v2745
        %3138 = vmatpush1.bf16.msra.mxu0 %v2744
        %3139 = vmatprep.subr.bf16.mxu0 %v2749
        %3140 = vmatpush1.bf16.msra.mxu0 %v2748
        %3141 = vmatprep.mubr.bf16.mxu0 %v2237
        %3142 = vmatmul.mubr.bf16.gmra.mrb[0].mxu0 %v2236
        %v3143 = vpop.f32.mrb[0].mxu0
        %v3144 = vadd.f32 %v2377, %v3143
        %v3145 = vpop.f32.mrb[0].mxu0
        %v3146 = vadd.f32 %v2381, %v3145
        %v3147 = vpop.f32.mrb[0].mxu0
        %v3148 = vadd.f32 %v2377, %v3147
        %v3149 = vpop.f32.mrb[0].mxu0
        %v3150 = vadd.f32 %v2381, %v3149
        %3151 = vmatprep.mubr.bf16.mxu0 %v2241
        %3152 = vmatmul.mubr.bf16.gmra.mrb[0].mxu0 %v2240
        %v3153 = vpop.f32.mrb[0].mxu0
        %v3154 = vadd.f32 %v2377, %v3153
        %v3155 = vpop.f32.mrb[0].mxu0
        %v3156 = vadd.f32 %v2381, %v3155
        %v3157 = vpop.f32.mrb[0].mxu0
        %v3158 = vadd.f32 %v2377, %v3157
        %v3159 = vpop.f32.mrb[0].mxu0
        %v3160 = vadd.f32 %v2381, %v3159
        %3161 = vmatprep.mubr.bf16.mxu0 %v2245
        %3162 = vmatmul.mubr.bf16.gmra.mrb[0].mxu0 %v2244
        %v3163 = vpop.f32.mrb[0].mxu0
        %v3164 = vadd.f32 %v2377, %v3163
        %v3165 = vpop.f32.mrb[0].mxu0
        %v3166 = vadd.f32 %v2381, %v3165
        %v3167 = vpop.f32.mrb[0].mxu0
        %v3168 = vadd.f32 %v2377, %v3167
        %v3169 = vpop.f32.mrb[0].mxu0
        %v3170 = vadd.f32 %v2381, %v3169
        %3171 = vmatprep.mubr.bf16.mxu0 %v2249
        %3172 = vmatmul.mubr.bf16.gmra.mrb[0].mxu0 %v2248
        %v3173 = vpop.f32.mrb[0].mxu0
        %v3174 = vadd.f32 %v2377, %v3173
        %v3175 = vpop.f32.mrb[0].mxu0
        %v3176 = vadd.f32 %v2381, %v3175
        %v3177 = vpop.f32.mrb[0].mxu0
        %v3178 = vadd.f32 %v2377, %v3177
        %v3179 = vpop.f32.mrb[0].mxu0
        %v3180 = vadd.f32 %v2381, %v3179
        %3181 = vmatprep.mubr.bf16.mxu0 %v2253
        %3182 = vmatmul.mubr.bf16.gmra.mrb[0].mxu0 %v2252
        %v3183 = vpop.f32.mrb[0].mxu0
        %v3184 = vadd.f32 %v2377, %v3183
        %v3185 = vpop.f32.mrb[0].mxu0
        %v3186 = vadd.f32 %v2381, %v3185
        %v3187 = vpop.f32.mrb[0].mxu0
        %v3188 = vadd.f32 %v2377, %v3187
        %v3189 = vpop.f32.mrb[0].mxu0
        %v3190 = vadd.f32 %v2381, %v3189
        %3191 = vmatprep.mubr.bf16.mxu0 %v2257
        %3192 = vmatmul.mubr.bf16.gmra.mrb[0].mxu0 %v2256
        %v3193 = vpop.f32.mrb[0].mxu0
        %v3194 = vadd.f32 %v2377, %v3193
        %v3195 = vpop.f32.mrb[0].mxu0
        %v3196 = vadd.f32 %v2381, %v3195
        %v3197 = vpop.f32.mrb[0].mxu0
        %v3198 = vadd.f32 %v2377, %v3197
        %v3199 = vpop.f32.mrb[0].mxu0
        %v3200 = vadd.f32 %v2381, %v3199
        %3201 = vmatprep.mubr.bf16.mxu0 %v2261
        %3202 = vmatmul.mubr.bf16.gmra.mrb[0].mxu0 %v2260
        %v3203 = vpop.f32.mrb[0].mxu0
        %v3204 = vadd.f32 %v2377, %v3203
        %v3205 = vpop.f32.mrb[0].mxu0
        %v3206 = vadd.f32 %v2381, %v3205
        %v3207 = vpop.f32.mrb[0].mxu0
        %v3208 = vpop.f32.mrb[0].mxu0
        %3209 = vdwg.mxu0
        %3210 = vmatprep.subr.bf16.mxu0 %v2753
        %3211 = vmatpush1.bf16.msra.mxu0 %v2752
        %3212 = vmatprep.subr.bf16.mxu0 %v2757
        %3213 = vmatpush1.bf16.msra.mxu0 %v2756
        %3214 = vmatprep.subr.bf16.mxu0 %v2761
        %3215 = vmatpush1.bf16.msra.mxu0 %v2760
        %3216 = vmatprep.subr.bf16.mxu0 %v2765
        %3217 = vmatpush1.bf16.msra.mxu0 %v2764
        %3218 = vmatprep.subr.bf16.mxu0 %v2769
        %3219 = vmatpush1.bf16.msra.mxu0 %v2768
        %3220 = vmatprep.subr.bf16.mxu0 %v2773
        %3221 = vmatpush1.bf16.msra.mxu0 %v2772
        %3222 = vmatprep.subr.bf16.mxu0 %v2777
        %3223 = vmatpush1.bf16.msra.mxu0 %v2776
        %3224 = vmatprep.subr.bf16.mxu0 %v2781
        %3225 = vmatpush1.bf16.msra.mxu0 %v2780
        %3226 = vmatprep.subr.bf16.mxu0 %v2785
        %3227 = vmatpush1.bf16.msra.mxu0 %v2784
        %3228 = vmatprep.subr.bf16.mxu0 0
        %3229 = vmatpush1.bf16.msra.mxu0 0
        %3230 = vmatprep.subr.bf16.mxu0 0
        %3231 = vmatpush1.bf16.msra.mxu0 0
        %3232 = vmatprep.subr.bf16.mxu0 0
        %3233 = vmatpush1.bf16.msra.mxu0 0
        %3234 = vmatprep.subr.bf16.mxu0 0
        %3235 = vmatpush1.bf16.msra.mxu0 0
        %3236 = vmatprep.subr.bf16.mxu0 0
        %3237 = vmatpush1.bf16.msra.mxu0 0
        %3238 = vmatprep.subr.bf16.mxu0 0
        %3239 = vmatpush1.bf16.msra.mxu0 0
        %3240 = vmatprep.subr.bf16.mxu0 0
        %3241 = vmatpush1.bf16.msra.mxu0 0
        %3242 = vmatprep.mubr.bf16.mxu0 %v2887
        %3243 = vmatmul.mubr.bf16.gmra.mrb[0].mxu0 %v2238
        %v3244 = vpop.f32.mrb[0].mxu0
        %v3245 = vadd.f32 %v3144, %v3244
        %v3246 = vpop.f32.mrb[0].mxu0
        %v3247 = vadd.f32 %v3146, %v3246
        %v3248 = vpop.f32.mrb[0].mxu0
        %v3249 = vadd.f32 %v3148, %v3248
        %v3250 = vpop.f32.mrb[0].mxu0
        %v3251 = vadd.f32 %v3150, %v3250
        %3252 = vmatprep.mubr.bf16.mxu0 %v2890
        %3253 = vmatmul.mubr.bf16.gmra.mrb[0].mxu0 %v2242
        %v3254 = vpop.f32.mrb[0].mxu0
        %v3255 = vadd.f32 %v3154, %v3254
        %v3256 = vpop.f32.mrb[0].mxu0
        %v3257 = vadd.f32 %v3156, %v3256
        %v3258 = vpop.f32.mrb[0].mxu0
        %v3259 = vadd.f32 %v3158, %v3258
        %v3260 = vpop.f32.mrb[0].mxu0
        %v3261 = vadd.f32 %v3160, %v3260
        %3262 = vmatprep.mubr.bf16.mxu0 %v2893
        %3263 = vmatmul.mubr.bf16.gmra.mrb[0].mxu0 %v2246
        %v3264 = vpop.f32.mrb[0].mxu0
        %v3265 = vadd.f32 %v3164, %v3264
        %v3266 = vpop.f32.mrb[0].mxu0
        %v3267 = vadd.f32 %v3166, %v3266
        %v3268 = vpop.f32.mrb[0].mxu0
        %v3269 = vadd.f32 %v3168, %v3268
        %v3270 = vpop.f32.mrb[0].mxu0
        %v3271 = vadd.f32 %v3170, %v3270
        %3272 = vmatprep.mubr.bf16.mxu0 %v2896
        %3273 = vmatmul.mubr.bf16.gmra.mrb[0].mxu0 %v2250
        %v3274 = vpop.f32.mrb[0].mxu0
        %v3275 = vadd.f32 %v3174, %v3274
        %v3276 = vpop.f32.mrb[0].mxu0
        %v3277 = vadd.f32 %v3176, %v3276
        %v3278 = vpop.f32.mrb[0].mxu0
        %v3279 = vadd.f32 %v3178, %v3278
        %v3280 = vpop.f32.mrb[0].mxu0
        %v3281 = vadd.f32 %v3180, %v3280
        %3282 = vmatprep.mubr.bf16.mxu0 %v2899
        %3283 = vmatmul.mubr.bf16.gmra.mrb[0].mxu0 %v2254
        %v3284 = vpop.f32.mrb[0].mxu0
        %v3285 = vadd.f32 %v3184, %v3284
        %v3286 = vpop.f32.mrb[0].mxu0
        %v3287 = vadd.f32 %v3186, %v3286
        %v3288 = vpop.f32.mrb[0].mxu0
        %v3289 = vadd.f32 %v3188, %v3288
        %v3290 = vpop.f32.mrb[0].mxu0
        %v3291 = vadd.f32 %v3190, %v3290
        %3292 = vmatprep.mubr.bf16.mxu0 %v2902
        %3293 = vmatmul.mubr.bf16.gmra.mrb[0].mxu0 %v2258
        %v3294 = vpop.f32.mrb[0].mxu0
        %v3295 = vadd.f32 %v3194, %v3294
        %v3296 = vpop.f32.mrb[0].mxu0
        %v3297 = vadd.f32 %v3196, %v3296
        %v3298 = vpop.f32.mrb[0].mxu0
        %v3299 = vadd.f32 %v3198, %v3298
        %v3300 = vpop.f32.mrb[0].mxu0
        %v3301 = vadd.f32 %v3200, %v3300
        %3302 = vmatprep.mubr.bf16.mxu0 %v2905
        %3303 = vmatmul.mubr.bf16.gmra.mrb[0].mxu0 %v2262
        %v3304 = vpop.f32.mrb[0].mxu0
        %v3305 = vadd.f32 %v3204, %v3304
        %v3306 = vpop.f32.mrb[0].mxu0
        %v3307 = vadd.f32 %v3206, %v3306
        %v3308 = vpop.f32.mrb[0].mxu0
        %v3309 = vpop.f32.mrb[0].mxu0
        %3310 = vdwg.mxu0
        %v3311 = vmax.f32 %v3043, 0.0
        %v3312 = vmax.f32 %v3045, 0.0
        %v3313 = vmax.f32 %v3245, 0.0
        %v3314 = vmax.f32 %v3247, 0.0
        %v3315 = vmax.f32 %v3047, 0.0
        %v3316 = vmax.f32 %v3049, 0.0
        %v3317 = vmax.f32 %v3249, 0.0
        %v3318 = vmax.f32 %v3251, 0.0
        %v3319 = vmax.f32 %v3053, 0.0
        %v3320 = vmax.f32 %v3055, 0.0
        %v3321 = vmax.f32 %v3255, 0.0
        %v3322 = vmax.f32 %v3257, 0.0
        %v3323 = vmax.f32 %v3057, 0.0
        %v3324 = vmax.f32 %v3059, 0.0
        %v3325 = vmax.f32 %v3259, 0.0
        %v3326 = vmax.f32 %v3261, 0.0
        %v3327 = vmax.f32 %v3063, 0.0
        %v3328 = vmax.f32 %v3065, 0.0
        %v3329 = vmax.f32 %v3265, 0.0
        %v3330 = vmax.f32 %v3267, 0.0
        %v3331 = vmax.f32 %v3067, 0.0
        %v3332 = vmax.f32 %v3069, 0.0
        %v3333 = vmax.f32 %v3269, 0.0
        %v3334 = vmax.f32 %v3271, 0.0
        %v3335 = vmax.f32 %v3073, 0.0
        %v3336 = vmax.f32 %v3075, 0.0
        %v3337 = vmax.f32 %v3275, 0.0
        %v3338 = vmax.f32 %v3277, 0.0
        %v3339 = vmax.f32 %v3077, 0.0
        %v3340 = vmax.f32 %v3079, 0.0
        %v3341 = vmax.f32 %v3279, 0.0
        %v3342 = vmax.f32 %v3281, 0.0
        %v3343 = vmax.f32 %v3083, 0.0
        %v3344 = vmax.f32 %v3085, 0.0
        %v3345 = vmax.f32 %v3285, 0.0
        %v3346 = vmax.f32 %v3287, 0.0
        %v3347 = vmax.f32 %v3087, 0.0
        %v3348 = vmax.f32 %v3089, 0.0
        %v3349 = vmax.f32 %v3289, 0.0
        %v3350 = vmax.f32 %v3291, 0.0
        %v3351 = vmax.f32 %v3093, 0.0
        %v3352 = vmax.f32 %v3095, 0.0
        %v3353 = vmax.f32 %v3295, 0.0
        %v3354 = vmax.f32 %v3297, 0.0
        %v3355 = vmax.f32 %v3097, 0.0
        %v3356 = vmax.f32 %v3099, 0.0
        %v3357 = vmax.f32 %v3299, 0.0
        %v3358 = vmax.f32 %v3301, 0.0
        %v3359 = vmax.f32 %v3103, 0.0
        %v3360 = vmax.f32 %v3105, 0.0
        %v3361 = vmax.f32 %v3305, 0.0
        %v3362 = vmax.f32 %v3307, 0.0
        %v3363 = vpack.c.bf16 %v3315, %v3311
        %v3364 = vpack.c.bf16 %v3316, %v3312
        %v3365 = vpack.c.bf16 %v3317, %v3313
        %v3366 = vpack.c.bf16 %v3318, %v3314
        %v3367 = vpack.c.bf16 %v3323, %v3319
        %v3368 = vpack.c.bf16 %v3324, %v3320
        %v3369 = vpack.c.bf16 %v3325, %v3321
        %v3370 = vpack.c.bf16 %v3326, %v3322
        %v3371 = vpack.c.bf16 %v3331, %v3327
        %v3372 = vpack.c.bf16 %v3332, %v3328
        %v3373 = vpack.c.bf16 %v3333, %v3329
        %v3374 = vpack.c.bf16 %v3334, %v3330
        %v3375 = vpack.c.bf16 %v3339, %v3335
        %v3376 = vpack.c.bf16 %v3340, %v3336
        %v3377 = vpack.c.bf16 %v3341, %v3337
        %v3378 = vpack.c.bf16 %v3342, %v3338
        %v3379 = vpack.c.bf16 %v3347, %v3343
        %v3380 = vpack.c.bf16 %v3348, %v3344
        %v3381 = vpack.c.bf16 %v3349, %v3345
        %v3382 = vpack.c.bf16 %v3350, %v3346
        %v3383 = vpack.c.bf16 %v3355, %v3351
        %v3384 = vpack.c.bf16 %v3356, %v3352
        %v3385 = vpack.c.bf16 %v3357, %v3353
        %v3386 = vpack.c.bf16 %v3358, %v3354
        %v3387 = vpack.c.bf16 %v3359, %v3359
        %v3388 = vpack.c.bf16 %v3360, %v3360
        %v3389 = vpack.c.bf16 %v3361, %v3361
        %v3390 = vpack.c.bf16 %v3362, %v3362
        %v3391 = vld [vmem:[#allocation10] sm:$0xff]
        %v3392 = vld [vmem:[#allocation10 + $0x8] sm:$0xff]
        %v3393 = vld [vmem:[#allocation10 + $0x10] sm:$0xff]
        %v3394 = vld [vmem:[#allocation10 + $0x18] sm:$0xff]
        %v3395 = vld [vmem:[#allocation10 + $0x20] sm:$0xff]
        %v3396 = vld [vmem:[#allocation10 + $0x28] sm:$0xff]
        %v3397 = vld [vmem:[#allocation10 + $0x30] sm:$0xff]
        %v3398 = vld [vmem:[#allocation10 + $0x38] sm:$0xff]
        %v3399 = vld [vmem:[#allocation10 + $0x40] sm:$0xff]
        %v3400 = vld [vmem:[#allocation10 + $0x48] sm:$0xff]
        %v3401 = vld [vmem:[#allocation10 + $0x50] sm:$0xff]
        %v3402 = vld [vmem:[#allocation10 + $0x58] sm:$0xff]
        %v3403 = vld [vmem:[#allocation10 + $0x60] sm:$0xff]
        %v3404 = vld [vmem:[#allocation10 + $0x68] sm:$0xff]
        %v3405 = vld [vmem:[#allocation10 + $0x70] sm:$0xff]
        %v3406 = vld [vmem:[#allocation10 + $0x78] sm:$0xff]
        %v3407 = vld [vmem:[#allocation10 + $0x80] sm:$0xff]
        %v3408 = vld [vmem:[#allocation10 + $0x88] sm:$0xff]
        %v3409 = vld [vmem:[#allocation10 + $0x90] sm:$0xff]
        %v3410 = vld [vmem:[#allocation10 + $0x98] sm:$0xff]
        %v3411 = vld [vmem:[#allocation10 + $0xa0] sm:$0xff]
        %v3412 = vld [vmem:[#allocation10 + $0xa8] sm:$0xff]
        %v3413 = vld [vmem:[#allocation10 + $0xb0] sm:$0xff]
        %v3414 = vld [vmem:[#allocation10 + $0xb8] sm:$0xff]
        %v3415 = vld [vmem:[#allocation10 + $0xc0] sm:$0xff]
        %v3416 = vld [vmem:[#allocation10 + $0xc8] sm:$0xff]
        %v3417 = vld [vmem:[#allocation10 + $0xd0] sm:$0xff]
        %v3418 = vld [vmem:[#allocation10 + $0xd8] sm:$0xff]
        %v3419 = vld [vmem:[#allocation10 + $0xe0] sm:$0xff]
        %v3420 = vld [vmem:[#allocation10 + $0xe8] sm:$0xff]
        %v3421 = vld [vmem:[#allocation10 + $0xf0] sm:$0xff]
        %v3422 = vld [vmem:[#allocation10 + $0xf8] sm:$0xff]
        %v3423 = vld [vmem:[#allocation10 + $0x100] sm:$0xff]
        %v3424 = vld [vmem:[#allocation10 + $0x108] sm:$0xff]
        %v3425 = vld [vmem:[#allocation10 + $0x110] sm:$0xff]
        %v3426 = vld [vmem:[#allocation10 + $0x118] sm:$0xff]
        %v3427 = vld [vmem:[#allocation10 + $0x120] sm:$0xff]
        %v3428 = vld [vmem:[#allocation10 + $0x128] sm:$0xff]
        %v3429 = vld [vmem:[#allocation10 + $0x130] sm:$0xff]
        %v3430 = vld [vmem:[#allocation10 + $0x138] sm:$0xff]
        %v3431 = vld [vmem:[#allocation10 + $0x140] sm:$0xff]
        %v3432 = vld [vmem:[#allocation10 + $0x148] sm:$0xff]
        %v3433 = vld [vmem:[#allocation10 + $0x150] sm:$0xff]
        %v3434 = vld [vmem:[#allocation10 + $0x158] sm:$0xff]
        %v3435 = vld [vmem:[#allocation10 + $0x160] sm:$0xff]
        %v3436 = vld [vmem:[#allocation10 + $0x168] sm:$0xff]
        %v3437 = vld [vmem:[#allocation10 + $0x170] sm:$0xff]
        %v3438 = vld [vmem:[#allocation10 + $0x178] sm:$0xff]
        %v3439 = vld [vmem:[#allocation10 + $0x180] sm:$0xff]
        %v3440 = vld [vmem:[#allocation10 + $0x188] sm:$0xff]
        %v3441 = vld [vmem:[#allocation10 + $0x190] sm:$0xff]
        %v3442 = vld [vmem:[#allocation10 + $0x198] sm:$0xff]
        %v3443 = vld [vmem:[#allocation10 + $0x1a0] sm:$0xff]
        %v3444 = vld [vmem:[#allocation10 + $0x1a8] sm:$0xff]
        %v3445 = vld [vmem:[#allocation10 + $0x1b0] sm:$0xff]
        %v3446 = vld [vmem:[#allocation10 + $0x1b8] sm:$0xff]
        %v3447 = vld [vmem:[#allocation10 + $0x1c0] sm:$0xff]
        %v3448 = vld [vmem:[#allocation10 + $0x1c8] sm:$0xff]
        %v3449 = vld [vmem:[#allocation10 + $0x1d0] sm:$0xff]
        %v3450 = vld [vmem:[#allocation10 + $0x1d8] sm:$0xff]
        %v3451 = vld [vmem:[#allocation10 + $0x1e0] sm:$0xff]
        %v3452 = vld [vmem:[#allocation10 + $0x1e8] sm:$0xff]
        %v3453 = vld [vmem:[#allocation10 + $0x1f0] sm:$0xff]
        %v3454 = vld [vmem:[#allocation10 + $0x1f8] sm:$0xff]
        %v3455 = vld [vmem:[#allocation10 + $0x200] sm:$0xff]
        %v3456 = vld [vmem:[#allocation10 + $0x208] sm:$0xff]
        %v3457 = vld [vmem:[#allocation10 + $0x210] sm:$0xff]
        %v3458 = vld [vmem:[#allocation10 + $0x218] sm:$0xff]
        %v3459 = vld [vmem:[#allocation10 + $0x220] sm:$0xff]
        %v3460 = vld [vmem:[#allocation10 + $0x228] sm:$0xff]
        %v3461 = vld [vmem:[#allocation10 + $0x230] sm:$0xff]
        %v3462 = vld [vmem:[#allocation10 + $0x238] sm:$0xff]
        %v3463 = vld [vmem:[#allocation10 + $0x240] sm:$0xff]
        %v3464 = vld [vmem:[#allocation10 + $0x248] sm:$0xff]
        %v3465 = vld [vmem:[#allocation10 + $0x250] sm:$0xff]
        %v3466 = vld [vmem:[#allocation10 + $0x258] sm:$0xff]
        %v3467 = vld [vmem:[#allocation10 + $0x260] sm:$0xff]
        %v3468 = vld [vmem:[#allocation10 + $0x268] sm:$0xff]
        %v3469 = vld [vmem:[#allocation10 + $0x270] sm:$0xff]
        %v3470 = vld [vmem:[#allocation10 + $0x278] sm:$0xff]
        %v3471 = vld [vmem:[#allocation10 + $0x280] sm:$0xff]
        %v3472 = vld [vmem:[#allocation10 + $0x288] sm:$0xff]
        %v3473 = vld [vmem:[#allocation10 + $0x290] sm:$0xff]
        %v3474 = vld [vmem:[#allocation10 + $0x298] sm:$0xff]
        %v3475 = vld [vmem:[#allocation10 + $0x2a0] sm:$0xff]
        %v3476 = vld [vmem:[#allocation10 + $0x2a8] sm:$0xff]
        %v3477 = vld [vmem:[#allocation10 + $0x2b0] sm:$0xff]
        %v3478 = vld [vmem:[#allocation10 + $0x2b8] sm:$0xff]
        %v3479 = vld [vmem:[#allocation10 + $0x2c0] sm:$0xff]
        %v3480 = vld [vmem:[#allocation10 + $0x2c8] sm:$0xff]
        %v3481 = vld [vmem:[#allocation10 + $0x2d0] sm:$0xff]
        %v3482 = vld [vmem:[#allocation10 + $0x2d8] sm:$0xff]
        %v3483 = vld [vmem:[#allocation10 + $0x2e0] sm:$0xff]
        %v3484 = vld [vmem:[#allocation10 + $0x2e8] sm:$0xff]
        %v3485 = vld [vmem:[#allocation10 + $0x2f0] sm:$0xff]
        %v3486 = vld [vmem:[#allocation10 + $0x2f8] sm:$0xff]
        %v3487 = vld [vmem:[#allocation10 + $0x300] sm:$0xff]
        %v3488 = vld [vmem:[#allocation10 + $0x308] sm:$0xff]
        %v3489 = vld [vmem:[#allocation10 + $0x310] sm:$0xff]
        %v3490 = vld [vmem:[#allocation10 + $0x318] sm:$0xff]
        %v3491 = vld [vmem:[#allocation12] sm:$0xf]
        %v3493 = vlaneseq
        %v3494 = vshrl.u32 %v3493, 7
        %v3495 = vsub.s32 0, %v3494
        %v3496 = vrot.slane %v3491, %v3495
        %v3497 = vlaneseq
        %v3498 = vshrl.u32 %v3497, 7
        %v3499 = vsub.s32 1, %v3498
        %v3500 = vrot.slane %v3491, %v3499
        %v3501 = vlaneseq
        %v3502 = vshrl.u32 %v3501, 7
        %v3503 = vsub.s32 2, %v3502
        %v3504 = vrot.slane %v3491, %v3503
        %v3505 = vlaneseq
        %v3506 = vshrl.u32 %v3505, 7
        %v3507 = vsub.s32 3, %v3506
        %v3508 = vrot.slane %v3491, %v3507
        %v3613 = vunpack.c.l.b16 %v3391
        %v3614 = vunpack.c.h.b16 %v3391
        %v3615 = vunpack.c.l.b16 %v3392
        %v3616 = vunpack.c.h.b16 %v3392
        %v3617 = vunpack.c.l.b16 %v3393
        %v3618 = vunpack.c.h.b16 %v3393
        %v3619 = vunpack.c.l.b16 %v3394
        %v3620 = vunpack.c.h.b16 %v3394
        %v3621 = vunpack.c.l.b16 %v3395
        %v3622 = vunpack.c.h.b16 %v3395
        %v3623 = vunpack.c.l.b16 %v3396
        %v3624 = vunpack.c.h.b16 %v3396
        %v3625 = vunpack.c.l.b16 %v3397
        %v3626 = vunpack.c.h.b16 %v3397
        %v3627 = vunpack.c.l.b16 %v3398
        %v3628 = vunpack.c.h.b16 %v3398
        %v3629 = vunpack.c.l.b16 %v3399
        %v3630 = vunpack.c.h.b16 %v3399
        %v3631 = vunpack.c.l.b16 %v3400
        %v3632 = vunpack.c.h.b16 %v3400
        %v3633 = vunpack.c.l.b16 %v3401
        %v3634 = vunpack.c.h.b16 %v3401
        %v3635 = vunpack.c.l.b16 %v3402
        %v3636 = vunpack.c.h.b16 %v3402
        %v3637 = vunpack.c.l.b16 %v3403
        %v3638 = vunpack.c.h.b16 %v3403
        %v3639 = vunpack.c.l.b16 %v3404
        %v3640 = vunpack.c.h.b16 %v3404
        %v3641 = vunpack.c.l.b16 %v3405
        %v3642 = vunpack.c.h.b16 %v3405
        %v3643 = vunpack.c.l.b16 %v3406
        %v3644 = vunpack.c.h.b16 %v3406
        %v3645 = vunpack.c.l.b16 %v3407
        %v3646 = vunpack.c.h.b16 %v3407
        %v3647 = vunpack.c.l.b16 %v3408
        %v3648 = vunpack.c.h.b16 %v3408
        %v3649 = vunpack.c.l.b16 %v3409
        %v3650 = vunpack.c.h.b16 %v3409
        %v3651 = vunpack.c.l.b16 %v3410
        %v3652 = vunpack.c.h.b16 %v3410
        %v3653 = vunpack.c.l.b16 %v3411
        %v3654 = vunpack.c.h.b16 %v3411
        %v3655 = vunpack.c.l.b16 %v3412
        %v3656 = vunpack.c.h.b16 %v3412
        %v3657 = vunpack.c.l.b16 %v3413
        %v3658 = vunpack.c.h.b16 %v3413
        %v3659 = vunpack.c.l.b16 %v3414
        %v3660 = vunpack.c.h.b16 %v3414
        %v3661 = vunpack.c.l.b16 %v3415
        %v3662 = vunpack.c.h.b16 %v3415
        %v3663 = vunpack.c.l.b16 %v3416
        %v3664 = vunpack.c.h.b16 %v3416
        %v3665 = vunpack.c.l.b16 %v3417
        %v3666 = vunpack.c.h.b16 %v3417
        %v3667 = vunpack.c.l.b16 %v3418
        %v3668 = vunpack.c.h.b16 %v3418
        %v3669 = vunpack.c.l.b16 %v3419
        %v3670 = vunpack.c.h.b16 %v3419
        %v3671 = vunpack.c.l.b16 %v3420
        %v3672 = vunpack.c.h.b16 %v3420
        %v3673 = vunpack.c.l.b16 %v3421
        %v3674 = vunpack.c.h.b16 %v3421
        %v3675 = vunpack.c.l.b16 %v3422
        %v3676 = vunpack.c.h.b16 %v3422
        %v3677 = vunpack.c.l.b16 %v3423
        %v3678 = vunpack.c.h.b16 %v3423
        %v3679 = vunpack.c.l.b16 %v3424
        %v3680 = vunpack.c.h.b16 %v3424
        %v3681 = vunpack.c.l.b16 %v3425
        %v3682 = vunpack.c.h.b16 %v3425
        %v3683 = vunpack.c.l.b16 %v3426
        %v3684 = vunpack.c.h.b16 %v3426
        %v3685 = vunpack.c.l.b16 %v3427
        %v3686 = vunpack.c.h.b16 %v3427
        %v3687 = vunpack.c.l.b16 %v3428
        %v3688 = vunpack.c.h.b16 %v3428
        %v3689 = vunpack.c.l.b16 %v3429
        %v3690 = vunpack.c.h.b16 %v3429
        %v3691 = vunpack.c.l.b16 %v3430
        %v3692 = vunpack.c.h.b16 %v3430
        %v3693 = vunpack.c.l.b16 %v3431
        %v3694 = vunpack.c.h.b16 %v3431
        %v3695 = vunpack.c.l.b16 %v3432
        %v3696 = vunpack.c.h.b16 %v3432
        %v3697 = vunpack.c.l.b16 %v3433
        %v3698 = vunpack.c.h.b16 %v3433
        %v3699 = vunpack.c.l.b16 %v3434
        %v3700 = vunpack.c.h.b16 %v3434
        %v3701 = vunpack.c.l.b16 %v3435
        %v3702 = vunpack.c.h.b16 %v3435
        %v3703 = vunpack.c.l.b16 %v3436
        %v3704 = vunpack.c.h.b16 %v3436
        %v3705 = vunpack.c.l.b16 %v3437
        %v3706 = vunpack.c.h.b16 %v3437
        %v3707 = vunpack.c.l.b16 %v3438
        %v3708 = vunpack.c.h.b16 %v3438
        %v3709 = vunpack.c.l.b16 %v3439
        %v3710 = vunpack.c.h.b16 %v3439
        %v3711 = vunpack.c.l.b16 %v3440
        %v3712 = vunpack.c.h.b16 %v3440
        %v3713 = vunpack.c.l.b16 %v3441
        %v3714 = vunpack.c.h.b16 %v3441
        %v3715 = vunpack.c.l.b16 %v3442
        %v3716 = vunpack.c.h.b16 %v3442
        %v3717 = vunpack.c.l.b16 %v3443
        %v3718 = vunpack.c.h.b16 %v3443
        %v3719 = vunpack.c.l.b16 %v3444
        %v3720 = vunpack.c.h.b16 %v3444
        %v3721 = vunpack.c.l.b16 %v3445
        %v3722 = vunpack.c.h.b16 %v3445
        %v3723 = vunpack.c.l.b16 %v3446
        %v3724 = vunpack.c.h.b16 %v3446
        %v3725 = vunpack.c.l.b16 %v3447
        %v3726 = vunpack.c.h.b16 %v3447
        %v3727 = vunpack.c.l.b16 %v3448
        %v3728 = vunpack.c.h.b16 %v3448
        %v3729 = vunpack.c.l.b16 %v3449
        %v3730 = vunpack.c.h.b16 %v3449
        %v3731 = vunpack.c.l.b16 %v3450
        %v3732 = vunpack.c.h.b16 %v3450
        %v3733 = vunpack.c.l.b16 %v3451
        %v3734 = vunpack.c.h.b16 %v3451
        %v3735 = vunpack.c.l.b16 %v3452
        %v3736 = vunpack.c.h.b16 %v3452
        %v3737 = vunpack.c.l.b16 %v3453
        %v3738 = vunpack.c.h.b16 %v3453
        %v3739 = vunpack.c.l.b16 %v3454
        %v3740 = vunpack.c.h.b16 %v3454
        %v3741 = vunpack.c.l.b16 %v3455
        %v3742 = vunpack.c.h.b16 %v3455
        %v3743 = vunpack.c.l.b16 %v3456
        %v3744 = vunpack.c.h.b16 %v3456
        %v3745 = vunpack.c.l.b16 %v3457
        %v3746 = vunpack.c.h.b16 %v3457
        %v3747 = vunpack.c.l.b16 %v3458
        %v3748 = vunpack.c.h.b16 %v3458
        %v3749 = vunpack.c.l.b16 %v3459
        %v3750 = vunpack.c.h.b16 %v3459
        %v3751 = vunpack.c.l.b16 %v3460
        %v3752 = vunpack.c.h.b16 %v3460
        %v3753 = vunpack.c.l.b16 %v3461
        %v3754 = vunpack.c.h.b16 %v3461
        %v3755 = vunpack.c.l.b16 %v3462
        %v3756 = vunpack.c.h.b16 %v3462
        %v3757 = vunpack.c.l.b16 %v3463
        %v3758 = vunpack.c.h.b16 %v3463
        %v3759 = vunpack.c.l.b16 %v3464
        %v3760 = vunpack.c.h.b16 %v3464
        %v3761 = vunpack.c.l.b16 %v3465
        %v3762 = vunpack.c.h.b16 %v3465
        %v3763 = vunpack.c.l.b16 %v3466
        %v3764 = vunpack.c.h.b16 %v3466
        %v3765 = vunpack.c.l.b16 %v3467
        %v3766 = vunpack.c.h.b16 %v3467
        %v3767 = vunpack.c.l.b16 %v3468
        %v3768 = vunpack.c.h.b16 %v3468
        %v3769 = vunpack.c.l.b16 %v3469
        %v3770 = vunpack.c.h.b16 %v3469
        %v3771 = vunpack.c.l.b16 %v3470
        %v3772 = vunpack.c.h.b16 %v3470
        %v3773 = vunpack.c.l.b16 %v3471
        %v3774 = vunpack.c.h.b16 %v3471
        %v3775 = vunpack.c.l.b16 %v3472
        %v3776 = vunpack.c.h.b16 %v3472
        %v3777 = vunpack.c.l.b16 %v3473
        %v3778 = vunpack.c.h.b16 %v3473
        %v3779 = vunpack.c.l.b16 %v3474
        %v3780 = vunpack.c.h.b16 %v3474
        %v3781 = vunpack.c.l.b16 %v3475
        %v3782 = vunpack.c.h.b16 %v3475
        %v3783 = vunpack.c.l.b16 %v3476
        %v3784 = vunpack.c.h.b16 %v3476
        %v3785 = vunpack.c.l.b16 %v3477
        %v3786 = vunpack.c.h.b16 %v3477
        %v3787 = vunpack.c.l.b16 %v3478
        %v3788 = vunpack.c.h.b16 %v3478
        %v3789 = vunpack.c.l.b16 %v3479
        %v3790 = vunpack.c.h.b16 %v3479
        %v3791 = vunpack.c.l.b16 %v3480
        %v3792 = vunpack.c.h.b16 %v3480
        %v3793 = vunpack.c.l.b16 %v3481
        %v3794 = vunpack.c.h.b16 %v3481
        %v3795 = vunpack.c.l.b16 %v3482
        %v3796 = vunpack.c.h.b16 %v3482
        %v3797 = vunpack.c.l.b16 %v3483
        %v3798 = vunpack.c.h.b16 %v3483
        %v3799 = vunpack.c.l.b16 %v3484
        %v3800 = vunpack.c.h.b16 %v3484
        %v3801 = vunpack.c.l.b16 %v3485
        %v3802 = vunpack.c.h.b16 %v3485
        %v3803 = vunpack.c.l.b16 %v3486
        %v3804 = vunpack.c.h.b16 %v3486
        %v3805 = vunpack.c.l.b16 %v3487
        %v3806 = vunpack.c.h.b16 %v3487
        %v3807 = vunpack.c.l.b16 %v3488
        %v3808 = vunpack.c.h.b16 %v3488
        %v3809 = vunpack.c.l.b16 %v3489
        %v3810 = vunpack.c.h.b16 %v3489
        %v3811 = vunpack.c.l.b16 %v3490
        %v3812 = vunpack.c.h.b16 %v3490
        %v3813 = vpack.c.b16 %v3617, %v3613
        %v3814 = vpack.c.b16 %v3618, %v3614
        %v3815 = vpack.c.b16 %v3619, %v3615
        %v3816 = vpack.c.b16 %v3620, %v3616
        %v3817 = vpack.c.b16 %v3625, %v3621
        %v3818 = vpack.c.b16 %v3626, %v3622
        %v3819 = vpack.c.b16 %v3627, %v3623
        %v3820 = vpack.c.b16 %v3628, %v3624
        %v3821 = vpack.c.b16 %v3633, %v3629
        %v3822 = vpack.c.b16 %v3634, %v3630
        %v3823 = vpack.c.b16 %v3635, %v3631
        %v3824 = vpack.c.b16 %v3636, %v3632
        %v3825 = vpack.c.b16 %v3641, %v3637
        %v3826 = vpack.c.b16 %v3642, %v3638
        %v3827 = vpack.c.b16 %v3643, %v3639
        %v3828 = vpack.c.b16 %v3644, %v3640
        %v3829 = vpack.c.b16 %v3649, %v3645
        %v3830 = vpack.c.b16 %v3650, %v3646
        %v3831 = vpack.c.b16 %v3651, %v3647
        %v3832 = vpack.c.b16 %v3652, %v3648
        %v3833 = vpack.c.b16 %v3657, %v3653
        %v3834 = vpack.c.b16 %v3658, %v3654
        %v3835 = vpack.c.b16 %v3659, %v3655
        %v3836 = vpack.c.b16 %v3660, %v3656
        %v3837 = vpack.c.b16 %v3665, %v3661
        %v3838 = vpack.c.b16 %v3666, %v3662
        %v3839 = vpack.c.b16 %v3667, %v3663
        %v3840 = vpack.c.b16 %v3668, %v3664
        %v3841 = vpack.c.b16 %v3673, %v3669
        %v3842 = vpack.c.b16 %v3674, %v3670
        %v3843 = vpack.c.b16 %v3675, %v3671
        %v3844 = vpack.c.b16 %v3676, %v3672
        %v3845 = vpack.c.b16 %v3681, %v3677
        %v3846 = vpack.c.b16 %v3682, %v3678
        %v3847 = vpack.c.b16 %v3683, %v3679
        %v3848 = vpack.c.b16 %v3684, %v3680
        %v3849 = vpack.c.b16 %v3689, %v3685
        %v3850 = vpack.c.b16 %v3690, %v3686
        %v3851 = vpack.c.b16 %v3691, %v3687
        %v3852 = vpack.c.b16 %v3692, %v3688
        %v3853 = vpack.c.b16 %v3697, %v3693
        %v3854 = vpack.c.b16 %v3698, %v3694
        %v3855 = vpack.c.b16 %v3699, %v3695
        %v3856 = vpack.c.b16 %v3700, %v3696
        %v3857 = vpack.c.b16 %v3705, %v3701
        %v3858 = vpack.c.b16 %v3706, %v3702
        %v3859 = vpack.c.b16 %v3707, %v3703
        %v3860 = vpack.c.b16 %v3708, %v3704
        %v3861 = vpack.c.b16 %v3713, %v3709
        %v3862 = vpack.c.b16 %v3714, %v3710
        %v3863 = vpack.c.b16 %v3715, %v3711
        %v3864 = vpack.c.b16 %v3716, %v3712
        %v3865 = vpack.c.b16 %v3721, %v3717
        %v3866 = vpack.c.b16 %v3722, %v3718
        %v3867 = vpack.c.b16 %v3723, %v3719
        %v3868 = vpack.c.b16 %v3724, %v3720
        %v3869 = vpack.c.b16 %v3729, %v3725
        %v3870 = vpack.c.b16 %v3730, %v3726
        %v3871 = vpack.c.b16 %v3731, %v3727
        %v3872 = vpack.c.b16 %v3732, %v3728
        %v3873 = vpack.c.b16 %v3737, %v3733
        %v3874 = vpack.c.b16 %v3738, %v3734
        %v3875 = vpack.c.b16 %v3739, %v3735
        %v3876 = vpack.c.b16 %v3740, %v3736
        %v3877 = vpack.c.b16 %v3745, %v3741
        %v3878 = vpack.c.b16 %v3746, %v3742
        %v3879 = vpack.c.b16 %v3747, %v3743
        %v3880 = vpack.c.b16 %v3748, %v3744
        %v3881 = vpack.c.b16 %v3753, %v3749
        %v3882 = vpack.c.b16 %v3754, %v3750
        %v3883 = vpack.c.b16 %v3755, %v3751
        %v3884 = vpack.c.b16 %v3756, %v3752
        %v3885 = vpack.c.b16 %v3761, %v3757
        %v3886 = vpack.c.b16 %v3762, %v3758
        %v3887 = vpack.c.b16 %v3763, %v3759
        %v3888 = vpack.c.b16 %v3764, %v3760
        %v3889 = vpack.c.b16 %v3769, %v3765
        %v3890 = vpack.c.b16 %v3770, %v3766
        %v3891 = vpack.c.b16 %v3771, %v3767
        %v3892 = vpack.c.b16 %v3772, %v3768
        %v3893 = vpack.c.b16 %v3777, %v3773
        %v3894 = vpack.c.b16 %v3778, %v3774
        %v3895 = vpack.c.b16 %v3779, %v3775
        %v3896 = vpack.c.b16 %v3780, %v3776
        %v3897 = vpack.c.b16 %v3785, %v3781
        %v3898 = vpack.c.b16 %v3786, %v3782
        %v3899 = vpack.c.b16 %v3787, %v3783
        %v3900 = vpack.c.b16 %v3788, %v3784
        %v3901 = vpack.c.b16 %v3793, %v3789
        %v3902 = vpack.c.b16 %v3794, %v3790
        %v3903 = vpack.c.b16 %v3795, %v3791
        %v3904 = vpack.c.b16 %v3796, %v3792
        %v3905 = vpack.c.b16 %v3801, %v3797
        %v3906 = vpack.c.b16 %v3802, %v3798
        %v3907 = vpack.c.b16 %v3803, %v3799
        %v3908 = vpack.c.b16 %v3804, %v3800
        %v3909 = vpack.c.b16 %v3809, %v3805
        %v3910 = vpack.c.b16 %v3810, %v3806
        %v3911 = vpack.c.b16 %v3811, %v3807
        %v3912 = vpack.c.b16 %v3812, %v3808
        %v4014 = vsel %vm1758, %v3366, 0
        %v4017 = vsel %vm1758, %v3370, 0
        %v4020 = vsel %vm1758, %v3374, 0
        %v4023 = vsel %vm1758, %v3378, 0
        %v4026 = vsel %vm1758, %v3382, 0
        %v4029 = vsel %vm1758, %v3386, 0
        %v4032 = vsel %vm1758, %v3390, 0
        %4034 = vmatprep.subr.bf16.mxu0 %v3814
        %4035 = vmatpush1.bf16.msra.mxu0 %v3813
        %4036 = vmatprep.subr.bf16.mxu0 %v3818
        %4037 = vmatpush1.bf16.msra.mxu0 %v3817
        %4038 = vmatprep.subr.bf16.mxu0 %v3822
        %4039 = vmatpush1.bf16.msra.mxu0 %v3821
        %4040 = vmatprep.subr.bf16.mxu0 %v3826
        %4041 = vmatpush1.bf16.msra.mxu0 %v3825
        %4042 = vmatprep.subr.bf16.mxu0 %v3830
        %4043 = vmatpush1.bf16.msra.mxu0 %v3829
        %4044 = vmatprep.subr.bf16.mxu0 %v3834
        %4045 = vmatpush1.bf16.msra.mxu0 %v3833
        %4046 = vmatprep.subr.bf16.mxu0 %v3838
        %4047 = vmatpush1.bf16.msra.mxu0 %v3837
        %4048 = vmatprep.subr.bf16.mxu0 %v3842
        %4049 = vmatpush1.bf16.msra.mxu0 %v3841
        %4050 = vmatprep.subr.bf16.mxu0 %v3846
        %4051 = vmatpush1.bf16.msra.mxu0 %v3845
        %4052 = vmatprep.subr.bf16.mxu0 %v3850
        %4053 = vmatpush1.bf16.msra.mxu0 %v3849
        %4054 = vmatprep.subr.bf16.mxu0 %v3854
        %4055 = vmatpush1.bf16.msra.mxu0 %v3853
        %4056 = vmatprep.subr.bf16.mxu0 %v3858
        %4057 = vmatpush1.bf16.msra.mxu0 %v3857
        %4058 = vmatprep.subr.bf16.mxu0 %v3862
        %4059 = vmatpush1.bf16.msra.mxu0 %v3861
        %4060 = vmatprep.subr.bf16.mxu0 %v3866
        %4061 = vmatpush1.bf16.msra.mxu0 %v3865
        %4062 = vmatprep.subr.bf16.mxu0 %v3870
        %4063 = vmatpush1.bf16.msra.mxu0 %v3869
        %4064 = vmatprep.subr.bf16.mxu0 %v3874
        %4065 = vmatpush1.bf16.msra.mxu0 %v3873
        %4066 = vmatprep.mubr.bf16.mxu0 %v3364
        %4067 = vmatmul.mubr.bf16.gmra.mrb[0].mxu0 %v3363
        %v4068 = vpop.f32.mrb[0].mxu0
        %v4069 = vadd.f32 %v3496, %v4068
        %v4070 = vpop.f32.mrb[0].mxu0
        %v4071 = vadd.f32 %v3500, %v4070
        %v4072 = vpop.f32.mrb[0].mxu0
        %v4073 = vadd.f32 %v3496, %v4072
        %v4074 = vpop.f32.mrb[0].mxu0
        %v4075 = vadd.f32 %v3500, %v4074
        %4076 = vmatprep.mubr.bf16.mxu0 %v3368
        %4077 = vmatmul.mubr.bf16.gmra.mrb[0].mxu0 %v3367
        %v4078 = vpop.f32.mrb[0].mxu0
        %v4079 = vadd.f32 %v3496, %v4078
        %v4080 = vpop.f32.mrb[0].mxu0
        %v4081 = vadd.f32 %v3500, %v4080
        %v4082 = vpop.f32.mrb[0].mxu0
        %v4083 = vadd.f32 %v3496, %v4082
        %v4084 = vpop.f32.mrb[0].mxu0
        %v4085 = vadd.f32 %v3500, %v4084
        %4086 = vmatprep.mubr.bf16.mxu0 %v3372
        %4087 = vmatmul.mubr.bf16.gmra.mrb[0].mxu0 %v3371
        %v4088 = vpop.f32.mrb[0].mxu0
        %v4089 = vadd.f32 %v3496, %v4088
        %v4090 = vpop.f32.mrb[0].mxu0
        %v4091 = vadd.f32 %v3500, %v4090
        %v4092 = vpop.f32.mrb[0].mxu0
        %v4093 = vadd.f32 %v3496, %v4092
        %v4094 = vpop.f32.mrb[0].mxu0
        %v4095 = vadd.f32 %v3500, %v4094
        %4096 = vmatprep.mubr.bf16.mxu0 %v3376
        %4097 = vmatmul.mubr.bf16.gmra.mrb[0].mxu0 %v3375
        %v4098 = vpop.f32.mrb[0].mxu0
        %v4099 = vadd.f32 %v3496, %v4098
        %v4100 = vpop.f32.mrb[0].mxu0
        %v4101 = vadd.f32 %v3500, %v4100
        %v4102 = vpop.f32.mrb[0].mxu0
        %v4103 = vadd.f32 %v3496, %v4102
        %v4104 = vpop.f32.mrb[0].mxu0
        %v4105 = vadd.f32 %v3500, %v4104
        %4106 = vmatprep.mubr.bf16.mxu0 %v3380
        %4107 = vmatmul.mubr.bf16.gmra.mrb[0].mxu0 %v3379
        %v4108 = vpop.f32.mrb[0].mxu0
        %v4109 = vadd.f32 %v3496, %v4108
        %v4110 = vpop.f32.mrb[0].mxu0
        %v4111 = vadd.f32 %v3500, %v4110
        %v4112 = vpop.f32.mrb[0].mxu0
        %v4113 = vadd.f32 %v3496, %v4112
        %v4114 = vpop.f32.mrb[0].mxu0
        %v4115 = vadd.f32 %v3500, %v4114
        %4116 = vmatprep.mubr.bf16.mxu0 %v3384
        %4117 = vmatmul.mubr.bf16.gmra.mrb[0].mxu0 %v3383
        %v4118 = vpop.f32.mrb[0].mxu0
        %v4119 = vadd.f32 %v3496, %v4118
        %v4120 = vpop.f32.mrb[0].mxu0
        %v4121 = vadd.f32 %v3500, %v4120
        %v4122 = vpop.f32.mrb[0].mxu0
        %v4123 = vadd.f32 %v3496, %v4122
        %v4124 = vpop.f32.mrb[0].mxu0
        %v4125 = vadd.f32 %v3500, %v4124
        %4126 = vmatprep.mubr.bf16.mxu0 %v3388
        %4127 = vmatmul.mubr.bf16.gmra.mrb[0].mxu0 %v3387
        %v4128 = vpop.f32.mrb[0].mxu0
        %v4129 = vadd.f32 %v3496, %v4128
        %v4130 = vpop.f32.mrb[0].mxu0
        %v4131 = vadd.f32 %v3500, %v4130
        %v4132 = vpop.f32.mrb[0].mxu0
        %v4133 = vpop.f32.mrb[0].mxu0
        %4134 = vdwg.mxu0
        %4135 = vmatprep.subr.bf16.mxu0 %v3878
        %4136 = vmatpush1.bf16.msra.mxu0 %v3877
        %4137 = vmatprep.subr.bf16.mxu0 %v3882
        %4138 = vmatpush1.bf16.msra.mxu0 %v3881
        %4139 = vmatprep.subr.bf16.mxu0 %v3886
        %4140 = vmatpush1.bf16.msra.mxu0 %v3885
        %4141 = vmatprep.subr.bf16.mxu0 %v3890
        %4142 = vmatpush1.bf16.msra.mxu0 %v3889
        %4143 = vmatprep.subr.bf16.mxu0 %v3894
        %4144 = vmatpush1.bf16.msra.mxu0 %v3893
        %4145 = vmatprep.subr.bf16.mxu0 %v3898
        %4146 = vmatpush1.bf16.msra.mxu0 %v3897
        %4147 = vmatprep.subr.bf16.mxu0 %v3902
        %4148 = vmatpush1.bf16.msra.mxu0 %v3901
        %4149 = vmatprep.subr.bf16.mxu0 %v3906
        %4150 = vmatpush1.bf16.msra.mxu0 %v3905
        %4151 = vmatprep.subr.bf16.mxu0 %v3910
        %4152 = vmatpush1.bf16.msra.mxu0 %v3909
        %4153 = vmatprep.subr.bf16.mxu0 0
        %4154 = vmatpush1.bf16.msra.mxu0 0
        %4155 = vmatprep.subr.bf16.mxu0 0
        %4156 = vmatpush1.bf16.msra.mxu0 0
        %4157 = vmatprep.subr.bf16.mxu0 0
        %4158 = vmatpush1.bf16.msra.mxu0 0
        %4159 = vmatprep.subr.bf16.mxu0 0
        %4160 = vmatpush1.bf16.msra.mxu0 0
        %4161 = vmatprep.subr.bf16.mxu0 0
        %4162 = vmatpush1.bf16.msra.mxu0 0
        %4163 = vmatprep.subr.bf16.mxu0 0
        %4164 = vmatpush1.bf16.msra.mxu0 0
        %4165 = vmatprep.subr.bf16.mxu0 0
        %4166 = vmatpush1.bf16.msra.mxu0 0
        %4167 = vmatprep.mubr.bf16.mxu0 %v4014
        %4168 = vmatmul.mubr.bf16.gmra.mrb[0].mxu0 %v3365
        %v4169 = vpop.f32.mrb[0].mxu0
        %v4170 = vadd.f32 %v4069, %v4169
        %v4171 = vpop.f32.mrb[0].mxu0
        %v4172 = vadd.f32 %v4071, %v4171
        %v4173 = vpop.f32.mrb[0].mxu0
        %v4174 = vadd.f32 %v4073, %v4173
        %v4175 = vpop.f32.mrb[0].mxu0
        %v4176 = vadd.f32 %v4075, %v4175
        %4177 = vmatprep.mubr.bf16.mxu0 %v4017
        %4178 = vmatmul.mubr.bf16.gmra.mrb[0].mxu0 %v3369
        %v4179 = vpop.f32.mrb[0].mxu0
        %v4180 = vadd.f32 %v4079, %v4179
        %v4181 = vpop.f32.mrb[0].mxu0
        %v4182 = vadd.f32 %v4081, %v4181
        %v4183 = vpop.f32.mrb[0].mxu0
        %v4184 = vadd.f32 %v4083, %v4183
        %v4185 = vpop.f32.mrb[0].mxu0
        %v4186 = vadd.f32 %v4085, %v4185
        %4187 = vmatprep.mubr.bf16.mxu0 %v4020
        %4188 = vmatmul.mubr.bf16.gmra.mrb[0].mxu0 %v3373
        %v4189 = vpop.f32.mrb[0].mxu0
        %v4190 = vadd.f32 %v4089, %v4189
        %v4191 = vpop.f32.mrb[0].mxu0
        %v4192 = vadd.f32 %v4091, %v4191
        %v4193 = vpop.f32.mrb[0].mxu0
        %v4194 = vadd.f32 %v4093, %v4193
        %v4195 = vpop.f32.mrb[0].mxu0
        %v4196 = vadd.f32 %v4095, %v4195
        %4197 = vmatprep.mubr.bf16.mxu0 %v4023
        %4198 = vmatmul.mubr.bf16.gmra.mrb[0].mxu0 %v3377
        %v4199 = vpop.f32.mrb[0].mxu0
        %v4200 = vadd.f32 %v4099, %v4199
        %v4201 = vpop.f32.mrb[0].mxu0
        %v4202 = vadd.f32 %v4101, %v4201
        %v4203 = vpop.f32.mrb[0].mxu0
        %v4204 = vadd.f32 %v4103, %v4203
        %v4205 = vpop.f32.mrb[0].mxu0
        %v4206 = vadd.f32 %v4105, %v4205
        %4207 = vmatprep.mubr.bf16.mxu0 %v4026
        %4208 = vmatmul.mubr.bf16.gmra.mrb[0].mxu0 %v3381
        %v4209 = vpop.f32.mrb[0].mxu0
        %v4210 = vadd.f32 %v4109, %v4209
        %v4211 = vpop.f32.mrb[0].mxu0
        %v4212 = vadd.f32 %v4111, %v4211
        %v4213 = vpop.f32.mrb[0].mxu0
        %v4214 = vadd.f32 %v4113, %v4213
        %v4215 = vpop.f32.mrb[0].mxu0
        %v4216 = vadd.f32 %v4115, %v4215
        %4217 = vmatprep.mubr.bf16.mxu0 %v4029
        %4218 = vmatmul.mubr.bf16.gmra.mrb[0].mxu0 %v3385
        %v4219 = vpop.f32.mrb[0].mxu0
        %v4220 = vadd.f32 %v4119, %v4219
        %v4221 = vpop.f32.mrb[0].mxu0
        %v4222 = vadd.f32 %v4121, %v4221
        %v4223 = vpop.f32.mrb[0].mxu0
        %v4224 = vadd.f32 %v4123, %v4223
        %v4225 = vpop.f32.mrb[0].mxu0
        %v4226 = vadd.f32 %v4125, %v4225
        %4227 = vmatprep.mubr.bf16.mxu0 %v4032
        %4228 = vmatmul.mubr.bf16.gmra.mrb[0].mxu0 %v3389
        %v4229 = vpop.f32.mrb[0].mxu0
        %v4230 = vadd.f32 %v4129, %v4229
        %v4231 = vpop.f32.mrb[0].mxu0
        %v4232 = vadd.f32 %v4131, %v4231
        %v4233 = vpop.f32.mrb[0].mxu0
        %v4234 = vpop.f32.mrb[0].mxu0
        %4235 = vdwg.mxu0
        %4236 = vmatprep.subr.bf16.mxu0 %v3816
        %4237 = vmatpush1.bf16.msra.mxu0 %v3815
        %4238 = vmatprep.subr.bf16.mxu0 %v3820
        %4239 = vmatpush1.bf16.msra.mxu0 %v3819
        %4240 = vmatprep.subr.bf16.mxu0 %v3824
        %4241 = vmatpush1.bf16.msra.mxu0 %v3823
        %4242 = vmatprep.subr.bf16.mxu0 %v3828
        %4243 = vmatpush1.bf16.msra.mxu0 %v3827
        %4244 = vmatprep.subr.bf16.mxu0 %v3832
        %4245 = vmatpush1.bf16.msra.mxu0 %v3831
        %4246 = vmatprep.subr.bf16.mxu0 %v3836
        %4247 = vmatpush1.bf16.msra.mxu0 %v3835
        %4248 = vmatprep.subr.bf16.mxu0 %v3840
        %4249 = vmatpush1.bf16.msra.mxu0 %v3839
        %4250 = vmatprep.subr.bf16.mxu0 %v3844
        %4251 = vmatpush1.bf16.msra.mxu0 %v3843
        %4252 = vmatprep.subr.bf16.mxu0 %v3848
        %4253 = vmatpush1.bf16.msra.mxu0 %v3847
        %4254 = vmatprep.subr.bf16.mxu0 %v3852
        %4255 = vmatpush1.bf16.msra.mxu0 %v3851
        %4256 = vmatprep.subr.bf16.mxu0 %v3856
        %4257 = vmatpush1.bf16.msra.mxu0 %v3855
        %4258 = vmatprep.subr.bf16.mxu0 %v3860
        %4259 = vmatpush1.bf16.msra.mxu0 %v3859
        %4260 = vmatprep.subr.bf16.mxu0 %v3864
        %4261 = vmatpush1.bf16.msra.mxu0 %v3863
        %4262 = vmatprep.subr.bf16.mxu0 %v3868
        %4263 = vmatpush1.bf16.msra.mxu0 %v3867
        %4264 = vmatprep.subr.bf16.mxu0 %v3872
        %4265 = vmatpush1.bf16.msra.mxu0 %v3871
        %4266 = vmatprep.subr.bf16.mxu0 %v3876
        %4267 = vmatpush1.bf16.msra.mxu0 %v3875
        %4268 = vmatprep.mubr.bf16.mxu0 %v3364
        %4269 = vmatmul.mubr.bf16.gmra.mrb[0].mxu0 %v3363
        %v4270 = vpop.f32.mrb[0].mxu0
        %v4271 = vadd.f32 %v3504, %v4270
        %v4272 = vpop.f32.mrb[0].mxu0
        %v4273 = vadd.f32 %v3508, %v4272
        %v4274 = vpop.f32.mrb[0].mxu0
        %v4275 = vadd.f32 %v3504, %v4274
        %v4276 = vpop.f32.mrb[0].mxu0
        %v4277 = vadd.f32 %v3508, %v4276
        %4278 = vmatprep.mubr.bf16.mxu0 %v3368
        %4279 = vmatmul.mubr.bf16.gmra.mrb[0].mxu0 %v3367
        %v4280 = vpop.f32.mrb[0].mxu0
        %v4281 = vadd.f32 %v3504, %v4280
        %v4282 = vpop.f32.mrb[0].mxu0
        %v4283 = vadd.f32 %v3508, %v4282
        %v4284 = vpop.f32.mrb[0].mxu0
        %v4285 = vadd.f32 %v3504, %v4284
        %v4286 = vpop.f32.mrb[0].mxu0
        %v4287 = vadd.f32 %v3508, %v4286
        %4288 = vmatprep.mubr.bf16.mxu0 %v3372
        %4289 = vmatmul.mubr.bf16.gmra.mrb[0].mxu0 %v3371
        %v4290 = vpop.f32.mrb[0].mxu0
        %v4291 = vadd.f32 %v3504, %v4290
        %v4292 = vpop.f32.mrb[0].mxu0
        %v4293 = vadd.f32 %v3508, %v4292
        %v4294 = vpop.f32.mrb[0].mxu0
        %v4295 = vadd.f32 %v3504, %v4294
        %v4296 = vpop.f32.mrb[0].mxu0
        %v4297 = vadd.f32 %v3508, %v4296
        %4298 = vmatprep.mubr.bf16.mxu0 %v3376
        %4299 = vmatmul.mubr.bf16.gmra.mrb[0].mxu0 %v3375
        %v4300 = vpop.f32.mrb[0].mxu0
        %v4301 = vadd.f32 %v3504, %v4300
        %v4302 = vpop.f32.mrb[0].mxu0
        %v4303 = vadd.f32 %v3508, %v4302
        %v4304 = vpop.f32.mrb[0].mxu0
        %v4305 = vadd.f32 %v3504, %v4304
        %v4306 = vpop.f32.mrb[0].mxu0
        %v4307 = vadd.f32 %v3508, %v4306
        %4308 = vmatprep.mubr.bf16.mxu0 %v3380
        %4309 = vmatmul.mubr.bf16.gmra.mrb[0].mxu0 %v3379
        %v4310 = vpop.f32.mrb[0].mxu0
        %v4311 = vadd.f32 %v3504, %v4310
        %v4312 = vpop.f32.mrb[0].mxu0
        %v4313 = vadd.f32 %v3508, %v4312
        %v4314 = vpop.f32.mrb[0].mxu0
        %v4315 = vadd.f32 %v3504, %v4314
        %v4316 = vpop.f32.mrb[0].mxu0
        %v4317 = vadd.f32 %v3508, %v4316
        %4318 = vmatprep.mubr.bf16.mxu0 %v3384
        %4319 = vmatmul.mubr.bf16.gmra.mrb[0].mxu0 %v3383
        %v4320 = vpop.f32.mrb[0].mxu0
        %v4321 = vadd.f32 %v3504, %v4320
        %v4322 = vpop.f32.mrb[0].mxu0
        %v4323 = vadd.f32 %v3508, %v4322
        %v4324 = vpop.f32.mrb[0].mxu0
        %v4325 = vadd.f32 %v3504, %v4324
        %v4326 = vpop.f32.mrb[0].mxu0
        %v4327 = vadd.f32 %v3508, %v4326
        %4328 = vmatprep.mubr.bf16.mxu0 %v3388
        %4329 = vmatmul.mubr.bf16.gmra.mrb[0].mxu0 %v3387
        %v4330 = vpop.f32.mrb[0].mxu0
        %v4331 = vadd.f32 %v3504, %v4330
        %v4332 = vpop.f32.mrb[0].mxu0
        %v4333 = vadd.f32 %v3508, %v4332
        %v4334 = vpop.f32.mrb[0].mxu0
        %v4335 = vpop.f32.mrb[0].mxu0
        %4336 = vdwg.mxu0
        %4337 = vmatprep.subr.bf16.mxu0 %v3880
        %4338 = vmatpush1.bf16.msra.mxu0 %v3879
        %4339 = vmatprep.subr.bf16.mxu0 %v3884
        %4340 = vmatpush1.bf16.msra.mxu0 %v3883
        %4341 = vmatprep.subr.bf16.mxu0 %v3888
        %4342 = vmatpush1.bf16.msra.mxu0 %v3887
        %4343 = vmatprep.subr.bf16.mxu0 %v3892
        %4344 = vmatpush1.bf16.msra.mxu0 %v3891
        %4345 = vmatprep.subr.bf16.mxu0 %v3896
        %4346 = vmatpush1.bf16.msra.mxu0 %v3895
        %4347 = vmatprep.subr.bf16.mxu0 %v3900
        %4348 = vmatpush1.bf16.msra.mxu0 %v3899
        %4349 = vmatprep.subr.bf16.mxu0 %v3904
        %4350 = vmatpush1.bf16.msra.mxu0 %v3903
        %4351 = vmatprep.subr.bf16.mxu0 %v3908
        %4352 = vmatpush1.bf16.msra.mxu0 %v3907
        %4353 = vmatprep.subr.bf16.mxu0 %v3912
        %4354 = vmatpush1.bf16.msra.mxu0 %v3911
        %4355 = vmatprep.subr.bf16.mxu0 0
        %4356 = vmatpush1.bf16.msra.mxu0 0
        %4357 = vmatprep.subr.bf16.mxu0 0
        %4358 = vmatpush1.bf16.msra.mxu0 0
        %4359 = vmatprep.subr.bf16.mxu0 0
        %4360 = vmatpush1.bf16.msra.mxu0 0
        %4361 = vmatprep.subr.bf16.mxu0 0
        %4362 = vmatpush1.bf16.msra.mxu0 0
        %4363 = vmatprep.subr.bf16.mxu0 0
        %4364 = vmatpush1.bf16.msra.mxu0 0
        %4365 = vmatprep.subr.bf16.mxu0 0
        %4366 = vmatpush1.bf16.msra.mxu0 0
        %4367 = vmatprep.subr.bf16.mxu0 0
        %4368 = vmatpush1.bf16.msra.mxu0 0
        %4369 = vmatprep.mubr.bf16.mxu0 %v4014
        %4370 = vmatmul.mubr.bf16.gmra.mrb[0].mxu0 %v3365
        %v4371 = vpop.f32.mrb[0].mxu0
        %v4372 = vadd.f32 %v4271, %v4371
        %v4373 = vpop.f32.mrb[0].mxu0
        %v4374 = vadd.f32 %v4273, %v4373
        %v4375 = vpop.f32.mrb[0].mxu0
        %v4376 = vadd.f32 %v4275, %v4375
        %v4377 = vpop.f32.mrb[0].mxu0
        %v4378 = vadd.f32 %v4277, %v4377
        %4379 = vmatprep.mubr.bf16.mxu0 %v4017
        %4380 = vmatmul.mubr.bf16.gmra.mrb[0].mxu0 %v3369
        %v4381 = vpop.f32.mrb[0].mxu0
        %v4382 = vadd.f32 %v4281, %v4381
        %v4383 = vpop.f32.mrb[0].mxu0
        %v4384 = vadd.f32 %v4283, %v4383
        %v4385 = vpop.f32.mrb[0].mxu0
        %v4386 = vadd.f32 %v4285, %v4385
        %v4387 = vpop.f32.mrb[0].mxu0
        %v4388 = vadd.f32 %v4287, %v4387
        %4389 = vmatprep.mubr.bf16.mxu0 %v4020
        %4390 = vmatmul.mubr.bf16.gmra.mrb[0].mxu0 %v3373
        %v4391 = vpop.f32.mrb[0].mxu0
        %v4392 = vadd.f32 %v4291, %v4391
        %v4393 = vpop.f32.mrb[0].mxu0
        %v4394 = vadd.f32 %v4293, %v4393
        %v4395 = vpop.f32.mrb[0].mxu0
        %v4396 = vadd.f32 %v4295, %v4395
        %v4397 = vpop.f32.mrb[0].mxu0
        %v4398 = vadd.f32 %v4297, %v4397
        %4399 = vmatprep.mubr.bf16.mxu0 %v4023
        %4400 = vmatmul.mubr.bf16.gmra.mrb[0].mxu0 %v3377
        %v4401 = vpop.f32.mrb[0].mxu0
        %v4402 = vadd.f32 %v4301, %v4401
        %v4403 = vpop.f32.mrb[0].mxu0
        %v4404 = vadd.f32 %v4303, %v4403
        %v4405 = vpop.f32.mrb[0].mxu0
        %v4406 = vadd.f32 %v4305, %v4405
        %v4407 = vpop.f32.mrb[0].mxu0
        %v4408 = vadd.f32 %v4307, %v4407
        %4409 = vmatprep.mubr.bf16.mxu0 %v4026
        %4410 = vmatmul.mubr.bf16.gmra.mrb[0].mxu0 %v3381
        %v4411 = vpop.f32.mrb[0].mxu0
        %v4412 = vadd.f32 %v4311, %v4411
        %v4413 = vpop.f32.mrb[0].mxu0
        %v4414 = vadd.f32 %v4313, %v4413
        %v4415 = vpop.f32.mrb[0].mxu0
        %v4416 = vadd.f32 %v4315, %v4415
        %v4417 = vpop.f32.mrb[0].mxu0
        %v4418 = vadd.f32 %v4317, %v4417
        %4419 = vmatprep.mubr.bf16.mxu0 %v4029
        %4420 = vmatmul.mubr.bf16.gmra.mrb[0].mxu0 %v3385
        %v4421 = vpop.f32.mrb[0].mxu0
        %v4422 = vadd.f32 %v4321, %v4421
        %v4423 = vpop.f32.mrb[0].mxu0
        %v4424 = vadd.f32 %v4323, %v4423
        %v4425 = vpop.f32.mrb[0].mxu0
        %v4426 = vadd.f32 %v4325, %v4425
        %v4427 = vpop.f32.mrb[0].mxu0
        %v4428 = vadd.f32 %v4327, %v4427
        %4429 = vmatprep.mubr.bf16.mxu0 %v4032
        %4430 = vmatmul.mubr.bf16.gmra.mrb[0].mxu0 %v3389
        %v4431 = vpop.f32.mrb[0].mxu0
        %v4432 = vadd.f32 %v4331, %v4431
        %v4433 = vpop.f32.mrb[0].mxu0
        %v4434 = vadd.f32 %v4333, %v4433
        %v4435 = vpop.f32.mrb[0].mxu0
        %v4436 = vpop.f32.mrb[0].mxu0
        %4437 = vdwg.mxu0
        %v4438 = vmax.f32 %v4170, 0.0
        %v4439 = vmax.f32 %v4172, 0.0
        %v4440 = vmax.f32 %v4372, 0.0
        %v4441 = vmax.f32 %v4374, 0.0
        %v4442 = vmax.f32 %v4174, 0.0
        %v4443 = vmax.f32 %v4176, 0.0
        %v4444 = vmax.f32 %v4376, 0.0
        %v4445 = vmax.f32 %v4378, 0.0
        %v4446 = vmax.f32 %v4180, 0.0
        %v4447 = vmax.f32 %v4182, 0.0
        %v4448 = vmax.f32 %v4382, 0.0
        %v4449 = vmax.f32 %v4384, 0.0
        %v4450 = vmax.f32 %v4184, 0.0
        %v4451 = vmax.f32 %v4186, 0.0
        %v4452 = vmax.f32 %v4386, 0.0
        %v4453 = vmax.f32 %v4388, 0.0
        %v4454 = vmax.f32 %v4190, 0.0
        %v4455 = vmax.f32 %v4192, 0.0
        %v4456 = vmax.f32 %v4392, 0.0
        %v4457 = vmax.f32 %v4394, 0.0
        %v4458 = vmax.f32 %v4194, 0.0
        %v4459 = vmax.f32 %v4196, 0.0
        %v4460 = vmax.f32 %v4396, 0.0
        %v4461 = vmax.f32 %v4398, 0.0
        %v4462 = vmax.f32 %v4200, 0.0
        %v4463 = vmax.f32 %v4202, 0.0
        %v4464 = vmax.f32 %v4402, 0.0
        %v4465 = vmax.f32 %v4404, 0.0
        %v4466 = vmax.f32 %v4204, 0.0
        %v4467 = vmax.f32 %v4206, 0.0
        %v4468 = vmax.f32 %v4406, 0.0
        %v4469 = vmax.f32 %v4408, 0.0
        %v4470 = vmax.f32 %v4210, 0.0
        %v4471 = vmax.f32 %v4212, 0.0
        %v4472 = vmax.f32 %v4412, 0.0
        %v4473 = vmax.f32 %v4414, 0.0
        %v4474 = vmax.f32 %v4214, 0.0
        %v4475 = vmax.f32 %v4216, 0.0
        %v4476 = vmax.f32 %v4416, 0.0
        %v4477 = vmax.f32 %v4418, 0.0
        %v4478 = vmax.f32 %v4220, 0.0
        %v4479 = vmax.f32 %v4222, 0.0
        %v4480 = vmax.f32 %v4422, 0.0
        %v4481 = vmax.f32 %v4424, 0.0
        %v4482 = vmax.f32 %v4224, 0.0
        %v4483 = vmax.f32 %v4226, 0.0
        %v4484 = vmax.f32 %v4426, 0.0
        %v4485 = vmax.f32 %v4428, 0.0
        %v4486 = vmax.f32 %v4230, 0.0
        %v4487 = vmax.f32 %v4232, 0.0
        %v4488 = vmax.f32 %v4432, 0.0
        %v4489 = vmax.f32 %v4434, 0.0
        %v4490 = vpack.c.bf16 %v4442, %v4438
        %v4491 = vpack.c.bf16 %v4443, %v4439
        %v4492 = vpack.c.bf16 %v4444, %v4440
        %v4493 = vpack.c.bf16 %v4445, %v4441
        %v4494 = vpack.c.bf16 %v4450, %v4446
        %v4495 = vpack.c.bf16 %v4451, %v4447
        %v4496 = vpack.c.bf16 %v4452, %v4448
        %v4497 = vpack.c.bf16 %v4453, %v4449
        %v4498 = vpack.c.bf16 %v4458, %v4454
        %v4499 = vpack.c.bf16 %v4459, %v4455
        %v4500 = vpack.c.bf16 %v4460, %v4456
        %v4501 = vpack.c.bf16 %v4461, %v4457
        %v4502 = vpack.c.bf16 %v4466, %v4462
        %v4503 = vpack.c.bf16 %v4467, %v4463
        %v4504 = vpack.c.bf16 %v4468, %v4464
        %v4505 = vpack.c.bf16 %v4469, %v4465
        %v4506 = vpack.c.bf16 %v4474, %v4470
        %v4507 = vpack.c.bf16 %v4475, %v4471
        %v4508 = vpack.c.bf16 %v4476, %v4472
        %v4509 = vpack.c.bf16 %v4477, %v4473
        %v4510 = vpack.c.bf16 %v4482, %v4478
        %v4511 = vpack.c.bf16 %v4483, %v4479
        %v4512 = vpack.c.bf16 %v4484, %v4480
        %v4513 = vpack.c.bf16 %v4485, %v4481
        %v4514 = vpack.c.bf16 %v4486, %v4486
        %v4515 = vpack.c.bf16 %v4487, %v4487
        %v4516 = vpack.c.bf16 %v4488, %v4488
        %v4517 = vpack.c.bf16 %v4489, %v4489
        %v4518 = vld [vmem:[#allocation13] sm:$0xff]
        %v4519 = vld [vmem:[#allocation13 + $0x8] sm:$0xff]
        %v4520 = vld [vmem:[#allocation13 + $0x10] sm:$0xff]
        %v4521 = vld [vmem:[#allocation13 + $0x18] sm:$0xff]
        %v4522 = vld [vmem:[#allocation13 + $0x20] sm:$0xff]
        %v4523 = vld [vmem:[#allocation13 + $0x28] sm:$0xff]
        %v4524 = vld [vmem:[#allocation13 + $0x30] sm:$0xff]
        %v4525 = vld [vmem:[#allocation13 + $0x38] sm:$0xff]
        %v4526 = vld [vmem:[#allocation13 + $0x40] sm:$0xff]
        %v4527 = vld [vmem:[#allocation13 + $0x48] sm:$0xff]
        %v4528 = vld [vmem:[#allocation13 + $0x50] sm:$0xff]
        %v4529 = vld [vmem:[#allocation13 + $0x58] sm:$0xff]
        %v4530 = vld [vmem:[#allocation13 + $0x60] sm:$0xff]
        %v4531 = vld [vmem:[#allocation13 + $0x68] sm:$0xff]
        %v4532 = vld [vmem:[#allocation13 + $0x70] sm:$0xff]
        %v4533 = vld [vmem:[#allocation13 + $0x78] sm:$0xff]
        %v4534 = vld [vmem:[#allocation13 + $0x80] sm:$0xff]
        %v4535 = vld [vmem:[#allocation13 + $0x88] sm:$0xff]
        %v4536 = vld [vmem:[#allocation13 + $0x90] sm:$0xff]
        %v4537 = vld [vmem:[#allocation13 + $0x98] sm:$0xff]
        %v4538 = vld [vmem:[#allocation13 + $0xa0] sm:$0xff]
        %v4539 = vld [vmem:[#allocation13 + $0xa8] sm:$0xff]
        %v4540 = vld [vmem:[#allocation13 + $0xb0] sm:$0xff]
        %v4541 = vld [vmem:[#allocation13 + $0xb8] sm:$0xff]
        %v4542 = vld [vmem:[#allocation13 + $0xc0] sm:$0xff]
        %v4543 = vld [vmem:[#allocation13 + $0xc8] sm:$0xff]
        %v4544 = vld [vmem:[#allocation13 + $0xd0] sm:$0xff]
        %v4545 = vld [vmem:[#allocation13 + $0xd8] sm:$0xff]
        %v4546 = vld [vmem:[#allocation13 + $0xe0] sm:$0xff]
        %v4547 = vld [vmem:[#allocation13 + $0xe8] sm:$0xff]
        %v4548 = vld [vmem:[#allocation13 + $0xf0] sm:$0xff]
        %v4549 = vld [vmem:[#allocation13 + $0xf8] sm:$0xff]
        %v4550 = vld [vmem:[#allocation13 + $0x100] sm:$0xff]
        %v4551 = vld [vmem:[#allocation13 + $0x108] sm:$0xff]
        %v4552 = vld [vmem:[#allocation13 + $0x110] sm:$0xff]
        %v4553 = vld [vmem:[#allocation13 + $0x118] sm:$0xff]
        %v4554 = vld [vmem:[#allocation13 + $0x120] sm:$0xff]
        %v4555 = vld [vmem:[#allocation13 + $0x128] sm:$0xff]
        %v4556 = vld [vmem:[#allocation13 + $0x130] sm:$0xff]
        %v4557 = vld [vmem:[#allocation13 + $0x138] sm:$0xff]
        %v4558 = vld [vmem:[#allocation13 + $0x140] sm:$0xff]
        %v4559 = vld [vmem:[#allocation13 + $0x148] sm:$0xff]
        %v4560 = vld [vmem:[#allocation13 + $0x150] sm:$0xff]
        %v4561 = vld [vmem:[#allocation13 + $0x158] sm:$0xff]
        %v4562 = vld [vmem:[#allocation13 + $0x160] sm:$0xff]
        %v4563 = vld [vmem:[#allocation13 + $0x168] sm:$0xff]
        %v4564 = vld [vmem:[#allocation13 + $0x170] sm:$0xff]
        %v4565 = vld [vmem:[#allocation13 + $0x178] sm:$0xff]
        %v4566 = vld [vmem:[#allocation13 + $0x180] sm:$0xff]
        %v4567 = vld [vmem:[#allocation13 + $0x188] sm:$0xff]
        %v4568 = vld [vmem:[#allocation13 + $0x190] sm:$0xff]
        %v4569 = vld [vmem:[#allocation13 + $0x198] sm:$0xff]
        %v4570 = vld [vmem:[#allocation13 + $0x1a0] sm:$0xff]
        %v4571 = vld [vmem:[#allocation13 + $0x1a8] sm:$0xff]
        %v4572 = vld [vmem:[#allocation13 + $0x1b0] sm:$0xff]
        %v4573 = vld [vmem:[#allocation13 + $0x1b8] sm:$0xff]
        %v4574 = vld [vmem:[#allocation13 + $0x1c0] sm:$0xff]
        %v4575 = vld [vmem:[#allocation13 + $0x1c8] sm:$0xff]
        %v4576 = vld [vmem:[#allocation13 + $0x1d0] sm:$0xff]
        %v4577 = vld [vmem:[#allocation13 + $0x1d8] sm:$0xff]
        %v4578 = vld [vmem:[#allocation13 + $0x1e0] sm:$0xff]
        %v4579 = vld [vmem:[#allocation13 + $0x1e8] sm:$0xff]
        %v4580 = vld [vmem:[#allocation13 + $0x1f0] sm:$0xff]
        %v4581 = vld [vmem:[#allocation13 + $0x1f8] sm:$0xff]
        %v4582 = vld [vmem:[#allocation13 + $0x200] sm:$0xff]
        %v4583 = vld [vmem:[#allocation13 + $0x208] sm:$0xff]
        %v4584 = vld [vmem:[#allocation13 + $0x210] sm:$0xff]
        %v4585 = vld [vmem:[#allocation13 + $0x218] sm:$0xff]
        %v4586 = vld [vmem:[#allocation13 + $0x220] sm:$0xff]
        %v4587 = vld [vmem:[#allocation13 + $0x228] sm:$0xff]
        %v4588 = vld [vmem:[#allocation13 + $0x230] sm:$0xff]
        %v4589 = vld [vmem:[#allocation13 + $0x238] sm:$0xff]
        %v4590 = vld [vmem:[#allocation13 + $0x240] sm:$0xff]
        %v4591 = vld [vmem:[#allocation13 + $0x248] sm:$0xff]
        %v4592 = vld [vmem:[#allocation13 + $0x250] sm:$0xff]
        %v4593 = vld [vmem:[#allocation13 + $0x258] sm:$0xff]
        %v4594 = vld [vmem:[#allocation13 + $0x260] sm:$0xff]
        %v4595 = vld [vmem:[#allocation13 + $0x268] sm:$0xff]
        %v4596 = vld [vmem:[#allocation13 + $0x270] sm:$0xff]
        %v4597 = vld [vmem:[#allocation13 + $0x278] sm:$0xff]
        %v4598 = vld [vmem:[#allocation13 + $0x280] sm:$0xff]
        %v4599 = vld [vmem:[#allocation13 + $0x288] sm:$0xff]
        %v4600 = vld [vmem:[#allocation13 + $0x290] sm:$0xff]
        %v4601 = vld [vmem:[#allocation13 + $0x298] sm:$0xff]
        %v4602 = vld [vmem:[#allocation13 + $0x2a0] sm:$0xff]
        %v4603 = vld [vmem:[#allocation13 + $0x2a8] sm:$0xff]
        %v4604 = vld [vmem:[#allocation13 + $0x2b0] sm:$0xff]
        %v4605 = vld [vmem:[#allocation13 + $0x2b8] sm:$0xff]
        %v4606 = vld [vmem:[#allocation13 + $0x2c0] sm:$0xff]
        %v4607 = vld [vmem:[#allocation13 + $0x2c8] sm:$0xff]
        %v4608 = vld [vmem:[#allocation13 + $0x2d0] sm:$0xff]
        %v4609 = vld [vmem:[#allocation13 + $0x2d8] sm:$0xff]
        %v4610 = vld [vmem:[#allocation13 + $0x2e0] sm:$0xff]
        %v4611 = vld [vmem:[#allocation13 + $0x2e8] sm:$0xff]
        %v4612 = vld [vmem:[#allocation13 + $0x2f0] sm:$0xff]
        %v4613 = vld [vmem:[#allocation13 + $0x2f8] sm:$0xff]
        %v4614 = vld [vmem:[#allocation13 + $0x300] sm:$0xff]
        %v4615 = vld [vmem:[#allocation13 + $0x308] sm:$0xff]
        %v4616 = vld [vmem:[#allocation13 + $0x310] sm:$0xff]
        %v4617 = vld [vmem:[#allocation13 + $0x318] sm:$0xff]
        %v4618 = vld [vmem:[#allocation15] sm:$0xf]
        %v4620 = vlaneseq
        %v4621 = vshrl.u32 %v4620, 7
        %v4622 = vsub.s32 0, %v4621
        %v4623 = vrot.slane %v4618, %v4622
        %v4624 = vlaneseq
        %v4625 = vshrl.u32 %v4624, 7
        %v4626 = vsub.s32 1, %v4625
        %v4627 = vrot.slane %v4618, %v4626
        %v4628 = vlaneseq
        %v4629 = vshrl.u32 %v4628, 7
        %v4630 = vsub.s32 2, %v4629
        %v4631 = vrot.slane %v4618, %v4630
        %v4632 = vlaneseq
        %v4633 = vshrl.u32 %v4632, 7
        %v4634 = vsub.s32 3, %v4633
        %v4635 = vrot.slane %v4618, %v4634
        %v4740 = vunpack.c.l.b16 %v4518
        %v4741 = vunpack.c.h.b16 %v4518
        %v4742 = vunpack.c.l.b16 %v4519
        %v4743 = vunpack.c.h.b16 %v4519
        %v4744 = vunpack.c.l.b16 %v4520
        %v4745 = vunpack.c.h.b16 %v4520
        %v4746 = vunpack.c.l.b16 %v4521
        %v4747 = vunpack.c.h.b16 %v4521
        %v4748 = vunpack.c.l.b16 %v4522
        %v4749 = vunpack.c.h.b16 %v4522
        %v4750 = vunpack.c.l.b16 %v4523
        %v4751 = vunpack.c.h.b16 %v4523
        %v4752 = vunpack.c.l.b16 %v4524
        %v4753 = vunpack.c.h.b16 %v4524
        %v4754 = vunpack.c.l.b16 %v4525
        %v4755 = vunpack.c.h.b16 %v4525
        %v4756 = vunpack.c.l.b16 %v4526
        %v4757 = vunpack.c.h.b16 %v4526
        %v4758 = vunpack.c.l.b16 %v4527
        %v4759 = vunpack.c.h.b16 %v4527
        %v4760 = vunpack.c.l.b16 %v4528
        %v4761 = vunpack.c.h.b16 %v4528
        %v4762 = vunpack.c.l.b16 %v4529
        %v4763 = vunpack.c.h.b16 %v4529
        %v4764 = vunpack.c.l.b16 %v4530
        %v4765 = vunpack.c.h.b16 %v4530
        %v4766 = vunpack.c.l.b16 %v4531
        %v4767 = vunpack.c.h.b16 %v4531
        %v4768 = vunpack.c.l.b16 %v4532
        %v4769 = vunpack.c.h.b16 %v4532
        %v4770 = vunpack.c.l.b16 %v4533
        %v4771 = vunpack.c.h.b16 %v4533
        %v4772 = vunpack.c.l.b16 %v4534
        %v4773 = vunpack.c.h.b16 %v4534
        %v4774 = vunpack.c.l.b16 %v4535
        %v4775 = vunpack.c.h.b16 %v4535
        %v4776 = vunpack.c.l.b16 %v4536
        %v4777 = vunpack.c.h.b16 %v4536
        %v4778 = vunpack.c.l.b16 %v4537
        %v4779 = vunpack.c.h.b16 %v4537
        %v4780 = vunpack.c.l.b16 %v4538
        %v4781 = vunpack.c.h.b16 %v4538
        %v4782 = vunpack.c.l.b16 %v4539
        %v4783 = vunpack.c.h.b16 %v4539
        %v4784 = vunpack.c.l.b16 %v4540
        %v4785 = vunpack.c.h.b16 %v4540
        %v4786 = vunpack.c.l.b16 %v4541
        %v4787 = vunpack.c.h.b16 %v4541
        %v4788 = vunpack.c.l.b16 %v4542
        %v4789 = vunpack.c.h.b16 %v4542
        %v4790 = vunpack.c.l.b16 %v4543
        %v4791 = vunpack.c.h.b16 %v4543
        %v4792 = vunpack.c.l.b16 %v4544
        %v4793 = vunpack.c.h.b16 %v4544
        %v4794 = vunpack.c.l.b16 %v4545
        %v4795 = vunpack.c.h.b16 %v4545
        %v4796 = vunpack.c.l.b16 %v4546
        %v4797 = vunpack.c.h.b16 %v4546
        %v4798 = vunpack.c.l.b16 %v4547
        %v4799 = vunpack.c.h.b16 %v4547
        %v4800 = vunpack.c.l.b16 %v4548
        %v4801 = vunpack.c.h.b16 %v4548
        %v4802 = vunpack.c.l.b16 %v4549
        %v4803 = vunpack.c.h.b16 %v4549
        %v4804 = vunpack.c.l.b16 %v4550
        %v4805 = vunpack.c.h.b16 %v4550
        %v4806 = vunpack.c.l.b16 %v4551
        %v4807 = vunpack.c.h.b16 %v4551
        %v4808 = vunpack.c.l.b16 %v4552
        %v4809 = vunpack.c.h.b16 %v4552
        %v4810 = vunpack.c.l.b16 %v4553
        %v4811 = vunpack.c.h.b16 %v4553
        %v4812 = vunpack.c.l.b16 %v4554
        %v4813 = vunpack.c.h.b16 %v4554
        %v4814 = vunpack.c.l.b16 %v4555
        %v4815 = vunpack.c.h.b16 %v4555
        %v4816 = vunpack.c.l.b16 %v4556
        %v4817 = vunpack.c.h.b16 %v4556
        %v4818 = vunpack.c.l.b16 %v4557
        %v4819 = vunpack.c.h.b16 %v4557
        %v4820 = vunpack.c.l.b16 %v4558
        %v4821 = vunpack.c.h.b16 %v4558
        %v4822 = vunpack.c.l.b16 %v4559
        %v4823 = vunpack.c.h.b16 %v4559
        %v4824 = vunpack.c.l.b16 %v4560
        %v4825 = vunpack.c.h.b16 %v4560
        %v4826 = vunpack.c.l.b16 %v4561
        %v4827 = vunpack.c.h.b16 %v4561
        %v4828 = vunpack.c.l.b16 %v4562
        %v4829 = vunpack.c.h.b16 %v4562
        %v4830 = vunpack.c.l.b16 %v4563
        %v4831 = vunpack.c.h.b16 %v4563
        %v4832 = vunpack.c.l.b16 %v4564
        %v4833 = vunpack.c.h.b16 %v4564
        %v4834 = vunpack.c.l.b16 %v4565
        %v4835 = vunpack.c.h.b16 %v4565
        %v4836 = vunpack.c.l.b16 %v4566
        %v4837 = vunpack.c.h.b16 %v4566
        %v4838 = vunpack.c.l.b16 %v4567
        %v4839 = vunpack.c.h.b16 %v4567
        %v4840 = vunpack.c.l.b16 %v4568
        %v4841 = vunpack.c.h.b16 %v4568
        %v4842 = vunpack.c.l.b16 %v4569
        %v4843 = vunpack.c.h.b16 %v4569
        %v4844 = vunpack.c.l.b16 %v4570
        %v4845 = vunpack.c.h.b16 %v4570
        %v4846 = vunpack.c.l.b16 %v4571
        %v4847 = vunpack.c.h.b16 %v4571
        %v4848 = vunpack.c.l.b16 %v4572
        %v4849 = vunpack.c.h.b16 %v4572
        %v4850 = vunpack.c.l.b16 %v4573
        %v4851 = vunpack.c.h.b16 %v4573
        %v4852 = vunpack.c.l.b16 %v4574
        %v4853 = vunpack.c.h.b16 %v4574
        %v4854 = vunpack.c.l.b16 %v4575
        %v4855 = vunpack.c.h.b16 %v4575
        %v4856 = vunpack.c.l.b16 %v4576
        %v4857 = vunpack.c.h.b16 %v4576
        %v4858 = vunpack.c.l.b16 %v4577
        %v4859 = vunpack.c.h.b16 %v4577
        %v4860 = vunpack.c.l.b16 %v4578
        %v4861 = vunpack.c.h.b16 %v4578
        %v4862 = vunpack.c.l.b16 %v4579
        %v4863 = vunpack.c.h.b16 %v4579
        %v4864 = vunpack.c.l.b16 %v4580
        %v4865 = vunpack.c.h.b16 %v4580
        %v4866 = vunpack.c.l.b16 %v4581
        %v4867 = vunpack.c.h.b16 %v4581
        %v4868 = vunpack.c.l.b16 %v4582
        %v4869 = vunpack.c.h.b16 %v4582
        %v4870 = vunpack.c.l.b16 %v4583
        %v4871 = vunpack.c.h.b16 %v4583
        %v4872 = vunpack.c.l.b16 %v4584
        %v4873 = vunpack.c.h.b16 %v4584
        %v4874 = vunpack.c.l.b16 %v4585
        %v4875 = vunpack.c.h.b16 %v4585
        %v4876 = vunpack.c.l.b16 %v4586
        %v4877 = vunpack.c.h.b16 %v4586
        %v4878 = vunpack.c.l.b16 %v4587
        %v4879 = vunpack.c.h.b16 %v4587
        %v4880 = vunpack.c.l.b16 %v4588
        %v4881 = vunpack.c.h.b16 %v4588
        %v4882 = vunpack.c.l.b16 %v4589
        %v4883 = vunpack.c.h.b16 %v4589
        %v4884 = vunpack.c.l.b16 %v4590
        %v4885 = vunpack.c.h.b16 %v4590
        %v4886 = vunpack.c.l.b16 %v4591
        %v4887 = vunpack.c.h.b16 %v4591
        %v4888 = vunpack.c.l.b16 %v4592
        %v4889 = vunpack.c.h.b16 %v4592
        %v4890 = vunpack.c.l.b16 %v4593
        %v4891 = vunpack.c.h.b16 %v4593
        %v4892 = vunpack.c.l.b16 %v4594
        %v4893 = vunpack.c.h.b16 %v4594
        %v4894 = vunpack.c.l.b16 %v4595
        %v4895 = vunpack.c.h.b16 %v4595
        %v4896 = vunpack.c.l.b16 %v4596
        %v4897 = vunpack.c.h.b16 %v4596
        %v4898 = vunpack.c.l.b16 %v4597
        %v4899 = vunpack.c.h.b16 %v4597
        %v4900 = vunpack.c.l.b16 %v4598
        %v4901 = vunpack.c.h.b16 %v4598
        %v4902 = vunpack.c.l.b16 %v4599
        %v4903 = vunpack.c.h.b16 %v4599
        %v4904 = vunpack.c.l.b16 %v4600
        %v4905 = vunpack.c.h.b16 %v4600
        %v4906 = vunpack.c.l.b16 %v4601
        %v4907 = vunpack.c.h.b16 %v4601
        %v4908 = vunpack.c.l.b16 %v4602
        %v4909 = vunpack.c.h.b16 %v4602
        %v4910 = vunpack.c.l.b16 %v4603
        %v4911 = vunpack.c.h.b16 %v4603
        %v4912 = vunpack.c.l.b16 %v4604
        %v4913 = vunpack.c.h.b16 %v4604
        %v4914 = vunpack.c.l.b16 %v4605
        %v4915 = vunpack.c.h.b16 %v4605
        %v4916 = vunpack.c.l.b16 %v4606
        %v4917 = vunpack.c.h.b16 %v4606
        %v4918 = vunpack.c.l.b16 %v4607
        %v4919 = vunpack.c.h.b16 %v4607
        %v4920 = vunpack.c.l.b16 %v4608
        %v4921 = vunpack.c.h.b16 %v4608
        %v4922 = vunpack.c.l.b16 %v4609
        %v4923 = vunpack.c.h.b16 %v4609
        %v4924 = vunpack.c.l.b16 %v4610
        %v4925 = vunpack.c.h.b16 %v4610
        %v4926 = vunpack.c.l.b16 %v4611
        %v4927 = vunpack.c.h.b16 %v4611
        %v4928 = vunpack.c.l.b16 %v4612
        %v4929 = vunpack.c.h.b16 %v4612
        %v4930 = vunpack.c.l.b16 %v4613
        %v4931 = vunpack.c.h.b16 %v4613
        %v4932 = vunpack.c.l.b16 %v4614
        %v4933 = vunpack.c.h.b16 %v4614
        %v4934 = vunpack.c.l.b16 %v4615
        %v4935 = vunpack.c.h.b16 %v4615
        %v4936 = vunpack.c.l.b16 %v4616
        %v4937 = vunpack.c.h.b16 %v4616
        %v4938 = vunpack.c.l.b16 %v4617
        %v4939 = vunpack.c.h.b16 %v4617
        %v4940 = vpack.c.b16 %v4744, %v4740
        %v4941 = vpack.c.b16 %v4745, %v4741
        %v4942 = vpack.c.b16 %v4746, %v4742
        %v4943 = vpack.c.b16 %v4747, %v4743
        %v4944 = vpack.c.b16 %v4752, %v4748
        %v4945 = vpack.c.b16 %v4753, %v4749
        %v4946 = vpack.c.b16 %v4754, %v4750
        %v4947 = vpack.c.b16 %v4755, %v4751
        %v4948 = vpack.c.b16 %v4760, %v4756
        %v4949 = vpack.c.b16 %v4761, %v4757
        %v4950 = vpack.c.b16 %v4762, %v4758
        %v4951 = vpack.c.b16 %v4763, %v4759
        %v4952 = vpack.c.b16 %v4768, %v4764
        %v4953 = vpack.c.b16 %v4769, %v4765
        %v4954 = vpack.c.b16 %v4770, %v4766
        %v4955 = vpack.c.b16 %v4771, %v4767
        %v4956 = vpack.c.b16 %v4776, %v4772
        %v4957 = vpack.c.b16 %v4777, %v4773
        %v4958 = vpack.c.b16 %v4778, %v4774
        %v4959 = vpack.c.b16 %v4779, %v4775
        %v4960 = vpack.c.b16 %v4784, %v4780
        %v4961 = vpack.c.b16 %v4785, %v4781
        %v4962 = vpack.c.b16 %v4786, %v4782
        %v4963 = vpack.c.b16 %v4787, %v4783
        %v4964 = vpack.c.b16 %v4792, %v4788
        %v4965 = vpack.c.b16 %v4793, %v4789
        %v4966 = vpack.c.b16 %v4794, %v4790
        %v4967 = vpack.c.b16 %v4795, %v4791
        %v4968 = vpack.c.b16 %v4800, %v4796
        %v4969 = vpack.c.b16 %v4801, %v4797
        %v4970 = vpack.c.b16 %v4802, %v4798
        %v4971 = vpack.c.b16 %v4803, %v4799
        %v4972 = vpack.c.b16 %v4808, %v4804
        %v4973 = vpack.c.b16 %v4809, %v4805
        %v4974 = vpack.c.b16 %v4810, %v4806
        %v4975 = vpack.c.b16 %v4811, %v4807
        %v4976 = vpack.c.b16 %v4816, %v4812
        %v4977 = vpack.c.b16 %v4817, %v4813
        %v4978 = vpack.c.b16 %v4818, %v4814
        %v4979 = vpack.c.b16 %v4819, %v4815
        %v4980 = vpack.c.b16 %v4824, %v4820
        %v4981 = vpack.c.b16 %v4825, %v4821
        %v4982 = vpack.c.b16 %v4826, %v4822
        %v4983 = vpack.c.b16 %v4827, %v4823
        %v4984 = vpack.c.b16 %v4832, %v4828
        %v4985 = vpack.c.b16 %v4833, %v4829
        %v4986 = vpack.c.b16 %v4834, %v4830
        %v4987 = vpack.c.b16 %v4835, %v4831
        %v4988 = vpack.c.b16 %v4840, %v4836
        %v4989 = vpack.c.b16 %v4841, %v4837
        %v4990 = vpack.c.b16 %v4842, %v4838
        %v4991 = vpack.c.b16 %v4843, %v4839
        %v4992 = vpack.c.b16 %v4848, %v4844
        %v4993 = vpack.c.b16 %v4849, %v4845
        %v4994 = vpack.c.b16 %v4850, %v4846
        %v4995 = vpack.c.b16 %v4851, %v4847
        %v4996 = vpack.c.b16 %v4856, %v4852
        %v4997 = vpack.c.b16 %v4857, %v4853
        %v4998 = vpack.c.b16 %v4858, %v4854
        %v4999 = vpack.c.b16 %v4859, %v4855
        %v5000 = vpack.c.b16 %v4864, %v4860
        %v5001 = vpack.c.b16 %v4865, %v4861
        %v5002 = vpack.c.b16 %v4866, %v4862
        %v5003 = vpack.c.b16 %v4867, %v4863
        %v5004 = vpack.c.b16 %v4872, %v4868
        %v5005 = vpack.c.b16 %v4873, %v4869
        %v5006 = vpack.c.b16 %v4874, %v4870
        %v5007 = vpack.c.b16 %v4875, %v4871
        %v5008 = vpack.c.b16 %v4880, %v4876
        %v5009 = vpack.c.b16 %v4881, %v4877
        %v5010 = vpack.c.b16 %v4882, %v4878
        %v5011 = vpack.c.b16 %v4883, %v4879
        %v5012 = vpack.c.b16 %v4888, %v4884
        %v5013 = vpack.c.b16 %v4889, %v4885
        %v5014 = vpack.c.b16 %v4890, %v4886
        %v5015 = vpack.c.b16 %v4891, %v4887
        %v5016 = vpack.c.b16 %v4896, %v4892
        %v5017 = vpack.c.b16 %v4897, %v4893
        %v5018 = vpack.c.b16 %v4898, %v4894
        %v5019 = vpack.c.b16 %v4899, %v4895
        %v5020 = vpack.c.b16 %v4904, %v4900
        %v5021 = vpack.c.b16 %v4905, %v4901
        %v5022 = vpack.c.b16 %v4906, %v4902
        %v5023 = vpack.c.b16 %v4907, %v4903
        %v5024 = vpack.c.b16 %v4912, %v4908
        %v5025 = vpack.c.b16 %v4913, %v4909
        %v5026 = vpack.c.b16 %v4914, %v4910
        %v5027 = vpack.c.b16 %v4915, %v4911
        %v5028 = vpack.c.b16 %v4920, %v4916
        %v5029 = vpack.c.b16 %v4921, %v4917
        %v5030 = vpack.c.b16 %v4922, %v4918
        %v5031 = vpack.c.b16 %v4923, %v4919
        %v5032 = vpack.c.b16 %v4928, %v4924
        %v5033 = vpack.c.b16 %v4929, %v4925
        %v5034 = vpack.c.b16 %v4930, %v4926
        %v5035 = vpack.c.b16 %v4931, %v4927
        %v5036 = vpack.c.b16 %v4936, %v4932
        %v5037 = vpack.c.b16 %v4937, %v4933
        %v5038 = vpack.c.b16 %v4938, %v4934
        %v5039 = vpack.c.b16 %v4939, %v4935
        %v5141 = vsel %vm1758, %v4493, 0
        %v5144 = vsel %vm1758, %v4497, 0
        %v5147 = vsel %vm1758, %v4501, 0
        %v5150 = vsel %vm1758, %v4505, 0
        %v5153 = vsel %vm1758, %v4509, 0
        %v5156 = vsel %vm1758, %v4513, 0
        %v5159 = vsel %vm1758, %v4517, 0
        %5161 = vmatprep.subr.bf16.mxu0 %v4941
        %5162 = vmatpush1.bf16.msra.mxu0 %v4940
        %5163 = vmatprep.subr.bf16.mxu0 %v4945
        %5164 = vmatpush1.bf16.msra.mxu0 %v4944
        %5165 = vmatprep.subr.bf16.mxu0 %v4949
        %5166 = vmatpush1.bf16.msra.mxu0 %v4948
        %5167 = vmatprep.subr.bf16.mxu0 %v4953
        %5168 = vmatpush1.bf16.msra.mxu0 %v4952
        %5169 = vmatprep.subr.bf16.mxu0 %v4957
        %5170 = vmatpush1.bf16.msra.mxu0 %v4956
        %5171 = vmatprep.subr.bf16.mxu0 %v4961
        %5172 = vmatpush1.bf16.msra.mxu0 %v4960
        %5173 = vmatprep.subr.bf16.mxu0 %v4965
        %5174 = vmatpush1.bf16.msra.mxu0 %v4964
        %5175 = vmatprep.subr.bf16.mxu0 %v4969
        %5176 = vmatpush1.bf16.msra.mxu0 %v4968
        %5177 = vmatprep.subr.bf16.mxu0 %v4973
        %5178 = vmatpush1.bf16.msra.mxu0 %v4972
        %5179 = vmatprep.subr.bf16.mxu0 %v4977
        %5180 = vmatpush1.bf16.msra.mxu0 %v4976
        %5181 = vmatprep.subr.bf16.mxu0 %v4981
        %5182 = vmatpush1.bf16.msra.mxu0 %v4980
        %5183 = vmatprep.subr.bf16.mxu0 %v4985
        %5184 = vmatpush1.bf16.msra.mxu0 %v4984
        %5185 = vmatprep.subr.bf16.mxu0 %v4989
        %5186 = vmatpush1.bf16.msra.mxu0 %v4988
        %5187 = vmatprep.subr.bf16.mxu0 %v4993
        %5188 = vmatpush1.bf16.msra.mxu0 %v4992
        %5189 = vmatprep.subr.bf16.mxu0 %v4997
        %5190 = vmatpush1.bf16.msra.mxu0 %v4996
        %5191 = vmatprep.subr.bf16.mxu0 %v5001
        %5192 = vmatpush1.bf16.msra.mxu0 %v5000
        %5193 = vmatprep.mubr.bf16.mxu0 %v4491
        %5194 = vmatmul.mubr.bf16.gmra.mrb[0].mxu0 %v4490
        %v5195 = vpop.f32.mrb[0].mxu0
        %v5196 = vadd.f32 %v4623, %v5195
        %v5197 = vpop.f32.mrb[0].mxu0
        %v5198 = vadd.f32 %v4627, %v5197
        %v5199 = vpop.f32.mrb[0].mxu0
        %v5200 = vadd.f32 %v4623, %v5199
        %v5201 = vpop.f32.mrb[0].mxu0
        %v5202 = vadd.f32 %v4627, %v5201
        %5203 = vmatprep.mubr.bf16.mxu0 %v4495
        %5204 = vmatmul.mubr.bf16.gmra.mrb[0].mxu0 %v4494
        %v5205 = vpop.f32.mrb[0].mxu0
        %v5206 = vadd.f32 %v4623, %v5205
        %v5207 = vpop.f32.mrb[0].mxu0
        %v5208 = vadd.f32 %v4627, %v5207
        %v5209 = vpop.f32.mrb[0].mxu0
        %v5210 = vadd.f32 %v4623, %v5209
        %v5211 = vpop.f32.mrb[0].mxu0
        %v5212 = vadd.f32 %v4627, %v5211
        %5213 = vmatprep.mubr.bf16.mxu0 %v4499
        %5214 = vmatmul.mubr.bf16.gmra.mrb[0].mxu0 %v4498
        %v5215 = vpop.f32.mrb[0].mxu0
        %v5216 = vadd.f32 %v4623, %v5215
        %v5217 = vpop.f32.mrb[0].mxu0
        %v5218 = vadd.f32 %v4627, %v5217
        %v5219 = vpop.f32.mrb[0].mxu0
        %v5220 = vadd.f32 %v4623, %v5219
        %v5221 = vpop.f32.mrb[0].mxu0
        %v5222 = vadd.f32 %v4627, %v5221
        %5223 = vmatprep.mubr.bf16.mxu0 %v4503
        %5224 = vmatmul.mubr.bf16.gmra.mrb[0].mxu0 %v4502
        %v5225 = vpop.f32.mrb[0].mxu0
        %v5226 = vadd.f32 %v4623, %v5225
        %v5227 = vpop.f32.mrb[0].mxu0
        %v5228 = vadd.f32 %v4627, %v5227
        %v5229 = vpop.f32.mrb[0].mxu0
        %v5230 = vadd.f32 %v4623, %v5229
        %v5231 = vpop.f32.mrb[0].mxu0
        %v5232 = vadd.f32 %v4627, %v5231
        %5233 = vmatprep.mubr.bf16.mxu0 %v4507
        %5234 = vmatmul.mubr.bf16.gmra.mrb[0].mxu0 %v4506
        %v5235 = vpop.f32.mrb[0].mxu0
        %v5236 = vadd.f32 %v4623, %v5235
        %v5237 = vpop.f32.mrb[0].mxu0
        %v5238 = vadd.f32 %v4627, %v5237
        %v5239 = vpop.f32.mrb[0].mxu0
        %v5240 = vadd.f32 %v4623, %v5239
        %v5241 = vpop.f32.mrb[0].mxu0
        %v5242 = vadd.f32 %v4627, %v5241
        %5243 = vmatprep.mubr.bf16.mxu0 %v4511
        %5244 = vmatmul.mubr.bf16.gmra.mrb[0].mxu0 %v4510
        %v5245 = vpop.f32.mrb[0].mxu0
        %v5246 = vadd.f32 %v4623, %v5245
        %v5247 = vpop.f32.mrb[0].mxu0
        %v5248 = vadd.f32 %v4627, %v5247
        %v5249 = vpop.f32.mrb[0].mxu0
        %v5250 = vadd.f32 %v4623, %v5249
        %v5251 = vpop.f32.mrb[0].mxu0
        %v5252 = vadd.f32 %v4627, %v5251
        %5253 = vmatprep.mubr.bf16.mxu0 %v4515
        %5254 = vmatmul.mubr.bf16.gmra.mrb[0].mxu0 %v4514
        %v5255 = vpop.f32.mrb[0].mxu0
        %v5256 = vadd.f32 %v4623, %v5255
        %v5257 = vpop.f32.mrb[0].mxu0
        %v5258 = vadd.f32 %v4627, %v5257
        %v5259 = vpop.f32.mrb[0].mxu0
        %v5260 = vpop.f32.mrb[0].mxu0
        %5261 = vdwg.mxu0
        %5262 = vmatprep.subr.bf16.mxu0 %v5005
        %5263 = vmatpush1.bf16.msra.mxu0 %v5004
        %5264 = vmatprep.subr.bf16.mxu0 %v5009
        %5265 = vmatpush1.bf16.msra.mxu0 %v5008
        %5266 = vmatprep.subr.bf16.mxu0 %v5013
        %5267 = vmatpush1.bf16.msra.mxu0 %v5012
        %5268 = vmatprep.subr.bf16.mxu0 %v5017
        %5269 = vmatpush1.bf16.msra.mxu0 %v5016
        %5270 = vmatprep.subr.bf16.mxu0 %v5021
        %5271 = vmatpush1.bf16.msra.mxu0 %v5020
        %5272 = vmatprep.subr.bf16.mxu0 %v5025
        %5273 = vmatpush1.bf16.msra.mxu0 %v5024
        %5274 = vmatprep.subr.bf16.mxu0 %v5029
        %5275 = vmatpush1.bf16.msra.mxu0 %v5028
        %5276 = vmatprep.subr.bf16.mxu0 %v5033
        %5277 = vmatpush1.bf16.msra.mxu0 %v5032
        %5278 = vmatprep.subr.bf16.mxu0 %v5037
        %5279 = vmatpush1.bf16.msra.mxu0 %v5036
        %5280 = vmatprep.subr.bf16.mxu0 0
        %5281 = vmatpush1.bf16.msra.mxu0 0
        %5282 = vmatprep.subr.bf16.mxu0 0
        %5283 = vmatpush1.bf16.msra.mxu0 0
        %5284 = vmatprep.subr.bf16.mxu0 0
        %5285 = vmatpush1.bf16.msra.mxu0 0
        %5286 = vmatprep.subr.bf16.mxu0 0
        %5287 = vmatpush1.bf16.msra.mxu0 0
        %5288 = vmatprep.subr.bf16.mxu0 0
        %5289 = vmatpush1.bf16.msra.mxu0 0
        %5290 = vmatprep.subr.bf16.mxu0 0
        %5291 = vmatpush1.bf16.msra.mxu0 0
        %5292 = vmatprep.subr.bf16.mxu0 0
        %5293 = vmatpush1.bf16.msra.mxu0 0
        %5294 = vmatprep.mubr.bf16.mxu0 %v5141
        %5295 = vmatmul.mubr.bf16.gmra.mrb[0].mxu0 %v4492
        %v5296 = vpop.f32.mrb[0].mxu0
        %v5297 = vadd.f32 %v5196, %v5296
        %v5298 = vpop.f32.mrb[0].mxu0
        %v5299 = vadd.f32 %v5198, %v5298
        %v5300 = vpop.f32.mrb[0].mxu0
        %v5301 = vadd.f32 %v5200, %v5300
        %v5302 = vpop.f32.mrb[0].mxu0
        %v5303 = vadd.f32 %v5202, %v5302
        %5304 = vmatprep.mubr.bf16.mxu0 %v5144
        %5305 = vmatmul.mubr.bf16.gmra.mrb[0].mxu0 %v4496
        %v5306 = vpop.f32.mrb[0].mxu0
        %v5307 = vadd.f32 %v5206, %v5306
        %v5308 = vpop.f32.mrb[0].mxu0
        %v5309 = vadd.f32 %v5208, %v5308
        %v5310 = vpop.f32.mrb[0].mxu0
        %v5311 = vadd.f32 %v5210, %v5310
        %v5312 = vpop.f32.mrb[0].mxu0
        %v5313 = vadd.f32 %v5212, %v5312
        %5314 = vmatprep.mubr.bf16.mxu0 %v5147
        %5315 = vmatmul.mubr.bf16.gmra.mrb[0].mxu0 %v4500
        %v5316 = vpop.f32.mrb[0].mxu0
        %v5317 = vadd.f32 %v5216, %v5316
        %v5318 = vpop.f32.mrb[0].mxu0
        %v5319 = vadd.f32 %v5218, %v5318
        %v5320 = vpop.f32.mrb[0].mxu0
        %v5321 = vadd.f32 %v5220, %v5320
        %v5322 = vpop.f32.mrb[0].mxu0
        %v5323 = vadd.f32 %v5222, %v5322
        %5324 = vmatprep.mubr.bf16.mxu0 %v5150
        %5325 = vmatmul.mubr.bf16.gmra.mrb[0].mxu0 %v4504
        %v5326 = vpop.f32.mrb[0].mxu0
        %v5327 = vadd.f32 %v5226, %v5326
        %v5328 = vpop.f32.mrb[0].mxu0
        %v5329 = vadd.f32 %v5228, %v5328
        %v5330 = vpop.f32.mrb[0].mxu0
        %v5331 = vadd.f32 %v5230, %v5330
        %v5332 = vpop.f32.mrb[0].mxu0
        %v5333 = vadd.f32 %v5232, %v5332
        %5334 = vmatprep.mubr.bf16.mxu0 %v5153
        %5335 = vmatmul.mubr.bf16.gmra.mrb[0].mxu0 %v4508
        %v5336 = vpop.f32.mrb[0].mxu0
        %v5337 = vadd.f32 %v5236, %v5336
        %v5338 = vpop.f32.mrb[0].mxu0
        %v5339 = vadd.f32 %v5238, %v5338
        %v5340 = vpop.f32.mrb[0].mxu0
        %v5341 = vadd.f32 %v5240, %v5340
        %v5342 = vpop.f32.mrb[0].mxu0
        %v5343 = vadd.f32 %v5242, %v5342
        %5344 = vmatprep.mubr.bf16.mxu0 %v5156
        %5345 = vmatmul.mubr.bf16.gmra.mrb[0].mxu0 %v4512
        %v5346 = vpop.f32.mrb[0].mxu0
        %v5347 = vadd.f32 %v5246, %v5346
        %v5348 = vpop.f32.mrb[0].mxu0
        %v5349 = vadd.f32 %v5248, %v5348
        %v5350 = vpop.f32.mrb[0].mxu0
        %v5351 = vadd.f32 %v5250, %v5350
        %v5352 = vpop.f32.mrb[0].mxu0
        %v5353 = vadd.f32 %v5252, %v5352
        %5354 = vmatprep.mubr.bf16.mxu0 %v5159
        %5355 = vmatmul.mubr.bf16.gmra.mrb[0].mxu0 %v4516
        %v5356 = vpop.f32.mrb[0].mxu0
        %v5357 = vadd.f32 %v5256, %v5356
        %v5358 = vpop.f32.mrb[0].mxu0
        %v5359 = vadd.f32 %v5258, %v5358
        %v5360 = vpop.f32.mrb[0].mxu0
        %v5361 = vpop.f32.mrb[0].mxu0
        %5362 = vdwg.mxu0
        %5363 = vmatprep.subr.bf16.mxu0 %v4943
        %5364 = vmatpush1.bf16.msra.mxu0 %v4942
        %5365 = vmatprep.subr.bf16.mxu0 %v4947
        %5366 = vmatpush1.bf16.msra.mxu0 %v4946
        %5367 = vmatprep.subr.bf16.mxu0 %v4951
        %5368 = vmatpush1.bf16.msra.mxu0 %v4950
        %5369 = vmatprep.subr.bf16.mxu0 %v4955
        %5370 = vmatpush1.bf16.msra.mxu0 %v4954
        %5371 = vmatprep.subr.bf16.mxu0 %v4959
        %5372 = vmatpush1.bf16.msra.mxu0 %v4958
        %5373 = vmatprep.subr.bf16.mxu0 %v4963
        %5374 = vmatpush1.bf16.msra.mxu0 %v4962
        %5375 = vmatprep.subr.bf16.mxu0 %v4967
        %5376 = vmatpush1.bf16.msra.mxu0 %v4966
        %5377 = vmatprep.subr.bf16.mxu0 %v4971
        %5378 = vmatpush1.bf16.msra.mxu0 %v4970
        %5379 = vmatprep.subr.bf16.mxu0 %v4975
        %5380 = vmatpush1.bf16.msra.mxu0 %v4974
        %5381 = vmatprep.subr.bf16.mxu0 %v4979
        %5382 = vmatpush1.bf16.msra.mxu0 %v4978
        %5383 = vmatprep.subr.bf16.mxu0 %v4983
        %5384 = vmatpush1.bf16.msra.mxu0 %v4982
        %5385 = vmatprep.subr.bf16.mxu0 %v4987
        %5386 = vmatpush1.bf16.msra.mxu0 %v4986
        %5387 = vmatprep.subr.bf16.mxu0 %v4991
        %5388 = vmatpush1.bf16.msra.mxu0 %v4990
        %5389 = vmatprep.subr.bf16.mxu0 %v4995
        %5390 = vmatpush1.bf16.msra.mxu0 %v4994
        %5391 = vmatprep.subr.bf16.mxu0 %v4999
        %5392 = vmatpush1.bf16.msra.mxu0 %v4998
        %5393 = vmatprep.subr.bf16.mxu0 %v5003
        %5394 = vmatpush1.bf16.msra.mxu0 %v5002
        %5395 = vmatprep.mubr.bf16.mxu0 %v4491
        %5396 = vmatmul.mubr.bf16.gmra.mrb[0].mxu0 %v4490
        %v5397 = vpop.f32.mrb[0].mxu0
        %v5398 = vadd.f32 %v4631, %v5397
        %v5399 = vpop.f32.mrb[0].mxu0
        %v5400 = vadd.f32 %v4635, %v5399
        %v5401 = vpop.f32.mrb[0].mxu0
        %v5402 = vadd.f32 %v4631, %v5401
        %v5403 = vpop.f32.mrb[0].mxu0
        %v5404 = vadd.f32 %v4635, %v5403
        %5405 = vmatprep.mubr.bf16.mxu0 %v4495
        %5406 = vmatmul.mubr.bf16.gmra.mrb[0].mxu0 %v4494
        %v5407 = vpop.f32.mrb[0].mxu0
        %v5408 = vadd.f32 %v4631, %v5407
        %v5409 = vpop.f32.mrb[0].mxu0
        %v5410 = vadd.f32 %v4635, %v5409
        %v5411 = vpop.f32.mrb[0].mxu0
        %v5412 = vadd.f32 %v4631, %v5411
        %v5413 = vpop.f32.mrb[0].mxu0
        %v5414 = vadd.f32 %v4635, %v5413
        %5415 = vmatprep.mubr.bf16.mxu0 %v4499
        %5416 = vmatmul.mubr.bf16.gmra.mrb[0].mxu0 %v4498
        %v5417 = vpop.f32.mrb[0].mxu0
        %v5418 = vadd.f32 %v4631, %v5417
        %v5419 = vpop.f32.mrb[0].mxu0
        %v5420 = vadd.f32 %v4635, %v5419
        %v5421 = vpop.f32.mrb[0].mxu0
        %v5422 = vadd.f32 %v4631, %v5421
        %v5423 = vpop.f32.mrb[0].mxu0
        %v5424 = vadd.f32 %v4635, %v5423
        %5425 = vmatprep.mubr.bf16.mxu0 %v4503
        %5426 = vmatmul.mubr.bf16.gmra.mrb[0].mxu0 %v4502
        %v5427 = vpop.f32.mrb[0].mxu0
        %v5428 = vadd.f32 %v4631, %v5427
        %v5429 = vpop.f32.mrb[0].mxu0
        %v5430 = vadd.f32 %v4635, %v5429
        %v5431 = vpop.f32.mrb[0].mxu0
        %v5432 = vadd.f32 %v4631, %v5431
        %v5433 = vpop.f32.mrb[0].mxu0
        %v5434 = vadd.f32 %v4635, %v5433
        %5435 = vmatprep.mubr.bf16.mxu0 %v4507
        %5436 = vmatmul.mubr.bf16.gmra.mrb[0].mxu0 %v4506
        %v5437 = vpop.f32.mrb[0].mxu0
        %v5438 = vadd.f32 %v4631, %v5437
        %v5439 = vpop.f32.mrb[0].mxu0
        %v5440 = vadd.f32 %v4635, %v5439
        %v5441 = vpop.f32.mrb[0].mxu0
        %v5442 = vadd.f32 %v4631, %v5441
        %v5443 = vpop.f32.mrb[0].mxu0
        %v5444 = vadd.f32 %v4635, %v5443
        %5445 = vmatprep.mubr.bf16.mxu0 %v4511
        %5446 = vmatmul.mubr.bf16.gmra.mrb[0].mxu0 %v4510
        %v5447 = vpop.f32.mrb[0].mxu0
        %v5448 = vadd.f32 %v4631, %v5447
        %v5449 = vpop.f32.mrb[0].mxu0
        %v5450 = vadd.f32 %v4635, %v5449
        %v5451 = vpop.f32.mrb[0].mxu0
        %v5452 = vadd.f32 %v4631, %v5451
        %v5453 = vpop.f32.mrb[0].mxu0
        %v5454 = vadd.f32 %v4635, %v5453
        %5455 = vmatprep.mubr.bf16.mxu0 %v4515
        %5456 = vmatmul.mubr.bf16.gmra.mrb[0].mxu0 %v4514
        %v5457 = vpop.f32.mrb[0].mxu0
        %v5458 = vadd.f32 %v4631, %v5457
        %v5459 = vpop.f32.mrb[0].mxu0
        %v5460 = vadd.f32 %v4635, %v5459
        %v5461 = vpop.f32.mrb[0].mxu0
        %v5462 = vpop.f32.mrb[0].mxu0
        %5463 = vdwg.mxu0
        %5464 = vmatprep.subr.bf16.mxu0 %v5007
        %5465 = vmatpush1.bf16.msra.mxu0 %v5006
        %5466 = vmatprep.subr.bf16.mxu0 %v5011
        %5467 = vmatpush1.bf16.msra.mxu0 %v5010
        %5468 = vmatprep.subr.bf16.mxu0 %v5015
        %5469 = vmatpush1.bf16.msra.mxu0 %v5014
        %5470 = vmatprep.subr.bf16.mxu0 %v5019
        %5471 = vmatpush1.bf16.msra.mxu0 %v5018
        %5472 = vmatprep.subr.bf16.mxu0 %v5023
        %5473 = vmatpush1.bf16.msra.mxu0 %v5022
        %5474 = vmatprep.subr.bf16.mxu0 %v5027
        %5475 = vmatpush1.bf16.msra.mxu0 %v5026
        %5476 = vmatprep.subr.bf16.mxu0 %v5031
        %5477 = vmatpush1.bf16.msra.mxu0 %v5030
        %5478 = vmatprep.subr.bf16.mxu0 %v5035
        %5479 = vmatpush1.bf16.msra.mxu0 %v5034
        %5480 = vmatprep.subr.bf16.mxu0 %v5039
        %5481 = vmatpush1.bf16.msra.mxu0 %v5038
        %5482 = vmatprep.subr.bf16.mxu0 0
        %5483 = vmatpush1.bf16.msra.mxu0 0
        %5484 = vmatprep.subr.bf16.mxu0 0
        %5485 = vmatpush1.bf16.msra.mxu0 0
        %5486 = vmatprep.subr.bf16.mxu0 0
        %5487 = vmatpush1.bf16.msra.mxu0 0
        %5488 = vmatprep.subr.bf16.mxu0 0
        %5489 = vmatpush1.bf16.msra.mxu0 0
        %5490 = vmatprep.subr.bf16.mxu0 0
        %5491 = vmatpush1.bf16.msra.mxu0 0
        %5492 = vmatprep.subr.bf16.mxu0 0
        %5493 = vmatpush1.bf16.msra.mxu0 0
        %5494 = vmatprep.subr.bf16.mxu0 0
        %5495 = vmatpush1.bf16.msra.mxu0 0
        %5496 = vmatprep.mubr.bf16.mxu0 %v5141
        %5497 = vmatmul.mubr.bf16.gmra.mrb[0].mxu0 %v4492
        %v5498 = vpop.f32.mrb[0].mxu0
        %v5499 = vadd.f32 %v5398, %v5498
        %v5500 = vpop.f32.mrb[0].mxu0
        %v5501 = vadd.f32 %v5400, %v5500
        %v5502 = vpop.f32.mrb[0].mxu0
        %v5503 = vadd.f32 %v5402, %v5502
        %v5504 = vpop.f32.mrb[0].mxu0
        %v5505 = vadd.f32 %v5404, %v5504
        %5506 = vmatprep.mubr.bf16.mxu0 %v5144
        %5507 = vmatmul.mubr.bf16.gmra.mrb[0].mxu0 %v4496
        %v5508 = vpop.f32.mrb[0].mxu0
        %v5509 = vadd.f32 %v5408, %v5508
        %v5510 = vpop.f32.mrb[0].mxu0
        %v5511 = vadd.f32 %v5410, %v5510
        %v5512 = vpop.f32.mrb[0].mxu0
        %v5513 = vadd.f32 %v5412, %v5512
        %v5514 = vpop.f32.mrb[0].mxu0
        %v5515 = vadd.f32 %v5414, %v5514
        %5516 = vmatprep.mubr.bf16.mxu0 %v5147
        %5517 = vmatmul.mubr.bf16.gmra.mrb[0].mxu0 %v4500
        %v5518 = vpop.f32.mrb[0].mxu0
        %v5519 = vadd.f32 %v5418, %v5518
        %v5520 = vpop.f32.mrb[0].mxu0
        %v5521 = vadd.f32 %v5420, %v5520
        %v5522 = vpop.f32.mrb[0].mxu0
        %v5523 = vadd.f32 %v5422, %v5522
        %v5524 = vpop.f32.mrb[0].mxu0
        %v5525 = vadd.f32 %v5424, %v5524
        %5526 = vmatprep.mubr.bf16.mxu0 %v5150
        %5527 = vmatmul.mubr.bf16.gmra.mrb[0].mxu0 %v4504
        %v5528 = vpop.f32.mrb[0].mxu0
        %v5529 = vadd.f32 %v5428, %v5528
        %v5530 = vpop.f32.mrb[0].mxu0
        %v5531 = vadd.f32 %v5430, %v5530
        %v5532 = vpop.f32.mrb[0].mxu0
        %v5533 = vadd.f32 %v5432, %v5532
        %v5534 = vpop.f32.mrb[0].mxu0
        %v5535 = vadd.f32 %v5434, %v5534
        %5536 = vmatprep.mubr.bf16.mxu0 %v5153
        %5537 = vmatmul.mubr.bf16.gmra.mrb[0].mxu0 %v4508
        %v5538 = vpop.f32.mrb[0].mxu0
        %v5539 = vadd.f32 %v5438, %v5538
        %v5540 = vpop.f32.mrb[0].mxu0
        %v5541 = vadd.f32 %v5440, %v5540
        %v5542 = vpop.f32.mrb[0].mxu0
        %v5543 = vadd.f32 %v5442, %v5542
        %v5544 = vpop.f32.mrb[0].mxu0
        %v5545 = vadd.f32 %v5444, %v5544
        %5546 = vmatprep.mubr.bf16.mxu0 %v5156
        %5547 = vmatmul.mubr.bf16.gmra.mrb[0].mxu0 %v4512
        %v5548 = vpop.f32.mrb[0].mxu0
        %v5549 = vadd.f32 %v5448, %v5548
        %v5550 = vpop.f32.mrb[0].mxu0
        %v5551 = vadd.f32 %v5450, %v5550
        %v5552 = vpop.f32.mrb[0].mxu0
        %v5553 = vadd.f32 %v5452, %v5552
        %v5554 = vpop.f32.mrb[0].mxu0
        %v5555 = vadd.f32 %v5454, %v5554
        %5556 = vmatprep.mubr.bf16.mxu0 %v5159
        %5557 = vmatmul.mubr.bf16.gmra.mrb[0].mxu0 %v4516
        %v5558 = vpop.f32.mrb[0].mxu0
        %v5559 = vadd.f32 %v5458, %v5558
        %v5560 = vpop.f32.mrb[0].mxu0
        %v5561 = vadd.f32 %v5460, %v5560
        %v5562 = vpop.f32.mrb[0].mxu0
        %v5563 = vpop.f32.mrb[0].mxu0
        %5564 = vdwg.mxu0
        %v5565 = vmax.f32 %v5297, 0.0
        %v5566 = vmax.f32 %v5299, 0.0
        %v5567 = vmax.f32 %v5499, 0.0
        %v5568 = vmax.f32 %v5501, 0.0
        %v5569 = vmax.f32 %v5301, 0.0
        %v5570 = vmax.f32 %v5303, 0.0
        %v5571 = vmax.f32 %v5503, 0.0
        %v5572 = vmax.f32 %v5505, 0.0
        %v5573 = vmax.f32 %v5307, 0.0
        %v5574 = vmax.f32 %v5309, 0.0
        %v5575 = vmax.f32 %v5509, 0.0
        %v5576 = vmax.f32 %v5511, 0.0
        %v5577 = vmax.f32 %v5311, 0.0
        %v5578 = vmax.f32 %v5313, 0.0
        %v5579 = vmax.f32 %v5513, 0.0
        %v5580 = vmax.f32 %v5515, 0.0
        %v5581 = vmax.f32 %v5317, 0.0
        %v5582 = vmax.f32 %v5319, 0.0
        %v5583 = vmax.f32 %v5519, 0.0
        %v5584 = vmax.f32 %v5521, 0.0
        %v5585 = vmax.f32 %v5321, 0.0
        %v5586 = vmax.f32 %v5323, 0.0
        %v5587 = vmax.f32 %v5523, 0.0
        %v5588 = vmax.f32 %v5525, 0.0
        %v5589 = vmax.f32 %v5327, 0.0
        %v5590 = vmax.f32 %v5329, 0.0
        %v5591 = vmax.f32 %v5529, 0.0
        %v5592 = vmax.f32 %v5531, 0.0
        %v5593 = vmax.f32 %v5331, 0.0
        %v5594 = vmax.f32 %v5333, 0.0
        %v5595 = vmax.f32 %v5533, 0.0
        %v5596 = vmax.f32 %v5535, 0.0
        %v5597 = vmax.f32 %v5337, 0.0
        %v5598 = vmax.f32 %v5339, 0.0
        %v5599 = vmax.f32 %v5539, 0.0
        %v5600 = vmax.f32 %v5541, 0.0
        %v5601 = vmax.f32 %v5341, 0.0
        %v5602 = vmax.f32 %v5343, 0.0
        %v5603 = vmax.f32 %v5543, 0.0
        %v5604 = vmax.f32 %v5545, 0.0
        %v5605 = vmax.f32 %v5347, 0.0
        %v5606 = vmax.f32 %v5349, 0.0
        %v5607 = vmax.f32 %v5549, 0.0
        %v5608 = vmax.f32 %v5551, 0.0
        %v5609 = vmax.f32 %v5351, 0.0
        %v5610 = vmax.f32 %v5353, 0.0
        %v5611 = vmax.f32 %v5553, 0.0
        %v5612 = vmax.f32 %v5555, 0.0
        %v5613 = vmax.f32 %v5357, 0.0
        %v5614 = vmax.f32 %v5359, 0.0
        %v5615 = vmax.f32 %v5559, 0.0
        %v5616 = vmax.f32 %v5561, 0.0
        %v5617 = vpack.c.bf16 %v5569, %v5565
        %v5618 = vpack.c.bf16 %v5570, %v5566
        %v5619 = vpack.c.bf16 %v5571, %v5567
        %v5620 = vpack.c.bf16 %v5572, %v5568
        %v5621 = vpack.c.bf16 %v5577, %v5573
        %v5622 = vpack.c.bf16 %v5578, %v5574
        %v5623 = vpack.c.bf16 %v5579, %v5575
        %v5624 = vpack.c.bf16 %v5580, %v5576
        %v5625 = vpack.c.bf16 %v5585, %v5581
        %v5626 = vpack.c.bf16 %v5586, %v5582
        %v5627 = vpack.c.bf16 %v5587, %v5583
        %v5628 = vpack.c.bf16 %v5588, %v5584
        %v5629 = vpack.c.bf16 %v5593, %v5589
        %v5630 = vpack.c.bf16 %v5594, %v5590
        %v5631 = vpack.c.bf16 %v5595, %v5591
        %v5632 = vpack.c.bf16 %v5596, %v5592
        %v5633 = vpack.c.bf16 %v5601, %v5597
        %v5634 = vpack.c.bf16 %v5602, %v5598
        %v5635 = vpack.c.bf16 %v5603, %v5599
        %v5636 = vpack.c.bf16 %v5604, %v5600
        %v5637 = vpack.c.bf16 %v5609, %v5605
        %v5638 = vpack.c.bf16 %v5610, %v5606
        %v5639 = vpack.c.bf16 %v5611, %v5607
        %v5640 = vpack.c.bf16 %v5612, %v5608
        %v5641 = vpack.c.bf16 %v5613, %v5613
        %v5642 = vpack.c.bf16 %v5614, %v5614
        %v5643 = vpack.c.bf16 %v5615, %v5615
        %v5644 = vpack.c.bf16 %v5616, %v5616
        %v5645 = vld [vmem:[#allocation16] sm:$0xff]
        %v5646 = vld [vmem:[#allocation16 + $0x8] sm:$0xff]
        %v5647 = vld [vmem:[#allocation16 + $0x10] sm:$0xff]
        %v5648 = vld [vmem:[#allocation16 + $0x18] sm:$0xff]
        %v5649 = vld [vmem:[#allocation16 + $0x20] sm:$0xff]
        %v5650 = vld [vmem:[#allocation16 + $0x28] sm:$0xff]
        %v5651 = vld [vmem:[#allocation16 + $0x30] sm:$0xff]
        %v5652 = vld [vmem:[#allocation16 + $0x38] sm:$0xff]
        %v5653 = vld [vmem:[#allocation16 + $0x40] sm:$0xff]
        %v5654 = vld [vmem:[#allocation16 + $0x48] sm:$0xff]
        %v5655 = vld [vmem:[#allocation16 + $0x50] sm:$0xff]
        %v5656 = vld [vmem:[#allocation16 + $0x58] sm:$0xff]
        %v5657 = vld [vmem:[#allocation16 + $0x60] sm:$0xff]
        %v5658 = vld [vmem:[#allocation16 + $0x68] sm:$0xff]
        %v5659 = vld [vmem:[#allocation16 + $0x70] sm:$0xff]
        %v5660 = vld [vmem:[#allocation16 + $0x78] sm:$0xff]
        %v5661 = vld [vmem:[#allocation16 + $0x80] sm:$0xff]
        %v5662 = vld [vmem:[#allocation16 + $0x88] sm:$0xff]
        %v5663 = vld [vmem:[#allocation16 + $0x90] sm:$0xff]
        %v5664 = vld [vmem:[#allocation16 + $0x98] sm:$0xff]
        %v5665 = vld [vmem:[#allocation16 + $0xa0] sm:$0xff]
        %v5666 = vld [vmem:[#allocation16 + $0xa8] sm:$0xff]
        %v5667 = vld [vmem:[#allocation16 + $0xb0] sm:$0xff]
        %v5668 = vld [vmem:[#allocation16 + $0xb8] sm:$0xff]
        %v5669 = vld [vmem:[#allocation16 + $0xc0] sm:$0xff]
        %v5670 = vld [vmem:[#allocation16 + $0xc8] sm:$0xff]
        %v5671 = vld [vmem:[#allocation16 + $0xd0] sm:$0xff]
        %v5672 = vld [vmem:[#allocation16 + $0xd8] sm:$0xff]
        %v5673 = vld [vmem:[#allocation16 + $0xe0] sm:$0xff]
        %v5674 = vld [vmem:[#allocation16 + $0xe8] sm:$0xff]
        %v5675 = vld [vmem:[#allocation16 + $0xf0] sm:$0xff]
        %v5676 = vld [vmem:[#allocation16 + $0xf8] sm:$0xff]
        %v5677 = vld [vmem:[#allocation16 + $0x100] sm:$0xff]
        %v5678 = vld [vmem:[#allocation16 + $0x108] sm:$0xff]
        %v5679 = vld [vmem:[#allocation16 + $0x110] sm:$0xff]
        %v5680 = vld [vmem:[#allocation16 + $0x118] sm:$0xff]
        %v5681 = vld [vmem:[#allocation16 + $0x120] sm:$0xff]
        %v5682 = vld [vmem:[#allocation16 + $0x128] sm:$0xff]
        %v5683 = vld [vmem:[#allocation16 + $0x130] sm:$0xff]
        %v5684 = vld [vmem:[#allocation16 + $0x138] sm:$0xff]
        %v5685 = vld [vmem:[#allocation16 + $0x140] sm:$0xff]
        %v5686 = vld [vmem:[#allocation16 + $0x148] sm:$0xff]
        %v5687 = vld [vmem:[#allocation16 + $0x150] sm:$0xff]
        %v5688 = vld [vmem:[#allocation16 + $0x158] sm:$0xff]
        %v5689 = vld [vmem:[#allocation16 + $0x160] sm:$0xff]
        %v5690 = vld [vmem:[#allocation16 + $0x168] sm:$0xff]
        %v5691 = vld [vmem:[#allocation16 + $0x170] sm:$0xff]
        %v5692 = vld [vmem:[#allocation16 + $0x178] sm:$0xff]
        %v5693 = vld [vmem:[#allocation16 + $0x180] sm:$0xff]
        %v5694 = vld [vmem:[#allocation16 + $0x188] sm:$0xff]
        %v5695 = vld [vmem:[#allocation16 + $0x190] sm:$0xff]
        %v5696 = vld [vmem:[#allocation16 + $0x198] sm:$0xff]
        %v5697 = vld [vmem:[#allocation16 + $0x1a0] sm:$0xff]
        %v5698 = vld [vmem:[#allocation16 + $0x1a8] sm:$0xff]
        %v5699 = vld [vmem:[#allocation16 + $0x1b0] sm:$0xff]
        %v5700 = vld [vmem:[#allocation16 + $0x1b8] sm:$0xff]
        %v5701 = vld [vmem:[#allocation16 + $0x1c0] sm:$0xff]
        %v5702 = vld [vmem:[#allocation16 + $0x1c8] sm:$0xff]
        %v5703 = vld [vmem:[#allocation16 + $0x1d0] sm:$0xff]
        %v5704 = vld [vmem:[#allocation16 + $0x1d8] sm:$0xff]
        %v5705 = vld [vmem:[#allocation16 + $0x1e0] sm:$0xff]
        %v5706 = vld [vmem:[#allocation16 + $0x1e8] sm:$0xff]
        %v5707 = vld [vmem:[#allocation16 + $0x1f0] sm:$0xff]
        %v5708 = vld [vmem:[#allocation16 + $0x1f8] sm:$0xff]
        %v5709 = vld [vmem:[#allocation16 + $0x200] sm:$0xff]
        %v5710 = vld [vmem:[#allocation16 + $0x208] sm:$0xff]
        %v5711 = vld [vmem:[#allocation16 + $0x210] sm:$0xff]
        %v5712 = vld [vmem:[#allocation16 + $0x218] sm:$0xff]
        %v5713 = vld [vmem:[#allocation16 + $0x220] sm:$0xff]
        %v5714 = vld [vmem:[#allocation16 + $0x228] sm:$0xff]
        %v5715 = vld [vmem:[#allocation16 + $0x230] sm:$0xff]
        %v5716 = vld [vmem:[#allocation16 + $0x238] sm:$0xff]
        %v5717 = vld [vmem:[#allocation16 + $0x240] sm:$0xff]
        %v5718 = vld [vmem:[#allocation16 + $0x248] sm:$0xff]
        %v5719 = vld [vmem:[#allocation16 + $0x250] sm:$0xff]
        %v5720 = vld [vmem:[#allocation16 + $0x258] sm:$0xff]
        %v5721 = vld [vmem:[#allocation16 + $0x260] sm:$0xff]
        %v5722 = vld [vmem:[#allocation16 + $0x268] sm:$0xff]
        %v5723 = vld [vmem:[#allocation16 + $0x270] sm:$0xff]
        %v5724 = vld [vmem:[#allocation16 + $0x278] sm:$0xff]
        %v5725 = vld [vmem:[#allocation16 + $0x280] sm:$0xff]
        %v5726 = vld [vmem:[#allocation16 + $0x288] sm:$0xff]
        %v5727 = vld [vmem:[#allocation16 + $0x290] sm:$0xff]
        %v5728 = vld [vmem:[#allocation16 + $0x298] sm:$0xff]
        %v5729 = vld [vmem:[#allocation16 + $0x2a0] sm:$0xff]
        %v5730 = vld [vmem:[#allocation16 + $0x2a8] sm:$0xff]
        %v5731 = vld [vmem:[#allocation16 + $0x2b0] sm:$0xff]
        %v5732 = vld [vmem:[#allocation16 + $0x2b8] sm:$0xff]
        %v5733 = vld [vmem:[#allocation16 + $0x2c0] sm:$0xff]
        %v5734 = vld [vmem:[#allocation16 + $0x2c8] sm:$0xff]
        %v5735 = vld [vmem:[#allocation16 + $0x2d0] sm:$0xff]
        %v5736 = vld [vmem:[#allocation16 + $0x2d8] sm:$0xff]
        %v5737 = vld [vmem:[#allocation16 + $0x2e0] sm:$0xff]
        %v5738 = vld [vmem:[#allocation16 + $0x2e8] sm:$0xff]
        %v5739 = vld [vmem:[#allocation16 + $0x2f0] sm:$0xff]
        %v5740 = vld [vmem:[#allocation16 + $0x2f8] sm:$0xff]
        %v5741 = vld [vmem:[#allocation16 + $0x300] sm:$0xff]
        %v5742 = vld [vmem:[#allocation16 + $0x308] sm:$0xff]
        %v5743 = vld [vmem:[#allocation16 + $0x310] sm:$0xff]
        %v5744 = vld [vmem:[#allocation16 + $0x318] sm:$0xff]
        %v5745 = vld [vmem:[#allocation18] sm:$0xf]
        %v5747 = vlaneseq
        %v5748 = vshrl.u32 %v5747, 7
        %v5749 = vsub.s32 0, %v5748
        %v5750 = vrot.slane %v5745, %v5749
        %v5751 = vlaneseq
        %v5752 = vshrl.u32 %v5751, 7
        %v5753 = vsub.s32 1, %v5752
        %v5754 = vrot.slane %v5745, %v5753
        %v5755 = vlaneseq
        %v5756 = vshrl.u32 %v5755, 7
        %v5757 = vsub.s32 2, %v5756
        %v5758 = vrot.slane %v5745, %v5757
        %v5759 = vlaneseq
        %v5760 = vshrl.u32 %v5759, 7
        %v5761 = vsub.s32 3, %v5760
        %v5762 = vrot.slane %v5745, %v5761
        %v5867 = vunpack.c.l.b16 %v5645
        %v5868 = vunpack.c.h.b16 %v5645
        %v5869 = vunpack.c.l.b16 %v5646
        %v5870 = vunpack.c.h.b16 %v5646
        %v5871 = vunpack.c.l.b16 %v5647
        %v5872 = vunpack.c.h.b16 %v5647
        %v5873 = vunpack.c.l.b16 %v5648
        %v5874 = vunpack.c.h.b16 %v5648
        %v5875 = vunpack.c.l.b16 %v5649
        %v5876 = vunpack.c.h.b16 %v5649
        %v5877 = vunpack.c.l.b16 %v5650
        %v5878 = vunpack.c.h.b16 %v5650
        %v5879 = vunpack.c.l.b16 %v5651
        %v5880 = vunpack.c.h.b16 %v5651
        %v5881 = vunpack.c.l.b16 %v5652
        %v5882 = vunpack.c.h.b16 %v5652
        %v5883 = vunpack.c.l.b16 %v5653
        %v5884 = vunpack.c.h.b16 %v5653
        %v5885 = vunpack.c.l.b16 %v5654
        %v5886 = vunpack.c.h.b16 %v5654
        %v5887 = vunpack.c.l.b16 %v5655
        %v5888 = vunpack.c.h.b16 %v5655
        %v5889 = vunpack.c.l.b16 %v5656
        %v5890 = vunpack.c.h.b16 %v5656
        %v5891 = vunpack.c.l.b16 %v5657
        %v5892 = vunpack.c.h.b16 %v5657
        %v5893 = vunpack.c.l.b16 %v5658
        %v5894 = vunpack.c.h.b16 %v5658
        %v5895 = vunpack.c.l.b16 %v5659
        %v5896 = vunpack.c.h.b16 %v5659
        %v5897 = vunpack.c.l.b16 %v5660
        %v5898 = vunpack.c.h.b16 %v5660
        %v5899 = vunpack.c.l.b16 %v5661
        %v5900 = vunpack.c.h.b16 %v5661
        %v5901 = vunpack.c.l.b16 %v5662
        %v5902 = vunpack.c.h.b16 %v5662
        %v5903 = vunpack.c.l.b16 %v5663
        %v5904 = vunpack.c.h.b16 %v5663
        %v5905 = vunpack.c.l.b16 %v5664
        %v5906 = vunpack.c.h.b16 %v5664
        %v5907 = vunpack.c.l.b16 %v5665
        %v5908 = vunpack.c.h.b16 %v5665
        %v5909 = vunpack.c.l.b16 %v5666
        %v5910 = vunpack.c.h.b16 %v5666
        %v5911 = vunpack.c.l.b16 %v5667
        %v5912 = vunpack.c.h.b16 %v5667
        %v5913 = vunpack.c.l.b16 %v5668
        %v5914 = vunpack.c.h.b16 %v5668
        %v5915 = vunpack.c.l.b16 %v5669
        %v5916 = vunpack.c.h.b16 %v5669
        %v5917 = vunpack.c.l.b16 %v5670
        %v5918 = vunpack.c.h.b16 %v5670
        %v5919 = vunpack.c.l.b16 %v5671
        %v5920 = vunpack.c.h.b16 %v5671
        %v5921 = vunpack.c.l.b16 %v5672
        %v5922 = vunpack.c.h.b16 %v5672
        %v5923 = vunpack.c.l.b16 %v5673
        %v5924 = vunpack.c.h.b16 %v5673
        %v5925 = vunpack.c.l.b16 %v5674
        %v5926 = vunpack.c.h.b16 %v5674
        %v5927 = vunpack.c.l.b16 %v5675
        %v5928 = vunpack.c.h.b16 %v5675
        %v5929 = vunpack.c.l.b16 %v5676
        %v5930 = vunpack.c.h.b16 %v5676
        %v5931 = vunpack.c.l.b16 %v5677
        %v5932 = vunpack.c.h.b16 %v5677
        %v5933 = vunpack.c.l.b16 %v5678
        %v5934 = vunpack.c.h.b16 %v5678
        %v5935 = vunpack.c.l.b16 %v5679
        %v5936 = vunpack.c.h.b16 %v5679
        %v5937 = vunpack.c.l.b16 %v5680
        %v5938 = vunpack.c.h.b16 %v5680
        %v5939 = vunpack.c.l.b16 %v5681
        %v5940 = vunpack.c.h.b16 %v5681
        %v5941 = vunpack.c.l.b16 %v5682
        %v5942 = vunpack.c.h.b16 %v5682
        %v5943 = vunpack.c.l.b16 %v5683
        %v5944 = vunpack.c.h.b16 %v5683
        %v5945 = vunpack.c.l.b16 %v5684
        %v5946 = vunpack.c.h.b16 %v5684
        %v5947 = vunpack.c.l.b16 %v5685
        %v5948 = vunpack.c.h.b16 %v5685
        %v5949 = vunpack.c.l.b16 %v5686
        %v5950 = vunpack.c.h.b16 %v5686
        %v5951 = vunpack.c.l.b16 %v5687
        %v5952 = vunpack.c.h.b16 %v5687
        %v5953 = vunpack.c.l.b16 %v5688
        %v5954 = vunpack.c.h.b16 %v5688
        %v5955 = vunpack.c.l.b16 %v5689
        %v5956 = vunpack.c.h.b16 %v5689
        %v5957 = vunpack.c.l.b16 %v5690
        %v5958 = vunpack.c.h.b16 %v5690
        %v5959 = vunpack.c.l.b16 %v5691
        %v5960 = vunpack.c.h.b16 %v5691
        %v5961 = vunpack.c.l.b16 %v5692
        %v5962 = vunpack.c.h.b16 %v5692
        %v5963 = vunpack.c.l.b16 %v5693
        %v5964 = vunpack.c.h.b16 %v5693
        %v5965 = vunpack.c.l.b16 %v5694
        %v5966 = vunpack.c.h.b16 %v5694
        %v5967 = vunpack.c.l.b16 %v5695
        %v5968 = vunpack.c.h.b16 %v5695
        %v5969 = vunpack.c.l.b16 %v5696
        %v5970 = vunpack.c.h.b16 %v5696
        %v5971 = vunpack.c.l.b16 %v5697
        %v5972 = vunpack.c.h.b16 %v5697
        %v5973 = vunpack.c.l.b16 %v5698
        %v5974 = vunpack.c.h.b16 %v5698
        %v5975 = vunpack.c.l.b16 %v5699
        %v5976 = vunpack.c.h.b16 %v5699
        %v5977 = vunpack.c.l.b16 %v5700
        %v5978 = vunpack.c.h.b16 %v5700
        %v5979 = vunpack.c.l.b16 %v5701
        %v5980 = vunpack.c.h.b16 %v5701
        %v5981 = vunpack.c.l.b16 %v5702
        %v5982 = vunpack.c.h.b16 %v5702
        %v5983 = vunpack.c.l.b16 %v5703
        %v5984 = vunpack.c.h.b16 %v5703
        %v5985 = vunpack.c.l.b16 %v5704
        %v5986 = vunpack.c.h.b16 %v5704
        %v5987 = vunpack.c.l.b16 %v5705
        %v5988 = vunpack.c.h.b16 %v5705
        %v5989 = vunpack.c.l.b16 %v5706
        %v5990 = vunpack.c.h.b16 %v5706
        %v5991 = vunpack.c.l.b16 %v5707
        %v5992 = vunpack.c.h.b16 %v5707
        %v5993 = vunpack.c.l.b16 %v5708
        %v5994 = vunpack.c.h.b16 %v5708
        %v5995 = vunpack.c.l.b16 %v5709
        %v5996 = vunpack.c.h.b16 %v5709
        %v5997 = vunpack.c.l.b16 %v5710
        %v5998 = vunpack.c.h.b16 %v5710
        %v5999 = vunpack.c.l.b16 %v5711
        %v6000 = vunpack.c.h.b16 %v5711
        %v6001 = vunpack.c.l.b16 %v5712
        %v6002 = vunpack.c.h.b16 %v5712
        %v6003 = vunpack.c.l.b16 %v5713
        %v6004 = vunpack.c.h.b16 %v5713
        %v6005 = vunpack.c.l.b16 %v5714
        %v6006 = vunpack.c.h.b16 %v5714
        %v6007 = vunpack.c.l.b16 %v5715
        %v6008 = vunpack.c.h.b16 %v5715
        %v6009 = vunpack.c.l.b16 %v5716
        %v6010 = vunpack.c.h.b16 %v5716
        %v6011 = vunpack.c.l.b16 %v5717
        %v6012 = vunpack.c.h.b16 %v5717
        %v6013 = vunpack.c.l.b16 %v5718
        %v6014 = vunpack.c.h.b16 %v5718
        %v6015 = vunpack.c.l.b16 %v5719
        %v6016 = vunpack.c.h.b16 %v5719
        %v6017 = vunpack.c.l.b16 %v5720
        %v6018 = vunpack.c.h.b16 %v5720
        %v6019 = vunpack.c.l.b16 %v5721
        %v6020 = vunpack.c.h.b16 %v5721
        %v6021 = vunpack.c.l.b16 %v5722
        %v6022 = vunpack.c.h.b16 %v5722
        %v6023 = vunpack.c.l.b16 %v5723
        %v6024 = vunpack.c.h.b16 %v5723
        %v6025 = vunpack.c.l.b16 %v5724
        %v6026 = vunpack.c.h.b16 %v5724
        %v6027 = vunpack.c.l.b16 %v5725
        %v6028 = vunpack.c.h.b16 %v5725
        %v6029 = vunpack.c.l.b16 %v5726
        %v6030 = vunpack.c.h.b16 %v5726
        %v6031 = vunpack.c.l.b16 %v5727
        %v6032 = vunpack.c.h.b16 %v5727
        %v6033 = vunpack.c.l.b16 %v5728
        %v6034 = vunpack.c.h.b16 %v5728
        %v6035 = vunpack.c.l.b16 %v5729
        %v6036 = vunpack.c.h.b16 %v5729
        %v6037 = vunpack.c.l.b16 %v5730
        %v6038 = vunpack.c.h.b16 %v5730
        %v6039 = vunpack.c.l.b16 %v5731
        %v6040 = vunpack.c.h.b16 %v5731
        %v6041 = vunpack.c.l.b16 %v5732
        %v6042 = vunpack.c.h.b16 %v5732
        %v6043 = vunpack.c.l.b16 %v5733
        %v6044 = vunpack.c.h.b16 %v5733
        %v6045 = vunpack.c.l.b16 %v5734
        %v6046 = vunpack.c.h.b16 %v5734
        %v6047 = vunpack.c.l.b16 %v5735
        %v6048 = vunpack.c.h.b16 %v5735
        %v6049 = vunpack.c.l.b16 %v5736
        %v6050 = vunpack.c.h.b16 %v5736
        %v6051 = vunpack.c.l.b16 %v5737
        %v6052 = vunpack.c.h.b16 %v5737
        %v6053 = vunpack.c.l.b16 %v5738
        %v6054 = vunpack.c.h.b16 %v5738
        %v6055 = vunpack.c.l.b16 %v5739
        %v6056 = vunpack.c.h.b16 %v5739
        %v6057 = vunpack.c.l.b16 %v5740
        %v6058 = vunpack.c.h.b16 %v5740
        %v6059 = vunpack.c.l.b16 %v5741
        %v6060 = vunpack.c.h.b16 %v5741
        %v6061 = vunpack.c.l.b16 %v5742
        %v6062 = vunpack.c.h.b16 %v5742
        %v6063 = vunpack.c.l.b16 %v5743
        %v6064 = vunpack.c.h.b16 %v5743
        %v6065 = vunpack.c.l.b16 %v5744
        %v6066 = vunpack.c.h.b16 %v5744
        %v6067 = vpack.c.b16 %v5871, %v5867
        %v6068 = vpack.c.b16 %v5872, %v5868
        %v6069 = vpack.c.b16 %v5873, %v5869
        %v6070 = vpack.c.b16 %v5874, %v5870
        %v6071 = vpack.c.b16 %v5879, %v5875
        %v6072 = vpack.c.b16 %v5880, %v5876
        %v6073 = vpack.c.b16 %v5881, %v5877
        %v6074 = vpack.c.b16 %v5882, %v5878
        %v6075 = vpack.c.b16 %v5887, %v5883
        %v6076 = vpack.c.b16 %v5888, %v5884
        %v6077 = vpack.c.b16 %v5889, %v5885
        %v6078 = vpack.c.b16 %v5890, %v5886
        %v6079 = vpack.c.b16 %v5895, %v5891
        %v6080 = vpack.c.b16 %v5896, %v5892
        %v6081 = vpack.c.b16 %v5897, %v5893
        %v6082 = vpack.c.b16 %v5898, %v5894
        %v6083 = vpack.c.b16 %v5903, %v5899
        %v6084 = vpack.c.b16 %v5904, %v5900
        %v6085 = vpack.c.b16 %v5905, %v5901
        %v6086 = vpack.c.b16 %v5906, %v5902
        %v6087 = vpack.c.b16 %v5911, %v5907
        %v6088 = vpack.c.b16 %v5912, %v5908
        %v6089 = vpack.c.b16 %v5913, %v5909
        %v6090 = vpack.c.b16 %v5914, %v5910
        %v6091 = vpack.c.b16 %v5919, %v5915
        %v6092 = vpack.c.b16 %v5920, %v5916
        %v6093 = vpack.c.b16 %v5921, %v5917
        %v6094 = vpack.c.b16 %v5922, %v5918
        %v6095 = vpack.c.b16 %v5927, %v5923
        %v6096 = vpack.c.b16 %v5928, %v5924
        %v6097 = vpack.c.b16 %v5929, %v5925
        %v6098 = vpack.c.b16 %v5930, %v5926
        %v6099 = vpack.c.b16 %v5935, %v5931
        %v6100 = vpack.c.b16 %v5936, %v5932
        %v6101 = vpack.c.b16 %v5937, %v5933
        %v6102 = vpack.c.b16 %v5938, %v5934
        %v6103 = vpack.c.b16 %v5943, %v5939
        %v6104 = vpack.c.b16 %v5944, %v5940
        %v6105 = vpack.c.b16 %v5945, %v5941
        %v6106 = vpack.c.b16 %v5946, %v5942
        %v6107 = vpack.c.b16 %v5951, %v5947
        %v6108 = vpack.c.b16 %v5952, %v5948
        %v6109 = vpack.c.b16 %v5953, %v5949
        %v6110 = vpack.c.b16 %v5954, %v5950
        %v6111 = vpack.c.b16 %v5959, %v5955
        %v6112 = vpack.c.b16 %v5960, %v5956
        %v6113 = vpack.c.b16 %v5961, %v5957
        %v6114 = vpack.c.b16 %v5962, %v5958
        %v6115 = vpack.c.b16 %v5967, %v5963
        %v6116 = vpack.c.b16 %v5968, %v5964
        %v6117 = vpack.c.b16 %v5969, %v5965
        %v6118 = vpack.c.b16 %v5970, %v5966
        %v6119 = vpack.c.b16 %v5975, %v5971
        %v6120 = vpack.c.b16 %v5976, %v5972
        %v6121 = vpack.c.b16 %v5977, %v5973
        %v6122 = vpack.c.b16 %v5978, %v5974
        %v6123 = vpack.c.b16 %v5983, %v5979
        %v6124 = vpack.c.b16 %v5984, %v5980
        %v6125 = vpack.c.b16 %v5985, %v5981
        %v6126 = vpack.c.b16 %v5986, %v5982
        %v6127 = vpack.c.b16 %v5991, %v5987
        %v6128 = vpack.c.b16 %v5992, %v5988
        %v6129 = vpack.c.b16 %v5993, %v5989
        %v6130 = vpack.c.b16 %v5994, %v5990
        %v6131 = vpack.c.b16 %v5999, %v5995
        %v6132 = vpack.c.b16 %v6000, %v5996
        %v6133 = vpack.c.b16 %v6001, %v5997
        %v6134 = vpack.c.b16 %v6002, %v5998
        %v6135 = vpack.c.b16 %v6007, %v6003
        %v6136 = vpack.c.b16 %v6008, %v6004
        %v6137 = vpack.c.b16 %v6009, %v6005
        %v6138 = vpack.c.b16 %v6010, %v6006
        %v6139 = vpack.c.b16 %v6015, %v6011
        %v6140 = vpack.c.b16 %v6016, %v6012
        %v6141 = vpack.c.b16 %v6017, %v6013
        %v6142 = vpack.c.b16 %v6018, %v6014
        %v6143 = vpack.c.b16 %v6023, %v6019
        %v6144 = vpack.c.b16 %v6024, %v6020
        %v6145 = vpack.c.b16 %v6025, %v6021
        %v6146 = vpack.c.b16 %v6026, %v6022
        %v6147 = vpack.c.b16 %v6031, %v6027
        %v6148 = vpack.c.b16 %v6032, %v6028
        %v6149 = vpack.c.b16 %v6033, %v6029
        %v6150 = vpack.c.b16 %v6034, %v6030
        %v6151 = vpack.c.b16 %v6039, %v6035
        %v6152 = vpack.c.b16 %v6040, %v6036
        %v6153 = vpack.c.b16 %v6041, %v6037
        %v6154 = vpack.c.b16 %v6042, %v6038
        %v6155 = vpack.c.b16 %v6047, %v6043
        %v6156 = vpack.c.b16 %v6048, %v6044
        %v6157 = vpack.c.b16 %v6049, %v6045
        %v6158 = vpack.c.b16 %v6050, %v6046
        %v6159 = vpack.c.b16 %v6055, %v6051
        %v6160 = vpack.c.b16 %v6056, %v6052
        %v6161 = vpack.c.b16 %v6057, %v6053
        %v6162 = vpack.c.b16 %v6058, %v6054
        %v6163 = vpack.c.b16 %v6063, %v6059
        %v6164 = vpack.c.b16 %v6064, %v6060
        %v6165 = vpack.c.b16 %v6065, %v6061
        %v6166 = vpack.c.b16 %v6066, %v6062
        %v6268 = vsel %vm1758, %v5620, 0
        %v6271 = vsel %vm1758, %v5624, 0
        %v6274 = vsel %vm1758, %v5628, 0
        %v6277 = vsel %vm1758, %v5632, 0
        %v6280 = vsel %vm1758, %v5636, 0
        %v6283 = vsel %vm1758, %v5640, 0
        %v6286 = vsel %vm1758, %v5644, 0
        %6288 = vmatprep.subr.bf16.mxu0 %v6068
        %6289 = vmatpush1.bf16.msra.mxu0 %v6067
        %6290 = vmatprep.subr.bf16.mxu0 %v6072
        %6291 = vmatpush1.bf16.msra.mxu0 %v6071
        %6292 = vmatprep.subr.bf16.mxu0 %v6076
        %6293 = vmatpush1.bf16.msra.mxu0 %v6075
        %6294 = vmatprep.subr.bf16.mxu0 %v6080
        %6295 = vmatpush1.bf16.msra.mxu0 %v6079
        %6296 = vmatprep.subr.bf16.mxu0 %v6084
        %6297 = vmatpush1.bf16.msra.mxu0 %v6083
        %6298 = vmatprep.subr.bf16.mxu0 %v6088
        %6299 = vmatpush1.bf16.msra.mxu0 %v6087
        %6300 = vmatprep.subr.bf16.mxu0 %v6092
        %6301 = vmatpush1.bf16.msra.mxu0 %v6091
        %6302 = vmatprep.subr.bf16.mxu0 %v6096
        %6303 = vmatpush1.bf16.msra.mxu0 %v6095
        %6304 = vmatprep.subr.bf16.mxu0 %v6100
        %6305 = vmatpush1.bf16.msra.mxu0 %v6099
        %6306 = vmatprep.subr.bf16.mxu0 %v6104
        %6307 = vmatpush1.bf16.msra.mxu0 %v6103
        %6308 = vmatprep.subr.bf16.mxu0 %v6108
        %6309 = vmatpush1.bf16.msra.mxu0 %v6107
        %6310 = vmatprep.subr.bf16.mxu0 %v6112
        %6311 = vmatpush1.bf16.msra.mxu0 %v6111
        %6312 = vmatprep.subr.bf16.mxu0 %v6116
        %6313 = vmatpush1.bf16.msra.mxu0 %v6115
        %6314 = vmatprep.subr.bf16.mxu0 %v6120
        %6315 = vmatpush1.bf16.msra.mxu0 %v6119
        %6316 = vmatprep.subr.bf16.mxu0 %v6124
        %6317 = vmatpush1.bf16.msra.mxu0 %v6123
        %6318 = vmatprep.subr.bf16.mxu0 %v6128
        %6319 = vmatpush1.bf16.msra.mxu0 %v6127
        %6320 = vmatprep.mubr.bf16.mxu0 %v5618
        %6321 = vmatmul.mubr.bf16.gmra.mrb[0].mxu0 %v5617
        %v6322 = vpop.f32.mrb[0].mxu0
        %v6323 = vadd.f32 %v5750, %v6322
        %v6324 = vpop.f32.mrb[0].mxu0
        %v6325 = vadd.f32 %v5754, %v6324
        %v6326 = vpop.f32.mrb[0].mxu0
        %v6327 = vadd.f32 %v5750, %v6326
        %v6328 = vpop.f32.mrb[0].mxu0
        %v6329 = vadd.f32 %v5754, %v6328
        %6330 = vmatprep.mubr.bf16.mxu0 %v5622
        %6331 = vmatmul.mubr.bf16.gmra.mrb[0].mxu0 %v5621
        %v6332 = vpop.f32.mrb[0].mxu0
        %v6333 = vadd.f32 %v5750, %v6332
        %v6334 = vpop.f32.mrb[0].mxu0
        %v6335 = vadd.f32 %v5754, %v6334
        %v6336 = vpop.f32.mrb[0].mxu0
        %v6337 = vadd.f32 %v5750, %v6336
        %v6338 = vpop.f32.mrb[0].mxu0
        %v6339 = vadd.f32 %v5754, %v6338
        %6340 = vmatprep.mubr.bf16.mxu0 %v5626
        %6341 = vmatmul.mubr.bf16.gmra.mrb[0].mxu0 %v5625
        %v6342 = vpop.f32.mrb[0].mxu0
        %v6343 = vadd.f32 %v5750, %v6342
        %v6344 = vpop.f32.mrb[0].mxu0
        %v6345 = vadd.f32 %v5754, %v6344
        %v6346 = vpop.f32.mrb[0].mxu0
        %v6347 = vadd.f32 %v5750, %v6346
        %v6348 = vpop.f32.mrb[0].mxu0
        %v6349 = vadd.f32 %v5754, %v6348
        %6350 = vmatprep.mubr.bf16.mxu0 %v5630
        %6351 = vmatmul.mubr.bf16.gmra.mrb[0].mxu0 %v5629
        %v6352 = vpop.f32.mrb[0].mxu0
        %v6353 = vadd.f32 %v5750, %v6352
        %v6354 = vpop.f32.mrb[0].mxu0
        %v6355 = vadd.f32 %v5754, %v6354
        %v6356 = vpop.f32.mrb[0].mxu0
        %v6357 = vadd.f32 %v5750, %v6356
        %v6358 = vpop.f32.mrb[0].mxu0
        %v6359 = vadd.f32 %v5754, %v6358
        %6360 = vmatprep.mubr.bf16.mxu0 %v5634
        %6361 = vmatmul.mubr.bf16.gmra.mrb[0].mxu0 %v5633
        %v6362 = vpop.f32.mrb[0].mxu0
        %v6363 = vadd.f32 %v5750, %v6362
        %v6364 = vpop.f32.mrb[0].mxu0
        %v6365 = vadd.f32 %v5754, %v6364
        %v6366 = vpop.f32.mrb[0].mxu0
        %v6367 = vadd.f32 %v5750, %v6366
        %v6368 = vpop.f32.mrb[0].mxu0
        %v6369 = vadd.f32 %v5754, %v6368
        %6370 = vmatprep.mubr.bf16.mxu0 %v5638
        %6371 = vmatmul.mubr.bf16.gmra.mrb[0].mxu0 %v5637
        %v6372 = vpop.f32.mrb[0].mxu0
        %v6373 = vadd.f32 %v5750, %v6372
        %v6374 = vpop.f32.mrb[0].mxu0
        %v6375 = vadd.f32 %v5754, %v6374
        %v6376 = vpop.f32.mrb[0].mxu0
        %v6377 = vadd.f32 %v5750, %v6376
        %v6378 = vpop.f32.mrb[0].mxu0
        %v6379 = vadd.f32 %v5754, %v6378
        %6380 = vmatprep.mubr.bf16.mxu0 %v5642
        %6381 = vmatmul.mubr.bf16.gmra.mrb[0].mxu0 %v5641
        %v6382 = vpop.f32.mrb[0].mxu0
        %v6383 = vadd.f32 %v5750, %v6382
        %v6384 = vpop.f32.mrb[0].mxu0
        %v6385 = vadd.f32 %v5754, %v6384
        %v6386 = vpop.f32.mrb[0].mxu0
        %v6387 = vpop.f32.mrb[0].mxu0
        %6388 = vdwg.mxu0
        %6389 = vmatprep.subr.bf16.mxu0 %v6132
        %6390 = vmatpush1.bf16.msra.mxu0 %v6131
        %6391 = vmatprep.subr.bf16.mxu0 %v6136
        %6392 = vmatpush1.bf16.msra.mxu0 %v6135
        %6393 = vmatprep.subr.bf16.mxu0 %v6140
        %6394 = vmatpush1.bf16.msra.mxu0 %v6139
        %6395 = vmatprep.subr.bf16.mxu0 %v6144
        %6396 = vmatpush1.bf16.msra.mxu0 %v6143
        %6397 = vmatprep.subr.bf16.mxu0 %v6148
        %6398 = vmatpush1.bf16.msra.mxu0 %v6147
        %6399 = vmatprep.subr.bf16.mxu0 %v6152
        %6400 = vmatpush1.bf16.msra.mxu0 %v6151
        %6401 = vmatprep.subr.bf16.mxu0 %v6156
        %6402 = vmatpush1.bf16.msra.mxu0 %v6155
        %6403 = vmatprep.subr.bf16.mxu0 %v6160
        %6404 = vmatpush1.bf16.msra.mxu0 %v6159
        %6405 = vmatprep.subr.bf16.mxu0 %v6164
        %6406 = vmatpush1.bf16.msra.mxu0 %v6163
        %6407 = vmatprep.subr.bf16.mxu0 0
        %6408 = vmatpush1.bf16.msra.mxu0 0
        %6409 = vmatprep.subr.bf16.mxu0 0
        %6410 = vmatpush1.bf16.msra.mxu0 0
        %6411 = vmatprep.subr.bf16.mxu0 0
        %6412 = vmatpush1.bf16.msra.mxu0 0
        %6413 = vmatprep.subr.bf16.mxu0 0
        %6414 = vmatpush1.bf16.msra.mxu0 0
        %6415 = vmatprep.subr.bf16.mxu0 0
        %6416 = vmatpush1.bf16.msra.mxu0 0
        %6417 = vmatprep.subr.bf16.mxu0 0
        %6418 = vmatpush1.bf16.msra.mxu0 0
        %6419 = vmatprep.subr.bf16.mxu0 0
        %6420 = vmatpush1.bf16.msra.mxu0 0
        %6421 = vmatprep.mubr.bf16.mxu0 %v6268
        %6422 = vmatmul.mubr.bf16.gmra.mrb[0].mxu0 %v5619
        %v6423 = vpop.f32.mrb[0].mxu0
        %v6424 = vadd.f32 %v6323, %v6423
        %v6425 = vpop.f32.mrb[0].mxu0
        %v6426 = vadd.f32 %v6325, %v6425
        %v6427 = vpop.f32.mrb[0].mxu0
        %v6428 = vadd.f32 %v6327, %v6427
        %v6429 = vpop.f32.mrb[0].mxu0
        %v6430 = vadd.f32 %v6329, %v6429
        %6431 = vmatprep.mubr.bf16.mxu0 %v6271
        %6432 = vmatmul.mubr.bf16.gmra.mrb[0].mxu0 %v5623
        %v6433 = vpop.f32.mrb[0].mxu0
        %v6434 = vadd.f32 %v6333, %v6433
        %v6435 = vpop.f32.mrb[0].mxu0
        %v6436 = vadd.f32 %v6335, %v6435
        %v6437 = vpop.f32.mrb[0].mxu0
        %v6438 = vadd.f32 %v6337, %v6437
        %v6439 = vpop.f32.mrb[0].mxu0
        %v6440 = vadd.f32 %v6339, %v6439
        %6441 = vmatprep.mubr.bf16.mxu0 %v6274
        %6442 = vmatmul.mubr.bf16.gmra.mrb[0].mxu0 %v5627
        %v6443 = vpop.f32.mrb[0].mxu0
        %v6444 = vadd.f32 %v6343, %v6443
        %v6445 = vpop.f32.mrb[0].mxu0
        %v6446 = vadd.f32 %v6345, %v6445
        %v6447 = vpop.f32.mrb[0].mxu0
        %v6448 = vadd.f32 %v6347, %v6447
        %v6449 = vpop.f32.mrb[0].mxu0
        %v6450 = vadd.f32 %v6349, %v6449
        %6451 = vmatprep.mubr.bf16.mxu0 %v6277
        %6452 = vmatmul.mubr.bf16.gmra.mrb[0].mxu0 %v5631
        %v6453 = vpop.f32.mrb[0].mxu0
        %v6454 = vadd.f32 %v6353, %v6453
        %v6455 = vpop.f32.mrb[0].mxu0
        %v6456 = vadd.f32 %v6355, %v6455
        %v6457 = vpop.f32.mrb[0].mxu0
        %v6458 = vadd.f32 %v6357, %v6457
        %v6459 = vpop.f32.mrb[0].mxu0
        %v6460 = vadd.f32 %v6359, %v6459
        %6461 = vmatprep.mubr.bf16.mxu0 %v6280
        %6462 = vmatmul.mubr.bf16.gmra.mrb[0].mxu0 %v5635
        %v6463 = vpop.f32.mrb[0].mxu0
        %v6464 = vadd.f32 %v6363, %v6463
        %v6465 = vpop.f32.mrb[0].mxu0
        %v6466 = vadd.f32 %v6365, %v6465
        %v6467 = vpop.f32.mrb[0].mxu0
        %v6468 = vadd.f32 %v6367, %v6467
        %v6469 = vpop.f32.mrb[0].mxu0
        %v6470 = vadd.f32 %v6369, %v6469
        %6471 = vmatprep.mubr.bf16.mxu0 %v6283
        %6472 = vmatmul.mubr.bf16.gmra.mrb[0].mxu0 %v5639
        %v6473 = vpop.f32.mrb[0].mxu0
        %v6474 = vadd.f32 %v6373, %v6473
        %v6475 = vpop.f32.mrb[0].mxu0
        %v6476 = vadd.f32 %v6375, %v6475
        %v6477 = vpop.f32.mrb[0].mxu0
        %v6478 = vadd.f32 %v6377, %v6477
        %v6479 = vpop.f32.mrb[0].mxu0
        %v6480 = vadd.f32 %v6379, %v6479
        %6481 = vmatprep.mubr.bf16.mxu0 %v6286
        %6482 = vmatmul.mubr.bf16.gmra.mrb[0].mxu0 %v5643
        %v6483 = vpop.f32.mrb[0].mxu0
        %v6484 = vadd.f32 %v6383, %v6483
        %v6485 = vpop.f32.mrb[0].mxu0
        %v6486 = vadd.f32 %v6385, %v6485
        %v6487 = vpop.f32.mrb[0].mxu0
        %v6488 = vpop.f32.mrb[0].mxu0
        %6489 = vdwg.mxu0
        %6490 = vmatprep.subr.bf16.mxu0 %v6070
        %6491 = vmatpush1.bf16.msra.mxu0 %v6069
        %6492 = vmatprep.subr.bf16.mxu0 %v6074
        %6493 = vmatpush1.bf16.msra.mxu0 %v6073
        %6494 = vmatprep.subr.bf16.mxu0 %v6078
        %6495 = vmatpush1.bf16.msra.mxu0 %v6077
        %6496 = vmatprep.subr.bf16.mxu0 %v6082
        %6497 = vmatpush1.bf16.msra.mxu0 %v6081
        %6498 = vmatprep.subr.bf16.mxu0 %v6086
        %6499 = vmatpush1.bf16.msra.mxu0 %v6085
        %6500 = vmatprep.subr.bf16.mxu0 %v6090
        %6501 = vmatpush1.bf16.msra.mxu0 %v6089
        %6502 = vmatprep.subr.bf16.mxu0 %v6094
        %6503 = vmatpush1.bf16.msra.mxu0 %v6093
        %6504 = vmatprep.subr.bf16.mxu0 %v6098
        %6505 = vmatpush1.bf16.msra.mxu0 %v6097
        %6506 = vmatprep.subr.bf16.mxu0 %v6102
        %6507 = vmatpush1.bf16.msra.mxu0 %v6101
        %6508 = vmatprep.subr.bf16.mxu0 %v6106
        %6509 = vmatpush1.bf16.msra.mxu0 %v6105
        %6510 = vmatprep.subr.bf16.mxu0 %v6110
        %6511 = vmatpush1.bf16.msra.mxu0 %v6109
        %6512 = vmatprep.subr.bf16.mxu0 %v6114
        %6513 = vmatpush1.bf16.msra.mxu0 %v6113
        %6514 = vmatprep.subr.bf16.mxu0 %v6118
        %6515 = vmatpush1.bf16.msra.mxu0 %v6117
        %6516 = vmatprep.subr.bf16.mxu0 %v6122
        %6517 = vmatpush1.bf16.msra.mxu0 %v6121
        %6518 = vmatprep.subr.bf16.mxu0 %v6126
        %6519 = vmatpush1.bf16.msra.mxu0 %v6125
        %6520 = vmatprep.subr.bf16.mxu0 %v6130
        %6521 = vmatpush1.bf16.msra.mxu0 %v6129
        %6522 = vmatprep.mubr.bf16.mxu0 %v5618
        %6523 = vmatmul.mubr.bf16.gmra.mrb[0].mxu0 %v5617
        %v6524 = vpop.f32.mrb[0].mxu0
        %v6525 = vadd.f32 %v5758, %v6524
        %v6526 = vpop.f32.mrb[0].mxu0
        %v6527 = vadd.f32 %v5762, %v6526
        %v6528 = vpop.f32.mrb[0].mxu0
        %v6529 = vadd.f32 %v5758, %v6528
        %v6530 = vpop.f32.mrb[0].mxu0
        %v6531 = vadd.f32 %v5762, %v6530
        %6532 = vmatprep.mubr.bf16.mxu0 %v5622
        %6533 = vmatmul.mubr.bf16.gmra.mrb[0].mxu0 %v5621
        %v6534 = vpop.f32.mrb[0].mxu0
        %v6535 = vadd.f32 %v5758, %v6534
        %v6536 = vpop.f32.mrb[0].mxu0
        %v6537 = vadd.f32 %v5762, %v6536
        %v6538 = vpop.f32.mrb[0].mxu0
        %v6539 = vadd.f32 %v5758, %v6538
        %v6540 = vpop.f32.mrb[0].mxu0
        %v6541 = vadd.f32 %v5762, %v6540
        %6542 = vmatprep.mubr.bf16.mxu0 %v5626
        %6543 = vmatmul.mubr.bf16.gmra.mrb[0].mxu0 %v5625
        %v6544 = vpop.f32.mrb[0].mxu0
        %v6545 = vadd.f32 %v5758, %v6544
        %v6546 = vpop.f32.mrb[0].mxu0
        %v6547 = vadd.f32 %v5762, %v6546
        %v6548 = vpop.f32.mrb[0].mxu0
        %v6549 = vadd.f32 %v5758, %v6548
        %v6550 = vpop.f32.mrb[0].mxu0
        %v6551 = vadd.f32 %v5762, %v6550
        %6552 = vmatprep.mubr.bf16.mxu0 %v5630
        %6553 = vmatmul.mubr.bf16.gmra.mrb[0].mxu0 %v5629
        %v6554 = vpop.f32.mrb[0].mxu0
        %v6555 = vadd.f32 %v5758, %v6554
        %v6556 = vpop.f32.mrb[0].mxu0
        %v6557 = vadd.f32 %v5762, %v6556
        %v6558 = vpop.f32.mrb[0].mxu0
        %v6559 = vadd.f32 %v5758, %v6558
        %v6560 = vpop.f32.mrb[0].mxu0
        %v6561 = vadd.f32 %v5762, %v6560
        %6562 = vmatprep.mubr.bf16.mxu0 %v5634
        %6563 = vmatmul.mubr.bf16.gmra.mrb[0].mxu0 %v5633
        %v6564 = vpop.f32.mrb[0].mxu0
        %v6565 = vadd.f32 %v5758, %v6564
        %v6566 = vpop.f32.mrb[0].mxu0
        %v6567 = vadd.f32 %v5762, %v6566
        %v6568 = vpop.f32.mrb[0].mxu0
        %v6569 = vadd.f32 %v5758, %v6568
        %v6570 = vpop.f32.mrb[0].mxu0
        %v6571 = vadd.f32 %v5762, %v6570
        %6572 = vmatprep.mubr.bf16.mxu0 %v5638
        %6573 = vmatmul.mubr.bf16.gmra.mrb[0].mxu0 %v5637
        %v6574 = vpop.f32.mrb[0].mxu0
        %v6575 = vadd.f32 %v5758, %v6574
        %v6576 = vpop.f32.mrb[0].mxu0
        %v6577 = vadd.f32 %v5762, %v6576
        %v6578 = vpop.f32.mrb[0].mxu0
        %v6579 = vadd.f32 %v5758, %v6578
        %v6580 = vpop.f32.mrb[0].mxu0
        %v6581 = vadd.f32 %v5762, %v6580
        %6582 = vmatprep.mubr.bf16.mxu0 %v5642
        %6583 = vmatmul.mubr.bf16.gmra.mrb[0].mxu0 %v5641
        %v6584 = vpop.f32.mrb[0].mxu0
        %v6585 = vadd.f32 %v5758, %v6584
        %v6586 = vpop.f32.mrb[0].mxu0
        %v6587 = vadd.f32 %v5762, %v6586
        %v6588 = vpop.f32.mrb[0].mxu0
        %v6589 = vpop.f32.mrb[0].mxu0
        %6590 = vdwg.mxu0
        %6591 = vmatprep.subr.bf16.mxu0 %v6134
        %6592 = vmatpush1.bf16.msra.mxu0 %v6133
        %6593 = vmatprep.subr.bf16.mxu0 %v6138
        %6594 = vmatpush1.bf16.msra.mxu0 %v6137
        %6595 = vmatprep.subr.bf16.mxu0 %v6142
        %6596 = vmatpush1.bf16.msra.mxu0 %v6141
        %6597 = vmatprep.subr.bf16.mxu0 %v6146
        %6598 = vmatpush1.bf16.msra.mxu0 %v6145
        %6599 = vmatprep.subr.bf16.mxu0 %v6150
        %6600 = vmatpush1.bf16.msra.mxu0 %v6149
        %6601 = vmatprep.subr.bf16.mxu0 %v6154
        %6602 = vmatpush1.bf16.msra.mxu0 %v6153
        %6603 = vmatprep.subr.bf16.mxu0 %v6158
        %6604 = vmatpush1.bf16.msra.mxu0 %v6157
        %6605 = vmatprep.subr.bf16.mxu0 %v6162
        %6606 = vmatpush1.bf16.msra.mxu0 %v6161
        %6607 = vmatprep.subr.bf16.mxu0 %v6166
        %6608 = vmatpush1.bf16.msra.mxu0 %v6165
        %6609 = vmatprep.subr.bf16.mxu0 0
        %6610 = vmatpush1.bf16.msra.mxu0 0
        %6611 = vmatprep.subr.bf16.mxu0 0
        %6612 = vmatpush1.bf16.msra.mxu0 0
        %6613 = vmatprep.subr.bf16.mxu0 0
        %6614 = vmatpush1.bf16.msra.mxu0 0
        %6615 = vmatprep.subr.bf16.mxu0 0
        %6616 = vmatpush1.bf16.msra.mxu0 0
        %6617 = vmatprep.subr.bf16.mxu0 0
        %6618 = vmatpush1.bf16.msra.mxu0 0
        %6619 = vmatprep.subr.bf16.mxu0 0
        %6620 = vmatpush1.bf16.msra.mxu0 0
        %6621 = vmatprep.subr.bf16.mxu0 0
        %6622 = vmatpush1.bf16.msra.mxu0 0
        %6623 = vmatprep.mubr.bf16.mxu0 %v6268
        %6624 = vmatmul.mubr.bf16.gmra.mrb[0].mxu0 %v5619
        %v6625 = vpop.f32.mrb[0].mxu0
        %v6626 = vadd.f32 %v6525, %v6625
        %v6627 = vpop.f32.mrb[0].mxu0
        %v6628 = vadd.f32 %v6527, %v6627
        %v6629 = vpop.f32.mrb[0].mxu0
        %v6630 = vadd.f32 %v6529, %v6629
        %v6631 = vpop.f32.mrb[0].mxu0
        %v6632 = vadd.f32 %v6531, %v6631
        %6633 = vmatprep.mubr.bf16.mxu0 %v6271
        %6634 = vmatmul.mubr.bf16.gmra.mrb[0].mxu0 %v5623
        %v6635 = vpop.f32.mrb[0].mxu0
        %v6636 = vadd.f32 %v6535, %v6635
        %v6637 = vpop.f32.mrb[0].mxu0
        %v6638 = vadd.f32 %v6537, %v6637
        %v6639 = vpop.f32.mrb[0].mxu0
        %v6640 = vadd.f32 %v6539, %v6639
        %v6641 = vpop.f32.mrb[0].mxu0
        %v6642 = vadd.f32 %v6541, %v6641
        %6643 = vmatprep.mubr.bf16.mxu0 %v6274
        %6644 = vmatmul.mubr.bf16.gmra.mrb[0].mxu0 %v5627
        %v6645 = vpop.f32.mrb[0].mxu0
        %v6646 = vadd.f32 %v6545, %v6645
        %v6647 = vpop.f32.mrb[0].mxu0
        %v6648 = vadd.f32 %v6547, %v6647
        %v6649 = vpop.f32.mrb[0].mxu0
        %v6650 = vadd.f32 %v6549, %v6649
        %v6651 = vpop.f32.mrb[0].mxu0
        %v6652 = vadd.f32 %v6551, %v6651
        %6653 = vmatprep.mubr.bf16.mxu0 %v6277
        %6654 = vmatmul.mubr.bf16.gmra.mrb[0].mxu0 %v5631
        %v6655 = vpop.f32.mrb[0].mxu0
        %v6656 = vadd.f32 %v6555, %v6655
        %v6657 = vpop.f32.mrb[0].mxu0
        %v6658 = vadd.f32 %v6557, %v6657
        %v6659 = vpop.f32.mrb[0].mxu0
        %v6660 = vadd.f32 %v6559, %v6659
        %v6661 = vpop.f32.mrb[0].mxu0
        %v6662 = vadd.f32 %v6561, %v6661
        %6663 = vmatprep.mubr.bf16.mxu0 %v6280
        %6664 = vmatmul.mubr.bf16.gmra.mrb[0].mxu0 %v5635
        %v6665 = vpop.f32.mrb[0].mxu0
        %v6666 = vadd.f32 %v6565, %v6665
        %v6667 = vpop.f32.mrb[0].mxu0
        %v6668 = vadd.f32 %v6567, %v6667
        %v6669 = vpop.f32.mrb[0].mxu0
        %v6670 = vadd.f32 %v6569, %v6669
        %v6671 = vpop.f32.mrb[0].mxu0
        %v6672 = vadd.f32 %v6571, %v6671
        %6673 = vmatprep.mubr.bf16.mxu0 %v6283
        %6674 = vmatmul.mubr.bf16.gmra.mrb[0].mxu0 %v5639
        %v6675 = vpop.f32.mrb[0].mxu0
        %v6676 = vadd.f32 %v6575, %v6675
        %v6677 = vpop.f32.mrb[0].mxu0
        %v6678 = vadd.f32 %v6577, %v6677
        %v6679 = vpop.f32.mrb[0].mxu0
        %v6680 = vadd.f32 %v6579, %v6679
        %v6681 = vpop.f32.mrb[0].mxu0
        %v6682 = vadd.f32 %v6581, %v6681
        %6683 = vmatprep.mubr.bf16.mxu0 %v6286
        %6684 = vmatmul.mubr.bf16.gmra.mrb[0].mxu0 %v5643
        %v6685 = vpop.f32.mrb[0].mxu0
        %v6686 = vadd.f32 %v6585, %v6685
        %v6687 = vpop.f32.mrb[0].mxu0
        %v6688 = vadd.f32 %v6587, %v6687
        %v6689 = vpop.f32.mrb[0].mxu0
        %v6690 = vpop.f32.mrb[0].mxu0
        %6691 = vdwg.mxu0
        %v6692 = vmax.f32 %v6424, 0.0
        %v6693 = vmax.f32 %v6426, 0.0
        %v6694 = vmax.f32 %v6626, 0.0
        %v6695 = vmax.f32 %v6628, 0.0
        %v6696 = vmax.f32 %v6428, 0.0
        %v6697 = vmax.f32 %v6430, 0.0
        %v6698 = vmax.f32 %v6630, 0.0
        %v6699 = vmax.f32 %v6632, 0.0
        %v6700 = vmax.f32 %v6434, 0.0
        %v6701 = vmax.f32 %v6436, 0.0
        %v6702 = vmax.f32 %v6636, 0.0
        %v6703 = vmax.f32 %v6638, 0.0
        %v6704 = vmax.f32 %v6438, 0.0
        %v6705 = vmax.f32 %v6440, 0.0
        %v6706 = vmax.f32 %v6640, 0.0
        %v6707 = vmax.f32 %v6642, 0.0
        %v6708 = vmax.f32 %v6444, 0.0
        %v6709 = vmax.f32 %v6446, 0.0
        %v6710 = vmax.f32 %v6646, 0.0
        %v6711 = vmax.f32 %v6648, 0.0
        %v6712 = vmax.f32 %v6448, 0.0
        %v6713 = vmax.f32 %v6450, 0.0
        %v6714 = vmax.f32 %v6650, 0.0
        %v6715 = vmax.f32 %v6652, 0.0
        %v6716 = vmax.f32 %v6454, 0.0
        %v6717 = vmax.f32 %v6456, 0.0
        %v6718 = vmax.f32 %v6656, 0.0
        %v6719 = vmax.f32 %v6658, 0.0
        %v6720 = vmax.f32 %v6458, 0.0
        %v6721 = vmax.f32 %v6460, 0.0
        %v6722 = vmax.f32 %v6660, 0.0
        %v6723 = vmax.f32 %v6662, 0.0
        %v6724 = vmax.f32 %v6464, 0.0
        %v6725 = vmax.f32 %v6466, 0.0
        %v6726 = vmax.f32 %v6666, 0.0
        %v6727 = vmax.f32 %v6668, 0.0
        %v6728 = vmax.f32 %v6468, 0.0
        %v6729 = vmax.f32 %v6470, 0.0
        %v6730 = vmax.f32 %v6670, 0.0
        %v6731 = vmax.f32 %v6672, 0.0
        %v6732 = vmax.f32 %v6474, 0.0
        %v6733 = vmax.f32 %v6476, 0.0
        %v6734 = vmax.f32 %v6676, 0.0
        %v6735 = vmax.f32 %v6678, 0.0
        %v6736 = vmax.f32 %v6478, 0.0
        %v6737 = vmax.f32 %v6480, 0.0
        %v6738 = vmax.f32 %v6680, 0.0
        %v6739 = vmax.f32 %v6682, 0.0
        %v6740 = vmax.f32 %v6484, 0.0
        %v6741 = vmax.f32 %v6486, 0.0
        %v6742 = vmax.f32 %v6686, 0.0
        %v6743 = vmax.f32 %v6688, 0.0
        %v6744 = vpack.c.bf16 %v6696, %v6692
        %v6745 = vpack.c.bf16 %v6697, %v6693
        %v6746 = vpack.c.bf16 %v6698, %v6694
        %v6747 = vpack.c.bf16 %v6699, %v6695
        %v6748 = vpack.c.bf16 %v6704, %v6700
        %v6749 = vpack.c.bf16 %v6705, %v6701
        %v6750 = vpack.c.bf16 %v6706, %v6702
        %v6751 = vpack.c.bf16 %v6707, %v6703
        %v6752 = vpack.c.bf16 %v6712, %v6708
        %v6753 = vpack.c.bf16 %v6713, %v6709
        %v6754 = vpack.c.bf16 %v6714, %v6710
        %v6755 = vpack.c.bf16 %v6715, %v6711
        %v6756 = vpack.c.bf16 %v6720, %v6716
        %v6757 = vpack.c.bf16 %v6721, %v6717
        %v6758 = vpack.c.bf16 %v6722, %v6718
        %v6759 = vpack.c.bf16 %v6723, %v6719
        %v6760 = vpack.c.bf16 %v6728, %v6724
        %v6761 = vpack.c.bf16 %v6729, %v6725
        %v6762 = vpack.c.bf16 %v6730, %v6726
        %v6763 = vpack.c.bf16 %v6731, %v6727
        %v6764 = vpack.c.bf16 %v6736, %v6732
        %v6765 = vpack.c.bf16 %v6737, %v6733
        %v6766 = vpack.c.bf16 %v6738, %v6734
        %v6767 = vpack.c.bf16 %v6739, %v6735
        %v6768 = vpack.c.bf16 %v6740, %v6740
        %v6769 = vpack.c.bf16 %v6741, %v6741
        %v6770 = vpack.c.bf16 %v6742, %v6742
        %v6771 = vpack.c.bf16 %v6743, %v6743
        %v6772 = vld [vmem:[#allocation19] sm:$0xf]
        %v6773 = vld [vmem:[#allocation19 + $0x4] sm:$0xf]
        %v6774 = vld [vmem:[#allocation19 + $0x8] sm:$0xf]
        %v6775 = vld [vmem:[#allocation19 + $0xc] sm:$0xf]
        %v6776 = vld [vmem:[#allocation19 + $0x10] sm:$0xf]
        %v6777 = vld [vmem:[#allocation19 + $0x14] sm:$0xf]
        %v6778 = vld [vmem:[#allocation19 + $0x18] sm:$0xf]
        %v6779 = vld [vmem:[#allocation19 + $0x1c] sm:$0xf]
        %v6780 = vld [vmem:[#allocation19 + $0x20] sm:$0xf]
        %v6781 = vld [vmem:[#allocation19 + $0x24] sm:$0xf]
        %v6782 = vld [vmem:[#allocation19 + $0x28] sm:$0xf]
        %v6783 = vld [vmem:[#allocation19 + $0x2c] sm:$0xf]
        %v6784 = vld [vmem:[#allocation19 + $0x30] sm:$0xf]
        %v6785 = vld [vmem:[#allocation19 + $0x34] sm:$0xf]
        %v6786 = vld [vmem:[#allocation19 + $0x38] sm:$0xf]
        %v6787 = vld [vmem:[#allocation19 + $0x3c] sm:$0xf]
        %v6788 = vld [vmem:[#allocation19 + $0x40] sm:$0xf]
        %v6789 = vld [vmem:[#allocation19 + $0x44] sm:$0xf]
        %v6790 = vld [vmem:[#allocation19 + $0x48] sm:$0xf]
        %v6791 = vld [vmem:[#allocation19 + $0x4c] sm:$0xf]
        %v6792 = vld [vmem:[#allocation19 + $0x50] sm:$0xf]
        %v6793 = vld [vmem:[#allocation19 + $0x54] sm:$0xf]
        %v6794 = vld [vmem:[#allocation19 + $0x58] sm:$0xf]
        %v6795 = vld [vmem:[#allocation19 + $0x5c] sm:$0xf]
        %v6796 = vld [vmem:[#allocation19 + $0x60] sm:$0xf]
        %v6797 = vld [vmem:[#allocation19 + $0x64] sm:$0xf]
        %v6798 = vld [vmem:[#allocation19 + $0x68] sm:$0xf]
        %v6799 = vld [vmem:[#allocation19 + $0x6c] sm:$0xf]
        %v6800 = vld [vmem:[#allocation19 + $0x70] sm:$0xf]
        %v6801 = vld [vmem:[#allocation19 + $0x74] sm:$0xf]
        %v6802 = vld [vmem:[#allocation19 + $0x78] sm:$0xf]
        %v6803 = vld [vmem:[#allocation19 + $0x7c] sm:$0xf]
        %v6804 = vld [vmem:[#allocation19 + $0x80] sm:$0xf]
        %v6805 = vld [vmem:[#allocation19 + $0x84] sm:$0xf]
        %v6806 = vld [vmem:[#allocation19 + $0x88] sm:$0xf]
        %v6807 = vld [vmem:[#allocation19 + $0x8c] sm:$0xf]
        %v6808 = vld [vmem:[#allocation19 + $0x90] sm:$0xf]
        %v6809 = vld [vmem:[#allocation19 + $0x94] sm:$0xf]
        %v6810 = vld [vmem:[#allocation19 + $0x98] sm:$0xf]
        %v6811 = vld [vmem:[#allocation19 + $0x9c] sm:$0xf]
        %v6812 = vld [vmem:[#allocation19 + $0xa0] sm:$0xf]
        %v6813 = vld [vmem:[#allocation19 + $0xa4] sm:$0xf]
        %v6814 = vld [vmem:[#allocation19 + $0xa8] sm:$0xf]
        %v6815 = vld [vmem:[#allocation19 + $0xac] sm:$0xf]
        %v6816 = vld [vmem:[#allocation19 + $0xb0] sm:$0xf]
        %v6817 = vld [vmem:[#allocation19 + $0xb4] sm:$0xf]
        %v6818 = vld [vmem:[#allocation19 + $0xb8] sm:$0xf]
        %v6819 = vld [vmem:[#allocation19 + $0xbc] sm:$0xf]
        %v6820 = vld [vmem:[#allocation19 + $0xc0] sm:$0xf]
        %v6821 = vld [vmem:[#allocation19 + $0xc4] sm:$0xf]
        %v6822 = vld [vmem:[#allocation21] sm:$0x1]
        %v6824 = vlaneseq
        %v6825 = vshrl.u32 %v6824, 7
        %v6826 = vsub.s32 0, %v6825
        %v6827 = vrot.slane %v6822, %v6826
        %v6879 = vunpack.c.l.b16 %v6772
        %v6880 = vunpack.c.l.b16 %v6773
        %v6881 = vunpack.c.l.b16 %v6774
        %v6882 = vunpack.c.l.b16 %v6775
        %v6883 = vunpack.c.l.b16 %v6776
        %v6884 = vunpack.c.l.b16 %v6777
        %v6885 = vunpack.c.l.b16 %v6778
        %v6886 = vunpack.c.l.b16 %v6779
        %v6887 = vunpack.c.l.b16 %v6780
        %v6888 = vunpack.c.l.b16 %v6781
        %v6889 = vunpack.c.l.b16 %v6782
        %v6890 = vunpack.c.l.b16 %v6783
        %v6891 = vunpack.c.l.b16 %v6784
        %v6892 = vunpack.c.l.b16 %v6785
        %v6893 = vunpack.c.l.b16 %v6786
        %v6894 = vunpack.c.l.b16 %v6787
        %v6895 = vunpack.c.l.b16 %v6788
        %v6896 = vunpack.c.l.b16 %v6789
        %v6897 = vunpack.c.l.b16 %v6790
        %v6898 = vunpack.c.l.b16 %v6791
        %v6899 = vunpack.c.l.b16 %v6792
        %v6900 = vunpack.c.l.b16 %v6793
        %v6901 = vunpack.c.l.b16 %v6794
        %v6902 = vunpack.c.l.b16 %v6795
        %v6903 = vunpack.c.l.b16 %v6796
        %v6904 = vunpack.c.l.b16 %v6797
        %v6905 = vunpack.c.l.b16 %v6798
        %v6906 = vunpack.c.l.b16 %v6799
        %v6907 = vunpack.c.l.b16 %v6800
        %v6908 = vunpack.c.l.b16 %v6801
        %v6909 = vunpack.c.l.b16 %v6802
        %v6910 = vunpack.c.l.b16 %v6803
        %v6911 = vunpack.c.l.b16 %v6804
        %v6912 = vunpack.c.l.b16 %v6805
        %v6913 = vunpack.c.l.b16 %v6806
        %v6914 = vunpack.c.l.b16 %v6807
        %v6915 = vunpack.c.l.b16 %v6808
        %v6916 = vunpack.c.l.b16 %v6809
        %v6917 = vunpack.c.l.b16 %v6810
        %v6918 = vunpack.c.l.b16 %v6811
        %v6919 = vunpack.c.l.b16 %v6812
        %v6920 = vunpack.c.l.b16 %v6813
        %v6921 = vunpack.c.l.b16 %v6814
        %v6922 = vunpack.c.l.b16 %v6815
        %v6923 = vunpack.c.l.b16 %v6816
        %v6924 = vunpack.c.l.b16 %v6817
        %v6925 = vunpack.c.l.b16 %v6818
        %v6926 = vunpack.c.l.b16 %v6819
        %v6927 = vunpack.c.l.b16 %v6820
        %v6928 = vunpack.c.l.b16 %v6821
        %v6929 = vpack.c.b16 %v6880, %v6879
        %v6930 = vpack.c.b16 %v6882, %v6881
        %v6931 = vpack.c.b16 %v6884, %v6883
        %v6932 = vpack.c.b16 %v6886, %v6885
        %v6933 = vpack.c.b16 %v6888, %v6887
        %v6934 = vpack.c.b16 %v6890, %v6889
        %v6935 = vpack.c.b16 %v6892, %v6891
        %v6936 = vpack.c.b16 %v6894, %v6893
        %v6937 = vpack.c.b16 %v6896, %v6895
        %v6938 = vpack.c.b16 %v6898, %v6897
        %v6939 = vpack.c.b16 %v6900, %v6899
        %v6940 = vpack.c.b16 %v6902, %v6901
        %v6941 = vpack.c.b16 %v6904, %v6903
        %v6942 = vpack.c.b16 %v6906, %v6905
        %v6943 = vpack.c.b16 %v6908, %v6907
        %v6944 = vpack.c.b16 %v6910, %v6909
        %v6945 = vpack.c.b16 %v6912, %v6911
        %v6946 = vpack.c.b16 %v6914, %v6913
        %v6947 = vpack.c.b16 %v6916, %v6915
        %v6948 = vpack.c.b16 %v6918, %v6917
        %v6949 = vpack.c.b16 %v6920, %v6919
        %v6950 = vpack.c.b16 %v6922, %v6921
        %v6951 = vpack.c.b16 %v6924, %v6923
        %v6952 = vpack.c.b16 %v6926, %v6925
        %v6953 = vpack.c.b16 %v6928, %v6927
        %v6980 = vsel %vm1758, %v6747, 0
        %v6983 = vsel %vm1758, %v6751, 0
        %v6986 = vsel %vm1758, %v6755, 0
        %v6989 = vsel %vm1758, %v6759, 0
        %v6992 = vsel %vm1758, %v6763, 0
        %v6995 = vsel %vm1758, %v6767, 0
        %v6998 = vsel %vm1758, %v6771, 0
        %7000 = vmatprep.subr.bf16.mxu0 0
        %7001 = vmatpush1.bf16.msra.mxu0 %v6929
        %7002 = vmatprep.subr.bf16.mxu0 0
        %7003 = vmatpush1.bf16.msra.mxu0 %v6930
        %7004 = vmatprep.subr.bf16.mxu0 0
        %7005 = vmatpush1.bf16.msra.mxu0 %v6931
        %7006 = vmatprep.subr.bf16.mxu0 0
        %7007 = vmatpush1.bf16.msra.mxu0 %v6932
        %7008 = vmatprep.subr.bf16.mxu0 0
        %7009 = vmatpush1.bf16.msra.mxu0 %v6933
        %7010 = vmatprep.subr.bf16.mxu0 0
        %7011 = vmatpush1.bf16.msra.mxu0 %v6934
        %7012 = vmatprep.subr.bf16.mxu0 0
        %7013 = vmatpush1.bf16.msra.mxu0 %v6935
        %7014 = vmatprep.subr.bf16.mxu0 0
        %7015 = vmatpush1.bf16.msra.mxu0 %v6936
        %7016 = vmatprep.subr.bf16.mxu0 0
        %7017 = vmatpush1.bf16.msra.mxu0 %v6937
        %7018 = vmatprep.subr.bf16.mxu0 0
        %7019 = vmatpush1.bf16.msra.mxu0 %v6938
        %7020 = vmatprep.subr.bf16.mxu0 0
        %7021 = vmatpush1.bf16.msra.mxu0 %v6939
        %7022 = vmatprep.subr.bf16.mxu0 0
        %7023 = vmatpush1.bf16.msra.mxu0 %v6940
        %7024 = vmatprep.subr.bf16.mxu0 0
        %7025 = vmatpush1.bf16.msra.mxu0 %v6941
        %7026 = vmatprep.subr.bf16.mxu0 0
        %7027 = vmatpush1.bf16.msra.mxu0 %v6942
        %7028 = vmatprep.subr.bf16.mxu0 0
        %7029 = vmatpush1.bf16.msra.mxu0 %v6943
        %7030 = vmatprep.subr.bf16.mxu0 0
        %7031 = vmatpush1.bf16.msra.mxu0 %v6944
        %7032 = vmatprep.mubr.bf16.mxu0 %v6745
        %7033 = vmatmul.mubr.bf16.gmra.mrb[0].mxu0 %v6744
        %v7034 = vpop.f32.mrb[0].mxu0
        %v7035 = vadd.f32 %v6827, %v7034
        %v7036 = vpop.f32.mrb[0].mxu0
        %v7037 = vpop.f32.mrb[0].mxu0
        %v7038 = vadd.f32 %v6827, %v7037
        %v7039 = vpop.f32.mrb[0].mxu0
        %7040 = vmatprep.mubr.bf16.mxu0 %v6749
        %7041 = vmatmul.mubr.bf16.gmra.mrb[0].mxu0 %v6748
        %v7042 = vpop.f32.mrb[0].mxu0
        %v7043 = vadd.f32 %v6827, %v7042
        %v7044 = vpop.f32.mrb[0].mxu0
        %v7045 = vpop.f32.mrb[0].mxu0
        %v7046 = vadd.f32 %v6827, %v7045
        %v7047 = vpop.f32.mrb[0].mxu0
        %7048 = vmatprep.mubr.bf16.mxu0 %v6753
        %7049 = vmatmul.mubr.bf16.gmra.mrb[0].mxu0 %v6752
        %v7050 = vpop.f32.mrb[0].mxu0
        %v7051 = vadd.f32 %v6827, %v7050
        %v7052 = vpop.f32.mrb[0].mxu0
        %v7053 = vpop.f32.mrb[0].mxu0
        %v7054 = vadd.f32 %v6827, %v7053
        %v7055 = vpop.f32.mrb[0].mxu0
        %7056 = vmatprep.mubr.bf16.mxu0 %v6757
        %7057 = vmatmul.mubr.bf16.gmra.mrb[0].mxu0 %v6756
        %v7058 = vpop.f32.mrb[0].mxu0
        %v7059 = vadd.f32 %v6827, %v7058
        %v7060 = vpop.f32.mrb[0].mxu0
        %v7061 = vpop.f32.mrb[0].mxu0
        %v7062 = vadd.f32 %v6827, %v7061
        %v7063 = vpop.f32.mrb[0].mxu0
        %7064 = vmatprep.mubr.bf16.mxu0 %v6761
        %7065 = vmatmul.mubr.bf16.gmra.mrb[0].mxu0 %v6760
        %v7066 = vpop.f32.mrb[0].mxu0
        %v7067 = vadd.f32 %v6827, %v7066
        %v7068 = vpop.f32.mrb[0].mxu0
        %v7069 = vpop.f32.mrb[0].mxu0
        %v7070 = vadd.f32 %v6827, %v7069
        %v7071 = vpop.f32.mrb[0].mxu0
        %7072 = vmatprep.mubr.bf16.mxu0 %v6765
        %7073 = vmatmul.mubr.bf16.gmra.mrb[0].mxu0 %v6764
        %v7074 = vpop.f32.mrb[0].mxu0
        %v7075 = vadd.f32 %v6827, %v7074
        %v7076 = vpop.f32.mrb[0].mxu0
        %v7077 = vpop.f32.mrb[0].mxu0
        %v7078 = vadd.f32 %v6827, %v7077
        %v7079 = vpop.f32.mrb[0].mxu0
        %7080 = vmatprep.mubr.bf16.mxu0 %v6769
        %7081 = vmatmul.mubr.bf16.gmra.mrb[0].mxu0 %v6768
        %v7082 = vpop.f32.mrb[0].mxu0
        %v7083 = vadd.f32 %v6827, %v7082
        %v7084 = vpop.f32.mrb[0].mxu0
        %v7085 = vpop.f32.mrb[0].mxu0
        %v7086 = vpop.f32.mrb[0].mxu0
        %7087 = vdwg.mxu0
        %7088 = vmatprep.subr.bf16.mxu0 0
        %7089 = vmatpush1.bf16.msra.mxu0 %v6945
        %7090 = vmatprep.subr.bf16.mxu0 0
        %7091 = vmatpush1.bf16.msra.mxu0 %v6946
        %7092 = vmatprep.subr.bf16.mxu0 0
        %7093 = vmatpush1.bf16.msra.mxu0 %v6947
        %7094 = vmatprep.subr.bf16.mxu0 0
        %7095 = vmatpush1.bf16.msra.mxu0 %v6948
        %7096 = vmatprep.subr.bf16.mxu0 0
        %7097 = vmatpush1.bf16.msra.mxu0 %v6949
        %7098 = vmatprep.subr.bf16.mxu0 0
        %7099 = vmatpush1.bf16.msra.mxu0 %v6950
        %7100 = vmatprep.subr.bf16.mxu0 0
        %7101 = vmatpush1.bf16.msra.mxu0 %v6951
        %7102 = vmatprep.subr.bf16.mxu0 0
        %7103 = vmatpush1.bf16.msra.mxu0 %v6952
        %7104 = vmatprep.subr.bf16.mxu0 0
        %7105 = vmatpush1.bf16.msra.mxu0 %v6953
        %7106 = vmatprep.subr.bf16.mxu0 0
        %7107 = vmatpush1.bf16.msra.mxu0 0
        %7108 = vmatprep.subr.bf16.mxu0 0
        %7109 = vmatpush1.bf16.msra.mxu0 0
        %7110 = vmatprep.subr.bf16.mxu0 0
        %7111 = vmatpush1.bf16.msra.mxu0 0
        %7112 = vmatprep.subr.bf16.mxu0 0
        %7113 = vmatpush1.bf16.msra.mxu0 0
        %7114 = vmatprep.subr.bf16.mxu0 0
        %7115 = vmatpush1.bf16.msra.mxu0 0
        %7116 = vmatprep.subr.bf16.mxu0 0
        %7117 = vmatpush1.bf16.msra.mxu0 0
        %7118 = vmatprep.subr.bf16.mxu0 0
        %7119 = vmatpush1.bf16.msra.mxu0 0
        %7120 = vmatprep.mubr.bf16.mxu0 %v6980
        %7121 = vmatmul.mubr.bf16.gmra.mrb[0].mxu0 %v6746
        %v7122 = vpop.f32.mrb[0].mxu0
        %v7123 = vadd.f32 %v7035, %v7122
        %v7124 = vpop.f32.mrb[0].mxu0
        %v7125 = vpop.f32.mrb[0].mxu0
        %v7126 = vadd.f32 %v7038, %v7125
        %v7127 = vpop.f32.mrb[0].mxu0
        %7128 = vmatprep.mubr.bf16.mxu0 %v6983
        %7129 = vmatmul.mubr.bf16.gmra.mrb[0].mxu0 %v6750
        %v7130 = vpop.f32.mrb[0].mxu0
        %v7131 = vadd.f32 %v7043, %v7130
        %v7132 = vpop.f32.mrb[0].mxu0
        %v7133 = vpop.f32.mrb[0].mxu0
        %v7134 = vadd.f32 %v7046, %v7133
        %v7135 = vpop.f32.mrb[0].mxu0
        %7136 = vmatprep.mubr.bf16.mxu0 %v6986
        %7137 = vmatmul.mubr.bf16.gmra.mrb[0].mxu0 %v6754
        %v7138 = vpop.f32.mrb[0].mxu0
        %v7139 = vadd.f32 %v7051, %v7138
        %v7140 = vpop.f32.mrb[0].mxu0
        %v7141 = vpop.f32.mrb[0].mxu0
        %v7142 = vadd.f32 %v7054, %v7141
        %v7143 = vpop.f32.mrb[0].mxu0
        %7144 = vmatprep.mubr.bf16.mxu0 %v6989
        %7145 = vmatmul.mubr.bf16.gmra.mrb[0].mxu0 %v6758
        %v7146 = vpop.f32.mrb[0].mxu0
        %v7147 = vadd.f32 %v7059, %v7146
        %v7148 = vpop.f32.mrb[0].mxu0
        %v7149 = vpop.f32.mrb[0].mxu0
        %v7150 = vadd.f32 %v7062, %v7149
        %v7151 = vpop.f32.mrb[0].mxu0
        %7152 = vmatprep.mubr.bf16.mxu0 %v6992
        %7153 = vmatmul.mubr.bf16.gmra.mrb[0].mxu0 %v6762
        %v7154 = vpop.f32.mrb[0].mxu0
        %v7155 = vadd.f32 %v7067, %v7154
        %v7156 = vpop.f32.mrb[0].mxu0
        %v7157 = vpop.f32.mrb[0].mxu0
        %v7158 = vadd.f32 %v7070, %v7157
        %v7159 = vpop.f32.mrb[0].mxu0
        %7160 = vmatprep.mubr.bf16.mxu0 %v6995
        %7161 = vmatmul.mubr.bf16.gmra.mrb[0].mxu0 %v6766
        %v7162 = vpop.f32.mrb[0].mxu0
        %v7163 = vadd.f32 %v7075, %v7162
        %v7164 = vpop.f32.mrb[0].mxu0
        %v7165 = vpop.f32.mrb[0].mxu0
        %v7166 = vadd.f32 %v7078, %v7165
        %v7167 = vpop.f32.mrb[0].mxu0
        %7168 = vmatprep.mubr.bf16.mxu0 %v6998
        %7169 = vmatmul.mubr.bf16.gmra.mrb[0].mxu0 %v6770
        %v7170 = vpop.f32.mrb[0].mxu0
        %v7171 = vadd.f32 %v7083, %v7170
        %v7172 = vpop.f32.mrb[0].mxu0
        %v7173 = vpop.f32.mrb[0].mxu0
        %v7174 = vpop.f32.mrb[0].mxu0
        %7175 = vdwg.mxu0
        %v7176 = vmax.f32 %v7123, 0.0
        %v7177 = vmax.f32 %v7126, 0.0
        %v7178 = vmax.f32 %v7131, 0.0
        %v7179 = vmax.f32 %v7134, 0.0
        %v7180 = vmax.f32 %v7139, 0.0
        %v7181 = vmax.f32 %v7142, 0.0
        %v7182 = vmax.f32 %v7147, 0.0
        %v7183 = vmax.f32 %v7150, 0.0
        %v7184 = vmax.f32 %v7155, 0.0
        %v7185 = vmax.f32 %v7158, 0.0
        %v7186 = vmax.f32 %v7163, 0.0
        %v7187 = vmax.f32 %v7166, 0.0
        %v7188 = vmax.f32 %v7171, 0.0
        %v7189 = vmul.f32 %v7176, 0.15
        %v7190 = vmul.f32 %v7177, 0.15
        %v7191 = vmul.f32 %v7178, 0.15
        %v7192 = vmul.f32 %v7179, 0.15
        %v7193 = vmul.f32 %v7180, 0.15
        %v7194 = vmul.f32 %v7181, 0.15
        %v7195 = vmul.f32 %v7182, 0.15
        %v7196 = vmul.f32 %v7183, 0.15
        %v7197 = vmul.f32 %v7184, 0.15
        %v7198 = vmul.f32 %v7185, 0.15
        %v7199 = vmul.f32 %v7186, 0.15
        %v7200 = vmul.f32 %v7187, 0.15
        %v7201 = vmul.f32 %v7188, 0.15
        %v7202 = vmul.f32 %v7189, 1.442695
        %v7203 = vpow.pop %v7202
        %v7204 = vmul.f32 %v7190, 1.442695
        %v7205 = vpow.pop %v7204
        %v7206 = vmul.f32 %v7191, 1.442695
        %v7207 = vpow.pop %v7206
        %v7208 = vmul.f32 %v7192, 1.442695
        %v7209 = vpow.pop %v7208
        %v7210 = vmul.f32 %v7193, 1.442695
        %v7211 = vpow.pop %v7210
        %v7212 = vmul.f32 %v7194, 1.442695
        %v7213 = vpow.pop %v7212
        %v7214 = vmul.f32 %v7195, 1.442695
        %v7215 = vpow.pop %v7214
        %v7216 = vmul.f32 %v7196, 1.442695
        %v7217 = vpow.pop %v7216
        %v7218 = vmul.f32 %v7197, 1.442695
        %v7219 = vpow.pop %v7218
        %v7220 = vmul.f32 %v7198, 1.442695
        %v7221 = vpow.pop %v7220
        %v7222 = vmul.f32 %v7199, 1.442695
        %v7223 = vpow.pop %v7222
        %v7224 = vmul.f32 %v7200, 1.442695
        %v7225 = vpow.pop %v7224
        %v7226 = vmul.f32 %v7201, 1.442695
        %v7227 = vpow.pop %v7226
        %v7228 = vsub.f32 %v7203, 1.0
        %v7229 = vsub.f32 %v7205, 1.0
        %v7230 = vsub.f32 %v7207, 1.0
        %v7231 = vsub.f32 %v7209, 1.0
        %v7232 = vsub.f32 %v7211, 1.0
        %v7233 = vsub.f32 %v7213, 1.0
        %v7234 = vsub.f32 %v7215, 1.0
        %v7235 = vsub.f32 %v7217, 1.0
        %v7236 = vsub.f32 %v7219, 1.0
        %v7237 = vsub.f32 %v7221, 1.0
        %v7238 = vsub.f32 %v7223, 1.0
        %v7239 = vsub.f32 %v7225, 1.0
        %v7240 = vsub.f32 %v7227, 1.0
        %v7241 = vmul.f32 %v7228, 1.442695
        %v7242 = vpow.pop %v7241
        %v7243 = vmul.f32 %v7229, 1.442695
        %v7244 = vpow.pop %v7243
        %v7245 = vmul.f32 %v7230, 1.442695
        %v7246 = vpow.pop %v7245
        %v7247 = vmul.f32 %v7231, 1.442695
        %v7248 = vpow.pop %v7247
        %v7249 = vmul.f32 %v7232, 1.442695
        %v7250 = vpow.pop %v7249
        %v7251 = vmul.f32 %v7233, 1.442695
        %v7252 = vpow.pop %v7251
        %v7253 = vmul.f32 %v7234, 1.442695
        %v7254 = vpow.pop %v7253
        %v7255 = vmul.f32 %v7235, 1.442695
        %v7256 = vpow.pop %v7255
        %v7257 = vmul.f32 %v7236, 1.442695
        %v7258 = vpow.pop %v7257
        %v7259 = vmul.f32 %v7237, 1.442695
        %v7260 = vpow.pop %v7259
        %v7261 = vmul.f32 %v7238, 1.442695
        %v7262 = vpow.pop %v7261
        %v7263 = vmul.f32 %v7239, 1.442695
        %v7264 = vpow.pop %v7263
        %v7265 = vmul.f32 %v7240, 1.442695
        %v7266 = vpow.pop %v7265
        %v7267 = vsub.f32 %v7242, 1.0
        %v7268 = vsub.f32 %v7244, 1.0
        %v7269 = vsub.f32 %v7246, 1.0
        %v7270 = vsub.f32 %v7248, 1.0
        %v7271 = vsub.f32 %v7250, 1.0
        %v7272 = vsub.f32 %v7252, 1.0
        %v7273 = vsub.f32 %v7254, 1.0
        %v7274 = vsub.f32 %v7256, 1.0
        %v7275 = vsub.f32 %v7258, 1.0
        %v7276 = vsub.f32 %v7260, 1.0
        %v7277 = vsub.f32 %v7262, 1.0
        %v7278 = vsub.f32 %v7264, 1.0
        %v7279 = vsub.f32 %v7266, 1.0
        %v7280 = vmul.f32 %v7267, 1.442695
        %v7281 = vpow.pop %v7280
        %v7282 = vmul.f32 %v7268, 1.442695
        %v7283 = vpow.pop %v7282
        %v7284 = vmul.f32 %v7269, 1.442695
        %v7285 = vpow.pop %v7284
        %v7286 = vmul.f32 %v7270, 1.442695
        %v7287 = vpow.pop %v7286
        %v7288 = vmul.f32 %v7271, 1.442695
        %v7289 = vpow.pop %v7288
        %v7290 = vmul.f32 %v7272, 1.442695
        %v7291 = vpow.pop %v7290
        %v7292 = vmul.f32 %v7273, 1.442695
        %v7293 = vpow.pop %v7292
        %v7294 = vmul.f32 %v7274, 1.442695
        %v7295 = vpow.pop %v7294
        %v7296 = vmul.f32 %v7275, 1.442695
        %v7297 = vpow.pop %v7296
        %v7298 = vmul.f32 %v7276, 1.442695
        %v7299 = vpow.pop %v7298
        %v7300 = vmul.f32 %v7277, 1.442695
        %v7301 = vpow.pop %v7300
        %v7302 = vmul.f32 %v7278, 1.442695
        %v7303 = vpow.pop %v7302
        %v7304 = vmul.f32 %v7279, 1.442695
        %v7305 = vpow.pop %v7304
        %v7306 = vsub.f32 %v7281, 1.0
        %v7307 = vsub.f32 %v7283, 1.0
        %v7308 = vsub.f32 %v7285, 1.0
        %v7309 = vsub.f32 %v7287, 1.0
        %v7310 = vsub.f32 %v7289, 1.0
        %v7311 = vsub.f32 %v7291, 1.0
        %v7312 = vsub.f32 %v7293, 1.0
        %v7313 = vsub.f32 %v7295, 1.0
        %v7314 = vsub.f32 %v7297, 1.0
        %v7315 = vsub.f32 %v7299, 1.0
        %v7316 = vsub.f32 %v7301, 1.0
        %v7317 = vsub.f32 %v7303, 1.0
        %v7318 = vsub.f32 %v7305, 1.0
        %v7319 = vmul.f32 %v7306, 1.442695
        %v7320 = vpow.pop %v7319
        %v7321 = vmul.f32 %v7307, 1.442695
        %v7322 = vpow.pop %v7321
        %v7323 = vmul.f32 %v7308, 1.442695
        %v7324 = vpow.pop %v7323
        %v7325 = vmul.f32 %v7309, 1.442695
        %v7326 = vpow.pop %v7325
        %v7327 = vmul.f32 %v7310, 1.442695
        %v7328 = vpow.pop %v7327
        %v7329 = vmul.f32 %v7311, 1.442695
        %v7330 = vpow.pop %v7329
        %v7331 = vmul.f32 %v7312, 1.442695
        %v7332 = vpow.pop %v7331
        %v7333 = vmul.f32 %v7313, 1.442695
        %v7334 = vpow.pop %v7333
        %v7335 = vmul.f32 %v7314, 1.442695
        %v7336 = vpow.pop %v7335
        %v7337 = vmul.f32 %v7315, 1.442695
        %v7338 = vpow.pop %v7337
        %v7339 = vmul.f32 %v7316, 1.442695
        %v7340 = vpow.pop %v7339
        %v7341 = vmul.f32 %v7317, 1.442695
        %v7342 = vpow.pop %v7341
        %v7343 = vmul.f32 %v7318, 1.442695
        %v7344 = vpow.pop %v7343
        %v7345 = vsub.f32 %v7320, 1.0
        %v7346 = vsub.f32 %v7322, 1.0
        %v7347 = vsub.f32 %v7324, 1.0
        %v7348 = vsub.f32 %v7326, 1.0
        %v7349 = vsub.f32 %v7328, 1.0
        %v7350 = vsub.f32 %v7330, 1.0
        %v7351 = vsub.f32 %v7332, 1.0
        %v7352 = vsub.f32 %v7334, 1.0
        %v7353 = vsub.f32 %v7336, 1.0
        %v7354 = vsub.f32 %v7338, 1.0
        %v7355 = vsub.f32 %v7340, 1.0
        %v7356 = vsub.f32 %v7342, 1.0
        %v7357 = vsub.f32 %v7344, 1.0
        %7358 = vst [vmem:[%s671] sm:$0xff] %v7345
        %7359 = vst [vmem:[%s671 + $0x8] sm:$0xff] %v7346
        %7360 = vst [vmem:[%s671 + $0x10] sm:$0xff] %v7347
        %7361 = vst [vmem:[%s671 + $0x18] sm:$0xff] %v7348
        %7362 = vst [vmem:[%s671 + $0x20] sm:$0xff] %v7349
        %7363 = vst [vmem:[%s671 + $0x28] sm:$0xff] %v7350
        %7364 = vst [vmem:[%s671 + $0x30] sm:$0xff] %v7351
        %7365 = vst [vmem:[%s671 + $0x38] sm:$0xff] %v7352
        %7366 = vst [vmem:[%s671 + $0x40] sm:$0xff] %v7353
        %7367 = vst [vmem:[%s671 + $0x48] sm:$0xff] %v7354
        %7368 = vst [vmem:[%s671 + $0x50] sm:$0xff] %v7355
        %7369 = vst [vmem:[%s671 + $0x58] sm:$0xff] %v7356
        %7370 = vst [vmem:[%s671 + $0x60] sm:$0xff] %v7357
        %s7371 = smul.u32 13, %s33
        %p7372 = scmp.lt.s32.totalorder %s7371, 25
        %s7373 = scalar_select %p7372, %s7371, 25
        %s7374 = smul.addr %s7373, 8
        %s7375 = scalar_lea.vmem %s15, %s7374
        // Predicated region
        $region133: #{nps_decoder_forward.1} parent=79 // pred_check
          %p7376 = pneg %p371
        $region134: #{nps_decoder_forward.1} parent=79 // pred_check_branch
          %7378 = sbr.rel (%p7376) target = $region136
        $region135: #{nps_decoder_forward.1} parent=79 // pred_region
          %s7379 = smul.u32 13, %s33
        $region136: #{nps_decoder_forward.1} parent=79 // pred_fallthru
          _
      $region80: #{nps_decoder_forward.1} parent=5 // pred_fallthru
        _
      %p7380 = scmp.le.s32.totalorder 2, %s28
      // Predicated region
      $region137: #{nps_decoder_forward.1} parent=5 // pred_check
        %p7381 = pneg %p7380
      $region138: #{nps_decoder_forward.1} parent=5 // pred_check_branch
        %7383 = sbr.rel (%p7381) target = $region140
      $region139: #{nps_decoder_forward.1} parent=5 // pred_region
        %s7384 = ssub.s32 %s28, 2
        // Predicated region
        $region141: #{nps_decoder_forward.1} parent=139 // pred_check
          %p7385 = pneg %p377
        $region142: #{nps_decoder_forward.1} parent=139 // pred_check_branch
          %7387 = sbr.rel (%p7385) target = $region144
        $region143: #{nps_decoder_forward.1} parent=139 // pred_region
          %s7388 = smul.u32 13, %s34
          %p7389 = scmp.lt.s32.totalorder %s7388, 25
          %s7390 = scalar_select %p7389, %s7388, 25
          %s7391 = smul.addr %s7390, 8
          %s7392 = scalar_lea.vmem %s15, %s7391
        $region144: #{nps_decoder_forward.1} parent=139 // pred_fallthru
          _
      $region140: #{nps_decoder_forward.1} parent=5 // pred_fallthru
        _
    $region6: #{nps_decoder_forward.1} parent=1 // loop_footer
      %s32 = sadd.s32 1, %s28
    $region7: #{nps_decoder_forward.1} parent=1 // loop_footer_branch
      %27 = sbr.rel target = $region3
    $region8: #{nps_decoder_forward.1} parent=1 // loop_exit
      _
    %7393 = vsyncpa [#allocation3], 1
    %s7394 = scalar_lea.sflag [#allocation3], 1
    %7395 = vsyncpa %s7394, 1
    %7396 = vsyncpa [#allocation5], 1
    %7397 = vsyncpa [#allocation8], 1
    %7398 = vsyncpa [#allocation11], 1
    %7399 = vsyncpa [#allocation14], 1
    %7400 = vsyncpa [#allocation17], 1
    %7401 = vsyncpa [#allocation20], 1

</llo_original>
